<compile_context>
chip_gen: v7x
topology: tpu7x:2x2x1
jax: 0.10.0
libtpu: 0.0.40
codegen_flags: <defaults>
</compile_context>

<pallas_src>
import math

import jax
import jax.numpy as jnp
from jax.experimental import pallas as pl
from jax.experimental.pallas import tpu as pltpu

# ----------------------------- model dims -----------------------------------
B = 2          # batch
S = 8          # source sequence length
T = 8          # target sequence length
D_MODEL = 32   # model width
N_HEADS = 4
D_HEAD = D_MODEL // N_HEADS
D_FF = 64
D_VIS = 32     # visual feature width
V_SRC = 16     # source vocab
V_TGT = 16     # target vocab
LN_EPS = 1e-6  # added to std (annotated-transformer LayerNorm)
NEG_INF = -1e9
SLAB_LANES = 128


def _round_up(x, m):
    return (x + m - 1) // m * m


# -------------------- static parameter-slab layout ---------------------------
# Every parameter lives in one contiguous (SLAB_ROWS, 128) f32 buffer.  Each
# entry starts on an 8-sublane-aligned row; columns are left-justified.
PARAM_SPECS = (
    # trajectory encoder: one pre-LN transformer layer + final stack norm
    ("enc/ln1_g", (1, D_MODEL)), ("enc/ln1_b", (1, D_MODEL)),
    ("enc/wqkv", (D_MODEL, 3 * D_MODEL)), ("enc/bqkv", (1, 3 * D_MODEL)),
    ("enc/wo", (D_MODEL, D_MODEL)), ("enc/bo", (1, D_MODEL)),
    ("enc/ln2_g", (1, D_MODEL)), ("enc/ln2_b", (1, D_MODEL)),
    ("enc/ff1_w", (D_MODEL, D_FF)), ("enc/ff1_b", (1, D_FF)),
    ("enc/ff2_w", (D_FF, D_MODEL)), ("enc/ff2_b", (1, D_MODEL)),
    ("enc/lnf_g", (1, D_MODEL)), ("enc/lnf_b", (1, D_MODEL)),
    # visual encoder: 2-layer MLP  (B,S,D_VIS) -> (B,S,D)
    ("vsn/l1_w", (D_VIS, D_MODEL)), ("vsn/l1_b", (1, D_MODEL)),
    ("vsn/l2_w", (D_MODEL, D_MODEL)), ("vsn/l2_b", (1, D_MODEL)),
    # decoder: one pre-LN transformer layer + final stack norm
    ("dec/ln1_g", (1, D_MODEL)), ("dec/ln1_b", (1, D_MODEL)),
    ("dec/self_wqkv", (D_MODEL, 3 * D_MODEL)), ("dec/self_bqkv", (1, 3 * D_MODEL)),
    ("dec/self_wo", (D_MODEL, D_MODEL)), ("dec/self_bo", (1, D_MODEL)),
    ("dec/ln2_g", (1, D_MODEL)), ("dec/ln2_b", (1, D_MODEL)),
    ("dec/cross_wq", (D_MODEL, D_MODEL)), ("dec/cross_bq", (1, D_MODEL)),
    ("dec/cross_wkv", (D_MODEL, 2 * D_MODEL)), ("dec/cross_bkv", (1, 2 * D_MODEL)),
    ("dec/cross_wo", (D_MODEL, D_MODEL)), ("dec/cross_bo", (1, D_MODEL)),
    ("dec/ln3_g", (1, D_MODEL)), ("dec/ln3_b", (1, D_MODEL)),
    ("dec/ff1_w", (D_MODEL, D_FF)), ("dec/ff1_b", (1, D_FF)),
    ("dec/ff2_w", (D_FF, D_MODEL)), ("dec/ff2_b", (1, D_MODEL)),
    ("dec/lnf_g", (1, D_MODEL)), ("dec/lnf_b", (1, D_MODEL)),
)

_SHAPES = dict(PARAM_SPECS)
_OFFSETS = {}
_row = 0
for _name, (_r, _c) in PARAM_SPECS:
    _OFFSETS[_name] = _row
    _row += _round_up(_r, 8)          # 8-sublane aligned start for clean loads
SLAB_ROWS = _round_up(_row, 8)        # ~696 rows -> ~350 KiB, one DMA


def pack_params(raw):
    """Pack the {name: array} parameter dict into the (SLAB_ROWS, 128) slab."""
    slab = jnp.zeros((SLAB_ROWS, SLAB_LANES), jnp.float32)
    for name, (r, c) in PARAM_SPECS:
        arr = jnp.asarray(raw[name], jnp.float32).reshape(r, c)
        slab = slab.at[_OFFSETS[name]:_OFFSETS[name] + r, :c].set(arr)
    return slab


# ------------------------ in-kernel building blocks --------------------------
def _fetch(slab_ref, name):
    """Static-offset load of one parameter from the packed slab (at use site)."""
    off = _OFFSETS[name]
    r, c = _SHAPES[name]
    return slab_ref[off:off + r, :c]


def _linear(x, slab_ref, w_name, b_name, relu=False):
    """x:(M,K) @ W:(K,N) + b:(1,N), optional ReLU.  Weights loaded here."""
    w = _fetch(slab_ref, w_name)
    b = _fetch(slab_ref, b_name)
    y = jnp.dot(x, w, preferred_element_type=jnp.float32) + b
    return jnp.maximum(y, 0.0) if relu else y


def _layernorm(x, slab_ref, g_name, b_name):
    """Annotated-transformer LayerNorm: g*(x-mean)/(std+eps)+b, unbiased std."""
    g = _fetch(slab_ref, g_name)
    b = _fetch(slab_ref, b_name)
    mean = jnp.mean(x, axis=-1, keepdims=True)
    xc = x - mean
    var = jnp.sum(xc * xc, axis=-1, keepdims=True) / (x.shape[-1] - 1)
    return g * xc / (jnp.sqrt(var) + LN_EPS) + b


def _mh_attention(q2, k2, v2, bias, slab_ref, wo_name, bo_name, bb, lq, lk):
    """Head-batched multi-head attention with a single output projection.

    q2:(bb*lq,D)  k2,v2:(bb*lk,D)  bias:(bb, 1|lq, lk) additive (0 / -1e9).
    Heads move from the lane dim to the untiled leading batch dim, so the
    score / softmax / ctx stages each run once over (H*bb) batches, and the
    output projection is one K=D_MODEL matmul.
    """
    q3 = q2.reshape(bb, lq, D_MODEL)
    k3 = k2.reshape(bb, lk, D_MODEL)
    v3 = v2.reshape(bb, lk, D_MODEL)

    qh = jnp.concatenate(
        [q3[:, :, h * D_HEAD:(h + 1) * D_HEAD] for h in range(N_HEADS)], axis=0)
    kh = jnp.concatenate(
        [k3[:, :, h * D_HEAD:(h + 1) * D_HEAD] for h in range(N_HEADS)], axis=0)
    vh = jnp.concatenate(
        [v3[:, :, h * D_HEAD:(h + 1) * D_HEAD] for h in range(N_HEADS)], axis=0)

    scale = 1.0 / math.sqrt(D_HEAD)
    s = jnp.einsum("bqd,bkd->bqk", qh, kh,
                   preferred_element_type=jnp.float32) * scale   # (H*bb, lq, lk)

    # mask bias: broadcast over the head axis (leading, untiled -> cheap)
    bias_h = jnp.broadcast_to(bias[None], (N_HEADS,) + bias.shape)
    bias_h = bias_h.reshape(N_HEADS * bb, bias.shape[1], lk)
    s = s + bias_h

    m = jnp.max(s, axis=-1, keepdims=True)
    e = jnp.exp(s - m)
    p = e / jnp.sum(e, axis=-1, keepdims=True)        # exact softmax (f32 parity)

    ctx = jnp.einsum("bqk,bkd->bqd", p, vh,
                     preferred_element_type=jnp.float32)          # (H*bb, lq, Dh)

    # heads back to the lane dim, then ONE (bb*lq, D) @ (D, D) projection
    ctx_cat = jnp.concatenate(
        [ctx[h * bb:(h + 1) * bb] for h in range(N_HEADS)], axis=-1)  # (bb, lq, D)
    wo = _fetch(slab_ref, wo_name)
    bo = _fetch(slab_ref, bo_name)
    return jnp.dot(ctx_cat.reshape(bb * lq, D_MODEL), wo,
                   preferred_element_type=jnp.float32) + bo


# ----------------------------- the fused kernel -------------------------------
def _forward_kernel(x_src_ref, x_tgt_ref, vis_ref, src_mask_ref, tgt_mask_ref,
                    slab_ref, out_ref):
    # small activations: load once
    x_src = x_src_ref[...].reshape(B * S, D_MODEL)
    x_tgt = x_tgt_ref[...].reshape(B * T, D_MODEL)
    vis = vis_ref[...].reshape(B * S, D_VIS)

    # additive attention biases, computed ONCE (not per head / per attention)
    zero = jnp.float32(0.0)
    ninf = jnp.float32(NEG_INF)
    src_bias = jnp.where(src_mask_ref[...] > 0.0, zero, ninf)   # (B, 1, S)
    tgt_bias = jnp.where(tgt_mask_ref[...] > 0.0, zero, ninf)   # (B, T, T)

    # ---- encoder_vsn: 2-layer MLP on the visual features ----
    hv = _linear(vis, slab_ref, "vsn/l1_w", "vsn/l1_b", relu=True)
    mem_vsn = _linear(hv, slab_ref, "vsn/l2_w", "vsn/l2_b")      # (B*S, D)

    # ---- encoder_trj: one pre-LN transformer layer + final stack norm ----
    x = x_src
    xn = _layernorm(x, slab_ref, "enc/ln1_g", "enc/ln1_b")
    qkv = _linear(xn, slab_ref, "enc/wqkv", "enc/bqkv")          # (B*S, 3D)
    x = x + _mh_attention(qkv[:, :D_MODEL], qkv[:, D_MODEL:2 * D_MODEL],
                          qkv[:, 2 * D_MODEL:], src_bias, slab_ref,
                          "enc/wo", "enc/bo", B, S, S)
    xn = _layernorm(x, slab_ref, "enc/ln2_g", "enc/ln2_b")
    x = x + _linear(_linear(xn, slab_ref, "enc/ff1_w", "enc/ff1_b", relu=True),
                    slab_ref, "enc/ff2_w", "enc/ff2_b")
    x = _layernorm(x, slab_ref, "enc/lnf_g", "enc/lnf_b")        # (B*S, D)

    # memory = output_trj + output_vsn  (torch `code` concat/.cuda() is dead code)
    memory = x + mem_vsn

    # ---- decoder: one pre-LN transformer layer + final stack norm ----
    y = x_tgt
    yn = _layernorm(y, slab_ref, "dec/ln1_g", "dec/ln1_b")
    qkv = _linear(yn, slab_ref, "dec/self_wqkv", "dec/self_bqkv")
    y = y + _mh_attention(qkv[:, :D_MODEL], qkv[:, D_MODEL:2 * D_MODEL],
                          qkv[:, 2 * D_MODEL:], tgt_bias, slab_ref,
                          "dec/self_wo", "dec/self_bo", B, T, T)

    yn = _layernorm(y, slab_ref, "dec/ln2_g", "dec/ln2_b")
    q = _linear(yn, slab_ref, "dec/cross_wq", "dec/cross_bq")
    kv = _linear(memory, slab_ref, "dec/cross_wkv", "dec/cross_bkv")  # (B*S, 2D)
    y = y + _mh_attention(q, kv[:, :D_MODEL], kv[:, D_MODEL:], src_bias,
                          slab_ref, "dec/cross_wo", "dec/cross_bo", B, T, S)

    yn = _layernorm(y, slab_ref, "dec/ln3_g", "dec/ln3_b")
    y = y + _linear(_linear(yn, slab_ref, "dec/ff1_w", "dec/ff1_b", relu=True),
                    slab_ref, "dec/ff2_w", "dec/ff2_b")
    y = _layernorm(y, slab_ref, "dec/lnf_g", "dec/lnf_b")

    out_ref[...] = y                                   # (B*T, D) 2-D store


# ----------------------------- model glue (XLA) -------------------------------
def positional_encoding(length, dim):
    pos = jnp.arange(length, dtype=jnp.float32)[:, None]
    i = jnp.arange(0, dim, 2, dtype=jnp.float32)
    div = jnp.exp(-jnp.log(10000.0) * i / dim)
    pe = jnp.zeros((length, dim), jnp.float32)
    pe = pe.at[:, 0::2].set(jnp.sin(pos * div))
    pe = pe.at[:, 1::2].set(jnp.cos(pos * div))
    return pe


def embed(tokens, table):
    # tokens: (B, L) int32 -> (B, L, D)   (tiny gather; kept outside Pallas)
    L = tokens.shape[1]
    x = jnp.take(table, tokens, axis=0) * math.sqrt(D_MODEL)
    return x + positional_encoding(L, D_MODEL)[None]


def encoder_decoder_forward(params, src, tgt, visual_input_tensor,
                            src_mask, tgt_mask):
    x_src = embed(src, params["emb_src"])          # (B, S, D)
    x_tgt = embed(tgt, params["emb_tgt"])          # (B, T, D)

    vmem = pl.BlockSpec(memory_space=pltpu.MemorySpace.VMEM)
    out2d = pl.pallas_call(
        _forward_kernel,
        out_shape=jax.ShapeDtypeStruct((B * T, D_MODEL), jnp.float32),
        in_specs=[vmem] * 6,
        out_specs=vmem,
    )(x_src, x_tgt, visual_input_tensor.astype(jnp.float32),
      src_mask.astype(jnp.float32), tgt_mask.astype(jnp.float32),
      params["slab"])
    return out2d.reshape(B, T, D_MODEL)


# ----------------------------- params ----------------------------------------
def init_params(key):
    keys = jax.random.split(key, len(PARAM_SPECS) + 2)
    raw = {}
    for i, (name, (r, c)) in enumerate(PARAM_SPECS):
        if "/ln" in name and name.endswith("_g"):
            raw[name] = jnp.ones((r, c), jnp.float32)          # LN gains
        elif name.endswith("_b"):
            raw[name] = jnp.zeros((r, c), jnp.float32)         # biases / LN betas
        else:
            raw[name] = 0.05 * jax.random.normal(keys[i], (r, c), jnp.float32)
    emb_src = 0.05 * jax.random.normal(keys[-2], (V_SRC, D_MODEL), jnp.float32)
    emb_tgt = 0.05 * jax.random.normal(keys[-1], (V_TGT, D_MODEL), jnp.float32)
    # TODO(synk): pooling (AdaptiveAvgPool1d) and generator are defined in the
    # torch module's __init__ but never used in forward(); intentionally omitted.
    return {"emb_src": emb_src, "emb_tgt": emb_tgt, "slab": pack_params(raw)}


# ----------------------------- main -------------------------------------------
if __name__ == "__main__":
    key = jax.random.PRNGKey(0)
    k_params, k_src, k_tgt, k_vis = jax.random.split(key, 4)

    params = init_params(k_params)

    src = jax.random.randint(k_src, (B, S), 0, V_SRC, dtype=jnp.int32)
    tgt = jax.random.randint(k_tgt, (B, T), 0, V_TGT, dtype=jnp.int32)
    visual_input_tensor = jax.random.normal(k_vis, (B, S, D_VIS), jnp.float32)
    src_mask = jnp.ones((B, 1, S), jnp.float32)
    tgt_mask = jnp.broadcast_to(jnp.tril(jnp.ones((T, T), jnp.float32))[None],
                                (B, T, T))

    fwd = jax.jit(encoder_decoder_forward)
    out = fwd(params, src, tgt, visual_input_tensor, src_mask, tgt_mask)
    jax.block_until_ready(out)

    assert out.shape == (B, T, D_MODEL), out.shape
    assert bool(jnp.all(jnp.isfinite(out)))
    print("KERNEL_OK")
</pallas_src>

<mosaic_0001>
module attributes {stable_mosaic.version = 11 : i64} {
  func.func @_forward_kernel(%arg0: memref<2x8x32xf32, #tpu.memory_space<vmem>>, %arg1: memref<2x8x32xf32, #tpu.memory_space<vmem>>, %arg2: memref<2x8x32xf32, #tpu.memory_space<vmem>>, %arg3: memref<2x1x8xf32, #tpu.memory_space<vmem>>, %arg4: memref<2x8x8xf32, #tpu.memory_space<vmem>>, %arg5: memref<696x128xf32, #tpu.memory_space<vmem>>, %arg6: memref<16x32xf32, #tpu.memory_space<vmem>>) attributes {dimension_semantics = [], scalar_prefetch = 0 : i64, scratch_operands = 0 : i64, tpu.core_type = #tpu.core_type<tc>} {
    %c0 = arith.constant 0 : index
    %c0_0 = arith.constant 0 : index
    %c0_1 = arith.constant 0 : index
    %0 = vector.load %arg0[%c0, %c0_0, %c0_1] : memref<2x8x32xf32, #tpu.memory_space<vmem>>, vector<2x8x32xf32>
    %1 = vector.shape_cast %0 : vector<2x8x32xf32> to vector<16x32xf32>
    %c0_2 = arith.constant 0 : index
    %c0_3 = arith.constant 0 : index
    %c0_4 = arith.constant 0 : index
    %2 = vector.load %arg1[%c0_2, %c0_3, %c0_4] : memref<2x8x32xf32, #tpu.memory_space<vmem>>, vector<2x8x32xf32>
    %3 = vector.shape_cast %2 : vector<2x8x32xf32> to vector<16x32xf32>
    %c0_5 = arith.constant 0 : index
    %c0_6 = arith.constant 0 : index
    %c0_7 = arith.constant 0 : index
    %4 = vector.load %arg2[%c0_5, %c0_6, %c0_7] : memref<2x8x32xf32, #tpu.memory_space<vmem>>, vector<2x8x32xf32>
    %5 = vector.shape_cast %4 : vector<2x8x32xf32> to vector<16x32xf32>
    %c0_8 = arith.constant 0 : index
    %c0_9 = arith.constant 0 : index
    %c0_10 = arith.constant 0 : index
    %6 = vector.load %arg3[%c0_8, %c0_9, %c0_10] : memref<2x1x8xf32, #tpu.memory_space<vmem>>, vector<2x1x8xf32>
    %cst = arith.constant 0.000000e+00 : f32
    %7 = vector.broadcast %cst : f32 to vector<2x1x8xf32>
    %8 = arith.cmpf ogt, %6, %7 : vector<2x1x8xf32>
    %cst_11 = arith.constant 0.000000e+00 : f32
    %cst_12 = arith.constant -1.000000e+09 : f32
    %9 = vector.broadcast %cst_11 : f32 to vector<2x1x8xf32>
    %10 = vector.broadcast %cst_12 : f32 to vector<2x1x8xf32>
    %11 = arith.select %8, %9, %10 : vector<2x1x8xi1>, vector<2x1x8xf32>
    %c0_13 = arith.constant 0 : index
    %c0_14 = arith.constant 0 : index
    %c0_15 = arith.constant 0 : index
    %12 = vector.load %arg4[%c0_13, %c0_14, %c0_15] : memref<2x8x8xf32, #tpu.memory_space<vmem>>, vector<2x8x8xf32>
    %cst_16 = arith.constant 0.000000e+00 : f32
    %13 = vector.broadcast %cst_16 : f32 to vector<2x8x8xf32>
    %14 = arith.cmpf ogt, %12, %13 : vector<2x8x8xf32>
    %cst_17 = arith.constant 0.000000e+00 : f32
    %cst_18 = arith.constant -1.000000e+09 : f32
    %15 = vector.broadcast %cst_17 : f32 to vector<2x8x8xf32>
    %16 = vector.broadcast %cst_18 : f32 to vector<2x8x8xf32>
    %17 = arith.select %14, %15, %16 : vector<2x8x8xi1>, vector<2x8x8xf32>
    %c240 = arith.constant 240 : index
    %c0_19 = arith.constant 0 : index
    %18 = vector.load %arg5[%c240, %c0_19] : memref<696x128xf32, #tpu.memory_space<vmem>>, vector<32x32xf32>
    %c272 = arith.constant 272 : index
    %c0_20 = arith.constant 0 : index
    %19 = vector.load %arg5[%c272, %c0_20] : memref<696x128xf32, #tpu.memory_space<vmem>>, vector<1x32xf32>
    %cst_21 = arith.constant dense<0.000000e+00> : vector<16x32xf32>
    %20 = tpu.matmul %5, %18, %cst_21 {dimension_numbers = #tpu.dot_dimension_numbers<[1], [0], [0], [1], [0, 0, 1, 1], [], []>} : vector<16x32xf32>, vector<32x32xf32>, vector<16x32xf32> -> vector<16x32xf32>
    %21 = vector.broadcast %19 : vector<1x32xf32> to vector<16x32xf32>
    %22 = arith.addf %20, %21 : vector<16x32xf32>
    %cst_22 = arith.constant 0.000000e+00 : f32
    %23 = vector.broadcast %cst_22 : f32 to vector<16x32xf32>
    %24 = arith.maximumf %22, %23 : vector<16x32xf32>
    %c280 = arith.constant 280 : index
    %c0_23 = arith.constant 0 : index
    %25 = vector.load %arg5[%c280, %c0_23] : memref<696x128xf32, #tpu.memory_space<vmem>>, vector<32x32xf32>
    %c312 = arith.constant 312 : index
    %c0_24 = arith.constant 0 : index
    %26 = vector.load %arg5[%c312, %c0_24] : memref<696x128xf32, #tpu.memory_space<vmem>>, vector<1x32xf32>
    %cst_25 = arith.constant dense<0.000000e+00> : vector<16x32xf32>
    %27 = tpu.matmul %24, %25, %cst_25 {dimension_numbers = #tpu.dot_dimension_numbers<[1], [0], [0], [1], [0, 0, 1, 1], [], []>} : vector<16x32xf32>, vector<32x32xf32>, vector<16x32xf32> -> vector<16x32xf32>
    %28 = vector.broadcast %26 : vector<1x32xf32> to vector<16x32xf32>
    %29 = arith.addf %27, %28 : vector<16x32xf32>
    %c0_26 = arith.constant 0 : index
    %c0_27 = arith.constant 0 : index
    %30 = vector.load %arg5[%c0_26, %c0_27] : memref<696x128xf32, #tpu.memory_space<vmem>>, vector<1x32xf32>
    %c8 = arith.constant 8 : index
    %c0_28 = arith.constant 0 : index
    %31 = vector.load %arg5[%c8, %c0_28] : memref<696x128xf32, #tpu.memory_space<vmem>>, vector<1x32xf32>
    %cst_29 = arith.constant dense<0.000000e+00> : vector<16xf32>
    %32 = vector.multi_reduction <add>, %1, %cst_29 [1] : vector<16x32xf32> to vector<16xf32>
    %33 = vector.shape_cast %32 : vector<16xf32> to vector<16x1xf32>
    %cst_30 = arith.constant 3.200000e+01 : f32
    %34 = vector.broadcast %cst_30 : f32 to vector<16x1xf32>
    %35 = arith.divf %33, %34 : vector<16x1xf32>
    %36 = vector.broadcast %35 : vector<16x1xf32> to vector<16x32xf32>
    %37 = arith.subf %1, %36 : vector<16x32xf32>
    %38 = arith.mulf %37, %37 : vector<16x32xf32>
    %cst_31 = arith.constant dense<0.000000e+00> : vector<16xf32>
    %39 = vector.multi_reduction <add>, %38, %cst_31 [1] : vector<16x32xf32> to vector<16xf32>
    %40 = vector.shape_cast %39 : vector<16xf32> to vector<16x1xf32>
    %cst_32 = arith.constant 3.100000e+01 : f32
    %41 = vector.broadcast %cst_32 : f32 to vector<16x1xf32>
    %42 = arith.divf %40, %41 : vector<16x1xf32>
    %43 = vector.broadcast %30 : vector<1x32xf32> to vector<16x32xf32>
    %44 = arith.mulf %43, %37 : vector<16x32xf32>
    %45 = math.sqrt %42 : vector<16x1xf32>
    %cst_33 = arith.constant 9.99999997E-7 : f32
    %46 = vector.broadcast %cst_33 : f32 to vector<16x1xf32>
    %47 = arith.addf %45, %46 : vector<16x1xf32>
    %48 = vector.broadcast %47 : vector<16x1xf32> to vector<16x32xf32>
    %49 = arith.divf %44, %48 : vector<16x32xf32>
    %50 = vector.broadcast %31 : vector<1x32xf32> to vector<16x32xf32>
    %51 = arith.addf %49, %50 : vector<16x32xf32>
    %c16 = arith.constant 16 : index
    %c0_34 = arith.constant 0 : index
    %52 = vector.load %arg5[%c16, %c0_34] : memref<696x128xf32, #tpu.memory_space<vmem>>, vector<32x96xf32>
    %c48 = arith.constant 48 : index
    %c0_35 = arith.constant 0 : index
    %53 = vector.load %arg5[%c48, %c0_35] : memref<696x128xf32, #tpu.memory_space<vmem>>, vector<1x96xf32>
    %cst_36 = arith.constant dense<0.000000e+00> : vector<16x96xf32>
    %54 = tpu.matmul %51, %52, %cst_36 {dimension_numbers = #tpu.dot_dimension_numbers<[1], [0], [0], [1], [0, 0, 1, 1], [], []>} : vector<16x32xf32>, vector<32x96xf32>, vector<16x96xf32> -> vector<16x96xf32>
    %55 = vector.broadcast %53 : vector<1x96xf32> to vector<16x96xf32>
    %56 = arith.addf %54, %55 : vector<16x96xf32>
    %57 = vector.extract_strided_slice %56 {offsets = [0, 0], sizes = [16, 32], strides = [1, 1]} : vector<16x96xf32> to vector<16x32xf32>
    %58 = vector.extract_strided_slice %56 {offsets = [0, 32], sizes = [16, 32], strides = [1, 1]} : vector<16x96xf32> to vector<16x32xf32>
    %59 = vector.extract_strided_slice %56 {offsets = [0, 64], sizes = [16, 32], strides = [1, 1]} : vector<16x96xf32> to vector<16x32xf32>
    %60 = vector.shape_cast %57 : vector<16x32xf32> to vector<2x8x32xf32>
    %61 = vector.shape_cast %58 : vector<16x32xf32> to vector<2x8x32xf32>
    %62 = vector.shape_cast %59 : vector<16x32xf32> to vector<2x8x32xf32>
    %63 = vector.extract_strided_slice %60 {offsets = [0, 0, 0], sizes = [2, 8, 8], strides = [1, 1, 1]} : vector<2x8x32xf32> to vector<2x8x8xf32>
    %64 = vector.extract_strided_slice %60 {offsets = [0, 0, 8], sizes = [2, 8, 8], strides = [1, 1, 1]} : vector<2x8x32xf32> to vector<2x8x8xf32>
    %65 = vector.extract_strided_slice %60 {offsets = [0, 0, 16], sizes = [2, 8, 8], strides = [1, 1, 1]} : vector<2x8x32xf32> to vector<2x8x8xf32>
    %66 = vector.extract_strided_slice %60 {offsets = [0, 0, 24], sizes = [2, 8, 8], strides = [1, 1, 1]} : vector<2x8x32xf32> to vector<2x8x8xf32>
    %67 = tpu.concatenate %63, %64, %65, %66 in 0 : vector<2x8x8xf32>, vector<2x8x8xf32>, vector<2x8x8xf32>, vector<2x8x8xf32> -> vector<8x8x8xf32>
    %68 = vector.extract_strided_slice %61 {offsets = [0, 0, 0], sizes = [2, 8, 8], strides = [1, 1, 1]} : vector<2x8x32xf32> to vector<2x8x8xf32>
    %69 = vector.extract_strided_slice %61 {offsets = [0, 0, 8], sizes = [2, 8, 8], strides = [1, 1, 1]} : vector<2x8x32xf32> to vector<2x8x8xf32>
    %70 = vector.extract_strided_slice %61 {offsets = [0, 0, 16], sizes = [2, 8, 8], strides = [1, 1, 1]} : vector<2x8x32xf32> to vector<2x8x8xf32>
    %71 = vector.extract_strided_slice %61 {offsets = [0, 0, 24], sizes = [2, 8, 8], strides = [1, 1, 1]} : vector<2x8x32xf32> to vector<2x8x8xf32>
    %72 = tpu.concatenate %68, %69, %70, %71 in 0 : vector<2x8x8xf32>, vector<2x8x8xf32>, vector<2x8x8xf32>, vector<2x8x8xf32> -> vector<8x8x8xf32>
    %73 = vector.extract_strided_slice %62 {offsets = [0, 0, 0], sizes = [2, 8, 8], strides = [1, 1, 1]} : vector<2x8x32xf32> to vector<2x8x8xf32>
    %74 = vector.extract_strided_slice %62 {offsets = [0, 0, 8], sizes = [2, 8, 8], strides = [1, 1, 1]} : vector<2x8x32xf32> to vector<2x8x8xf32>
    %75 = vector.extract_strided_slice %62 {offsets = [0, 0, 16], sizes = [2, 8, 8], strides = [1, 1, 1]} : vector<2x8x32xf32> to vector<2x8x8xf32>
    %76 = vector.extract_strided_slice %62 {offsets = [0, 0, 24], sizes = [2, 8, 8], strides = [1, 1, 1]} : vector<2x8x32xf32> to vector<2x8x8xf32>
    %77 = tpu.concatenate %73, %74, %75, %76 in 0 : vector<2x8x8xf32>, vector<2x8x8xf32>, vector<2x8x8xf32>, vector<2x8x8xf32> -> vector<8x8x8xf32>
    "tpu.trace_start"() <{level = 10 : i32, message = "bqd,bkd->bqk"}> : () -> ()
    %cst_37 = arith.constant dense<0.000000e+00> : vector<8x8x8xf32>
    %78 = tpu.matmul %67, %72, %cst_37 {dimension_numbers = #tpu.dot_dimension_numbers<[2], [2], [1], [1], [0, 0, 0, 1, 1, 1], [0], [0]>} : vector<8x8x8xf32>, vector<8x8x8xf32>, vector<8x8x8xf32> -> vector<8x8x8xf32>
    "tpu.trace_stop"() : () -> ()
    %cst_38 = arith.constant 0.353553385 : f32
    %79 = vector.broadcast %cst_38 : f32 to vector<8x8x8xf32>
    %80 = arith.mulf %78, %79 : vector<8x8x8xf32>
    %81 = vector.shape_cast %11 : vector<2x1x8xf32> to vector<1x2x1x8xf32>
    %82 = vector.shape_cast %81 : vector<1x2x1x8xf32> to vector<1x2x1x8xf32>
    %83 = vector.broadcast %82 : vector<1x2x1x8xf32> to vector<4x2x1x8xf32>
    %84 = vector.shape_cast %83 : vector<4x2x1x8xf32> to vector<8x1x8xf32>
    %85 = vector.broadcast %84 : vector<8x1x8xf32> to vector<8x8x8xf32>
    %86 = arith.addf %80, %85 : vector<8x8x8xf32>
    %cst_39 = arith.constant dense<0xFF800000> : vector<8x8xf32>
    %87 = vector.multi_reduction <maximumf>, %86, %cst_39 [2] : vector<8x8x8xf32> to vector<8x8xf32>
    %88 = vector.shape_cast %87 : vector<8x8xf32> to vector<8x8x1xf32>
    %89 = vector.broadcast %88 : vector<8x8x1xf32> to vector<8x8x8xf32>
    %90 = arith.subf %86, %89 : vector<8x8x8xf32>
    %91 = math.exp %90 : vector<8x8x8xf32>
    %cst_40 = arith.constant dense<0.000000e+00> : vector<8x8xf32>
    %92 = vector.multi_reduction <add>, %91, %cst_40 [2] : vector<8x8x8xf32> to vector<8x8xf32>
    %93 = vector.shape_cast %92 : vector<8x8xf32> to vector<8x8x1xf32>
    %94 = vector.broadcast %93 : vector<8x8x1xf32> to vector<8x8x8xf32>
    %95 = arith.divf %91, %94 : vector<8x8x8xf32>
    "tpu.trace_start"() <{level = 10 : i32, message = "bqk,bkd->bqd"}> : () -> ()
    %cst_41 = arith.constant dense<0.000000e+00> : vector<8x8x8xf32>
    %96 = tpu.matmul %95, %77, %cst_41 {dimension_numbers = #tpu.dot_dimension_numbers<[2], [1], [1], [2], [0, 0, 0, 1, 1, 2], [0], [0]>} : vector<8x8x8xf32>, vector<8x8x8xf32>, vector<8x8x8xf32> -> vector<8x8x8xf32>
    "tpu.trace_stop"() : () -> ()
    %97 = vector.extract_strided_slice %96 {offsets = [0, 0, 0], sizes = [2, 8, 8], strides = [1, 1, 1]} : vector<8x8x8xf32> to vector<2x8x8xf32>
    %98 = vector.extract_strided_slice %96 {offsets = [2, 0, 0], sizes = [2, 8, 8], strides = [1, 1, 1]} : vector<8x8x8xf32> to vector<2x8x8xf32>
    %99 = vector.extract_strided_slice %96 {offsets = [4, 0, 0], sizes = [2, 8, 8], strides = [1, 1, 1]} : vector<8x8x8xf32> to vector<2x8x8xf32>
    %100 = vector.extract_strided_slice %96 {offsets = [6, 0, 0], sizes = [2, 8, 8], strides = [1, 1, 1]} : vector<8x8x8xf32> to vector<2x8x8xf32>
    %101 = tpu.concatenate %97, %98, %99, %100 in 2 : vector<2x8x8xf32>, vector<2x8x8xf32>, vector<2x8x8xf32>, vector<2x8x8xf32> -> vector<2x8x32xf32>
    %c56 = arith.constant 56 : index
    %c0_42 = arith.constant 0 : index
    %102 = vector.load %arg5[%c56, %c0_42] : memref<696x128xf32, #tpu.memory_space<vmem>>, vector<32x32xf32>
    %c88 = arith.constant 88 : index
    %c0_43 = arith.constant 0 : index
    %103 = vector.load %arg5[%c88, %c0_43] : memref<696x128xf32, #tpu.memory_space<vmem>>, vector<1x32xf32>
    %104 = vector.shape_cast %101 : vector<2x8x32xf32> to vector<16x32xf32>
    %cst_44 = arith.constant dense<0.000000e+00> : vector<16x32xf32>
    %105 = tpu.matmul %104, %102, %cst_44 {dimension_numbers = #tpu.dot_dimension_numbers<[1], [0], [0], [1], [0, 0, 1, 1], [], []>} : vector<16x32xf32>, vector<32x32xf32>, vector<16x32xf32> -> vector<16x32xf32>
    %106 = vector.broadcast %103 : vector<1x32xf32> to vector<16x32xf32>
    %107 = arith.addf %105, %106 : vector<16x32xf32>
    %108 = arith.addf %1, %107 : vector<16x32xf32>
    %c96 = arith.constant 96 : index
    %c0_45 = arith.constant 0 : index
    %109 = vector.load %arg5[%c96, %c0_45] : memref<696x128xf32, #tpu.memory_space<vmem>>, vector<1x32xf32>
    %c104 = arith.constant 104 : index
    %c0_46 = arith.constant 0 : index
    %110 = vector.load %arg5[%c104, %c0_46] : memref<696x128xf32, #tpu.memory_space<vmem>>, vector<1x32xf32>
    %cst_47 = arith.constant dense<0.000000e+00> : vector<16xf32>
    %111 = vector.multi_reduction <add>, %108, %cst_47 [1] : vector<16x32xf32> to vector<16xf32>
    %112 = vector.shape_cast %111 : vector<16xf32> to vector<16x1xf32>
    %cst_48 = arith.constant 3.200000e+01 : f32
    %113 = vector.broadcast %cst_48 : f32 to vector<16x1xf32>
    %114 = arith.divf %112, %113 : vector<16x1xf32>
    %115 = vector.broadcast %114 : vector<16x1xf32> to vector<16x32xf32>
    %116 = arith.subf %108, %115 : vector<16x32xf32>
    %117 = arith.mulf %116, %116 : vector<16x32xf32>
    %cst_49 = arith.constant dense<0.000000e+00> : vector<16xf32>
    %118 = vector.multi_reduction <add>, %117, %cst_49 [1] : vector<16x32xf32> to vector<16xf32>
    %119 = vector.shape_cast %118 : vector<16xf32> to vector<16x1xf32>
    %cst_50 = arith.constant 3.100000e+01 : f32
    %120 = vector.broadcast %cst_50 : f32 to vector<16x1xf32>
    %121 = arith.divf %119, %120 : vector<16x1xf32>
    %122 = vector.broadcast %109 : vector<1x32xf32> to vector<16x32xf32>
    %123 = arith.mulf %122, %116 : vector<16x32xf32>
    %124 = math.sqrt %121 : vector<16x1xf32>
    %cst_51 = arith.constant 9.99999997E-7 : f32
    %125 = vector.broadcast %cst_51 : f32 to vector<16x1xf32>
    %126 = arith.addf %124, %125 : vector<16x1xf32>
    %127 = vector.broadcast %126 : vector<16x1xf32> to vector<16x32xf32>
    %128 = arith.divf %123, %127 : vector<16x32xf32>
    %129 = vector.broadcast %110 : vector<1x32xf32> to vector<16x32xf32>
    %130 = arith.addf %128, %129 : vector<16x32xf32>
    %c112 = arith.constant 112 : index
    %c0_52 = arith.constant 0 : index
    %131 = vector.load %arg5[%c112, %c0_52] : memref<696x128xf32, #tpu.memory_space<vmem>>, vector<32x64xf32>
    %c144 = arith.constant 144 : index
    %c0_53 = arith.constant 0 : index
    %132 = vector.load %arg5[%c144, %c0_53] : memref<696x128xf32, #tpu.memory_space<vmem>>, vector<1x64xf32>
    %cst_54 = arith.constant dense<0.000000e+00> : vector<16x64xf32>
    %133 = tpu.matmul %130, %131, %cst_54 {dimension_numbers = #tpu.dot_dimension_numbers<[1], [0], [0], [1], [0, 0, 1, 1], [], []>} : vector<16x32xf32>, vector<32x64xf32>, vector<16x64xf32> -> vector<16x64xf32>
    %134 = vector.broadcast %132 : vector<1x64xf32> to vector<16x64xf32>
    %135 = arith.addf %133, %134 : vector<16x64xf32>
    %cst_55 = arith.constant 0.000000e+00 : f32
    %136 = vector.broadcast %cst_55 : f32 to vector<16x64xf32>
    %137 = arith.maximumf %135, %136 : vector<16x64xf32>
    %c152 = arith.constant 152 : index
    %c0_56 = arith.constant 0 : index
    %138 = vector.load %arg5[%c152, %c0_56] : memref<696x128xf32, #tpu.memory_space<vmem>>, vector<64x32xf32>
    %c216 = arith.constant 216 : index
    %c0_57 = arith.constant 0 : index
    %139 = vector.load %arg5[%c216, %c0_57] : memref<696x128xf32, #tpu.memory_space<vmem>>, vector<1x32xf32>
    %cst_58 = arith.constant dense<0.000000e+00> : vector<16x32xf32>
    %140 = tpu.matmul %137, %138, %cst_58 {dimension_numbers = #tpu.dot_dimension_numbers<[1], [0], [0], [1], [0, 0, 1, 1], [], []>} : vector<16x64xf32>, vector<64x32xf32>, vector<16x32xf32> -> vector<16x32xf32>
    %141 = vector.broadcast %139 : vector<1x32xf32> to vector<16x32xf32>
    %142 = arith.addf %140, %141 : vector<16x32xf32>
    %143 = arith.addf %108, %142 : vector<16x32xf32>
    %c224 = arith.constant 224 : index
    %c0_59 = arith.constant 0 : index
    %144 = vector.load %arg5[%c224, %c0_59] : memref<696x128xf32, #tpu.memory_space<vmem>>, vector<1x32xf32>
    %c232 = arith.constant 232 : index
    %c0_60 = arith.constant 0 : index
    %145 = vector.load %arg5[%c232, %c0_60] : memref<696x128xf32, #tpu.memory_space<vmem>>, vector<1x32xf32>
    %cst_61 = arith.constant dense<0.000000e+00> : vector<16xf32>
    %146 = vector.multi_reduction <add>, %143, %cst_61 [1] : vector<16x32xf32> to vector<16xf32>
    %147 = vector.shape_cast %146 : vector<16xf32> to vector<16x1xf32>
    %cst_62 = arith.constant 3.200000e+01 : f32
    %148 = vector.broadcast %cst_62 : f32 to vector<16x1xf32>
    %149 = arith.divf %147, %148 : vector<16x1xf32>
    %150 = vector.broadcast %149 : vector<16x1xf32> to vector<16x32xf32>
    %151 = arith.subf %143, %150 : vector<16x32xf32>
    %152 = arith.mulf %151, %151 : vector<16x32xf32>
    %cst_63 = arith.constant dense<0.000000e+00> : vector<16xf32>
    %153 = vector.multi_reduction <add>, %152, %cst_63 [1] : vector<16x32xf32> to vector<16xf32>
    %154 = vector.shape_cast %153 : vector<16xf32> to vector<16x1xf32>
    %cst_64 = arith.constant 3.100000e+01 : f32
    %155 = vector.broadcast %cst_64 : f32 to vector<16x1xf32>
    %156 = arith.divf %154, %155 : vector<16x1xf32>
    %157 = vector.broadcast %144 : vector<1x32xf32> to vector<16x32xf32>
    %158 = arith.mulf %157, %151 : vector<16x32xf32>
    %159 = math.sqrt %156 : vector<16x1xf32>
    %cst_65 = arith.constant 9.99999997E-7 : f32
    %160 = vector.broadcast %cst_65 : f32 to vector<16x1xf32>
    %161 = arith.addf %159, %160 : vector<16x1xf32>
    %162 = vector.broadcast %161 : vector<16x1xf32> to vector<16x32xf32>
    %163 = arith.divf %158, %162 : vector<16x32xf32>
    %164 = vector.broadcast %145 : vector<1x32xf32> to vector<16x32xf32>
    %165 = arith.addf %163, %164 : vector<16x32xf32>
    %166 = arith.addf %165, %29 : vector<16x32xf32>
    %c320 = arith.constant 320 : index
    %c0_66 = arith.constant 0 : index
    %167 = vector.load %arg5[%c320, %c0_66] : memref<696x128xf32, #tpu.memory_space<vmem>>, vector<1x32xf32>
    %c328 = arith.constant 328 : index
    %c0_67 = arith.constant 0 : index
    %168 = vector.load %arg5[%c328, %c0_67] : memref<696x128xf32, #tpu.memory_space<vmem>>, vector<1x32xf32>
    %cst_68 = arith.constant dense<0.000000e+00> : vector<16xf32>
    %169 = vector.multi_reduction <add>, %3, %cst_68 [1] : vector<16x32xf32> to vector<16xf32>
    %170 = vector.shape_cast %169 : vector<16xf32> to vector<16x1xf32>
    %cst_69 = arith.constant 3.200000e+01 : f32
    %171 = vector.broadcast %cst_69 : f32 to vector<16x1xf32>
    %172 = arith.divf %170, %171 : vector<16x1xf32>
    %173 = vector.broadcast %172 : vector<16x1xf32> to vector<16x32xf32>
    %174 = arith.subf %3, %173 : vector<16x32xf32>
    %175 = arith.mulf %174, %174 : vector<16x32xf32>
    %cst_70 = arith.constant dense<0.000000e+00> : vector<16xf32>
    %176 = vector.multi_reduction <add>, %175, %cst_70 [1] : vector<16x32xf32> to vector<16xf32>
    %177 = vector.shape_cast %176 : vector<16xf32> to vector<16x1xf32>
    %cst_71 = arith.constant 3.100000e+01 : f32
    %178 = vector.broadcast %cst_71 : f32 to vector<16x1xf32>
    %179 = arith.divf %177, %178 : vector<16x1xf32>
    %180 = vector.broadcast %167 : vector<1x32xf32> to vector<16x32xf32>
    %181 = arith.mulf %180, %174 : vector<16x32xf32>
    %182 = math.sqrt %179 : vector<16x1xf32>
    %cst_72 = arith.constant 9.99999997E-7 : f32
    %183 = vector.broadcast %cst_72 : f32 to vector<16x1xf32>
    %184 = arith.addf %182, %183 : vector<16x1xf32>
    %185 = vector.broadcast %184 : vector<16x1xf32> to vector<16x32xf32>
    %186 = arith.divf %181, %185 : vector<16x32xf32>
    %187 = vector.broadcast %168 : vector<1x32xf32> to vector<16x32xf32>
    %188 = arith.addf %186, %187 : vector<16x32xf32>
    %c336 = arith.constant 336 : index
    %c0_73 = arith.constant 0 : index
    %189 = vector.load %arg5[%c336, %c0_73] : memref<696x128xf32, #tpu.memory_space<vmem>>, vector<32x96xf32>
    %c368 = arith.constant 368 : index
    %c0_74 = arith.constant 0 : index
    %190 = vector.load %arg5[%c368, %c0_74] : memref<696x128xf32, #tpu.memory_space<vmem>>, vector<1x96xf32>
    %cst_75 = arith.constant dense<0.000000e+00> : vector<16x96xf32>
    %191 = tpu.matmul %188, %189, %cst_75 {dimension_numbers = #tpu.dot_dimension_numbers<[1], [0], [0], [1], [0, 0, 1, 1], [], []>} : vector<16x32xf32>, vector<32x96xf32>, vector<16x96xf32> -> vector<16x96xf32>
    %192 = vector.broadcast %190 : vector<1x96xf32> to vector<16x96xf32>
    %193 = arith.addf %191, %192 : vector<16x96xf32>
    %194 = vector.extract_strided_slice %193 {offsets = [0, 0], sizes = [16, 32], strides = [1, 1]} : vector<16x96xf32> to vector<16x32xf32>
    %195 = vector.extract_strided_slice %193 {offsets = [0, 32], sizes = [16, 32], strides = [1, 1]} : vector<16x96xf32> to vector<16x32xf32>
    %196 = vector.extract_strided_slice %193 {offsets = [0, 64], sizes = [16, 32], strides = [1, 1]} : vector<16x96xf32> to vector<16x32xf32>
    %197 = vector.shape_cast %194 : vector<16x32xf32> to vector<2x8x32xf32>
    %198 = vector.shape_cast %195 : vector<16x32xf32> to vector<2x8x32xf32>
    %199 = vector.shape_cast %196 : vector<16x32xf32> to vector<2x8x32xf32>
    %200 = vector.extract_strided_slice %197 {offsets = [0, 0, 0], sizes = [2, 8, 8], strides = [1, 1, 1]} : vector<2x8x32xf32> to vector<2x8x8xf32>
    %201 = vector.extract_strided_slice %197 {offsets = [0, 0, 8], sizes = [2, 8, 8], strides = [1, 1, 1]} : vector<2x8x32xf32> to vector<2x8x8xf32>
    %202 = vector.extract_strided_slice %197 {offsets = [0, 0, 16], sizes = [2, 8, 8], strides = [1, 1, 1]} : vector<2x8x32xf32> to vector<2x8x8xf32>
    %203 = vector.extract_strided_slice %197 {offsets = [0, 0, 24], sizes = [2, 8, 8], strides = [1, 1, 1]} : vector<2x8x32xf32> to vector<2x8x8xf32>
    %204 = tpu.concatenate %200, %201, %202, %203 in 0 : vector<2x8x8xf32>, vector<2x8x8xf32>, vector<2x8x8xf32>, vector<2x8x8xf32> -> vector<8x8x8xf32>
    %205 = vector.extract_strided_slice %198 {offsets = [0, 0, 0], sizes = [2, 8, 8], strides = [1, 1, 1]} : vector<2x8x32xf32> to vector<2x8x8xf32>
    %206 = vector.extract_strided_slice %198 {offsets = [0, 0, 8], sizes = [2, 8, 8], strides = [1, 1, 1]} : vector<2x8x32xf32> to vector<2x8x8xf32>
    %207 = vector.extract_strided_slice %198 {offsets = [0, 0, 16], sizes = [2, 8, 8], strides = [1, 1, 1]} : vector<2x8x32xf32> to vector<2x8x8xf32>
    %208 = vector.extract_strided_slice %198 {offsets = [0, 0, 24], sizes = [2, 8, 8], strides = [1, 1, 1]} : vector<2x8x32xf32> to vector<2x8x8xf32>
    %209 = tpu.concatenate %205, %206, %207, %208 in 0 : vector<2x8x8xf32>, vector<2x8x8xf32>, vector<2x8x8xf32>, vector<2x8x8xf32> -> vector<8x8x8xf32>
    %210 = vector.extract_strided_slice %199 {offsets = [0, 0, 0], sizes = [2, 8, 8], strides = [1, 1, 1]} : vector<2x8x32xf32> to vector<2x8x8xf32>
    %211 = vector.extract_strided_slice %199 {offsets = [0, 0, 8], sizes = [2, 8, 8], strides = [1, 1, 1]} : vector<2x8x32xf32> to vector<2x8x8xf32>
    %212 = vector.extract_strided_slice %199 {offsets = [0, 0, 16], sizes = [2, 8, 8], strides = [1, 1, 1]} : vector<2x8x32xf32> to vector<2x8x8xf32>
    %213 = vector.extract_strided_slice %199 {offsets = [0, 0, 24], sizes = [2, 8, 8], strides = [1, 1, 1]} : vector<2x8x32xf32> to vector<2x8x8xf32>
    %214 = tpu.concatenate %210, %211, %212, %213 in 0 : vector<2x8x8xf32>, vector<2x8x8xf32>, vector<2x8x8xf32>, vector<2x8x8xf32> -> vector<8x8x8xf32>
    "tpu.trace_start"() <{level = 10 : i32, message = "bqd,bkd->bqk"}> : () -> ()
    %cst_76 = arith.constant dense<0.000000e+00> : vector<8x8x8xf32>
    %215 = tpu.matmul %204, %209, %cst_76 {dimension_numbers = #tpu.dot_dimension_numbers<[2], [2], [1], [1], [0, 0, 0, 1, 1, 1], [0], [0]>} : vector<8x8x8xf32>, vector<8x8x8xf32>, vector<8x8x8xf32> -> vector<8x8x8xf32>
    "tpu.trace_stop"() : () -> ()
    %cst_77 = arith.constant 0.353553385 : f32
    %216 = vector.broadcast %cst_77 : f32 to vector<8x8x8xf32>
    %217 = arith.mulf %215, %216 : vector<8x8x8xf32>
    %218 = vector.shape_cast %17 : vector<2x8x8xf32> to vector<1x2x8x8xf32>
    %219 = vector.shape_cast %218 : vector<1x2x8x8xf32> to vector<1x2x8x8xf32>
    %220 = vector.broadcast %219 : vector<1x2x8x8xf32> to vector<4x2x8x8xf32>
    %221 = vector.shape_cast %220 : vector<4x2x8x8xf32> to vector<8x8x8xf32>
    %222 = arith.addf %217, %221 : vector<8x8x8xf32>
    %cst_78 = arith.constant dense<0xFF800000> : vector<8x8xf32>
    %223 = vector.multi_reduction <maximumf>, %222, %cst_78 [2] : vector<8x8x8xf32> to vector<8x8xf32>
    %224 = vector.shape_cast %223 : vector<8x8xf32> to vector<8x8x1xf32>
    %225 = vector.broadcast %224 : vector<8x8x1xf32> to vector<8x8x8xf32>
    %226 = arith.subf %222, %225 : vector<8x8x8xf32>
    %227 = math.exp %226 : vector<8x8x8xf32>
    %cst_79 = arith.constant dense<0.000000e+00> : vector<8x8xf32>
    %228 = vector.multi_reduction <add>, %227, %cst_79 [2] : vector<8x8x8xf32> to vector<8x8xf32>
    %229 = vector.shape_cast %228 : vector<8x8xf32> to vector<8x8x1xf32>
    %230 = vector.broadcast %229 : vector<8x8x1xf32> to vector<8x8x8xf32>
    %231 = arith.divf %227, %230 : vector<8x8x8xf32>
    "tpu.trace_start"() <{level = 10 : i32, message = "bqk,bkd->bqd"}> : () -> ()
    %cst_80 = arith.constant dense<0.000000e+00> : vector<8x8x8xf32>
    %232 = tpu.matmul %231, %214, %cst_80 {dimension_numbers = #tpu.dot_dimension_numbers<[2], [1], [1], [2], [0, 0, 0, 1, 1, 2], [0], [0]>} : vector<8x8x8xf32>, vector<8x8x8xf32>, vector<8x8x8xf32> -> vector<8x8x8xf32>
    "tpu.trace_stop"() : () -> ()
    %233 = vector.extract_strided_slice %232 {offsets = [0, 0, 0], sizes = [2, 8, 8], strides = [1, 1, 1]} : vector<8x8x8xf32> to vector<2x8x8xf32>
    %234 = vector.extract_strided_slice %232 {offsets = [2, 0, 0], sizes = [2, 8, 8], strides = [1, 1, 1]} : vector<8x8x8xf32> to vector<2x8x8xf32>
    %235 = vector.extract_strided_slice %232 {offsets = [4, 0, 0], sizes = [2, 8, 8], strides = [1, 1, 1]} : vector<8x8x8xf32> to vector<2x8x8xf32>
    %236 = vector.extract_strided_slice %232 {offsets = [6, 0, 0], sizes = [2, 8, 8], strides = [1, 1, 1]} : vector<8x8x8xf32> to vector<2x8x8xf32>
    %237 = tpu.concatenate %233, %234, %235, %236 in 2 : vector<2x8x8xf32>, vector<2x8x8xf32>, vector<2x8x8xf32>, vector<2x8x8xf32> -> vector<2x8x32xf32>
    %c376 = arith.constant 376 : index
    %c0_81 = arith.constant 0 : index
    %238 = vector.load %arg5[%c376, %c0_81] : memref<696x128xf32, #tpu.memory_space<vmem>>, vector<32x32xf32>
    %c408 = arith.constant 408 : index
    %c0_82 = arith.constant 0 : index
    %239 = vector.load %arg5[%c408, %c0_82] : memref<696x128xf32, #tpu.memory_space<vmem>>, vector<1x32xf32>
    %240 = vector.shape_cast %237 : vector<2x8x32xf32> to vector<16x32xf32>
    %cst_83 = arith.constant dense<0.000000e+00> : vector<16x32xf32>
    %241 = tpu.matmul %240, %238, %cst_83 {dimension_numbers = #tpu.dot_dimension_numbers<[1], [0], [0], [1], [0, 0, 1, 1], [], []>} : vector<16x32xf32>, vector<32x32xf32>, vector<16x32xf32> -> vector<16x32xf32>
    %242 = vector.broadcast %239 : vector<1x32xf32> to vector<16x32xf32>
    %243 = arith.addf %241, %242 : vector<16x32xf32>
    %244 = arith.addf %3, %243 : vector<16x32xf32>
    %c416 = arith.constant 416 : index
    %c0_84 = arith.constant 0 : index
    %245 = vector.load %arg5[%c416, %c0_84] : memref<696x128xf32, #tpu.memory_space<vmem>>, vector<1x32xf32>
    %c424 = arith.constant 424 : index
    %c0_85 = arith.constant 0 : index
    %246 = vector.load %arg5[%c424, %c0_85] : memref<696x128xf32, #tpu.memory_space<vmem>>, vector<1x32xf32>
    %cst_86 = arith.constant dense<0.000000e+00> : vector<16xf32>
    %247 = vector.multi_reduction <add>, %244, %cst_86 [1] : vector<16x32xf32> to vector<16xf32>
    %248 = vector.shape_cast %247 : vector<16xf32> to vector<16x1xf32>
    %cst_87 = arith.constant 3.200000e+01 : f32
    %249 = vector.broadcast %cst_87 : f32 to vector<16x1xf32>
    %250 = arith.divf %248, %249 : vector<16x1xf32>
    %251 = vector.broadcast %250 : vector<16x1xf32> to vector<16x32xf32>
    %252 = arith.subf %244, %251 : vector<16x32xf32>
    %253 = arith.mulf %252, %252 : vector<16x32xf32>
    %cst_88 = arith.constant dense<0.000000e+00> : vector<16xf32>
    %254 = vector.multi_reduction <add>, %253, %cst_88 [1] : vector<16x32xf32> to vector<16xf32>
    %255 = vector.shape_cast %254 : vector<16xf32> to vector<16x1xf32>
    %cst_89 = arith.constant 3.100000e+01 : f32
    %256 = vector.broadcast %cst_89 : f32 to vector<16x1xf32>
    %257 = arith.divf %255, %256 : vector<16x1xf32>
    %258 = vector.broadcast %245 : vector<1x32xf32> to vector<16x32xf32>
    %259 = arith.mulf %258, %252 : vector<16x32xf32>
    %260 = math.sqrt %257 : vector<16x1xf32>
    %cst_90 = arith.constant 9.99999997E-7 : f32
    %261 = vector.broadcast %cst_90 : f32 to vector<16x1xf32>
    %262 = arith.addf %260, %261 : vector<16x1xf32>
    %263 = vector.broadcast %262 : vector<16x1xf32> to vector<16x32xf32>
    %264 = arith.divf %259, %263 : vector<16x32xf32>
    %265 = vector.broadcast %246 : vector<1x32xf32> to vector<16x32xf32>
    %266 = arith.addf %264, %265 : vector<16x32xf32>
    %c432 = arith.constant 432 : index
    %c0_91 = arith.constant 0 : index
    %267 = vector.load %arg5[%c432, %c0_91] : memref<696x128xf32, #tpu.memory_space<vmem>>, vector<32x32xf32>
    %c464 = arith.constant 464 : index
    %c0_92 = arith.constant 0 : index
    %268 = vector.load %arg5[%c464, %c0_92] : memref<696x128xf32, #tpu.memory_space<vmem>>, vector<1x32xf32>
    %cst_93 = arith.constant dense<0.000000e+00> : vector<16x32xf32>
    %269 = tpu.matmul %266, %267, %cst_93 {dimension_numbers = #tpu.dot_dimension_numbers<[1], [0], [0], [1], [0, 0, 1, 1], [], []>} : vector<16x32xf32>, vector<32x32xf32>, vector<16x32xf32> -> vector<16x32xf32>
    %270 = vector.broadcast %268 : vector<1x32xf32> to vector<16x32xf32>
    %271 = arith.addf %269, %270 : vector<16x32xf32>
    %c472 = arith.constant 472 : index
    %c0_94 = arith.constant 0 : index
    %272 = vector.load %arg5[%c472, %c0_94] : memref<696x128xf32, #tpu.memory_space<vmem>>, vector<32x64xf32>
    %c504 = arith.constant 504 : index
    %c0_95 = arith.constant 0 : index
    %273 = vector.load %arg5[%c504, %c0_95] : memref<696x128xf32, #tpu.memory_space<vmem>>, vector<1x64xf32>
    %cst_96 = arith.constant dense<0.000000e+00> : vector<16x64xf32>
    %274 = tpu.matmul %166, %272, %cst_96 {dimension_numbers = #tpu.dot_dimension_numbers<[1], [0], [0], [1], [0, 0, 1, 1], [], []>} : vector<16x32xf32>, vector<32x64xf32>, vector<16x64xf32> -> vector<16x64xf32>
    %275 = vector.broadcast %273 : vector<1x64xf32> to vector<16x64xf32>
    %276 = arith.addf %274, %275 : vector<16x64xf32>
    %277 = vector.extract_strided_slice %276 {offsets = [0, 0], sizes = [16, 32], strides = [1, 1]} : vector<16x64xf32> to vector<16x32xf32>
    %278 = vector.extract_strided_slice %276 {offsets = [0, 32], sizes = [16, 32], strides = [1, 1]} : vector<16x64xf32> to vector<16x32xf32>
    %279 = vector.shape_cast %271 : vector<16x32xf32> to vector<2x8x32xf32>
    %280 = vector.shape_cast %277 : vector<16x32xf32> to vector<2x8x32xf32>
    %281 = vector.shape_cast %278 : vector<16x32xf32> to vector<2x8x32xf32>
    %282 = vector.extract_strided_slice %279 {offsets = [0, 0, 0], sizes = [2, 8, 8], strides = [1, 1, 1]} : vector<2x8x32xf32> to vector<2x8x8xf32>
    %283 = vector.extract_strided_slice %279 {offsets = [0, 0, 8], sizes = [2, 8, 8], strides = [1, 1, 1]} : vector<2x8x32xf32> to vector<2x8x8xf32>
    %284 = vector.extract_strided_slice %279 {offsets = [0, 0, 16], sizes = [2, 8, 8], strides = [1, 1, 1]} : vector<2x8x32xf32> to vector<2x8x8xf32>
    %285 = vector.extract_strided_slice %279 {offsets = [0, 0, 24], sizes = [2, 8, 8], strides = [1, 1, 1]} : vector<2x8x32xf32> to vector<2x8x8xf32>
    %286 = tpu.concatenate %282, %283, %284, %285 in 0 : vector<2x8x8xf32>, vector<2x8x8xf32>, vector<2x8x8xf32>, vector<2x8x8xf32> -> vector<8x8x8xf32>
    %287 = vector.extract_strided_slice %280 {offsets = [0, 0, 0], sizes = [2, 8, 8], strides = [1, 1, 1]} : vector<2x8x32xf32> to vector<2x8x8xf32>
    %288 = vector.extract_strided_slice %280 {offsets = [0, 0, 8], sizes = [2, 8, 8], strides = [1, 1, 1]} : vector<2x8x32xf32> to vector<2x8x8xf32>
    %289 = vector.extract_strided_slice %280 {offsets = [0, 0, 16], sizes = [2, 8, 8], strides = [1, 1, 1]} : vector<2x8x32xf32> to vector<2x8x8xf32>
    %290 = vector.extract_strided_slice %280 {offsets = [0, 0, 24], sizes = [2, 8, 8], strides = [1, 1, 1]} : vector<2x8x32xf32> to vector<2x8x8xf32>
    %291 = tpu.concatenate %287, %288, %289, %290 in 0 : vector<2x8x8xf32>, vector<2x8x8xf32>, vector<2x8x8xf32>, vector<2x8x8xf32> -> vector<8x8x8xf32>
    %292 = vector.extract_strided_slice %281 {offsets = [0, 0, 0], sizes = [2, 8, 8], strides = [1, 1, 1]} : vector<2x8x32xf32> to vector<2x8x8xf32>
    %293 = vector.extract_strided_slice %281 {offsets = [0, 0, 8], sizes = [2, 8, 8], strides = [1, 1, 1]} : vector<2x8x32xf32> to vector<2x8x8xf32>
    %294 = vector.extract_strided_slice %281 {offsets = [0, 0, 16], sizes = [2, 8, 8], strides = [1, 1, 1]} : vector<2x8x32xf32> to vector<2x8x8xf32>
    %295 = vector.extract_strided_slice %281 {offsets = [0, 0, 24], sizes = [2, 8, 8], strides = [1, 1, 1]} : vector<2x8x32xf32> to vector<2x8x8xf32>
    %296 = tpu.concatenate %292, %293, %294, %295 in 0 : vector<2x8x8xf32>, vector<2x8x8xf32>, vector<2x8x8xf32>, vector<2x8x8xf32> -> vector<8x8x8xf32>
    "tpu.trace_start"() <{level = 10 : i32, message = "bqd,bkd->bqk"}> : () -> ()
    %cst_97 = arith.constant dense<0.000000e+00> : vector<8x8x8xf32>
    %297 = tpu.matmul %286, %291, %cst_97 {dimension_numbers = #tpu.dot_dimension_numbers<[2], [2], [1], [1], [0, 0, 0, 1, 1, 1], [0], [0]>} : vector<8x8x8xf32>, vector<8x8x8xf32>, vector<8x8x8xf32> -> vector<8x8x8xf32>
    "tpu.trace_stop"() : () -> ()
    %cst_98 = arith.constant 0.353553385 : f32
    %298 = vector.broadcast %cst_98 : f32 to vector<8x8x8xf32>
    %299 = arith.mulf %297, %298 : vector<8x8x8xf32>
    %300 = vector.shape_cast %11 : vector<2x1x8xf32> to vector<1x2x1x8xf32>
    %301 = vector.shape_cast %300 : vector<1x2x1x8xf32> to vector<1x2x1x8xf32>
    %302 = vector.broadcast %301 : vector<1x2x1x8xf32> to vector<4x2x1x8xf32>
    %303 = vector.shape_cast %302 : vector<4x2x1x8xf32> to vector<8x1x8xf32>
    %304 = vector.broadcast %303 : vector<8x1x8xf32> to vector<8x8x8xf32>
    %305 = arith.addf %299, %304 : vector<8x8x8xf32>
    %cst_99 = arith.constant dense<0xFF800000> : vector<8x8xf32>
    %306 = vector.multi_reduction <maximumf>, %305, %cst_99 [2] : vector<8x8x8xf32> to vector<8x8xf32>
    %307 = vector.shape_cast %306 : vector<8x8xf32> to vector<8x8x1xf32>
    %308 = vector.broadcast %307 : vector<8x8x1xf32> to vector<8x8x8xf32>
    %309 = arith.subf %305, %308 : vector<8x8x8xf32>
    %310 = math.exp %309 : vector<8x8x8xf32>
    %cst_100 = arith.constant dense<0.000000e+00> : vector<8x8xf32>
    %311 = vector.multi_reduction <add>, %310, %cst_100 [2] : vector<8x8x8xf32> to vector<8x8xf32>
    %312 = vector.shape_cast %311 : vector<8x8xf32> to vector<8x8x1xf32>
    %313 = vector.broadcast %312 : vector<8x8x1xf32> to vector<8x8x8xf32>
    %314 = arith.divf %310, %313 : vector<8x8x8xf32>
    "tpu.trace_start"() <{level = 10 : i32, message = "bqk,bkd->bqd"}> : () -> ()
    %cst_101 = arith.constant dense<0.000000e+00> : vector<8x8x8xf32>
    %315 = tpu.matmul %314, %296, %cst_101 {dimension_numbers = #tpu.dot_dimension_numbers<[2], [1], [1], [2], [0, 0, 0, 1, 1, 2], [0], [0]>} : vector<8x8x8xf32>, vector<8x8x8xf32>, vector<8x8x8xf32> -> vector<8x8x8xf32>
    "tpu.trace_stop"() : () -> ()
    %316 = vector.extract_strided_slice %315 {offsets = [0, 0, 0], sizes = [2, 8, 8], strides = [1, 1, 1]} : vector<8x8x8xf32> to vector<2x8x8xf32>
    %317 = vector.extract_strided_slice %315 {offsets = [2, 0, 0], sizes = [2, 8, 8], strides = [1, 1, 1]} : vector<8x8x8xf32> to vector<2x8x8xf32>
    %318 = vector.extract_strided_slice %315 {offsets = [4, 0, 0], sizes = [2, 8, 8], strides = [1, 1, 1]} : vector<8x8x8xf32> to vector<2x8x8xf32>
    %319 = vector.extract_strided_slice %315 {offsets = [6, 0, 0], sizes = [2, 8, 8], strides = [1, 1, 1]} : vector<8x8x8xf32> to vector<2x8x8xf32>
    %320 = tpu.concatenate %316, %317, %318, %319 in 2 : vector<2x8x8xf32>, vector<2x8x8xf32>, vector<2x8x8xf32>, vector<2x8x8xf32> -> vector<2x8x32xf32>
    %c512 = arith.constant 512 : index
    %c0_102 = arith.constant 0 : index
    %321 = vector.load %arg5[%c512, %c0_102] : memref<696x128xf32, #tpu.memory_space<vmem>>, vector<32x32xf32>
    %c544 = arith.constant 544 : index
    %c0_103 = arith.constant 0 : index
    %322 = vector.load %arg5[%c544, %c0_103] : memref<696x128xf32, #tpu.memory_space<vmem>>, vector<1x32xf32>
    %323 = vector.shape_cast %320 : vector<2x8x32xf32> to vector<16x32xf32>
    %cst_104 = arith.constant dense<0.000000e+00> : vector<16x32xf32>
    %324 = tpu.matmul %323, %321, %cst_104 {dimension_numbers = #tpu.dot_dimension_numbers<[1], [0], [0], [1], [0, 0, 1, 1], [], []>} : vector<16x32xf32>, vector<32x32xf32>, vector<16x32xf32> -> vector<16x32xf32>
    %325 = vector.broadcast %322 : vector<1x32xf32> to vector<16x32xf32>
    %326 = arith.addf %324, %325 : vector<16x32xf32>
    %327 = arith.addf %244, %326 : vector<16x32xf32>
    %c552 = arith.constant 552 : index
    %c0_105 = arith.constant 0 : index
    %328 = vector.load %arg5[%c552, %c0_105] : memref<696x128xf32, #tpu.memory_space<vmem>>, vector<1x32xf32>
    %c560 = arith.constant 560 : index
    %c0_106 = arith.constant 0 : index
    %329 = vector.load %arg5[%c560, %c0_106] : memref<696x128xf32, #tpu.memory_space<vmem>>, vector<1x32xf32>
    %cst_107 = arith.constant dense<0.000000e+00> : vector<16xf32>
    %330 = vector.multi_reduction <add>, %327, %cst_107 [1] : vector<16x32xf32> to vector<16xf32>
    %331 = vector.shape_cast %330 : vector<16xf32> to vector<16x1xf32>
    %cst_108 = arith.constant 3.200000e+01 : f32
    %332 = vector.broadcast %cst_108 : f32 to vector<16x1xf32>
    %333 = arith.divf %331, %332 : vector<16x1xf32>
    %334 = vector.broadcast %333 : vector<16x1xf32> to vector<16x32xf32>
    %335 = arith.subf %327, %334 : vector<16x32xf32>
    %336 = arith.mulf %335, %335 : vector<16x32xf32>
    %cst_109 = arith.constant dense<0.000000e+00> : vector<16xf32>
    %337 = vector.multi_reduction <add>, %336, %cst_109 [1] : vector<16x32xf32> to vector<16xf32>
    %338 = vector.shape_cast %337 : vector<16xf32> to vector<16x1xf32>
    %cst_110 = arith.constant 3.100000e+01 : f32
    %339 = vector.broadcast %cst_110 : f32 to vector<16x1xf32>
    %340 = arith.divf %338, %339 : vector<16x1xf32>
    %341 = vector.broadcast %328 : vector<1x32xf32> to vector<16x32xf32>
    %342 = arith.mulf %341, %335 : vector<16x32xf32>
    %343 = math.sqrt %340 : vector<16x1xf32>
    %cst_111 = arith.constant 9.99999997E-7 : f32
    %344 = vector.broadcast %cst_111 : f32 to vector<16x1xf32>
    %345 = arith.addf %343, %344 : vector<16x1xf32>
    %346 = vector.broadcast %345 : vector<16x1xf32> to vector<16x32xf32>
    %347 = arith.divf %342, %346 : vector<16x32xf32>
    %348 = vector.broadcast %329 : vector<1x32xf32> to vector<16x32xf32>
    %349 = arith.addf %347, %348 : vector<16x32xf32>
    %c568 = arith.constant 568 : index
    %c0_112 = arith.constant 0 : index
    %350 = vector.load %arg5[%c568, %c0_112] : memref<696x128xf32, #tpu.memory_space<vmem>>, vector<32x64xf32>
    %c600 = arith.constant 600 : index
    %c0_113 = arith.constant 0 : index
    %351 = vector.load %arg5[%c600, %c0_113] : memref<696x128xf32, #tpu.memory_space<vmem>>, vector<1x64xf32>
    %cst_114 = arith.constant dense<0.000000e+00> : vector<16x64xf32>
    %352 = tpu.matmul %349, %350, %cst_114 {dimension_numbers = #tpu.dot_dimension_numbers<[1], [0], [0], [1], [0, 0, 1, 1], [], []>} : vector<16x32xf32>, vector<32x64xf32>, vector<16x64xf32> -> vector<16x64xf32>
    %353 = vector.broadcast %351 : vector<1x64xf32> to vector<16x64xf32>
    %354 = arith.addf %352, %353 : vector<16x64xf32>
    %cst_115 = arith.constant 0.000000e+00 : f32
    %355 = vector.broadcast %cst_115 : f32 to vector<16x64xf32>
    %356 = arith.maximumf %354, %355 : vector<16x64xf32>
    %c608 = arith.constant 608 : index
    %c0_116 = arith.constant 0 : index
    %357 = vector.load %arg5[%c608, %c0_116] : memref<696x128xf32, #tpu.memory_space<vmem>>, vector<64x32xf32>
    %c672 = arith.constant 672 : index
    %c0_117 = arith.constant 0 : index
    %358 = vector.load %arg5[%c672, %c0_117] : memref<696x128xf32, #tpu.memory_space<vmem>>, vector<1x32xf32>
    %cst_118 = arith.constant dense<0.000000e+00> : vector<16x32xf32>
    %359 = tpu.matmul %356, %357, %cst_118 {dimension_numbers = #tpu.dot_dimension_numbers<[1], [0], [0], [1], [0, 0, 1, 1], [], []>} : vector<16x64xf32>, vector<64x32xf32>, vector<16x32xf32> -> vector<16x32xf32>
    %360 = vector.broadcast %358 : vector<1x32xf32> to vector<16x32xf32>
    %361 = arith.addf %359, %360 : vector<16x32xf32>
    %362 = arith.addf %327, %361 : vector<16x32xf32>
    %c680 = arith.constant 680 : index
    %c0_119 = arith.constant 0 : index
    %363 = vector.load %arg5[%c680, %c0_119] : memref<696x128xf32, #tpu.memory_space<vmem>>, vector<1x32xf32>
    %c688 = arith.constant 688 : index
    %c0_120 = arith.constant 0 : index
    %364 = vector.load %arg5[%c688, %c0_120] : memref<696x128xf32, #tpu.memory_space<vmem>>, vector<1x32xf32>
    %cst_121 = arith.constant dense<0.000000e+00> : vector<16xf32>
    %365 = vector.multi_reduction <add>, %362, %cst_121 [1] : vector<16x32xf32> to vector<16xf32>
    %366 = vector.shape_cast %365 : vector<16xf32> to vector<16x1xf32>
    %cst_122 = arith.constant 3.200000e+01 : f32
    %367 = vector.broadcast %cst_122 : f32 to vector<16x1xf32>
    %368 = arith.divf %366, %367 : vector<16x1xf32>
    %369 = vector.broadcast %368 : vector<16x1xf32> to vector<16x32xf32>
    %370 = arith.subf %362, %369 : vector<16x32xf32>
    %371 = arith.mulf %370, %370 : vector<16x32xf32>
    %cst_123 = arith.constant dense<0.000000e+00> : vector<16xf32>
    %372 = vector.multi_reduction <add>, %371, %cst_123 [1] : vector<16x32xf32> to vector<16xf32>
    %373 = vector.shape_cast %372 : vector<16xf32> to vector<16x1xf32>
    %cst_124 = arith.constant 3.100000e+01 : f32
    %374 = vector.broadcast %cst_124 : f32 to vector<16x1xf32>
    %375 = arith.divf %373, %374 : vector<16x1xf32>
    %376 = vector.broadcast %363 : vector<1x32xf32> to vector<16x32xf32>
    %377 = arith.mulf %376, %370 : vector<16x32xf32>
    %378 = math.sqrt %375 : vector<16x1xf32>
    %cst_125 = arith.constant 9.99999997E-7 : f32
    %379 = vector.broadcast %cst_125 : f32 to vector<16x1xf32>
    %380 = arith.addf %378, %379 : vector<16x1xf32>
    %381 = vector.broadcast %380 : vector<16x1xf32> to vector<16x32xf32>
    %382 = arith.divf %377, %381 : vector<16x32xf32>
    %383 = vector.broadcast %364 : vector<1x32xf32> to vector<16x32xf32>
    %384 = arith.addf %382, %383 : vector<16x32xf32>
    %c0_126 = arith.constant 0 : index
    %c0_127 = arith.constant 0 : index
    %385 = vector.load %arg6[%c0_126, %c0_127] : memref<16x32xf32, #tpu.memory_space<vmem>>, vector<16x32xf32>
    tpu.vector_store %arg6[%c0_126, %c0_127], %384 {strides = array<i32>} : memref<16x32xf32, #tpu.memory_space<vmem>>, vector<16x32xf32>,
    return
  }
}

</mosaic_0001>

<llo_original>
// kernel: encoder_decoder_forward.1
$region0: #{encoder_decoder_forward.1}
  #allocation0 [shape = 'u32[]', space=smem, size = 0x4, offset = 0x4, fixed_abs, tag = 'smem constant byte address 0x4 - core index']
  #allocation1 [shape = 'u32[144,128]{1,0:T(1,128)}', space=vmem, size = 0x12000, scoped, tag = 'internal scratch']
  %s0 = inlined_call_operand.vmem [shape: f32[2,8,32], index: 0, kind: input, shape index: {}]
  %s1 = inlined_call_operand.vmem [shape: f32[2,8,32], index: 1, kind: input, shape index: {}]
  %s2 = inlined_call_operand.vmem [shape: f32[2,8,32], index: 2, kind: input, shape index: {}]
  %s3 = inlined_call_operand.vmem [shape: f32[2,1,8], index: 3, kind: input, shape index: {}]
  %s4 = inlined_call_operand.vmem [shape: f32[2,8,8], index: 4, kind: input, shape index: {}]
  %s5 = inlined_call_operand.hbm [shape: f32[696,128], index: 5, kind: input, shape index: {}]
  %s6 = inlined_call_operand.hbm [shape: f32[16,32], index: 6, kind: output, shape index: {}]
  %s7 = sld [smem:[#allocation0]]
  $region38: #{encoder_decoder_forward.1} parent=0
    _
  %s9 = ssub.s32 1, %s7
  %s10 = scalar_select 0, %s9, %s7
  $region1: #{encoder_decoder_forward.1} parent=0
    #allocation2 [shape = 'u8[356352]{0}', space=vmem, size = 0x57000, scoped, tag = 'input window, operand 5, single buffered']
    #allocation3 [shape = 's32[1]{0}', space=sflag, size = 0x4, scoped, tag = 'scoped memory for encoder_decoder_forward.1']
    #allocation4 [shape = 's32[1]{0}', space=sflag, size = 0x4, scoped, tag = 'scoped memory for encoder_decoder_forward.1']
    #allocation5 [shape = 'u8[8192]{0}', space=vmem, size = 0x2000, scoped, tag = 'output window, operand 0, single buffered']
    %11 = vsyncpa [#allocation3], 0
    %12 = vsyncpa [#allocation4], 0
    // Predicated region
    $region2: #{encoder_decoder_forward.1} parent=1 // pred_check
      _
    $region3: #{encoder_decoder_forward.1} parent=1 // pred_check_branch
      %14 = sbr.rel (0) target = $region5
    $region4: #{encoder_decoder_forward.1} parent=1 // pred_region
      _
    $region5: #{encoder_decoder_forward.1} parent=1 // pred_fallthru
      _
    // Predicated region
    $region6: #{encoder_decoder_forward.1} parent=1 // pred_check
      _
    $region7: #{encoder_decoder_forward.1} parent=1 // pred_check_branch
      %16 = sbr.rel (0) target = $region9
    $region8: #{encoder_decoder_forward.1} parent=1 // pred_region
      _
    $region9: #{encoder_decoder_forward.1} parent=1 // pred_fallthru
      _
    // Predicated region
    $region10: #{encoder_decoder_forward.1} parent=1 // pred_check
      _
    $region11: #{encoder_decoder_forward.1} parent=1 // pred_check_branch
      %18 = sbr.rel (0) target = $region13
    $region12: #{encoder_decoder_forward.1} parent=1 // pred_region
      _
    $region13: #{encoder_decoder_forward.1} parent=1 // pred_fallthru
      _
    // Predicated region
    $region14: #{encoder_decoder_forward.1} parent=1 // pred_check
      _
    $region15: #{encoder_decoder_forward.1} parent=1 // pred_check_branch
      %20 = sbr.rel (0) target = $region17
    $region16: #{encoder_decoder_forward.1} parent=1 // pred_region
      _
    $region17: #{encoder_decoder_forward.1} parent=1 // pred_fallthru
      _
    // Predicated region
    $region18: #{encoder_decoder_forward.1} parent=1 // pred_check
      _
    $region19: #{encoder_decoder_forward.1} parent=1 // pred_check_branch
      %22 = sbr.rel (0) target = $region21
    $region20: #{encoder_decoder_forward.1} parent=1 // pred_region
      _
    $region21: #{encoder_decoder_forward.1} parent=1 // pred_fallthru
      _
    // Predicated region
    $region22: #{encoder_decoder_forward.1} parent=1 // pred_check
      _
    $region23: #{encoder_decoder_forward.1} parent=1 // pred_check_branch
      %24 = sbr.rel (0) target = $region25
    $region24: #{encoder_decoder_forward.1} parent=1 // pred_region
      %s26 = ssub.s32 11136, 11136
      %27 = vsyncadd [#allocation3], %s26
      %s28 = sshll.u32 [#allocation2], 4
      %s29 = int_to_ptr.vmem [resolvable:$true] %s28
      %34 = dma.hbm_to_vmem [thread:$0]  %s5, 11136, %s29, [#allocation3], 128, 128, 8
    $region25: #{encoder_decoder_forward.1} parent=1 // pred_fallthru
      _
    // Predicated region
    $region26: #{encoder_decoder_forward.1} parent=1 // pred_check
      _
    $region27: #{encoder_decoder_forward.1} parent=1 // pred_check_branch
      %36 = sbr.rel (0) target = $region29
    $region28: #{encoder_decoder_forward.1} parent=1 // pred_region
      %37 = dma.done [#allocation3], 11136
    $region29: #{encoder_decoder_forward.1} parent=1 // pred_fallthru
      _
    %v38 = vld [vmem:[%s0] sm:$0xff]
    %v39 = vld [vmem:[%s0 + $0x8] sm:$0xff]
    %v40 = vld [vmem:[%s1] sm:$0xff]
    %v41 = vld [vmem:[%s1 + $0x8] sm:$0xff]
    %v42 = vld [vmem:[%s2] sm:$0xff]
    %v43 = vld [vmem:[%s2 + $0x8] sm:$0xff]
    %v44 = vld [vmem:[%s3] sm:$0x1]
    %v45 = vld [vmem:[%s3 + $0x1] sm:$0x1]
    %vm46 = vcmp.gt.f32.partialorder %v44, 0.0
    %vm47 = vcmp.gt.f32.partialorder %v45, 0.0
    %v48 = vsel %vm46, 0.0, -1e+09
    %v49 = vsel %vm47, 0.0, -1e+09
    %v50 = vld [vmem:[%s4] sm:$0xff]
    %v51 = vld [vmem:[%s4 + $0x8] sm:$0xff]
    %vm52 = vcmp.gt.f32.partialorder %v50, 0.0
    %vm53 = vcmp.gt.f32.partialorder %v51, 0.0
    %v54 = vsel %vm52, 0.0, -1e+09
    %v55 = vsel %vm53, 0.0, -1e+09
    %v56 = vld [vmem:[#allocation2 + $0xf0] sm:$0xff]
    %v57 = vld [vmem:[#allocation2 + $0xf8] sm:$0xff]
    %v58 = vld [vmem:[#allocation2 + $0x100] sm:$0xff]
    %v59 = vld [vmem:[#allocation2 + $0x108] sm:$0xff]
    %v60 = vld [vmem:[#allocation2 + $0x110] sm:$0x1]
    %v61 = vlaneseq
    %v62 = vshrl.u32 %v61, 7
    %v63 = vsub.s32 0, %v62
    %v64 = vrot.slane %v60, %v63
    %vm65 = vcmask 261120
    %v67 = vsel %vm65, %v42, 0
    %v70 = vsel %vm65, %v43, 0
    %72 = vmatprep.subr.mxu0 0.0
    %73 = vmatpush1.msra.mxu0 %v56
    %74 = vmatprep.subr.mxu0 0.0
    %75 = vmatpush1.msra.mxu0 %v57
    %76 = vmatprep.subr.mxu0 0.0
    %77 = vmatpush1.msra.mxu0 %v58
    %78 = vmatprep.subr.mxu0 0.0
    %79 = vmatpush1.msra.mxu0 %v59
    %80 = vmatprep.subr.mxu0 0.0
    %81 = vmatpush1.msra.mxu0 0.0
    %82 = vmatprep.subr.mxu0 0.0
    %83 = vmatpush1.msra.mxu0 0.0
    %84 = vmatprep.subr.mxu0 0.0
    %85 = vmatpush1.msra.mxu0 0.0
    %86 = vmatprep.subr.mxu0 0.0
    %87 = vmatpush1.msra.mxu0 0.0
    %88 = vmatprep.subr.mxu0 0.0
    %89 = vmatpush1.msra.mxu0 0.0
    %90 = vmatprep.subr.mxu0 0.0
    %91 = vmatpush1.msra.mxu0 0.0
    %92 = vmatprep.subr.mxu0 0.0
    %93 = vmatpush1.msra.mxu0 0.0
    %94 = vmatprep.subr.mxu0 0.0
    %95 = vmatpush1.msra.mxu0 0.0
    %96 = vmatprep.subr.mxu0 0.0
    %97 = vmatpush1.msra.mxu0 0.0
    %98 = vmatprep.subr.mxu0 0.0
    %99 = vmatpush1.msra.mxu0 0.0
    %100 = vmatprep.subr.mxu0 0.0
    %101 = vmatpush1.msra.mxu0 0.0
    %102 = vmatprep.subr.mxu0 0.0
    %103 = vmatpush1.msra.mxu0 0.0
    %104 = vmatprep.subr.mxu0 0.0
    %105 = vmatpush1.msra.mxu0 0.0
    %106 = vmatprep.subr.mxu0 0.0
    %107 = vmatpush1.msra.mxu0 0.0
    %108 = vmatprep.subr.mxu0 0.0
    %109 = vmatpush1.msra.mxu0 0.0
    %110 = vmatprep.subr.mxu0 0.0
    %111 = vmatpush1.msra.mxu0 0.0
    %112 = vmatprep.subr.mxu0 0.0
    %113 = vmatpush1.msra.mxu0 0.0
    %114 = vmatprep.subr.mxu0 0.0
    %115 = vmatpush1.msra.mxu0 0.0
    %116 = vmatprep.subr.mxu0 0.0
    %117 = vmatpush1.msra.mxu0 0.0
    %118 = vmatprep.subr.mxu0 0.0
    %119 = vmatpush1.msra.mxu0 0.0
    %120 = vmatprep.subr.mxu0 0.0
    %121 = vmatpush1.msra.mxu0 0.0
    %122 = vmatprep.subr.mxu0 0.0
    %123 = vmatpush1.msra.mxu0 0.0
    %124 = vmatprep.subr.mxu0 0.0
    %125 = vmatpush1.msra.mxu0 0.0
    %126 = vmatprep.subr.mxu0 0.0
    %127 = vmatpush1.msra.mxu0 0.0
    %128 = vmatprep.subr.mxu0 0.0
    %129 = vmatpush1.msra.mxu0 0.0
    %130 = vmatprep.subr.mxu0 0.0
    %131 = vmatpush1.msra.mxu0 0.0
    %132 = vmatprep.subr.mxu0 0.0
    %133 = vmatpush1.msra.mxu0 0.0
    %134 = vmatprep.subr.mxu0 0.0
    %135 = vmatpush1.msra.mxu0 0.0
    %136 = vmatprep.mubr.f32.mxu0 0.0
    %137 = vmatmul.mubr.f32.gmra.mrb[0].mxu0 %v67
    %v138 = vpop.f32.mrb[0].mxu0
    %v139 = vadd.f32 %v64, %v138
    %v140 = vpop.f32.mrb[0].mxu0
    %141 = vmatprep.mubr.f32.mxu0 0.0
    %142 = vmatmul.mubr.f32.gmra.mrb[0].mxu0 %v70
    %v143 = vpop.f32.mrb[0].mxu0
    %v144 = vadd.f32 %v64, %v143
    %v145 = vpop.f32.mrb[0].mxu0
    %146 = vdwg.mxu0
    %v147 = vmax.f32 %v139, 0.0
    %v148 = vmax.f32 %v144, 0.0
    %v149 = vld [vmem:[#allocation2 + $0x118] sm:$0xff]
    %v150 = vld [vmem:[#allocation2 + $0x120] sm:$0xff]
    %v151 = vld [vmem:[#allocation2 + $0x128] sm:$0xff]
    %v152 = vld [vmem:[#allocation2 + $0x130] sm:$0xff]
    %v153 = vld [vmem:[#allocation2 + $0x138] sm:$0x1]
    %v154 = vlaneseq
    %v155 = vshrl.u32 %v154, 7
    %v156 = vsub.s32 0, %v155
    %v157 = vrot.slane %v153, %v156
    %v159 = vsel %vm65, %v147, 0
    %v162 = vsel %vm65, %v148, 0
    %164 = vmatprep.subr.mxu0 0.0
    %165 = vmatpush1.msra.mxu0 %v149
    %166 = vmatprep.subr.mxu0 0.0
    %167 = vmatpush1.msra.mxu0 %v150
    %168 = vmatprep.subr.mxu0 0.0
    %169 = vmatpush1.msra.mxu0 %v151
    %170 = vmatprep.subr.mxu0 0.0
    %171 = vmatpush1.msra.mxu0 %v152
    %172 = vmatprep.subr.mxu0 0.0
    %173 = vmatpush1.msra.mxu0 0.0
    %174 = vmatprep.subr.mxu0 0.0
    %175 = vmatpush1.msra.mxu0 0.0
    %176 = vmatprep.subr.mxu0 0.0
    %177 = vmatpush1.msra.mxu0 0.0
    %178 = vmatprep.subr.mxu0 0.0
    %179 = vmatpush1.msra.mxu0 0.0
    %180 = vmatprep.subr.mxu0 0.0
    %181 = vmatpush1.msra.mxu0 0.0
    %182 = vmatprep.subr.mxu0 0.0
    %183 = vmatpush1.msra.mxu0 0.0
    %184 = vmatprep.subr.mxu0 0.0
    %185 = vmatpush1.msra.mxu0 0.0
    %186 = vmatprep.subr.mxu0 0.0
    %187 = vmatpush1.msra.mxu0 0.0
    %188 = vmatprep.subr.mxu0 0.0
    %189 = vmatpush1.msra.mxu0 0.0
    %190 = vmatprep.subr.mxu0 0.0
    %191 = vmatpush1.msra.mxu0 0.0
    %192 = vmatprep.subr.mxu0 0.0
    %193 = vmatpush1.msra.mxu0 0.0
    %194 = vmatprep.subr.mxu0 0.0
    %195 = vmatpush1.msra.mxu0 0.0
    %196 = vmatprep.subr.mxu0 0.0
    %197 = vmatpush1.msra.mxu0 0.0
    %198 = vmatprep.subr.mxu0 0.0
    %199 = vmatpush1.msra.mxu0 0.0
    %200 = vmatprep.subr.mxu0 0.0
    %201 = vmatpush1.msra.mxu0 0.0
    %202 = vmatprep.subr.mxu0 0.0
    %203 = vmatpush1.msra.mxu0 0.0
    %204 = vmatprep.subr.mxu0 0.0
    %205 = vmatpush1.msra.mxu0 0.0
    %206 = vmatprep.subr.mxu0 0.0
    %207 = vmatpush1.msra.mxu0 0.0
    %208 = vmatprep.subr.mxu0 0.0
    %209 = vmatpush1.msra.mxu0 0.0
    %210 = vmatprep.subr.mxu0 0.0
    %211 = vmatpush1.msra.mxu0 0.0
    %212 = vmatprep.subr.mxu0 0.0
    %213 = vmatpush1.msra.mxu0 0.0
    %214 = vmatprep.subr.mxu0 0.0
    %215 = vmatpush1.msra.mxu0 0.0
    %216 = vmatprep.subr.mxu0 0.0
    %217 = vmatpush1.msra.mxu0 0.0
    %218 = vmatprep.subr.mxu0 0.0
    %219 = vmatpush1.msra.mxu0 0.0
    %220 = vmatprep.subr.mxu0 0.0
    %221 = vmatpush1.msra.mxu0 0.0
    %222 = vmatprep.subr.mxu0 0.0
    %223 = vmatpush1.msra.mxu0 0.0
    %224 = vmatprep.subr.mxu0 0.0
    %225 = vmatpush1.msra.mxu0 0.0
    %226 = vmatprep.subr.mxu0 0.0
    %227 = vmatpush1.msra.mxu0 0.0
    %228 = vmatprep.mubr.f32.mxu0 0.0
    %229 = vmatmul.mubr.f32.gmra.mrb[0].mxu0 %v159
    %v230 = vpop.f32.mrb[0].mxu0
    %v231 = vadd.f32 %v157, %v230
    %v232 = vpop.f32.mrb[0].mxu0
    %233 = vmatprep.mubr.f32.mxu0 0.0
    %234 = vmatmul.mubr.f32.gmra.mrb[0].mxu0 %v162
    %v235 = vpop.f32.mrb[0].mxu0
    %v236 = vadd.f32 %v157, %v235
    %v237 = vpop.f32.mrb[0].mxu0
    %238 = vdwg.mxu0
    %v239 = vld [vmem:[#allocation2] sm:$0x1]
    %v240 = vld [vmem:[#allocation2 + $0x8] sm:$0x1]
    %v241 = vsel %vm65, %v38, 0.0
    %242 = vadd.xlane.f32.xlu0 %v241
    %v243 = vpop.xlane.xlu0 %242
    %v244 = vsel %vm65, %v39, 0.0
    %245 = vadd.xlane.f32.xlu0 %v244
    %v246 = vpop.xlane.xlu0 %245
    %v247 = vrcp.pop 32.0
    %v248 = vmul.f32 %v243, %v247
    %v249 = vmul.f32 %v246, %v247
    %v250 = vsub.f32 %v38, %v248
    %v251 = vsub.f32 %v39, %v249
    %v252 = vmul.f32 %v250, %v250
    %v253 = vmul.f32 %v251, %v251
    %v254 = vsel %vm65, %v252, 0.0
    %255 = vadd.xlane.f32.xlu0 %v254
    %v256 = vpop.xlane.xlu0 %255
    %v257 = vsel %vm65, %v253, 0.0
    %258 = vadd.xlane.f32.xlu0 %v257
    %v259 = vpop.xlane.xlu0 %258
    %v260 = vrcp.pop 31.0
    %v261 = vmul.f32 %v256, %v260
    %v262 = vmul.f32 %v259, %v260
    %v263 = vlaneseq
    %v264 = vshrl.u32 %v263, 7
    %v265 = vsub.s32 0, %v264
    %v266 = vrot.slane %v239, %v265
    %v267 = vmul.f32 %v266, %v250
    %v268 = vmul.f32 %v266, %v251
    %v269 = vrsqrt.pop %v261
    %v270 = vmul.f32 %v261, %v269
    %vm271 = vcmp.eq.f32.partialorder %v261, inf
    %v272 = vsel %vm271, %v261, %v270
    %vm273 = vcmp.eq.f32.partialorder %v261, 0.0
    %v274 = vand.u32 %v261, 2147483648
    %v275 = vsel %vm273, %v274, %v272
    %v276 = vrsqrt.pop %v262
    %v277 = vmul.f32 %v262, %v276
    %vm278 = vcmp.eq.f32.partialorder %v262, inf
    %v279 = vsel %vm278, %v262, %v277
    %vm280 = vcmp.eq.f32.partialorder %v262, 0.0
    %v281 = vand.u32 %v262, 2147483648
    %v282 = vsel %vm280, %v281, %v279
    %v283 = vadd.f32 %v275, 1e-06
    %v284 = vadd.f32 %v282, 1e-06
    %v285 = vrcp.pop %v283
    %v286 = vmul.f32 %v267, %v285
    %v287 = vrcp.pop %v284
    %v288 = vmul.f32 %v268, %v287
    %v289 = vlaneseq
    %v290 = vshrl.u32 %v289, 7
    %v291 = vsub.s32 0, %v290
    %v292 = vrot.slane %v240, %v291
    %v293 = vadd.f32 %v286, %v292
    %v294 = vadd.f32 %v288, %v292
    %v295 = vld [vmem:[#allocation2 + $0x10] sm:$0xff]
    %v296 = vld [vmem:[#allocation2 + $0x18] sm:$0xff]
    %v297 = vld [vmem:[#allocation2 + $0x20] sm:$0xff]
    %v298 = vld [vmem:[#allocation2 + $0x28] sm:$0xff]
    %v299 = vld [vmem:[#allocation2 + $0x30] sm:$0x1]
    %v300 = vlaneseq
    %v301 = vshrl.u32 %v300, 7
    %v302 = vsub.s32 0, %v301
    %v303 = vrot.slane %v299, %v302
    %v305 = vsel %vm65, %v293, 0
    %v308 = vsel %vm65, %v294, 0
    %310 = vmatprep.subr.mxu0 0.0
    %311 = vmatpush1.msra.mxu0 %v295
    %312 = vmatprep.subr.mxu0 0.0
    %313 = vmatpush1.msra.mxu0 %v296
    %314 = vmatprep.subr.mxu0 0.0
    %315 = vmatpush1.msra.mxu0 %v297
    %316 = vmatprep.subr.mxu0 0.0
    %317 = vmatpush1.msra.mxu0 %v298
    %318 = vmatprep.subr.mxu0 0.0
    %319 = vmatpush1.msra.mxu0 0.0
    %320 = vmatprep.subr.mxu0 0.0
    %321 = vmatpush1.msra.mxu0 0.0
    %322 = vmatprep.subr.mxu0 0.0
    %323 = vmatpush1.msra.mxu0 0.0
    %324 = vmatprep.subr.mxu0 0.0
    %325 = vmatpush1.msra.mxu0 0.0
    %326 = vmatprep.subr.mxu0 0.0
    %327 = vmatpush1.msra.mxu0 0.0
    %328 = vmatprep.subr.mxu0 0.0
    %329 = vmatpush1.msra.mxu0 0.0
    %330 = vmatprep.subr.mxu0 0.0
    %331 = vmatpush1.msra.mxu0 0.0
    %332 = vmatprep.subr.mxu0 0.0
    %333 = vmatpush1.msra.mxu0 0.0
    %334 = vmatprep.subr.mxu0 0.0
    %335 = vmatpush1.msra.mxu0 0.0
    %336 = vmatprep.subr.mxu0 0.0
    %337 = vmatpush1.msra.mxu0 0.0
    %338 = vmatprep.subr.mxu0 0.0
    %339 = vmatpush1.msra.mxu0 0.0
    %340 = vmatprep.subr.mxu0 0.0
    %341 = vmatpush1.msra.mxu0 0.0
    %342 = vmatprep.subr.mxu0 0.0
    %343 = vmatpush1.msra.mxu0 0.0
    %344 = vmatprep.subr.mxu0 0.0
    %345 = vmatpush1.msra.mxu0 0.0
    %346 = vmatprep.subr.mxu0 0.0
    %347 = vmatpush1.msra.mxu0 0.0
    %348 = vmatprep.subr.mxu0 0.0
    %349 = vmatpush1.msra.mxu0 0.0
    %350 = vmatprep.subr.mxu0 0.0
    %351 = vmatpush1.msra.mxu0 0.0
    %352 = vmatprep.subr.mxu0 0.0
    %353 = vmatpush1.msra.mxu0 0.0
    %354 = vmatprep.subr.mxu0 0.0
    %355 = vmatpush1.msra.mxu0 0.0
    %356 = vmatprep.subr.mxu0 0.0
    %357 = vmatpush1.msra.mxu0 0.0
    %358 = vmatprep.subr.mxu0 0.0
    %359 = vmatpush1.msra.mxu0 0.0
    %360 = vmatprep.subr.mxu0 0.0
    %361 = vmatpush1.msra.mxu0 0.0
    %362 = vmatprep.subr.mxu0 0.0
    %363 = vmatpush1.msra.mxu0 0.0
    %364 = vmatprep.subr.mxu0 0.0
    %365 = vmatpush1.msra.mxu0 0.0
    %366 = vmatprep.subr.mxu0 0.0
    %367 = vmatpush1.msra.mxu0 0.0
    %368 = vmatprep.subr.mxu0 0.0
    %369 = vmatpush1.msra.mxu0 0.0
    %370 = vmatprep.subr.mxu0 0.0
    %371 = vmatpush1.msra.mxu0 0.0
    %372 = vmatprep.subr.mxu0 0.0
    %373 = vmatpush1.msra.mxu0 0.0
    %374 = vmatprep.mubr.f32.mxu0 0.0
    %375 = vmatmul.mubr.f32.gmra.mrb[0].mxu0 %v305
    %v376 = vpop.f32.mrb[0].mxu0
    %v377 = vadd.f32 %v303, %v376
    %v378 = vpop.f32.mrb[0].mxu0
    %379 = vmatprep.mubr.f32.mxu0 0.0
    %380 = vmatmul.mubr.f32.gmra.mrb[0].mxu0 %v308
    %v381 = vpop.f32.mrb[0].mxu0
    %v382 = vadd.f32 %v303, %v381
    %v383 = vpop.f32.mrb[0].mxu0
    %384 = vdwg.mxu0
    %387 = vrot.lane.b32.xlu0 %v377, 120
    %v388 = vpop.permute.xlu0 %387
    %389 = vrot.lane.b32.xlu0 %v382, 120
    %v390 = vpop.permute.xlu0 %389
    %391 = vrot.lane.b32.xlu0 %v377, 112
    %v392 = vpop.permute.xlu0 %391
    %393 = vrot.lane.b32.xlu0 %v382, 112
    %v394 = vpop.permute.xlu0 %393
    %395 = vrot.lane.b32.xlu0 %v377, 104
    %v396 = vpop.permute.xlu0 %395
    %397 = vrot.lane.b32.xlu0 %v382, 104
    %v398 = vpop.permute.xlu0 %397
    %399 = vrot.lane.b32.xlu0 %v377, 96
    %v400 = vpop.permute.xlu0 %399
    %vm401 = vcmask 64512
    %v402 = vsel %vm401, %v377, 0
    %v404 = vsel %vm401, %v400, 0
    %406 = vmatprep.subr.mxu0 0.0
    %407 = vmatpush1.xpose.msra.mxu0 %v404
    %408 = vmatprep.subr.mxu0 0.0
    %409 = vmatpush1.xpose.msra.mxu0 0.0
    %410 = vmatprep.subr.mxu0 0.0
    %411 = vmatpush1.xpose.msra.mxu0 0.0
    %412 = vmatprep.subr.mxu0 0.0
    %413 = vmatpush1.xpose.msra.mxu0 0.0
    %414 = vmatprep.subr.mxu0 0.0
    %415 = vmatpush1.xpose.msra.mxu0 0.0
    %416 = vmatprep.subr.mxu0 0.0
    %417 = vmatpush1.xpose.msra.mxu0 0.0
    %418 = vmatprep.subr.mxu0 0.0
    %419 = vmatpush1.xpose.msra.mxu0 0.0
    %420 = vmatprep.subr.mxu0 0.0
    %421 = vmatpush1.xpose.msra.mxu0 0.0
    %422 = vmatprep.subr.mxu0 0.0
    %423 = vmatpush1.xpose.msra.mxu0 0.0
    %424 = vmatprep.subr.mxu0 0.0
    %425 = vmatpush1.xpose.msra.mxu0 0.0
    %426 = vmatprep.subr.mxu0 0.0
    %427 = vmatpush1.xpose.msra.mxu0 0.0
    %428 = vmatprep.subr.mxu0 0.0
    %429 = vmatpush1.xpose.msra.mxu0 0.0
    %430 = vmatprep.subr.mxu0 0.0
    %431 = vmatpush1.xpose.msra.mxu0 0.0
    %432 = vmatprep.subr.mxu0 0.0
    %433 = vmatpush1.xpose.msra.mxu0 0.0
    %434 = vmatprep.subr.mxu0 0.0
    %435 = vmatpush1.xpose.msra.mxu0 0.0
    %436 = vmatprep.subr.mxu0 0.0
    %437 = vmatpush1.xpose.msra.mxu0 0.0
    %438 = vmatprep.subr.mxu0 0.0
    %439 = vmatpush1.xpose.msra.mxu0 0.0
    %440 = vmatprep.subr.mxu0 0.0
    %441 = vmatpush1.xpose.msra.mxu0 0.0
    %442 = vmatprep.subr.mxu0 0.0
    %443 = vmatpush1.xpose.msra.mxu0 0.0
    %444 = vmatprep.subr.mxu0 0.0
    %445 = vmatpush1.xpose.msra.mxu0 0.0
    %446 = vmatprep.subr.mxu0 0.0
    %447 = vmatpush1.xpose.msra.mxu0 0.0
    %448 = vmatprep.subr.mxu0 0.0
    %449 = vmatpush1.xpose.msra.mxu0 0.0
    %450 = vmatprep.subr.mxu0 0.0
    %451 = vmatpush1.xpose.msra.mxu0 0.0
    %452 = vmatprep.subr.mxu0 0.0
    %453 = vmatpush1.xpose.msra.mxu0 0.0
    %454 = vmatprep.subr.mxu0 0.0
    %455 = vmatpush1.xpose.msra.mxu0 0.0
    %456 = vmatprep.subr.mxu0 0.0
    %457 = vmatpush1.xpose.msra.mxu0 0.0
    %458 = vmatprep.subr.mxu0 0.0
    %459 = vmatpush1.xpose.msra.mxu0 0.0
    %460 = vmatprep.subr.mxu0 0.0
    %461 = vmatpush1.xpose.msra.mxu0 0.0
    %462 = vmatprep.subr.mxu0 0.0
    %463 = vmatpush1.xpose.msra.mxu0 0.0
    %464 = vmatprep.subr.mxu0 0.0
    %465 = vmatpush1.xpose.msra.mxu0 0.0
    %466 = vmatprep.subr.mxu0 0.0
    %467 = vmatpush1.xpose.msra.mxu0 0.0
    %468 = vmatprep.subr.mxu0 0.0
    %469 = vmatpush1.xpose.msra.mxu0 0.0
    %470 = vmatprep.mubr.f32.mxu0 0.0
    %471 = vmatmul.mubr.f32.gmra.mrb[0].mxu0 %v402
    %v472 = vpop.f32.mrb[0].mxu0
    %v473 = vadd.f32 0.0, %v472
    %v474 = vpop.f32.mrb[0].mxu0
    %475 = vdwg.mxu0
    %476 = vrot.lane.b32.xlu0 %v382, 96
    %v477 = vpop.permute.xlu0 %476
    %v478 = vsel %vm401, %v382, 0
    %v480 = vsel %vm401, %v477, 0
    %482 = vmatprep.subr.mxu0 0.0
    %483 = vmatpush1.xpose.msra.mxu0 %v480
    %484 = vmatprep.subr.mxu0 0.0
    %485 = vmatpush1.xpose.msra.mxu0 0.0
    %486 = vmatprep.subr.mxu0 0.0
    %487 = vmatpush1.xpose.msra.mxu0 0.0
    %488 = vmatprep.subr.mxu0 0.0
    %489 = vmatpush1.xpose.msra.mxu0 0.0
    %490 = vmatprep.subr.mxu0 0.0
    %491 = vmatpush1.xpose.msra.mxu0 0.0
    %492 = vmatprep.subr.mxu0 0.0
    %493 = vmatpush1.xpose.msra.mxu0 0.0
    %494 = vmatprep.subr.mxu0 0.0
    %495 = vmatpush1.xpose.msra.mxu0 0.0
    %496 = vmatprep.subr.mxu0 0.0
    %497 = vmatpush1.xpose.msra.mxu0 0.0
    %498 = vmatprep.subr.mxu0 0.0
    %499 = vmatpush1.xpose.msra.mxu0 0.0
    %500 = vmatprep.subr.mxu0 0.0
    %501 = vmatpush1.xpose.msra.mxu0 0.0
    %502 = vmatprep.subr.mxu0 0.0
    %503 = vmatpush1.xpose.msra.mxu0 0.0
    %504 = vmatprep.subr.mxu0 0.0
    %505 = vmatpush1.xpose.msra.mxu0 0.0
    %506 = vmatprep.subr.mxu0 0.0
    %507 = vmatpush1.xpose.msra.mxu0 0.0
    %508 = vmatprep.subr.mxu0 0.0
    %509 = vmatpush1.xpose.msra.mxu0 0.0
    %510 = vmatprep.subr.mxu0 0.0
    %511 = vmatpush1.xpose.msra.mxu0 0.0
    %512 = vmatprep.subr.mxu0 0.0
    %513 = vmatpush1.xpose.msra.mxu0 0.0
    %514 = vmatprep.subr.mxu0 0.0
    %515 = vmatpush1.xpose.msra.mxu0 0.0
    %516 = vmatprep.subr.mxu0 0.0
    %517 = vmatpush1.xpose.msra.mxu0 0.0
    %518 = vmatprep.subr.mxu0 0.0
    %519 = vmatpush1.xpose.msra.mxu0 0.0
    %520 = vmatprep.subr.mxu0 0.0
    %521 = vmatpush1.xpose.msra.mxu0 0.0
    %522 = vmatprep.subr.mxu0 0.0
    %523 = vmatpush1.xpose.msra.mxu0 0.0
    %524 = vmatprep.subr.mxu0 0.0
    %525 = vmatpush1.xpose.msra.mxu0 0.0
    %526 = vmatprep.subr.mxu0 0.0
    %527 = vmatpush1.xpose.msra.mxu0 0.0
    %528 = vmatprep.subr.mxu0 0.0
    %529 = vmatpush1.xpose.msra.mxu0 0.0
    %530 = vmatprep.subr.mxu0 0.0
    %531 = vmatpush1.xpose.msra.mxu0 0.0
    %532 = vmatprep.subr.mxu0 0.0
    %533 = vmatpush1.xpose.msra.mxu0 0.0
    %534 = vmatprep.subr.mxu0 0.0
    %535 = vmatpush1.xpose.msra.mxu0 0.0
    %536 = vmatprep.subr.mxu0 0.0
    %537 = vmatpush1.xpose.msra.mxu0 0.0
    %538 = vmatprep.subr.mxu0 0.0
    %539 = vmatpush1.xpose.msra.mxu0 0.0
    %540 = vmatprep.subr.mxu0 0.0
    %541 = vmatpush1.xpose.msra.mxu0 0.0
    %542 = vmatprep.subr.mxu0 0.0
    %543 = vmatpush1.xpose.msra.mxu0 0.0
    %544 = vmatprep.subr.mxu0 0.0
    %545 = vmatpush1.xpose.msra.mxu0 0.0
    %546 = vmatprep.mubr.f32.mxu0 0.0
    %547 = vmatmul.mubr.f32.gmra.mrb[0].mxu0 %v478
    %v548 = vpop.f32.mrb[0].mxu0
    %v549 = vadd.f32 0.0, %v548
    %v550 = vpop.f32.mrb[0].mxu0
    %551 = vdwg.mxu0
    %552 = vrot.lane.b32.xlu0 %v388, 96
    %v553 = vpop.permute.xlu0 %552
    %v554 = vsel %vm401, %v388, 0
    %v556 = vsel %vm401, %v553, 0
    %558 = vmatprep.subr.mxu0 0.0
    %559 = vmatpush1.xpose.msra.mxu0 %v556
    %560 = vmatprep.subr.mxu0 0.0
    %561 = vmatpush1.xpose.msra.mxu0 0.0
    %562 = vmatprep.subr.mxu0 0.0
    %563 = vmatpush1.xpose.msra.mxu0 0.0
    %564 = vmatprep.subr.mxu0 0.0
    %565 = vmatpush1.xpose.msra.mxu0 0.0
    %566 = vmatprep.subr.mxu0 0.0
    %567 = vmatpush1.xpose.msra.mxu0 0.0
    %568 = vmatprep.subr.mxu0 0.0
    %569 = vmatpush1.xpose.msra.mxu0 0.0
    %570 = vmatprep.subr.mxu0 0.0
    %571 = vmatpush1.xpose.msra.mxu0 0.0
    %572 = vmatprep.subr.mxu0 0.0
    %573 = vmatpush1.xpose.msra.mxu0 0.0
    %574 = vmatprep.subr.mxu0 0.0
    %575 = vmatpush1.xpose.msra.mxu0 0.0
    %576 = vmatprep.subr.mxu0 0.0
    %577 = vmatpush1.xpose.msra.mxu0 0.0
    %578 = vmatprep.subr.mxu0 0.0
    %579 = vmatpush1.xpose.msra.mxu0 0.0
    %580 = vmatprep.subr.mxu0 0.0
    %581 = vmatpush1.xpose.msra.mxu0 0.0
    %582 = vmatprep.subr.mxu0 0.0
    %583 = vmatpush1.xpose.msra.mxu0 0.0
    %584 = vmatprep.subr.mxu0 0.0
    %585 = vmatpush1.xpose.msra.mxu0 0.0
    %586 = vmatprep.subr.mxu0 0.0
    %587 = vmatpush1.xpose.msra.mxu0 0.0
    %588 = vmatprep.subr.mxu0 0.0
    %589 = vmatpush1.xpose.msra.mxu0 0.0
    %590 = vmatprep.subr.mxu0 0.0
    %591 = vmatpush1.xpose.msra.mxu0 0.0
    %592 = vmatprep.subr.mxu0 0.0
    %593 = vmatpush1.xpose.msra.mxu0 0.0
    %594 = vmatprep.subr.mxu0 0.0
    %595 = vmatpush1.xpose.msra.mxu0 0.0
    %596 = vmatprep.subr.mxu0 0.0
    %597 = vmatpush1.xpose.msra.mxu0 0.0
    %598 = vmatprep.subr.mxu0 0.0
    %599 = vmatpush1.xpose.msra.mxu0 0.0
    %600 = vmatprep.subr.mxu0 0.0
    %601 = vmatpush1.xpose.msra.mxu0 0.0
    %602 = vmatprep.subr.mxu0 0.0
    %603 = vmatpush1.xpose.msra.mxu0 0.0
    %604 = vmatprep.subr.mxu0 0.0
    %605 = vmatpush1.xpose.msra.mxu0 0.0
    %606 = vmatprep.subr.mxu0 0.0
    %607 = vmatpush1.xpose.msra.mxu0 0.0
    %608 = vmatprep.subr.mxu0 0.0
    %609 = vmatpush1.xpose.msra.mxu0 0.0
    %610 = vmatprep.subr.mxu0 0.0
    %611 = vmatpush1.xpose.msra.mxu0 0.0
    %612 = vmatprep.subr.mxu0 0.0
    %613 = vmatpush1.xpose.msra.mxu0 0.0
    %614 = vmatprep.subr.mxu0 0.0
    %615 = vmatpush1.xpose.msra.mxu0 0.0
    %616 = vmatprep.subr.mxu0 0.0
    %617 = vmatpush1.xpose.msra.mxu0 0.0
    %618 = vmatprep.subr.mxu0 0.0
    %619 = vmatpush1.xpose.msra.mxu0 0.0
    %620 = vmatprep.subr.mxu0 0.0
    %621 = vmatpush1.xpose.msra.mxu0 0.0
    %622 = vmatprep.mubr.f32.mxu0 0.0
    %623 = vmatmul.mubr.f32.gmra.mrb[0].mxu0 %v554
    %v624 = vpop.f32.mrb[0].mxu0
    %v625 = vadd.f32 0.0, %v624
    %v626 = vpop.f32.mrb[0].mxu0
    %627 = vdwg.mxu0
    %628 = vrot.lane.b32.xlu0 %v390, 96
    %v629 = vpop.permute.xlu0 %628
    %v630 = vsel %vm401, %v390, 0
    %v632 = vsel %vm401, %v629, 0
    %634 = vmatprep.subr.mxu0 0.0
    %635 = vmatpush1.xpose.msra.mxu0 %v632
    %636 = vmatprep.subr.mxu0 0.0
    %637 = vmatpush1.xpose.msra.mxu0 0.0
    %638 = vmatprep.subr.mxu0 0.0
    %639 = vmatpush1.xpose.msra.mxu0 0.0
    %640 = vmatprep.subr.mxu0 0.0
    %641 = vmatpush1.xpose.msra.mxu0 0.0
    %642 = vmatprep.subr.mxu0 0.0
    %643 = vmatpush1.xpose.msra.mxu0 0.0
    %644 = vmatprep.subr.mxu0 0.0
    %645 = vmatpush1.xpose.msra.mxu0 0.0
    %646 = vmatprep.subr.mxu0 0.0
    %647 = vmatpush1.xpose.msra.mxu0 0.0
    %648 = vmatprep.subr.mxu0 0.0
    %649 = vmatpush1.xpose.msra.mxu0 0.0
    %650 = vmatprep.subr.mxu0 0.0
    %651 = vmatpush1.xpose.msra.mxu0 0.0
    %652 = vmatprep.subr.mxu0 0.0
    %653 = vmatpush1.xpose.msra.mxu0 0.0
    %654 = vmatprep.subr.mxu0 0.0
    %655 = vmatpush1.xpose.msra.mxu0 0.0
    %656 = vmatprep.subr.mxu0 0.0
    %657 = vmatpush1.xpose.msra.mxu0 0.0
    %658 = vmatprep.subr.mxu0 0.0
    %659 = vmatpush1.xpose.msra.mxu0 0.0
    %660 = vmatprep.subr.mxu0 0.0
    %661 = vmatpush1.xpose.msra.mxu0 0.0
    %662 = vmatprep.subr.mxu0 0.0
    %663 = vmatpush1.xpose.msra.mxu0 0.0
    %664 = vmatprep.subr.mxu0 0.0
    %665 = vmatpush1.xpose.msra.mxu0 0.0
    %666 = vmatprep.subr.mxu0 0.0
    %667 = vmatpush1.xpose.msra.mxu0 0.0
    %668 = vmatprep.subr.mxu0 0.0
    %669 = vmatpush1.xpose.msra.mxu0 0.0
    %670 = vmatprep.subr.mxu0 0.0
    %671 = vmatpush1.xpose.msra.mxu0 0.0
    %672 = vmatprep.subr.mxu0 0.0
    %673 = vmatpush1.xpose.msra.mxu0 0.0
    %674 = vmatprep.subr.mxu0 0.0
    %675 = vmatpush1.xpose.msra.mxu0 0.0
    %676 = vmatprep.subr.mxu0 0.0
    %677 = vmatpush1.xpose.msra.mxu0 0.0
    %678 = vmatprep.subr.mxu0 0.0
    %679 = vmatpush1.xpose.msra.mxu0 0.0
    %680 = vmatprep.subr.mxu0 0.0
    %681 = vmatpush1.xpose.msra.mxu0 0.0
    %682 = vmatprep.subr.mxu0 0.0
    %683 = vmatpush1.xpose.msra.mxu0 0.0
    %684 = vmatprep.subr.mxu0 0.0
    %685 = vmatpush1.xpose.msra.mxu0 0.0
    %686 = vmatprep.subr.mxu0 0.0
    %687 = vmatpush1.xpose.msra.mxu0 0.0
    %688 = vmatprep.subr.mxu0 0.0
    %689 = vmatpush1.xpose.msra.mxu0 0.0
    %690 = vmatprep.subr.mxu0 0.0
    %691 = vmatpush1.xpose.msra.mxu0 0.0
    %692 = vmatprep.subr.mxu0 0.0
    %693 = vmatpush1.xpose.msra.mxu0 0.0
    %694 = vmatprep.subr.mxu0 0.0
    %695 = vmatpush1.xpose.msra.mxu0 0.0
    %696 = vmatprep.subr.mxu0 0.0
    %697 = vmatpush1.xpose.msra.mxu0 0.0
    %698 = vmatprep.mubr.f32.mxu0 0.0
    %699 = vmatmul.mubr.f32.gmra.mrb[0].mxu0 %v630
    %v700 = vpop.f32.mrb[0].mxu0
    %v701 = vadd.f32 0.0, %v700
    %v702 = vpop.f32.mrb[0].mxu0
    %703 = vdwg.mxu0
    %704 = vrot.lane.b32.xlu0 %v392, 96
    %v705 = vpop.permute.xlu0 %704
    %v706 = vsel %vm401, %v392, 0
    %v708 = vsel %vm401, %v705, 0
    %710 = vmatprep.subr.mxu0 0.0
    %711 = vmatpush1.xpose.msra.mxu0 %v708
    %712 = vmatprep.subr.mxu0 0.0
    %713 = vmatpush1.xpose.msra.mxu0 0.0
    %714 = vmatprep.subr.mxu0 0.0
    %715 = vmatpush1.xpose.msra.mxu0 0.0
    %716 = vmatprep.subr.mxu0 0.0
    %717 = vmatpush1.xpose.msra.mxu0 0.0
    %718 = vmatprep.subr.mxu0 0.0
    %719 = vmatpush1.xpose.msra.mxu0 0.0
    %720 = vmatprep.subr.mxu0 0.0
    %721 = vmatpush1.xpose.msra.mxu0 0.0
    %722 = vmatprep.subr.mxu0 0.0
    %723 = vmatpush1.xpose.msra.mxu0 0.0
    %724 = vmatprep.subr.mxu0 0.0
    %725 = vmatpush1.xpose.msra.mxu0 0.0
    %726 = vmatprep.subr.mxu0 0.0
    %727 = vmatpush1.xpose.msra.mxu0 0.0
    %728 = vmatprep.subr.mxu0 0.0
    %729 = vmatpush1.xpose.msra.mxu0 0.0
    %730 = vmatprep.subr.mxu0 0.0
    %731 = vmatpush1.xpose.msra.mxu0 0.0
    %732 = vmatprep.subr.mxu0 0.0
    %733 = vmatpush1.xpose.msra.mxu0 0.0
    %734 = vmatprep.subr.mxu0 0.0
    %735 = vmatpush1.xpose.msra.mxu0 0.0
    %736 = vmatprep.subr.mxu0 0.0
    %737 = vmatpush1.xpose.msra.mxu0 0.0
    %738 = vmatprep.subr.mxu0 0.0
    %739 = vmatpush1.xpose.msra.mxu0 0.0
    %740 = vmatprep.subr.mxu0 0.0
    %741 = vmatpush1.xpose.msra.mxu0 0.0
    %742 = vmatprep.subr.mxu0 0.0
    %743 = vmatpush1.xpose.msra.mxu0 0.0
    %744 = vmatprep.subr.mxu0 0.0
    %745 = vmatpush1.xpose.msra.mxu0 0.0
    %746 = vmatprep.subr.mxu0 0.0
    %747 = vmatpush1.xpose.msra.mxu0 0.0
    %748 = vmatprep.subr.mxu0 0.0
    %749 = vmatpush1.xpose.msra.mxu0 0.0
    %750 = vmatprep.subr.mxu0 0.0
    %751 = vmatpush1.xpose.msra.mxu0 0.0
    %752 = vmatprep.subr.mxu0 0.0
    %753 = vmatpush1.xpose.msra.mxu0 0.0
    %754 = vmatprep.subr.mxu0 0.0
    %755 = vmatpush1.xpose.msra.mxu0 0.0
    %756 = vmatprep.subr.mxu0 0.0
    %757 = vmatpush1.xpose.msra.mxu0 0.0
    %758 = vmatprep.subr.mxu0 0.0
    %759 = vmatpush1.xpose.msra.mxu0 0.0
    %760 = vmatprep.subr.mxu0 0.0
    %761 = vmatpush1.xpose.msra.mxu0 0.0
    %762 = vmatprep.subr.mxu0 0.0
    %763 = vmatpush1.xpose.msra.mxu0 0.0
    %764 = vmatprep.subr.mxu0 0.0
    %765 = vmatpush1.xpose.msra.mxu0 0.0
    %766 = vmatprep.subr.mxu0 0.0
    %767 = vmatpush1.xpose.msra.mxu0 0.0
    %768 = vmatprep.subr.mxu0 0.0
    %769 = vmatpush1.xpose.msra.mxu0 0.0
    %770 = vmatprep.subr.mxu0 0.0
    %771 = vmatpush1.xpose.msra.mxu0 0.0
    %772 = vmatprep.subr.mxu0 0.0
    %773 = vmatpush1.xpose.msra.mxu0 0.0
    %774 = vmatprep.mubr.f32.mxu0 0.0
    %775 = vmatmul.mubr.f32.gmra.mrb[0].mxu0 %v706
    %v776 = vpop.f32.mrb[0].mxu0
    %v777 = vadd.f32 0.0, %v776
    %v778 = vpop.f32.mrb[0].mxu0
    %779 = vdwg.mxu0
    %780 = vrot.lane.b32.xlu0 %v394, 96
    %v781 = vpop.permute.xlu0 %780
    %v782 = vsel %vm401, %v394, 0
    %v784 = vsel %vm401, %v781, 0
    %786 = vmatprep.subr.mxu0 0.0
    %787 = vmatpush1.xpose.msra.mxu0 %v784
    %788 = vmatprep.subr.mxu0 0.0
    %789 = vmatpush1.xpose.msra.mxu0 0.0
    %790 = vmatprep.subr.mxu0 0.0
    %791 = vmatpush1.xpose.msra.mxu0 0.0
    %792 = vmatprep.subr.mxu0 0.0
    %793 = vmatpush1.xpose.msra.mxu0 0.0
    %794 = vmatprep.subr.mxu0 0.0
    %795 = vmatpush1.xpose.msra.mxu0 0.0
    %796 = vmatprep.subr.mxu0 0.0
    %797 = vmatpush1.xpose.msra.mxu0 0.0
    %798 = vmatprep.subr.mxu0 0.0
    %799 = vmatpush1.xpose.msra.mxu0 0.0
    %800 = vmatprep.subr.mxu0 0.0
    %801 = vmatpush1.xpose.msra.mxu0 0.0
    %802 = vmatprep.subr.mxu0 0.0
    %803 = vmatpush1.xpose.msra.mxu0 0.0
    %804 = vmatprep.subr.mxu0 0.0
    %805 = vmatpush1.xpose.msra.mxu0 0.0
    %806 = vmatprep.subr.mxu0 0.0
    %807 = vmatpush1.xpose.msra.mxu0 0.0
    %808 = vmatprep.subr.mxu0 0.0
    %809 = vmatpush1.xpose.msra.mxu0 0.0
    %810 = vmatprep.subr.mxu0 0.0
    %811 = vmatpush1.xpose.msra.mxu0 0.0
    %812 = vmatprep.subr.mxu0 0.0
    %813 = vmatpush1.xpose.msra.mxu0 0.0
    %814 = vmatprep.subr.mxu0 0.0
    %815 = vmatpush1.xpose.msra.mxu0 0.0
    %816 = vmatprep.subr.mxu0 0.0
    %817 = vmatpush1.xpose.msra.mxu0 0.0
    %818 = vmatprep.subr.mxu0 0.0
    %819 = vmatpush1.xpose.msra.mxu0 0.0
    %820 = vmatprep.subr.mxu0 0.0
    %821 = vmatpush1.xpose.msra.mxu0 0.0
    %822 = vmatprep.subr.mxu0 0.0
    %823 = vmatpush1.xpose.msra.mxu0 0.0
    %824 = vmatprep.subr.mxu0 0.0
    %825 = vmatpush1.xpose.msra.mxu0 0.0
    %826 = vmatprep.subr.mxu0 0.0
    %827 = vmatpush1.xpose.msra.mxu0 0.0
    %828 = vmatprep.subr.mxu0 0.0
    %829 = vmatpush1.xpose.msra.mxu0 0.0
    %830 = vmatprep.subr.mxu0 0.0
    %831 = vmatpush1.xpose.msra.mxu0 0.0
    %832 = vmatprep.subr.mxu0 0.0
    %833 = vmatpush1.xpose.msra.mxu0 0.0
    %834 = vmatprep.subr.mxu0 0.0
    %835 = vmatpush1.xpose.msra.mxu0 0.0
    %836 = vmatprep.subr.mxu0 0.0
    %837 = vmatpush1.xpose.msra.mxu0 0.0
    %838 = vmatprep.subr.mxu0 0.0
    %839 = vmatpush1.xpose.msra.mxu0 0.0
    %840 = vmatprep.subr.mxu0 0.0
    %841 = vmatpush1.xpose.msra.mxu0 0.0
    %842 = vmatprep.subr.mxu0 0.0
    %843 = vmatpush1.xpose.msra.mxu0 0.0
    %844 = vmatprep.subr.mxu0 0.0
    %845 = vmatpush1.xpose.msra.mxu0 0.0
    %846 = vmatprep.subr.mxu0 0.0
    %847 = vmatpush1.xpose.msra.mxu0 0.0
    %848 = vmatprep.subr.mxu0 0.0
    %849 = vmatpush1.xpose.msra.mxu0 0.0
    %850 = vmatprep.mubr.f32.mxu0 0.0
    %851 = vmatmul.mubr.f32.gmra.mrb[0].mxu0 %v782
    %v852 = vpop.f32.mrb[0].mxu0
    %v853 = vadd.f32 0.0, %v852
    %v854 = vpop.f32.mrb[0].mxu0
    %855 = vdwg.mxu0
    %856 = vrot.lane.b32.xlu0 %v396, 96
    %v857 = vpop.permute.xlu0 %856
    %v858 = vsel %vm401, %v396, 0
    %v860 = vsel %vm401, %v857, 0
    %862 = vmatprep.subr.mxu0 0.0
    %863 = vmatpush1.xpose.msra.mxu0 %v860
    %864 = vmatprep.subr.mxu0 0.0
    %865 = vmatpush1.xpose.msra.mxu0 0.0
    %866 = vmatprep.subr.mxu0 0.0
    %867 = vmatpush1.xpose.msra.mxu0 0.0
    %868 = vmatprep.subr.mxu0 0.0
    %869 = vmatpush1.xpose.msra.mxu0 0.0
    %870 = vmatprep.subr.mxu0 0.0
    %871 = vmatpush1.xpose.msra.mxu0 0.0
    %872 = vmatprep.subr.mxu0 0.0
    %873 = vmatpush1.xpose.msra.mxu0 0.0
    %874 = vmatprep.subr.mxu0 0.0
    %875 = vmatpush1.xpose.msra.mxu0 0.0
    %876 = vmatprep.subr.mxu0 0.0
    %877 = vmatpush1.xpose.msra.mxu0 0.0
    %878 = vmatprep.subr.mxu0 0.0
    %879 = vmatpush1.xpose.msra.mxu0 0.0
    %880 = vmatprep.subr.mxu0 0.0
    %881 = vmatpush1.xpose.msra.mxu0 0.0
    %882 = vmatprep.subr.mxu0 0.0
    %883 = vmatpush1.xpose.msra.mxu0 0.0
    %884 = vmatprep.subr.mxu0 0.0
    %885 = vmatpush1.xpose.msra.mxu0 0.0
    %886 = vmatprep.subr.mxu0 0.0
    %887 = vmatpush1.xpose.msra.mxu0 0.0
    %888 = vmatprep.subr.mxu0 0.0
    %889 = vmatpush1.xpose.msra.mxu0 0.0
    %890 = vmatprep.subr.mxu0 0.0
    %891 = vmatpush1.xpose.msra.mxu0 0.0
    %892 = vmatprep.subr.mxu0 0.0
    %893 = vmatpush1.xpose.msra.mxu0 0.0
    %894 = vmatprep.subr.mxu0 0.0
    %895 = vmatpush1.xpose.msra.mxu0 0.0
    %896 = vmatprep.subr.mxu0 0.0
    %897 = vmatpush1.xpose.msra.mxu0 0.0
    %898 = vmatprep.subr.mxu0 0.0
    %899 = vmatpush1.xpose.msra.mxu0 0.0
    %900 = vmatprep.subr.mxu0 0.0
    %901 = vmatpush1.xpose.msra.mxu0 0.0
    %902 = vmatprep.subr.mxu0 0.0
    %903 = vmatpush1.xpose.msra.mxu0 0.0
    %904 = vmatprep.subr.mxu0 0.0
    %905 = vmatpush1.xpose.msra.mxu0 0.0
    %906 = vmatprep.subr.mxu0 0.0
    %907 = vmatpush1.xpose.msra.mxu0 0.0
    %908 = vmatprep.subr.mxu0 0.0
    %909 = vmatpush1.xpose.msra.mxu0 0.0
    %910 = vmatprep.subr.mxu0 0.0
    %911 = vmatpush1.xpose.msra.mxu0 0.0
    %912 = vmatprep.subr.mxu0 0.0
    %913 = vmatpush1.xpose.msra.mxu0 0.0
    %914 = vmatprep.subr.mxu0 0.0
    %915 = vmatpush1.xpose.msra.mxu0 0.0
    %916 = vmatprep.subr.mxu0 0.0
    %917 = vmatpush1.xpose.msra.mxu0 0.0
    %918 = vmatprep.subr.mxu0 0.0
    %919 = vmatpush1.xpose.msra.mxu0 0.0
    %920 = vmatprep.subr.mxu0 0.0
    %921 = vmatpush1.xpose.msra.mxu0 0.0
    %922 = vmatprep.subr.mxu0 0.0
    %923 = vmatpush1.xpose.msra.mxu0 0.0
    %924 = vmatprep.subr.mxu0 0.0
    %925 = vmatpush1.xpose.msra.mxu0 0.0
    %926 = vmatprep.mubr.f32.mxu0 0.0
    %927 = vmatmul.mubr.f32.gmra.mrb[0].mxu0 %v858
    %v928 = vpop.f32.mrb[0].mxu0
    %v929 = vadd.f32 0.0, %v928
    %v930 = vpop.f32.mrb[0].mxu0
    %931 = vdwg.mxu0
    %932 = vrot.lane.b32.xlu0 %v398, 96
    %v933 = vpop.permute.xlu0 %932
    %v934 = vsel %vm401, %v398, 0
    %v936 = vsel %vm401, %v933, 0
    %938 = vmatprep.subr.mxu0 0.0
    %939 = vmatpush1.xpose.msra.mxu0 %v936
    %940 = vmatprep.subr.mxu0 0.0
    %941 = vmatpush1.xpose.msra.mxu0 0.0
    %942 = vmatprep.subr.mxu0 0.0
    %943 = vmatpush1.xpose.msra.mxu0 0.0
    %944 = vmatprep.subr.mxu0 0.0
    %945 = vmatpush1.xpose.msra.mxu0 0.0
    %946 = vmatprep.subr.mxu0 0.0
    %947 = vmatpush1.xpose.msra.mxu0 0.0
    %948 = vmatprep.subr.mxu0 0.0
    %949 = vmatpush1.xpose.msra.mxu0 0.0
    %950 = vmatprep.subr.mxu0 0.0
    %951 = vmatpush1.xpose.msra.mxu0 0.0
    %952 = vmatprep.subr.mxu0 0.0
    %953 = vmatpush1.xpose.msra.mxu0 0.0
    %954 = vmatprep.subr.mxu0 0.0
    %955 = vmatpush1.xpose.msra.mxu0 0.0
    %956 = vmatprep.subr.mxu0 0.0
    %957 = vmatpush1.xpose.msra.mxu0 0.0
    %958 = vmatprep.subr.mxu0 0.0
    %959 = vmatpush1.xpose.msra.mxu0 0.0
    %960 = vmatprep.subr.mxu0 0.0
    %961 = vmatpush1.xpose.msra.mxu0 0.0
    %962 = vmatprep.subr.mxu0 0.0
    %963 = vmatpush1.xpose.msra.mxu0 0.0
    %964 = vmatprep.subr.mxu0 0.0
    %965 = vmatpush1.xpose.msra.mxu0 0.0
    %966 = vmatprep.subr.mxu0 0.0
    %967 = vmatpush1.xpose.msra.mxu0 0.0
    %968 = vmatprep.subr.mxu0 0.0
    %969 = vmatpush1.xpose.msra.mxu0 0.0
    %970 = vmatprep.subr.mxu0 0.0
    %971 = vmatpush1.xpose.msra.mxu0 0.0
    %972 = vmatprep.subr.mxu0 0.0
    %973 = vmatpush1.xpose.msra.mxu0 0.0
    %974 = vmatprep.subr.mxu0 0.0
    %975 = vmatpush1.xpose.msra.mxu0 0.0
    %976 = vmatprep.subr.mxu0 0.0
    %977 = vmatpush1.xpose.msra.mxu0 0.0
    %978 = vmatprep.subr.mxu0 0.0
    %979 = vmatpush1.xpose.msra.mxu0 0.0
    %980 = vmatprep.subr.mxu0 0.0
    %981 = vmatpush1.xpose.msra.mxu0 0.0
    %982 = vmatprep.subr.mxu0 0.0
    %983 = vmatpush1.xpose.msra.mxu0 0.0
    %984 = vmatprep.subr.mxu0 0.0
    %985 = vmatpush1.xpose.msra.mxu0 0.0
    %986 = vmatprep.subr.mxu0 0.0
    %987 = vmatpush1.xpose.msra.mxu0 0.0
    %988 = vmatprep.subr.mxu0 0.0
    %989 = vmatpush1.xpose.msra.mxu0 0.0
    %990 = vmatprep.subr.mxu0 0.0
    %991 = vmatpush1.xpose.msra.mxu0 0.0
    %992 = vmatprep.subr.mxu0 0.0
    %993 = vmatpush1.xpose.msra.mxu0 0.0
    %994 = vmatprep.subr.mxu0 0.0
    %995 = vmatpush1.xpose.msra.mxu0 0.0
    %996 = vmatprep.subr.mxu0 0.0
    %997 = vmatpush1.xpose.msra.mxu0 0.0
    %998 = vmatprep.subr.mxu0 0.0
    %999 = vmatpush1.xpose.msra.mxu0 0.0
    %1000 = vmatprep.subr.mxu0 0.0
    %1001 = vmatpush1.xpose.msra.mxu0 0.0
    %1002 = vmatprep.mubr.f32.mxu0 0.0
    %1003 = vmatmul.mubr.f32.gmra.mrb[0].mxu0 %v934
    %v1004 = vpop.f32.mrb[0].mxu0
    %v1005 = vadd.f32 0.0, %v1004
    %v1006 = vpop.f32.mrb[0].mxu0
    %1007 = vdwg.mxu0
    %v1008 = vmul.f32 %v473, 0.35355338
    %v1009 = vmul.f32 %v549, 0.35355338
    %v1010 = vmul.f32 %v625, 0.35355338
    %v1011 = vmul.f32 %v701, 0.35355338
    %v1012 = vmul.f32 %v777, 0.35355338
    %v1013 = vmul.f32 %v853, 0.35355338
    %v1014 = vmul.f32 %v929, 0.35355338
    %v1015 = vmul.f32 %v1005, 0.35355338
    %v1018 = vlaneseq
    %v1019 = vshrl.u32 %v1018, 7
    %v1020 = vsub.s32 0, %v1019
    %v1021 = vrot.slane %v48, %v1020
    %v1022 = vlaneseq
    %v1023 = vshrl.u32 %v1022, 7
    %v1024 = vsub.s32 0, %v1023
    %v1025 = vrot.slane %v49, %v1024
    %v1028 = vadd.f32 %v1008, %v1021
    %v1029 = vadd.f32 %v1009, %v1025
    %v1030 = vadd.f32 %v1010, %v1021
    %v1031 = vadd.f32 %v1011, %v1025
    %v1032 = vadd.f32 %v1012, %v1021
    %v1033 = vadd.f32 %v1013, %v1025
    %v1034 = vadd.f32 %v1014, %v1021
    %v1035 = vadd.f32 %v1015, %v1025
    %v1036 = vsel %vm401, %v1028, -inf
    %1037 = vmax.xlane.f32.xlu0 %v1036
    %v1038 = vpop.xlane.xlu0 %1037
    %v1039 = vsel %vm401, %v1029, -inf
    %1040 = vmax.xlane.f32.xlu0 %v1039
    %v1041 = vpop.xlane.xlu0 %1040
    %v1042 = vsel %vm401, %v1030, -inf
    %1043 = vmax.xlane.f32.xlu0 %v1042
    %v1044 = vpop.xlane.xlu0 %1043
    %v1045 = vsel %vm401, %v1031, -inf
    %1046 = vmax.xlane.f32.xlu0 %v1045
    %v1047 = vpop.xlane.xlu0 %1046
    %v1048 = vsel %vm401, %v1032, -inf
    %1049 = vmax.xlane.f32.xlu0 %v1048
    %v1050 = vpop.xlane.xlu0 %1049
    %v1051 = vsel %vm401, %v1033, -inf
    %1052 = vmax.xlane.f32.xlu0 %v1051
    %v1053 = vpop.xlane.xlu0 %1052
    %v1054 = vsel %vm401, %v1034, -inf
    %1055 = vmax.xlane.f32.xlu0 %v1054
    %v1056 = vpop.xlane.xlu0 %1055
    %v1057 = vsel %vm401, %v1035, -inf
    %1058 = vmax.xlane.f32.xlu0 %v1057
    %v1059 = vpop.xlane.xlu0 %1058
    %v1060 = vsub.f32 %v1028, %v1038
    %v1061 = vsub.f32 %v1029, %v1041
    %v1062 = vsub.f32 %v1030, %v1044
    %v1063 = vsub.f32 %v1031, %v1047
    %v1064 = vsub.f32 %v1032, %v1050
    %v1065 = vsub.f32 %v1033, %v1053
    %v1066 = vsub.f32 %v1034, %v1056
    %v1067 = vsub.f32 %v1035, %v1059
    %v1068 = vmul.f32 %v1060, 1.442695
    %v1069 = vpow.pop %v1068
    %v1070 = vmul.f32 %v1061, 1.442695
    %v1071 = vpow.pop %v1070
    %v1072 = vmul.f32 %v1062, 1.442695
    %v1073 = vpow.pop %v1072
    %v1074 = vmul.f32 %v1063, 1.442695
    %v1075 = vpow.pop %v1074
    %v1076 = vmul.f32 %v1064, 1.442695
    %v1077 = vpow.pop %v1076
    %v1078 = vmul.f32 %v1065, 1.442695
    %v1079 = vpow.pop %v1078
    %v1080 = vmul.f32 %v1066, 1.442695
    %v1081 = vpow.pop %v1080
    %v1082 = vmul.f32 %v1067, 1.442695
    %v1083 = vpow.pop %v1082
    %v1084 = vsel %vm401, %v1069, 0.0
    %1085 = vadd.xlane.f32.xlu0 %v1084
    %v1086 = vpop.xlane.xlu0 %1085
    %v1087 = vsel %vm401, %v1071, 0.0
    %1088 = vadd.xlane.f32.xlu0 %v1087
    %v1089 = vpop.xlane.xlu0 %1088
    %v1090 = vsel %vm401, %v1073, 0.0
    %1091 = vadd.xlane.f32.xlu0 %v1090
    %v1092 = vpop.xlane.xlu0 %1091
    %v1093 = vsel %vm401, %v1075, 0.0
    %1094 = vadd.xlane.f32.xlu0 %v1093
    %v1095 = vpop.xlane.xlu0 %1094
    %v1096 = vsel %vm401, %v1077, 0.0
    %1097 = vadd.xlane.f32.xlu0 %v1096
    %v1098 = vpop.xlane.xlu0 %1097
    %v1099 = vsel %vm401, %v1079, 0.0
    %1100 = vadd.xlane.f32.xlu0 %v1099
    %v1101 = vpop.xlane.xlu0 %1100
    %v1102 = vsel %vm401, %v1081, 0.0
    %1103 = vadd.xlane.f32.xlu0 %v1102
    %v1104 = vpop.xlane.xlu0 %1103
    %v1105 = vsel %vm401, %v1083, 0.0
    %1106 = vadd.xlane.f32.xlu0 %v1105
    %v1107 = vpop.xlane.xlu0 %1106
    %v1108 = vrcp.pop %v1086
    %v1109 = vmul.f32 %v1069, %v1108
    %v1110 = vrcp.pop %v1089
    %v1111 = vmul.f32 %v1071, %v1110
    %v1112 = vrcp.pop %v1092
    %v1113 = vmul.f32 %v1073, %v1112
    %v1114 = vrcp.pop %v1095
    %v1115 = vmul.f32 %v1075, %v1114
    %v1116 = vrcp.pop %v1098
    %v1117 = vmul.f32 %v1077, %v1116
    %v1118 = vrcp.pop %v1101
    %v1119 = vmul.f32 %v1079, %v1118
    %v1120 = vrcp.pop %v1104
    %v1121 = vmul.f32 %v1081, %v1120
    %v1122 = vrcp.pop %v1107
    %v1123 = vmul.f32 %v1083, %v1122
    %1124 = vrot.lane.b32.xlu0 %v377, 64
    %v1125 = vpop.permute.xlu0 %1124
    %v1128 = vsel %vm401, %v1109, 0
    %1130 = vmatprep.subr.mxu0 0.0
    %1131 = vmatpush1.msra.mxu0 %v1125
    %1132 = vmatprep.subr.mxu0 0.0
    %1133 = vmatpush1.msra.mxu0 0.0
    %1134 = vmatprep.subr.mxu0 0.0
    %1135 = vmatpush1.msra.mxu0 0.0
    %1136 = vmatprep.subr.mxu0 0.0
    %1137 = vmatpush1.msra.mxu0 0.0
    %1138 = vmatprep.subr.mxu0 0.0
    %1139 = vmatpush1.msra.mxu0 0.0
    %1140 = vmatprep.subr.mxu0 0.0
    %1141 = vmatpush1.msra.mxu0 0.0
    %1142 = vmatprep.subr.mxu0 0.0
    %1143 = vmatpush1.msra.mxu0 0.0
    %1144 = vmatprep.subr.mxu0 0.0
    %1145 = vmatpush1.msra.mxu0 0.0
    %1146 = vmatprep.subr.mxu0 0.0
    %1147 = vmatpush1.msra.mxu0 0.0
    %1148 = vmatprep.subr.mxu0 0.0
    %1149 = vmatpush1.msra.mxu0 0.0
    %1150 = vmatprep.subr.mxu0 0.0
    %1151 = vmatpush1.msra.mxu0 0.0
    %1152 = vmatprep.subr.mxu0 0.0
    %1153 = vmatpush1.msra.mxu0 0.0
    %1154 = vmatprep.subr.mxu0 0.0
    %1155 = vmatpush1.msra.mxu0 0.0
    %1156 = vmatprep.subr.mxu0 0.0
    %1157 = vmatpush1.msra.mxu0 0.0
    %1158 = vmatprep.subr.mxu0 0.0
    %1159 = vmatpush1.msra.mxu0 0.0
    %1160 = vmatprep.subr.mxu0 0.0
    %1161 = vmatpush1.msra.mxu0 0.0
    %1162 = vmatprep.subr.mxu0 0.0
    %1163 = vmatpush1.msra.mxu0 0.0
    %1164 = vmatprep.subr.mxu0 0.0
    %1165 = vmatpush1.msra.mxu0 0.0
    %1166 = vmatprep.subr.mxu0 0.0
    %1167 = vmatpush1.msra.mxu0 0.0
    %1168 = vmatprep.subr.mxu0 0.0
    %1169 = vmatpush1.msra.mxu0 0.0
    %1170 = vmatprep.subr.mxu0 0.0
    %1171 = vmatpush1.msra.mxu0 0.0
    %1172 = vmatprep.subr.mxu0 0.0
    %1173 = vmatpush1.msra.mxu0 0.0
    %1174 = vmatprep.subr.mxu0 0.0
    %1175 = vmatpush1.msra.mxu0 0.0
    %1176 = vmatprep.subr.mxu0 0.0
    %1177 = vmatpush1.msra.mxu0 0.0
    %1178 = vmatprep.subr.mxu0 0.0
    %1179 = vmatpush1.msra.mxu0 0.0
    %1180 = vmatprep.subr.mxu0 0.0
    %1181 = vmatpush1.msra.mxu0 0.0
    %1182 = vmatprep.subr.mxu0 0.0
    %1183 = vmatpush1.msra.mxu0 0.0
    %1184 = vmatprep.subr.mxu0 0.0
    %1185 = vmatpush1.msra.mxu0 0.0
    %1186 = vmatprep.subr.mxu0 0.0
    %1187 = vmatpush1.msra.mxu0 0.0
    %1188 = vmatprep.subr.mxu0 0.0
    %1189 = vmatpush1.msra.mxu0 0.0
    %1190 = vmatprep.subr.mxu0 0.0
    %1191 = vmatpush1.msra.mxu0 0.0
    %1192 = vmatprep.subr.mxu0 0.0
    %1193 = vmatpush1.msra.mxu0 0.0
    %1194 = vmatprep.mubr.f32.mxu0 0.0
    %1195 = vmatmul.mubr.f32.gmra.mrb[0].mxu0 %v1128
    %v1196 = vpop.f32.mrb[0].mxu0
    %v1197 = vadd.f32 0.0, %v1196
    %v1198 = vpop.f32.mrb[0].mxu0
    %1199 = vdwg.mxu0
    %1200 = vrot.lane.b32.xlu0 %v382, 64
    %v1201 = vpop.permute.xlu0 %1200
    %v1204 = vsel %vm401, %v1111, 0
    %1206 = vmatprep.subr.mxu0 0.0
    %1207 = vmatpush1.msra.mxu0 %v1201
    %1208 = vmatprep.subr.mxu0 0.0
    %1209 = vmatpush1.msra.mxu0 0.0
    %1210 = vmatprep.subr.mxu0 0.0
    %1211 = vmatpush1.msra.mxu0 0.0
    %1212 = vmatprep.subr.mxu0 0.0
    %1213 = vmatpush1.msra.mxu0 0.0
    %1214 = vmatprep.subr.mxu0 0.0
    %1215 = vmatpush1.msra.mxu0 0.0
    %1216 = vmatprep.subr.mxu0 0.0
    %1217 = vmatpush1.msra.mxu0 0.0
    %1218 = vmatprep.subr.mxu0 0.0
    %1219 = vmatpush1.msra.mxu0 0.0
    %1220 = vmatprep.subr.mxu0 0.0
    %1221 = vmatpush1.msra.mxu0 0.0
    %1222 = vmatprep.subr.mxu0 0.0
    %1223 = vmatpush1.msra.mxu0 0.0
    %1224 = vmatprep.subr.mxu0 0.0
    %1225 = vmatpush1.msra.mxu0 0.0
    %1226 = vmatprep.subr.mxu0 0.0
    %1227 = vmatpush1.msra.mxu0 0.0
    %1228 = vmatprep.subr.mxu0 0.0
    %1229 = vmatpush1.msra.mxu0 0.0
    %1230 = vmatprep.subr.mxu0 0.0
    %1231 = vmatpush1.msra.mxu0 0.0
    %1232 = vmatprep.subr.mxu0 0.0
    %1233 = vmatpush1.msra.mxu0 0.0
    %1234 = vmatprep.subr.mxu0 0.0
    %1235 = vmatpush1.msra.mxu0 0.0
    %1236 = vmatprep.subr.mxu0 0.0
    %1237 = vmatpush1.msra.mxu0 0.0
    %1238 = vmatprep.subr.mxu0 0.0
    %1239 = vmatpush1.msra.mxu0 0.0
    %1240 = vmatprep.subr.mxu0 0.0
    %1241 = vmatpush1.msra.mxu0 0.0
    %1242 = vmatprep.subr.mxu0 0.0
    %1243 = vmatpush1.msra.mxu0 0.0
    %1244 = vmatprep.subr.mxu0 0.0
    %1245 = vmatpush1.msra.mxu0 0.0
    %1246 = vmatprep.subr.mxu0 0.0
    %1247 = vmatpush1.msra.mxu0 0.0
    %1248 = vmatprep.subr.mxu0 0.0
    %1249 = vmatpush1.msra.mxu0 0.0
    %1250 = vmatprep.subr.mxu0 0.0
    %1251 = vmatpush1.msra.mxu0 0.0
    %1252 = vmatprep.subr.mxu0 0.0
    %1253 = vmatpush1.msra.mxu0 0.0
    %1254 = vmatprep.subr.mxu0 0.0
    %1255 = vmatpush1.msra.mxu0 0.0
    %1256 = vmatprep.subr.mxu0 0.0
    %1257 = vmatpush1.msra.mxu0 0.0
    %1258 = vmatprep.subr.mxu0 0.0
    %1259 = vmatpush1.msra.mxu0 0.0
    %1260 = vmatprep.subr.mxu0 0.0
    %1261 = vmatpush1.msra.mxu0 0.0
    %1262 = vmatprep.subr.mxu0 0.0
    %1263 = vmatpush1.msra.mxu0 0.0
    %1264 = vmatprep.subr.mxu0 0.0
    %1265 = vmatpush1.msra.mxu0 0.0
    %1266 = vmatprep.subr.mxu0 0.0
    %1267 = vmatpush1.msra.mxu0 0.0
    %1268 = vmatprep.subr.mxu0 0.0
    %1269 = vmatpush1.msra.mxu0 0.0
    %1270 = vmatprep.mubr.f32.mxu0 0.0
    %1271 = vmatmul.mubr.f32.gmra.mrb[0].mxu0 %v1204
    %v1272 = vpop.f32.mrb[0].mxu0
    %v1273 = vadd.f32 0.0, %v1272
    %v1274 = vpop.f32.mrb[0].mxu0
    %1275 = vdwg.mxu0
    %1276 = vrot.lane.b32.xlu0 %v388, 64
    %v1277 = vpop.permute.xlu0 %1276
    %v1280 = vsel %vm401, %v1113, 0
    %1282 = vmatprep.subr.mxu0 0.0
    %1283 = vmatpush1.msra.mxu0 %v1277
    %1284 = vmatprep.subr.mxu0 0.0
    %1285 = vmatpush1.msra.mxu0 0.0
    %1286 = vmatprep.subr.mxu0 0.0
    %1287 = vmatpush1.msra.mxu0 0.0
    %1288 = vmatprep.subr.mxu0 0.0
    %1289 = vmatpush1.msra.mxu0 0.0
    %1290 = vmatprep.subr.mxu0 0.0
    %1291 = vmatpush1.msra.mxu0 0.0
    %1292 = vmatprep.subr.mxu0 0.0
    %1293 = vmatpush1.msra.mxu0 0.0
    %1294 = vmatprep.subr.mxu0 0.0
    %1295 = vmatpush1.msra.mxu0 0.0
    %1296 = vmatprep.subr.mxu0 0.0
    %1297 = vmatpush1.msra.mxu0 0.0
    %1298 = vmatprep.subr.mxu0 0.0
    %1299 = vmatpush1.msra.mxu0 0.0
    %1300 = vmatprep.subr.mxu0 0.0
    %1301 = vmatpush1.msra.mxu0 0.0
    %1302 = vmatprep.subr.mxu0 0.0
    %1303 = vmatpush1.msra.mxu0 0.0
    %1304 = vmatprep.subr.mxu0 0.0
    %1305 = vmatpush1.msra.mxu0 0.0
    %1306 = vmatprep.subr.mxu0 0.0
    %1307 = vmatpush1.msra.mxu0 0.0
    %1308 = vmatprep.subr.mxu0 0.0
    %1309 = vmatpush1.msra.mxu0 0.0
    %1310 = vmatprep.subr.mxu0 0.0
    %1311 = vmatpush1.msra.mxu0 0.0
    %1312 = vmatprep.subr.mxu0 0.0
    %1313 = vmatpush1.msra.mxu0 0.0
    %1314 = vmatprep.subr.mxu0 0.0
    %1315 = vmatpush1.msra.mxu0 0.0
    %1316 = vmatprep.subr.mxu0 0.0
    %1317 = vmatpush1.msra.mxu0 0.0
    %1318 = vmatprep.subr.mxu0 0.0
    %1319 = vmatpush1.msra.mxu0 0.0
    %1320 = vmatprep.subr.mxu0 0.0
    %1321 = vmatpush1.msra.mxu0 0.0
    %1322 = vmatprep.subr.mxu0 0.0
    %1323 = vmatpush1.msra.mxu0 0.0
    %1324 = vmatprep.subr.mxu0 0.0
    %1325 = vmatpush1.msra.mxu0 0.0
    %1326 = vmatprep.subr.mxu0 0.0
    %1327 = vmatpush1.msra.mxu0 0.0
    %1328 = vmatprep.subr.mxu0 0.0
    %1329 = vmatpush1.msra.mxu0 0.0
    %1330 = vmatprep.subr.mxu0 0.0
    %1331 = vmatpush1.msra.mxu0 0.0
    %1332 = vmatprep.subr.mxu0 0.0
    %1333 = vmatpush1.msra.mxu0 0.0
    %1334 = vmatprep.subr.mxu0 0.0
    %1335 = vmatpush1.msra.mxu0 0.0
    %1336 = vmatprep.subr.mxu0 0.0
    %1337 = vmatpush1.msra.mxu0 0.0
    %1338 = vmatprep.subr.mxu0 0.0
    %1339 = vmatpush1.msra.mxu0 0.0
    %1340 = vmatprep.subr.mxu0 0.0
    %1341 = vmatpush1.msra.mxu0 0.0
    %1342 = vmatprep.subr.mxu0 0.0
    %1343 = vmatpush1.msra.mxu0 0.0
    %1344 = vmatprep.subr.mxu0 0.0
    %1345 = vmatpush1.msra.mxu0 0.0
    %1346 = vmatprep.mubr.f32.mxu0 0.0
    %1347 = vmatmul.mubr.f32.gmra.mrb[0].mxu0 %v1280
    %v1348 = vpop.f32.mrb[0].mxu0
    %v1349 = vadd.f32 0.0, %v1348
    %v1350 = vpop.f32.mrb[0].mxu0
    %1351 = vdwg.mxu0
    %1352 = vrot.lane.b32.xlu0 %v390, 64
    %v1353 = vpop.permute.xlu0 %1352
    %v1356 = vsel %vm401, %v1115, 0
    %1358 = vmatprep.subr.mxu0 0.0
    %1359 = vmatpush1.msra.mxu0 %v1353
    %1360 = vmatprep.subr.mxu0 0.0
    %1361 = vmatpush1.msra.mxu0 0.0
    %1362 = vmatprep.subr.mxu0 0.0
    %1363 = vmatpush1.msra.mxu0 0.0
    %1364 = vmatprep.subr.mxu0 0.0
    %1365 = vmatpush1.msra.mxu0 0.0
    %1366 = vmatprep.subr.mxu0 0.0
    %1367 = vmatpush1.msra.mxu0 0.0
    %1368 = vmatprep.subr.mxu0 0.0
    %1369 = vmatpush1.msra.mxu0 0.0
    %1370 = vmatprep.subr.mxu0 0.0
    %1371 = vmatpush1.msra.mxu0 0.0
    %1372 = vmatprep.subr.mxu0 0.0
    %1373 = vmatpush1.msra.mxu0 0.0
    %1374 = vmatprep.subr.mxu0 0.0
    %1375 = vmatpush1.msra.mxu0 0.0
    %1376 = vmatprep.subr.mxu0 0.0
    %1377 = vmatpush1.msra.mxu0 0.0
    %1378 = vmatprep.subr.mxu0 0.0
    %1379 = vmatpush1.msra.mxu0 0.0
    %1380 = vmatprep.subr.mxu0 0.0
    %1381 = vmatpush1.msra.mxu0 0.0
    %1382 = vmatprep.subr.mxu0 0.0
    %1383 = vmatpush1.msra.mxu0 0.0
    %1384 = vmatprep.subr.mxu0 0.0
    %1385 = vmatpush1.msra.mxu0 0.0
    %1386 = vmatprep.subr.mxu0 0.0
    %1387 = vmatpush1.msra.mxu0 0.0
    %1388 = vmatprep.subr.mxu0 0.0
    %1389 = vmatpush1.msra.mxu0 0.0
    %1390 = vmatprep.subr.mxu0 0.0
    %1391 = vmatpush1.msra.mxu0 0.0
    %1392 = vmatprep.subr.mxu0 0.0
    %1393 = vmatpush1.msra.mxu0 0.0
    %1394 = vmatprep.subr.mxu0 0.0
    %1395 = vmatpush1.msra.mxu0 0.0
    %1396 = vmatprep.subr.mxu0 0.0
    %1397 = vmatpush1.msra.mxu0 0.0
    %1398 = vmatprep.subr.mxu0 0.0
    %1399 = vmatpush1.msra.mxu0 0.0
    %1400 = vmatprep.subr.mxu0 0.0
    %1401 = vmatpush1.msra.mxu0 0.0
    %1402 = vmatprep.subr.mxu0 0.0
    %1403 = vmatpush1.msra.mxu0 0.0
    %1404 = vmatprep.subr.mxu0 0.0
    %1405 = vmatpush1.msra.mxu0 0.0
    %1406 = vmatprep.subr.mxu0 0.0
    %1407 = vmatpush1.msra.mxu0 0.0
    %1408 = vmatprep.subr.mxu0 0.0
    %1409 = vmatpush1.msra.mxu0 0.0
    %1410 = vmatprep.subr.mxu0 0.0
    %1411 = vmatpush1.msra.mxu0 0.0
    %1412 = vmatprep.subr.mxu0 0.0
    %1413 = vmatpush1.msra.mxu0 0.0
    %1414 = vmatprep.subr.mxu0 0.0
    %1415 = vmatpush1.msra.mxu0 0.0
    %1416 = vmatprep.subr.mxu0 0.0
    %1417 = vmatpush1.msra.mxu0 0.0
    %1418 = vmatprep.subr.mxu0 0.0
    %1419 = vmatpush1.msra.mxu0 0.0
    %1420 = vmatprep.subr.mxu0 0.0
    %1421 = vmatpush1.msra.mxu0 0.0
    %1422 = vmatprep.mubr.f32.mxu0 0.0
    %1423 = vmatmul.mubr.f32.gmra.mrb[0].mxu0 %v1356
    %v1424 = vpop.f32.mrb[0].mxu0
    %v1425 = vadd.f32 0.0, %v1424
    %v1426 = vpop.f32.mrb[0].mxu0
    %1427 = vdwg.mxu0
    %1428 = vrot.lane.b32.xlu0 %v392, 64
    %v1429 = vpop.permute.xlu0 %1428
    %v1432 = vsel %vm401, %v1117, 0
    %1434 = vmatprep.subr.mxu0 0.0
    %1435 = vmatpush1.msra.mxu0 %v1429
    %1436 = vmatprep.subr.mxu0 0.0
    %1437 = vmatpush1.msra.mxu0 0.0
    %1438 = vmatprep.subr.mxu0 0.0
    %1439 = vmatpush1.msra.mxu0 0.0
    %1440 = vmatprep.subr.mxu0 0.0
    %1441 = vmatpush1.msra.mxu0 0.0
    %1442 = vmatprep.subr.mxu0 0.0
    %1443 = vmatpush1.msra.mxu0 0.0
    %1444 = vmatprep.subr.mxu0 0.0
    %1445 = vmatpush1.msra.mxu0 0.0
    %1446 = vmatprep.subr.mxu0 0.0
    %1447 = vmatpush1.msra.mxu0 0.0
    %1448 = vmatprep.subr.mxu0 0.0
    %1449 = vmatpush1.msra.mxu0 0.0
    %1450 = vmatprep.subr.mxu0 0.0
    %1451 = vmatpush1.msra.mxu0 0.0
    %1452 = vmatprep.subr.mxu0 0.0
    %1453 = vmatpush1.msra.mxu0 0.0
    %1454 = vmatprep.subr.mxu0 0.0
    %1455 = vmatpush1.msra.mxu0 0.0
    %1456 = vmatprep.subr.mxu0 0.0
    %1457 = vmatpush1.msra.mxu0 0.0
    %1458 = vmatprep.subr.mxu0 0.0
    %1459 = vmatpush1.msra.mxu0 0.0
    %1460 = vmatprep.subr.mxu0 0.0
    %1461 = vmatpush1.msra.mxu0 0.0
    %1462 = vmatprep.subr.mxu0 0.0
    %1463 = vmatpush1.msra.mxu0 0.0
    %1464 = vmatprep.subr.mxu0 0.0
    %1465 = vmatpush1.msra.mxu0 0.0
    %1466 = vmatprep.subr.mxu0 0.0
    %1467 = vmatpush1.msra.mxu0 0.0
    %1468 = vmatprep.subr.mxu0 0.0
    %1469 = vmatpush1.msra.mxu0 0.0
    %1470 = vmatprep.subr.mxu0 0.0
    %1471 = vmatpush1.msra.mxu0 0.0
    %1472 = vmatprep.subr.mxu0 0.0
    %1473 = vmatpush1.msra.mxu0 0.0
    %1474 = vmatprep.subr.mxu0 0.0
    %1475 = vmatpush1.msra.mxu0 0.0
    %1476 = vmatprep.subr.mxu0 0.0
    %1477 = vmatpush1.msra.mxu0 0.0
    %1478 = vmatprep.subr.mxu0 0.0
    %1479 = vmatpush1.msra.mxu0 0.0
    %1480 = vmatprep.subr.mxu0 0.0
    %1481 = vmatpush1.msra.mxu0 0.0
    %1482 = vmatprep.subr.mxu0 0.0
    %1483 = vmatpush1.msra.mxu0 0.0
    %1484 = vmatprep.subr.mxu0 0.0
    %1485 = vmatpush1.msra.mxu0 0.0
    %1486 = vmatprep.subr.mxu0 0.0
    %1487 = vmatpush1.msra.mxu0 0.0
    %1488 = vmatprep.subr.mxu0 0.0
    %1489 = vmatpush1.msra.mxu0 0.0
    %1490 = vmatprep.subr.mxu0 0.0
    %1491 = vmatpush1.msra.mxu0 0.0
    %1492 = vmatprep.subr.mxu0 0.0
    %1493 = vmatpush1.msra.mxu0 0.0
    %1494 = vmatprep.subr.mxu0 0.0
    %1495 = vmatpush1.msra.mxu0 0.0
    %1496 = vmatprep.subr.mxu0 0.0
    %1497 = vmatpush1.msra.mxu0 0.0
    %1498 = vmatprep.mubr.f32.mxu0 0.0
    %1499 = vmatmul.mubr.f32.gmra.mrb[0].mxu0 %v1432
    %v1500 = vpop.f32.mrb[0].mxu0
    %v1501 = vadd.f32 0.0, %v1500
    %v1502 = vpop.f32.mrb[0].mxu0
    %1503 = vdwg.mxu0
    %1504 = vrot.lane.b32.xlu0 %v394, 64
    %v1505 = vpop.permute.xlu0 %1504
    %v1508 = vsel %vm401, %v1119, 0
    %1510 = vmatprep.subr.mxu0 0.0
    %1511 = vmatpush1.msra.mxu0 %v1505
    %1512 = vmatprep.subr.mxu0 0.0
    %1513 = vmatpush1.msra.mxu0 0.0
    %1514 = vmatprep.subr.mxu0 0.0
    %1515 = vmatpush1.msra.mxu0 0.0
    %1516 = vmatprep.subr.mxu0 0.0
    %1517 = vmatpush1.msra.mxu0 0.0
    %1518 = vmatprep.subr.mxu0 0.0
    %1519 = vmatpush1.msra.mxu0 0.0
    %1520 = vmatprep.subr.mxu0 0.0
    %1521 = vmatpush1.msra.mxu0 0.0
    %1522 = vmatprep.subr.mxu0 0.0
    %1523 = vmatpush1.msra.mxu0 0.0
    %1524 = vmatprep.subr.mxu0 0.0
    %1525 = vmatpush1.msra.mxu0 0.0
    %1526 = vmatprep.subr.mxu0 0.0
    %1527 = vmatpush1.msra.mxu0 0.0
    %1528 = vmatprep.subr.mxu0 0.0
    %1529 = vmatpush1.msra.mxu0 0.0
    %1530 = vmatprep.subr.mxu0 0.0
    %1531 = vmatpush1.msra.mxu0 0.0
    %1532 = vmatprep.subr.mxu0 0.0
    %1533 = vmatpush1.msra.mxu0 0.0
    %1534 = vmatprep.subr.mxu0 0.0
    %1535 = vmatpush1.msra.mxu0 0.0
    %1536 = vmatprep.subr.mxu0 0.0
    %1537 = vmatpush1.msra.mxu0 0.0
    %1538 = vmatprep.subr.mxu0 0.0
    %1539 = vmatpush1.msra.mxu0 0.0
    %1540 = vmatprep.subr.mxu0 0.0
    %1541 = vmatpush1.msra.mxu0 0.0
    %1542 = vmatprep.subr.mxu0 0.0
    %1543 = vmatpush1.msra.mxu0 0.0
    %1544 = vmatprep.subr.mxu0 0.0
    %1545 = vmatpush1.msra.mxu0 0.0
    %1546 = vmatprep.subr.mxu0 0.0
    %1547 = vmatpush1.msra.mxu0 0.0
    %1548 = vmatprep.subr.mxu0 0.0
    %1549 = vmatpush1.msra.mxu0 0.0
    %1550 = vmatprep.subr.mxu0 0.0
    %1551 = vmatpush1.msra.mxu0 0.0
    %1552 = vmatprep.subr.mxu0 0.0
    %1553 = vmatpush1.msra.mxu0 0.0
    %1554 = vmatprep.subr.mxu0 0.0
    %1555 = vmatpush1.msra.mxu0 0.0
    %1556 = vmatprep.subr.mxu0 0.0
    %1557 = vmatpush1.msra.mxu0 0.0
    %1558 = vmatprep.subr.mxu0 0.0
    %1559 = vmatpush1.msra.mxu0 0.0
    %1560 = vmatprep.subr.mxu0 0.0
    %1561 = vmatpush1.msra.mxu0 0.0
    %1562 = vmatprep.subr.mxu0 0.0
    %1563 = vmatpush1.msra.mxu0 0.0
    %1564 = vmatprep.subr.mxu0 0.0
    %1565 = vmatpush1.msra.mxu0 0.0
    %1566 = vmatprep.subr.mxu0 0.0
    %1567 = vmatpush1.msra.mxu0 0.0
    %1568 = vmatprep.subr.mxu0 0.0
    %1569 = vmatpush1.msra.mxu0 0.0
    %1570 = vmatprep.subr.mxu0 0.0
    %1571 = vmatpush1.msra.mxu0 0.0
    %1572 = vmatprep.subr.mxu0 0.0
    %1573 = vmatpush1.msra.mxu0 0.0
    %1574 = vmatprep.mubr.f32.mxu0 0.0
    %1575 = vmatmul.mubr.f32.gmra.mrb[0].mxu0 %v1508
    %v1576 = vpop.f32.mrb[0].mxu0
    %v1577 = vadd.f32 0.0, %v1576
    %v1578 = vpop.f32.mrb[0].mxu0
    %1579 = vdwg.mxu0
    %1580 = vrot.lane.b32.xlu0 %v396, 64
    %v1581 = vpop.permute.xlu0 %1580
    %v1584 = vsel %vm401, %v1121, 0
    %1586 = vmatprep.subr.mxu0 0.0
    %1587 = vmatpush1.msra.mxu0 %v1581
    %1588 = vmatprep.subr.mxu0 0.0
    %1589 = vmatpush1.msra.mxu0 0.0
    %1590 = vmatprep.subr.mxu0 0.0
    %1591 = vmatpush1.msra.mxu0 0.0
    %1592 = vmatprep.subr.mxu0 0.0
    %1593 = vmatpush1.msra.mxu0 0.0
    %1594 = vmatprep.subr.mxu0 0.0
    %1595 = vmatpush1.msra.mxu0 0.0
    %1596 = vmatprep.subr.mxu0 0.0
    %1597 = vmatpush1.msra.mxu0 0.0
    %1598 = vmatprep.subr.mxu0 0.0
    %1599 = vmatpush1.msra.mxu0 0.0
    %1600 = vmatprep.subr.mxu0 0.0
    %1601 = vmatpush1.msra.mxu0 0.0
    %1602 = vmatprep.subr.mxu0 0.0
    %1603 = vmatpush1.msra.mxu0 0.0
    %1604 = vmatprep.subr.mxu0 0.0
    %1605 = vmatpush1.msra.mxu0 0.0
    %1606 = vmatprep.subr.mxu0 0.0
    %1607 = vmatpush1.msra.mxu0 0.0
    %1608 = vmatprep.subr.mxu0 0.0
    %1609 = vmatpush1.msra.mxu0 0.0
    %1610 = vmatprep.subr.mxu0 0.0
    %1611 = vmatpush1.msra.mxu0 0.0
    %1612 = vmatprep.subr.mxu0 0.0
    %1613 = vmatpush1.msra.mxu0 0.0
    %1614 = vmatprep.subr.mxu0 0.0
    %1615 = vmatpush1.msra.mxu0 0.0
    %1616 = vmatprep.subr.mxu0 0.0
    %1617 = vmatpush1.msra.mxu0 0.0
    %1618 = vmatprep.subr.mxu0 0.0
    %1619 = vmatpush1.msra.mxu0 0.0
    %1620 = vmatprep.subr.mxu0 0.0
    %1621 = vmatpush1.msra.mxu0 0.0
    %1622 = vmatprep.subr.mxu0 0.0
    %1623 = vmatpush1.msra.mxu0 0.0
    %1624 = vmatprep.subr.mxu0 0.0
    %1625 = vmatpush1.msra.mxu0 0.0
    %1626 = vmatprep.subr.mxu0 0.0
    %1627 = vmatpush1.msra.mxu0 0.0
    %1628 = vmatprep.subr.mxu0 0.0
    %1629 = vmatpush1.msra.mxu0 0.0
    %1630 = vmatprep.subr.mxu0 0.0
    %1631 = vmatpush1.msra.mxu0 0.0
    %1632 = vmatprep.subr.mxu0 0.0
    %1633 = vmatpush1.msra.mxu0 0.0
    %1634 = vmatprep.subr.mxu0 0.0
    %1635 = vmatpush1.msra.mxu0 0.0
    %1636 = vmatprep.subr.mxu0 0.0
    %1637 = vmatpush1.msra.mxu0 0.0
    %1638 = vmatprep.subr.mxu0 0.0
    %1639 = vmatpush1.msra.mxu0 0.0
    %1640 = vmatprep.subr.mxu0 0.0
    %1641 = vmatpush1.msra.mxu0 0.0
    %1642 = vmatprep.subr.mxu0 0.0
    %1643 = vmatpush1.msra.mxu0 0.0
    %1644 = vmatprep.subr.mxu0 0.0
    %1645 = vmatpush1.msra.mxu0 0.0
    %1646 = vmatprep.subr.mxu0 0.0
    %1647 = vmatpush1.msra.mxu0 0.0
    %1648 = vmatprep.subr.mxu0 0.0
    %1649 = vmatpush1.msra.mxu0 0.0
    %1650 = vmatprep.mubr.f32.mxu0 0.0
    %1651 = vmatmul.mubr.f32.gmra.mrb[0].mxu0 %v1584
    %v1652 = vpop.f32.mrb[0].mxu0
    %v1653 = vadd.f32 0.0, %v1652
    %v1654 = vpop.f32.mrb[0].mxu0
    %1655 = vdwg.mxu0
    %1656 = vrot.lane.b32.xlu0 %v398, 64
    %v1657 = vpop.permute.xlu0 %1656
    %v1660 = vsel %vm401, %v1123, 0
    %1662 = vmatprep.subr.mxu0 0.0
    %1663 = vmatpush1.msra.mxu0 %v1657
    %1664 = vmatprep.subr.mxu0 0.0
    %1665 = vmatpush1.msra.mxu0 0.0
    %1666 = vmatprep.subr.mxu0 0.0
    %1667 = vmatpush1.msra.mxu0 0.0
    %1668 = vmatprep.subr.mxu0 0.0
    %1669 = vmatpush1.msra.mxu0 0.0
    %1670 = vmatprep.subr.mxu0 0.0
    %1671 = vmatpush1.msra.mxu0 0.0
    %1672 = vmatprep.subr.mxu0 0.0
    %1673 = vmatpush1.msra.mxu0 0.0
    %1674 = vmatprep.subr.mxu0 0.0
    %1675 = vmatpush1.msra.mxu0 0.0
    %1676 = vmatprep.subr.mxu0 0.0
    %1677 = vmatpush1.msra.mxu0 0.0
    %1678 = vmatprep.subr.mxu0 0.0
    %1679 = vmatpush1.msra.mxu0 0.0
    %1680 = vmatprep.subr.mxu0 0.0
    %1681 = vmatpush1.msra.mxu0 0.0
    %1682 = vmatprep.subr.mxu0 0.0
    %1683 = vmatpush1.msra.mxu0 0.0
    %1684 = vmatprep.subr.mxu0 0.0
    %1685 = vmatpush1.msra.mxu0 0.0
    %1686 = vmatprep.subr.mxu0 0.0
    %1687 = vmatpush1.msra.mxu0 0.0
    %1688 = vmatprep.subr.mxu0 0.0
    %1689 = vmatpush1.msra.mxu0 0.0
    %1690 = vmatprep.subr.mxu0 0.0
    %1691 = vmatpush1.msra.mxu0 0.0
    %1692 = vmatprep.subr.mxu0 0.0
    %1693 = vmatpush1.msra.mxu0 0.0
    %1694 = vmatprep.subr.mxu0 0.0
    %1695 = vmatpush1.msra.mxu0 0.0
    %1696 = vmatprep.subr.mxu0 0.0
    %1697 = vmatpush1.msra.mxu0 0.0
    %1698 = vmatprep.subr.mxu0 0.0
    %1699 = vmatpush1.msra.mxu0 0.0
    %1700 = vmatprep.subr.mxu0 0.0
    %1701 = vmatpush1.msra.mxu0 0.0
    %1702 = vmatprep.subr.mxu0 0.0
    %1703 = vmatpush1.msra.mxu0 0.0
    %1704 = vmatprep.subr.mxu0 0.0
    %1705 = vmatpush1.msra.mxu0 0.0
    %1706 = vmatprep.subr.mxu0 0.0
    %1707 = vmatpush1.msra.mxu0 0.0
    %1708 = vmatprep.subr.mxu0 0.0
    %1709 = vmatpush1.msra.mxu0 0.0
    %1710 = vmatprep.subr.mxu0 0.0
    %1711 = vmatpush1.msra.mxu0 0.0
    %1712 = vmatprep.subr.mxu0 0.0
    %1713 = vmatpush1.msra.mxu0 0.0
    %1714 = vmatprep.subr.mxu0 0.0
    %1715 = vmatpush1.msra.mxu0 0.0
    %1716 = vmatprep.subr.mxu0 0.0
    %1717 = vmatpush1.msra.mxu0 0.0
    %1718 = vmatprep.subr.mxu0 0.0
    %1719 = vmatpush1.msra.mxu0 0.0
    %1720 = vmatprep.subr.mxu0 0.0
    %1721 = vmatpush1.msra.mxu0 0.0
    %1722 = vmatprep.subr.mxu0 0.0
    %1723 = vmatpush1.msra.mxu0 0.0
    %1724 = vmatprep.subr.mxu0 0.0
    %1725 = vmatpush1.msra.mxu0 0.0
    %1726 = vmatprep.mubr.f32.mxu0 0.0
    %1727 = vmatmul.mubr.f32.gmra.mrb[0].mxu0 %v1660
    %v1728 = vpop.f32.mrb[0].mxu0
    %v1729 = vadd.f32 0.0, %v1728
    %v1730 = vpop.f32.mrb[0].mxu0
    %1731 = vdwg.mxu0
    %1734 = vrot.lane.b32.xlu0 %v1349, 8
    %v1735 = vpop.permute.xlu0 %1734
    %1736 = vrot.lane.b32.xlu0 %v1425, 8
    %v1737 = vpop.permute.xlu0 %1736
    %1742 = vrot.lane.b32.xlu0 %v1501, 16
    %v1743 = vpop.permute.xlu0 %1742
    %1744 = vrot.lane.b32.xlu0 %v1577, 16
    %v1745 = vpop.permute.xlu0 %1744
    %1750 = vrot.lane.b32.xlu0 %v1653, 24
    %v1751 = vpop.permute.xlu0 %1750
    %1752 = vrot.lane.b32.xlu0 %v1729, 24
    %v1753 = vpop.permute.xlu0 %1752
    %v1756 = vsel %vm401, %v1197, %v1735
    %v1757 = vsel %vm401, %v1273, %v1737
    %vm1758 = vcmask 130048
    %v1759 = vsel %vm1758, %v1756, %v1743
    %v1760 = vsel %vm1758, %v1757, %v1745
    %vm1761 = vcmask 195584
    %v1762 = vsel %vm1761, %v1759, %v1751
    %v1763 = vsel %vm1761, %v1760, %v1753
    %v1764 = vld [vmem:[#allocation2 + $0x38] sm:$0xff]
    %v1765 = vld [vmem:[#allocation2 + $0x40] sm:$0xff]
    %v1766 = vld [vmem:[#allocation2 + $0x48] sm:$0xff]
    %v1767 = vld [vmem:[#allocation2 + $0x50] sm:$0xff]
    %v1768 = vld [vmem:[#allocation2 + $0x58] sm:$0x1]
    %v1769 = vlaneseq
    %v1770 = vshrl.u32 %v1769, 7
    %v1771 = vsub.s32 0, %v1770
    %v1772 = vrot.slane %v1768, %v1771
    %v1774 = vsel %vm65, %v1762, 0
    %v1777 = vsel %vm65, %v1763, 0
    %1779 = vmatprep.subr.mxu0 0.0
    %1780 = vmatpush1.msra.mxu0 %v1764
    %1781 = vmatprep.subr.mxu0 0.0
    %1782 = vmatpush1.msra.mxu0 %v1765
    %1783 = vmatprep.subr.mxu0 0.0
    %1784 = vmatpush1.msra.mxu0 %v1766
    %1785 = vmatprep.subr.mxu0 0.0
    %1786 = vmatpush1.msra.mxu0 %v1767
    %1787 = vmatprep.subr.mxu0 0.0
    %1788 = vmatpush1.msra.mxu0 0.0
    %1789 = vmatprep.subr.mxu0 0.0
    %1790 = vmatpush1.msra.mxu0 0.0
    %1791 = vmatprep.subr.mxu0 0.0
    %1792 = vmatpush1.msra.mxu0 0.0
    %1793 = vmatprep.subr.mxu0 0.0
    %1794 = vmatpush1.msra.mxu0 0.0
    %1795 = vmatprep.subr.mxu0 0.0
    %1796 = vmatpush1.msra.mxu0 0.0
    %1797 = vmatprep.subr.mxu0 0.0
    %1798 = vmatpush1.msra.mxu0 0.0
    %1799 = vmatprep.subr.mxu0 0.0
    %1800 = vmatpush1.msra.mxu0 0.0
    %1801 = vmatprep.subr.mxu0 0.0
    %1802 = vmatpush1.msra.mxu0 0.0
    %1803 = vmatprep.subr.mxu0 0.0
    %1804 = vmatpush1.msra.mxu0 0.0
    %1805 = vmatprep.subr.mxu0 0.0
    %1806 = vmatpush1.msra.mxu0 0.0
    %1807 = vmatprep.subr.mxu0 0.0
    %1808 = vmatpush1.msra.mxu0 0.0
    %1809 = vmatprep.subr.mxu0 0.0
    %1810 = vmatpush1.msra.mxu0 0.0
    %1811 = vmatprep.subr.mxu0 0.0
    %1812 = vmatpush1.msra.mxu0 0.0
    %1813 = vmatprep.subr.mxu0 0.0
    %1814 = vmatpush1.msra.mxu0 0.0
    %1815 = vmatprep.subr.mxu0 0.0
    %1816 = vmatpush1.msra.mxu0 0.0
    %1817 = vmatprep.subr.mxu0 0.0
    %1818 = vmatpush1.msra.mxu0 0.0
    %1819 = vmatprep.subr.mxu0 0.0
    %1820 = vmatpush1.msra.mxu0 0.0
    %1821 = vmatprep.subr.mxu0 0.0
    %1822 = vmatpush1.msra.mxu0 0.0
    %1823 = vmatprep.subr.mxu0 0.0
    %1824 = vmatpush1.msra.mxu0 0.0
    %1825 = vmatprep.subr.mxu0 0.0
    %1826 = vmatpush1.msra.mxu0 0.0
    %1827 = vmatprep.subr.mxu0 0.0
    %1828 = vmatpush1.msra.mxu0 0.0
    %1829 = vmatprep.subr.mxu0 0.0
    %1830 = vmatpush1.msra.mxu0 0.0
    %1831 = vmatprep.subr.mxu0 0.0
    %1832 = vmatpush1.msra.mxu0 0.0
    %1833 = vmatprep.subr.mxu0 0.0
    %1834 = vmatpush1.msra.mxu0 0.0
    %1835 = vmatprep.subr.mxu0 0.0
    %1836 = vmatpush1.msra.mxu0 0.0
    %1837 = vmatprep.subr.mxu0 0.0
    %1838 = vmatpush1.msra.mxu0 0.0
    %1839 = vmatprep.subr.mxu0 0.0
    %1840 = vmatpush1.msra.mxu0 0.0
    %1841 = vmatprep.subr.mxu0 0.0
    %1842 = vmatpush1.msra.mxu0 0.0
    %1843 = vmatprep.mubr.f32.mxu0 0.0
    %1844 = vmatmul.mubr.f32.gmra.mrb[0].mxu0 %v1774
    %v1845 = vpop.f32.mrb[0].mxu0
    %v1846 = vadd.f32 %v1772, %v1845
    %v1847 = vpop.f32.mrb[0].mxu0
    %1848 = vmatprep.mubr.f32.mxu0 0.0
    %1849 = vmatmul.mubr.f32.gmra.mrb[0].mxu0 %v1777
    %v1850 = vpop.f32.mrb[0].mxu0
    %v1851 = vadd.f32 %v1772, %v1850
    %v1852 = vpop.f32.mrb[0].mxu0
    %1853 = vdwg.mxu0
    %v1854 = vadd.f32 %v38, %v1846
    %v1855 = vadd.f32 %v39, %v1851
    %v1856 = vld [vmem:[#allocation2 + $0x60] sm:$0x1]
    %v1857 = vld [vmem:[#allocation2 + $0x68] sm:$0x1]
    %v1858 = vsel %vm65, %v1854, 0.0
    %1859 = vadd.xlane.f32.xlu0 %v1858
    %v1860 = vpop.xlane.xlu0 %1859
    %v1861 = vsel %vm65, %v1855, 0.0
    %1862 = vadd.xlane.f32.xlu0 %v1861
    %v1863 = vpop.xlane.xlu0 %1862
    %v1864 = vmul.f32 %v1860, %v247
    %v1865 = vmul.f32 %v1863, %v247
    %v1866 = vsub.f32 %v1854, %v1864
    %v1867 = vsub.f32 %v1855, %v1865
    %v1868 = vmul.f32 %v1866, %v1866
    %v1869 = vmul.f32 %v1867, %v1867
    %v1870 = vsel %vm65, %v1868, 0.0
    %1871 = vadd.xlane.f32.xlu0 %v1870
    %v1872 = vpop.xlane.xlu0 %1871
    %v1873 = vsel %vm65, %v1869, 0.0
    %1874 = vadd.xlane.f32.xlu0 %v1873
    %v1875 = vpop.xlane.xlu0 %1874
    %v1876 = vmul.f32 %v1872, %v260
    %v1877 = vmul.f32 %v1875, %v260
    %v1878 = vlaneseq
    %v1879 = vshrl.u32 %v1878, 7
    %v1880 = vsub.s32 0, %v1879
    %v1881 = vrot.slane %v1856, %v1880
    %v1882 = vmul.f32 %v1881, %v1866
    %v1883 = vmul.f32 %v1881, %v1867
    %v1884 = vrsqrt.pop %v1876
    %v1885 = vmul.f32 %v1876, %v1884
    %vm1886 = vcmp.eq.f32.partialorder %v1876, inf
    %v1887 = vsel %vm1886, %v1876, %v1885
    %vm1888 = vcmp.eq.f32.partialorder %v1876, 0.0
    %v1889 = vand.u32 %v1876, 2147483648
    %v1890 = vsel %vm1888, %v1889, %v1887
    %v1891 = vrsqrt.pop %v1877
    %v1892 = vmul.f32 %v1877, %v1891
    %vm1893 = vcmp.eq.f32.partialorder %v1877, inf
    %v1894 = vsel %vm1893, %v1877, %v1892
    %vm1895 = vcmp.eq.f32.partialorder %v1877, 0.0
    %v1896 = vand.u32 %v1877, 2147483648
    %v1897 = vsel %vm1895, %v1896, %v1894
    %v1898 = vadd.f32 %v1890, 1e-06
    %v1899 = vadd.f32 %v1897, 1e-06
    %v1900 = vrcp.pop %v1898
    %v1901 = vmul.f32 %v1882, %v1900
    %v1902 = vrcp.pop %v1899
    %v1903 = vmul.f32 %v1883, %v1902
    %v1904 = vlaneseq
    %v1905 = vshrl.u32 %v1904, 7
    %v1906 = vsub.s32 0, %v1905
    %v1907 = vrot.slane %v1857, %v1906
    %v1908 = vadd.f32 %v1901, %v1907
    %v1909 = vadd.f32 %v1903, %v1907
    %v1910 = vld [vmem:[#allocation2 + $0x70] sm:$0xff]
    %v1911 = vld [vmem:[#allocation2 + $0x78] sm:$0xff]
    %v1912 = vld [vmem:[#allocation2 + $0x80] sm:$0xff]
    %v1913 = vld [vmem:[#allocation2 + $0x88] sm:$0xff]
    %v1914 = vld [vmem:[#allocation2 + $0x90] sm:$0x1]
    %v1915 = vlaneseq
    %v1916 = vshrl.u32 %v1915, 7
    %v1917 = vsub.s32 0, %v1916
    %v1918 = vrot.slane %v1914, %v1917
    %v1920 = vsel %vm65, %v1908, 0
    %v1923 = vsel %vm65, %v1909, 0
    %1925 = vmatprep.subr.mxu0 0.0
    %1926 = vmatpush1.msra.mxu0 %v1910
    %1927 = vmatprep.subr.mxu0 0.0
    %1928 = vmatpush1.msra.mxu0 %v1911
    %1929 = vmatprep.subr.mxu0 0.0
    %1930 = vmatpush1.msra.mxu0 %v1912
    %1931 = vmatprep.subr.mxu0 0.0
    %1932 = vmatpush1.msra.mxu0 %v1913
    %1933 = vmatprep.subr.mxu0 0.0
    %1934 = vmatpush1.msra.mxu0 0.0
    %1935 = vmatprep.subr.mxu0 0.0
    %1936 = vmatpush1.msra.mxu0 0.0
    %1937 = vmatprep.subr.mxu0 0.0
    %1938 = vmatpush1.msra.mxu0 0.0
    %1939 = vmatprep.subr.mxu0 0.0
    %1940 = vmatpush1.msra.mxu0 0.0
    %1941 = vmatprep.subr.mxu0 0.0
    %1942 = vmatpush1.msra.mxu0 0.0
    %1943 = vmatprep.subr.mxu0 0.0
    %1944 = vmatpush1.msra.mxu0 0.0
    %1945 = vmatprep.subr.mxu0 0.0
    %1946 = vmatpush1.msra.mxu0 0.0
    %1947 = vmatprep.subr.mxu0 0.0
    %1948 = vmatpush1.msra.mxu0 0.0
    %1949 = vmatprep.subr.mxu0 0.0
    %1950 = vmatpush1.msra.mxu0 0.0
    %1951 = vmatprep.subr.mxu0 0.0
    %1952 = vmatpush1.msra.mxu0 0.0
    %1953 = vmatprep.subr.mxu0 0.0
    %1954 = vmatpush1.msra.mxu0 0.0
    %1955 = vmatprep.subr.mxu0 0.0
    %1956 = vmatpush1.msra.mxu0 0.0
    %1957 = vmatprep.subr.mxu0 0.0
    %1958 = vmatpush1.msra.mxu0 0.0
    %1959 = vmatprep.subr.mxu0 0.0
    %1960 = vmatpush1.msra.mxu0 0.0
    %1961 = vmatprep.subr.mxu0 0.0
    %1962 = vmatpush1.msra.mxu0 0.0
    %1963 = vmatprep.subr.mxu0 0.0
    %1964 = vmatpush1.msra.mxu0 0.0
    %1965 = vmatprep.subr.mxu0 0.0
    %1966 = vmatpush1.msra.mxu0 0.0
    %1967 = vmatprep.subr.mxu0 0.0
    %1968 = vmatpush1.msra.mxu0 0.0
    %1969 = vmatprep.subr.mxu0 0.0
    %1970 = vmatpush1.msra.mxu0 0.0
    %1971 = vmatprep.subr.mxu0 0.0
    %1972 = vmatpush1.msra.mxu0 0.0
    %1973 = vmatprep.subr.mxu0 0.0
    %1974 = vmatpush1.msra.mxu0 0.0
    %1975 = vmatprep.subr.mxu0 0.0
    %1976 = vmatpush1.msra.mxu0 0.0
    %1977 = vmatprep.subr.mxu0 0.0
    %1978 = vmatpush1.msra.mxu0 0.0
    %1979 = vmatprep.subr.mxu0 0.0
    %1980 = vmatpush1.msra.mxu0 0.0
    %1981 = vmatprep.subr.mxu0 0.0
    %1982 = vmatpush1.msra.mxu0 0.0
    %1983 = vmatprep.subr.mxu0 0.0
    %1984 = vmatpush1.msra.mxu0 0.0
    %1985 = vmatprep.subr.mxu0 0.0
    %1986 = vmatpush1.msra.mxu0 0.0
    %1987 = vmatprep.subr.mxu0 0.0
    %1988 = vmatpush1.msra.mxu0 0.0
    %1989 = vmatprep.mubr.f32.mxu0 0.0
    %1990 = vmatmul.mubr.f32.gmra.mrb[0].mxu0 %v1920
    %v1991 = vpop.f32.mrb[0].mxu0
    %v1992 = vadd.f32 %v1918, %v1991
    %v1993 = vpop.f32.mrb[0].mxu0
    %1994 = vmatprep.mubr.f32.mxu0 0.0
    %1995 = vmatmul.mubr.f32.gmra.mrb[0].mxu0 %v1923
    %v1996 = vpop.f32.mrb[0].mxu0
    %v1997 = vadd.f32 %v1918, %v1996
    %v1998 = vpop.f32.mrb[0].mxu0
    %1999 = vdwg.mxu0
    %v2000 = vmax.f32 %v1992, 0.0
    %v2001 = vmax.f32 %v1997, 0.0
    %v2002 = vld [vmem:[#allocation2 + $0x98] sm:$0xff]
    %v2003 = vld [vmem:[#allocation2 + $0xa0] sm:$0xff]
    %v2004 = vld [vmem:[#allocation2 + $0xa8] sm:$0xff]
    %v2005 = vld [vmem:[#allocation2 + $0xb0] sm:$0xff]
    %v2006 = vld [vmem:[#allocation2 + $0xb8] sm:$0xff]
    %v2007 = vld [vmem:[#allocation2 + $0xc0] sm:$0xff]
    %v2008 = vld [vmem:[#allocation2 + $0xc8] sm:$0xff]
    %v2009 = vld [vmem:[#allocation2 + $0xd0] sm:$0xff]
    %v2010 = vld [vmem:[#allocation2 + $0xd8] sm:$0x1]
    %v2011 = vlaneseq
    %v2012 = vshrl.u32 %v2011, 7
    %v2013 = vsub.s32 0, %v2012
    %v2014 = vrot.slane %v2010, %v2013
    %vm2015 = vcmask 523264
    %v2017 = vsel %vm2015, %v2000, 0
    %v2020 = vsel %vm2015, %v2001, 0
    %2022 = vmatprep.subr.mxu0 0.0
    %2023 = vmatpush1.msra.mxu0 %v2002
    %2024 = vmatprep.subr.mxu0 0.0
    %2025 = vmatpush1.msra.mxu0 %v2003
    %2026 = vmatprep.subr.mxu0 0.0
    %2027 = vmatpush1.msra.mxu0 %v2004
    %2028 = vmatprep.subr.mxu0 0.0
    %2029 = vmatpush1.msra.mxu0 %v2005
    %2030 = vmatprep.subr.mxu0 0.0
    %2031 = vmatpush1.msra.mxu0 %v2006
    %2032 = vmatprep.subr.mxu0 0.0
    %2033 = vmatpush1.msra.mxu0 %v2007
    %2034 = vmatprep.subr.mxu0 0.0
    %2035 = vmatpush1.msra.mxu0 %v2008
    %2036 = vmatprep.subr.mxu0 0.0
    %2037 = vmatpush1.msra.mxu0 %v2009
    %2038 = vmatprep.subr.mxu0 0.0
    %2039 = vmatpush1.msra.mxu0 0.0
    %2040 = vmatprep.subr.mxu0 0.0
    %2041 = vmatpush1.msra.mxu0 0.0
    %2042 = vmatprep.subr.mxu0 0.0
    %2043 = vmatpush1.msra.mxu0 0.0
    %2044 = vmatprep.subr.mxu0 0.0
    %2045 = vmatpush1.msra.mxu0 0.0
    %2046 = vmatprep.subr.mxu0 0.0
    %2047 = vmatpush1.msra.mxu0 0.0
    %2048 = vmatprep.subr.mxu0 0.0
    %2049 = vmatpush1.msra.mxu0 0.0
    %2050 = vmatprep.subr.mxu0 0.0
    %2051 = vmatpush1.msra.mxu0 0.0
    %2052 = vmatprep.subr.mxu0 0.0
    %2053 = vmatpush1.msra.mxu0 0.0
    %2054 = vmatprep.subr.mxu0 0.0
    %2055 = vmatpush1.msra.mxu0 0.0
    %2056 = vmatprep.subr.mxu0 0.0
    %2057 = vmatpush1.msra.mxu0 0.0
    %2058 = vmatprep.subr.mxu0 0.0
    %2059 = vmatpush1.msra.mxu0 0.0
    %2060 = vmatprep.subr.mxu0 0.0
    %2061 = vmatpush1.msra.mxu0 0.0
    %2062 = vmatprep.subr.mxu0 0.0
    %2063 = vmatpush1.msra.mxu0 0.0
    %2064 = vmatprep.subr.mxu0 0.0
    %2065 = vmatpush1.msra.mxu0 0.0
    %2066 = vmatprep.subr.mxu0 0.0
    %2067 = vmatpush1.msra.mxu0 0.0
    %2068 = vmatprep.subr.mxu0 0.0
    %2069 = vmatpush1.msra.mxu0 0.0
    %2070 = vmatprep.subr.mxu0 0.0
    %2071 = vmatpush1.msra.mxu0 0.0
    %2072 = vmatprep.subr.mxu0 0.0
    %2073 = vmatpush1.msra.mxu0 0.0
    %2074 = vmatprep.subr.mxu0 0.0
    %2075 = vmatpush1.msra.mxu0 0.0
    %2076 = vmatprep.subr.mxu0 0.0
    %2077 = vmatpush1.msra.mxu0 0.0
    %2078 = vmatprep.subr.mxu0 0.0
    %2079 = vmatpush1.msra.mxu0 0.0
    %2080 = vmatprep.subr.mxu0 0.0
    %2081 = vmatpush1.msra.mxu0 0.0
    %2082 = vmatprep.subr.mxu0 0.0
    %2083 = vmatpush1.msra.mxu0 0.0
    %2084 = vmatprep.subr.mxu0 0.0
    %2085 = vmatpush1.msra.mxu0 0.0
    %2086 = vmatprep.mubr.f32.mxu0 0.0
    %2087 = vmatmul.mubr.f32.gmra.mrb[0].mxu0 %v2017
    %v2088 = vpop.f32.mrb[0].mxu0
    %v2089 = vadd.f32 %v2014, %v2088
    %v2090 = vpop.f32.mrb[0].mxu0
    %2091 = vmatprep.mubr.f32.mxu0 0.0
    %2092 = vmatmul.mubr.f32.gmra.mrb[0].mxu0 %v2020
    %v2093 = vpop.f32.mrb[0].mxu0
    %v2094 = vadd.f32 %v2014, %v2093
    %v2095 = vpop.f32.mrb[0].mxu0
    %2096 = vdwg.mxu0
    %v2097 = vadd.f32 %v1854, %v2089
    %v2098 = vadd.f32 %v1855, %v2094
    %v2099 = vld [vmem:[#allocation2 + $0xe0] sm:$0x1]
    %v2100 = vld [vmem:[#allocation2 + $0xe8] sm:$0x1]
    %v2101 = vsel %vm65, %v2097, 0.0
    %2102 = vadd.xlane.f32.xlu0 %v2101
    %v2103 = vpop.xlane.xlu0 %2102
    %v2104 = vsel %vm65, %v2098, 0.0
    %2105 = vadd.xlane.f32.xlu0 %v2104
    %v2106 = vpop.xlane.xlu0 %2105
    %v2107 = vmul.f32 %v2103, %v247
    %v2108 = vmul.f32 %v2106, %v247
    %v2109 = vsub.f32 %v2097, %v2107
    %v2110 = vsub.f32 %v2098, %v2108
    %v2111 = vmul.f32 %v2109, %v2109
    %v2112 = vmul.f32 %v2110, %v2110
    %v2113 = vsel %vm65, %v2111, 0.0
    %2114 = vadd.xlane.f32.xlu0 %v2113
    %v2115 = vpop.xlane.xlu0 %2114
    %v2116 = vsel %vm65, %v2112, 0.0
    %2117 = vadd.xlane.f32.xlu0 %v2116
    %v2118 = vpop.xlane.xlu0 %2117
    %v2119 = vmul.f32 %v2115, %v260
    %v2120 = vmul.f32 %v2118, %v260
    %v2121 = vlaneseq
    %v2122 = vshrl.u32 %v2121, 7
    %v2123 = vsub.s32 0, %v2122
    %v2124 = vrot.slane %v2099, %v2123
    %v2125 = vmul.f32 %v2124, %v2109
    %v2126 = vmul.f32 %v2124, %v2110
    %v2127 = vrsqrt.pop %v2119
    %v2128 = vmul.f32 %v2119, %v2127
    %vm2129 = vcmp.eq.f32.partialorder %v2119, inf
    %v2130 = vsel %vm2129, %v2119, %v2128
    %vm2131 = vcmp.eq.f32.partialorder %v2119, 0.0
    %v2132 = vand.u32 %v2119, 2147483648
    %v2133 = vsel %vm2131, %v2132, %v2130
    %v2134 = vrsqrt.pop %v2120
    %v2135 = vmul.f32 %v2120, %v2134
    %vm2136 = vcmp.eq.f32.partialorder %v2120, inf
    %v2137 = vsel %vm2136, %v2120, %v2135
    %vm2138 = vcmp.eq.f32.partialorder %v2120, 0.0
    %v2139 = vand.u32 %v2120, 2147483648
    %v2140 = vsel %vm2138, %v2139, %v2137
    %v2141 = vadd.f32 %v2133, 1e-06
    %v2142 = vadd.f32 %v2140, 1e-06
    %v2143 = vrcp.pop %v2141
    %v2144 = vmul.f32 %v2125, %v2143
    %v2145 = vrcp.pop %v2142
    %v2146 = vmul.f32 %v2126, %v2145
    %v2147 = vlaneseq
    %v2148 = vshrl.u32 %v2147, 7
    %v2149 = vsub.s32 0, %v2148
    %v2150 = vrot.slane %v2100, %v2149
    %v2151 = vadd.f32 %v2144, %v2150
    %v2152 = vadd.f32 %v2146, %v2150
    %v2153 = vadd.f32 %v2151, %v231
    %v2154 = vadd.f32 %v2152, %v236
    %v2155 = vld [vmem:[#allocation2 + $0x140] sm:$0x1]
    %v2156 = vld [vmem:[#allocation2 + $0x148] sm:$0x1]
    %v2157 = vsel %vm65, %v40, 0.0
    %2158 = vadd.xlane.f32.xlu0 %v2157
    %v2159 = vpop.xlane.xlu0 %2158
    %v2160 = vsel %vm65, %v41, 0.0
    %2161 = vadd.xlane.f32.xlu0 %v2160
    %v2162 = vpop.xlane.xlu0 %2161
    %v2163 = vmul.f32 %v2159, %v247
    %v2164 = vmul.f32 %v2162, %v247
    %v2165 = vsub.f32 %v40, %v2163
    %v2166 = vsub.f32 %v41, %v2164
    %v2167 = vmul.f32 %v2165, %v2165
    %v2168 = vmul.f32 %v2166, %v2166
    %v2169 = vsel %vm65, %v2167, 0.0
    %2170 = vadd.xlane.f32.xlu0 %v2169
    %v2171 = vpop.xlane.xlu0 %2170
    %v2172 = vsel %vm65, %v2168, 0.0
    %2173 = vadd.xlane.f32.xlu0 %v2172
    %v2174 = vpop.xlane.xlu0 %2173
    %v2175 = vmul.f32 %v2171, %v260
    %v2176 = vmul.f32 %v2174, %v260
    %v2177 = vlaneseq
    %v2178 = vshrl.u32 %v2177, 7
    %v2179 = vsub.s32 0, %v2178
    %v2180 = vrot.slane %v2155, %v2179
    %v2181 = vmul.f32 %v2180, %v2165
    %v2182 = vmul.f32 %v2180, %v2166
    %v2183 = vrsqrt.pop %v2175
    %v2184 = vmul.f32 %v2175, %v2183
    %vm2185 = vcmp.eq.f32.partialorder %v2175, inf
    %v2186 = vsel %vm2185, %v2175, %v2184
    %vm2187 = vcmp.eq.f32.partialorder %v2175, 0.0
    %v2188 = vand.u32 %v2175, 2147483648
    %v2189 = vsel %vm2187, %v2188, %v2186
    %v2190 = vrsqrt.pop %v2176
    %v2191 = vmul.f32 %v2176, %v2190
    %vm2192 = vcmp.eq.f32.partialorder %v2176, inf
    %v2193 = vsel %vm2192, %v2176, %v2191
    %vm2194 = vcmp.eq.f32.partialorder %v2176, 0.0
    %v2195 = vand.u32 %v2176, 2147483648
    %v2196 = vsel %vm2194, %v2195, %v2193
    %v2197 = vadd.f32 %v2189, 1e-06
    %v2198 = vadd.f32 %v2196, 1e-06
    %v2199 = vrcp.pop %v2197
    %v2200 = vmul.f32 %v2181, %v2199
    %v2201 = vrcp.pop %v2198
    %v2202 = vmul.f32 %v2182, %v2201
    %v2203 = vlaneseq
    %v2204 = vshrl.u32 %v2203, 7
    %v2205 = vsub.s32 0, %v2204
    %v2206 = vrot.slane %v2156, %v2205
    %v2207 = vadd.f32 %v2200, %v2206
    %v2208 = vadd.f32 %v2202, %v2206
    %v2209 = vld [vmem:[#allocation2 + $0x150] sm:$0xff]
    %v2210 = vld [vmem:[#allocation2 + $0x158] sm:$0xff]
    %v2211 = vld [vmem:[#allocation2 + $0x160] sm:$0xff]
    %v2212 = vld [vmem:[#allocation2 + $0x168] sm:$0xff]
    %v2213 = vld [vmem:[#allocation2 + $0x170] sm:$0x1]
    %v2214 = vlaneseq
    %v2215 = vshrl.u32 %v2214, 7
    %v2216 = vsub.s32 0, %v2215
    %v2217 = vrot.slane %v2213, %v2216
    %v2219 = vsel %vm65, %v2207, 0
    %v2222 = vsel %vm65, %v2208, 0
    %2224 = vmatprep.subr.mxu0 0.0
    %2225 = vmatpush1.msra.mxu0 %v2209
    %2226 = vmatprep.subr.mxu0 0.0
    %2227 = vmatpush1.msra.mxu0 %v2210
    %2228 = vmatprep.subr.mxu0 0.0
    %2229 = vmatpush1.msra.mxu0 %v2211
    %2230 = vmatprep.subr.mxu0 0.0
    %2231 = vmatpush1.msra.mxu0 %v2212
    %2232 = vmatprep.subr.mxu0 0.0
    %2233 = vmatpush1.msra.mxu0 0.0
    %2234 = vmatprep.subr.mxu0 0.0
    %2235 = vmatpush1.msra.mxu0 0.0
    %2236 = vmatprep.subr.mxu0 0.0
    %2237 = vmatpush1.msra.mxu0 0.0
    %2238 = vmatprep.subr.mxu0 0.0
    %2239 = vmatpush1.msra.mxu0 0.0
    %2240 = vmatprep.subr.mxu0 0.0
    %2241 = vmatpush1.msra.mxu0 0.0
    %2242 = vmatprep.subr.mxu0 0.0
    %2243 = vmatpush1.msra.mxu0 0.0
    %2244 = vmatprep.subr.mxu0 0.0
    %2245 = vmatpush1.msra.mxu0 0.0
    %2246 = vmatprep.subr.mxu0 0.0
    %2247 = vmatpush1.msra.mxu0 0.0
    %2248 = vmatprep.subr.mxu0 0.0
    %2249 = vmatpush1.msra.mxu0 0.0
    %2250 = vmatprep.subr.mxu0 0.0
    %2251 = vmatpush1.msra.mxu0 0.0
    %2252 = vmatprep.subr.mxu0 0.0
    %2253 = vmatpush1.msra.mxu0 0.0
    %2254 = vmatprep.subr.mxu0 0.0
    %2255 = vmatpush1.msra.mxu0 0.0
    %2256 = vmatprep.subr.mxu0 0.0
    %2257 = vmatpush1.msra.mxu0 0.0
    %2258 = vmatprep.subr.mxu0 0.0
    %2259 = vmatpush1.msra.mxu0 0.0
    %2260 = vmatprep.subr.mxu0 0.0
    %2261 = vmatpush1.msra.mxu0 0.0
    %2262 = vmatprep.subr.mxu0 0.0
    %2263 = vmatpush1.msra.mxu0 0.0
    %2264 = vmatprep.subr.mxu0 0.0
    %2265 = vmatpush1.msra.mxu0 0.0
    %2266 = vmatprep.subr.mxu0 0.0
    %2267 = vmatpush1.msra.mxu0 0.0
    %2268 = vmatprep.subr.mxu0 0.0
    %2269 = vmatpush1.msra.mxu0 0.0
    %2270 = vmatprep.subr.mxu0 0.0
    %2271 = vmatpush1.msra.mxu0 0.0
    %2272 = vmatprep.subr.mxu0 0.0
    %2273 = vmatpush1.msra.mxu0 0.0
    %2274 = vmatprep.subr.mxu0 0.0
    %2275 = vmatpush1.msra.mxu0 0.0
    %2276 = vmatprep.subr.mxu0 0.0
    %2277 = vmatpush1.msra.mxu0 0.0
    %2278 = vmatprep.subr.mxu0 0.0
    %2279 = vmatpush1.msra.mxu0 0.0
    %2280 = vmatprep.subr.mxu0 0.0
    %2281 = vmatpush1.msra.mxu0 0.0
    %2282 = vmatprep.subr.mxu0 0.0
    %2283 = vmatpush1.msra.mxu0 0.0
    %2284 = vmatprep.subr.mxu0 0.0
    %2285 = vmatpush1.msra.mxu0 0.0
    %2286 = vmatprep.subr.mxu0 0.0
    %2287 = vmatpush1.msra.mxu0 0.0
    %2288 = vmatprep.mubr.f32.mxu0 0.0
    %2289 = vmatmul.mubr.f32.gmra.mrb[0].mxu0 %v2219
    %v2290 = vpop.f32.mrb[0].mxu0
    %v2291 = vadd.f32 %v2217, %v2290
    %v2292 = vpop.f32.mrb[0].mxu0
    %2293 = vmatprep.mubr.f32.mxu0 0.0
    %2294 = vmatmul.mubr.f32.gmra.mrb[0].mxu0 %v2222
    %v2295 = vpop.f32.mrb[0].mxu0
    %v2296 = vadd.f32 %v2217, %v2295
    %v2297 = vpop.f32.mrb[0].mxu0
    %2298 = vdwg.mxu0
    %2301 = vrot.lane.b32.xlu0 %v2291, 120
    %v2302 = vpop.permute.xlu0 %2301
    %2303 = vrot.lane.b32.xlu0 %v2296, 120
    %v2304 = vpop.permute.xlu0 %2303
    %2305 = vrot.lane.b32.xlu0 %v2291, 112
    %v2306 = vpop.permute.xlu0 %2305
    %2307 = vrot.lane.b32.xlu0 %v2296, 112
    %v2308 = vpop.permute.xlu0 %2307
    %2309 = vrot.lane.b32.xlu0 %v2291, 104
    %v2310 = vpop.permute.xlu0 %2309
    %2311 = vrot.lane.b32.xlu0 %v2296, 104
    %v2312 = vpop.permute.xlu0 %2311
    %2313 = vrot.lane.b32.xlu0 %v2291, 96
    %v2314 = vpop.permute.xlu0 %2313
    %v2315 = vsel %vm401, %v2291, 0
    %v2317 = vsel %vm401, %v2314, 0
    %2319 = vmatprep.subr.mxu0 0.0
    %2320 = vmatpush1.xpose.msra.mxu0 %v2317
    %2321 = vmatprep.subr.mxu0 0.0
    %2322 = vmatpush1.xpose.msra.mxu0 0.0
    %2323 = vmatprep.subr.mxu0 0.0
    %2324 = vmatpush1.xpose.msra.mxu0 0.0
    %2325 = vmatprep.subr.mxu0 0.0
    %2326 = vmatpush1.xpose.msra.mxu0 0.0
    %2327 = vmatprep.subr.mxu0 0.0
    %2328 = vmatpush1.xpose.msra.mxu0 0.0
    %2329 = vmatprep.subr.mxu0 0.0
    %2330 = vmatpush1.xpose.msra.mxu0 0.0
    %2331 = vmatprep.subr.mxu0 0.0
    %2332 = vmatpush1.xpose.msra.mxu0 0.0
    %2333 = vmatprep.subr.mxu0 0.0
    %2334 = vmatpush1.xpose.msra.mxu0 0.0
    %2335 = vmatprep.subr.mxu0 0.0
    %2336 = vmatpush1.xpose.msra.mxu0 0.0
    %2337 = vmatprep.subr.mxu0 0.0
    %2338 = vmatpush1.xpose.msra.mxu0 0.0
    %2339 = vmatprep.subr.mxu0 0.0
    %2340 = vmatpush1.xpose.msra.mxu0 0.0
    %2341 = vmatprep.subr.mxu0 0.0
    %2342 = vmatpush1.xpose.msra.mxu0 0.0
    %2343 = vmatprep.subr.mxu0 0.0
    %2344 = vmatpush1.xpose.msra.mxu0 0.0
    %2345 = vmatprep.subr.mxu0 0.0
    %2346 = vmatpush1.xpose.msra.mxu0 0.0
    %2347 = vmatprep.subr.mxu0 0.0
    %2348 = vmatpush1.xpose.msra.mxu0 0.0
    %2349 = vmatprep.subr.mxu0 0.0
    %2350 = vmatpush1.xpose.msra.mxu0 0.0
    %2351 = vmatprep.subr.mxu0 0.0
    %2352 = vmatpush1.xpose.msra.mxu0 0.0
    %2353 = vmatprep.subr.mxu0 0.0
    %2354 = vmatpush1.xpose.msra.mxu0 0.0
    %2355 = vmatprep.subr.mxu0 0.0
    %2356 = vmatpush1.xpose.msra.mxu0 0.0
    %2357 = vmatprep.subr.mxu0 0.0
    %2358 = vmatpush1.xpose.msra.mxu0 0.0
    %2359 = vmatprep.subr.mxu0 0.0
    %2360 = vmatpush1.xpose.msra.mxu0 0.0
    %2361 = vmatprep.subr.mxu0 0.0
    %2362 = vmatpush1.xpose.msra.mxu0 0.0
    %2363 = vmatprep.subr.mxu0 0.0
    %2364 = vmatpush1.xpose.msra.mxu0 0.0
    %2365 = vmatprep.subr.mxu0 0.0
    %2366 = vmatpush1.xpose.msra.mxu0 0.0
    %2367 = vmatprep.subr.mxu0 0.0
    %2368 = vmatpush1.xpose.msra.mxu0 0.0
    %2369 = vmatprep.subr.mxu0 0.0
    %2370 = vmatpush1.xpose.msra.mxu0 0.0
    %2371 = vmatprep.subr.mxu0 0.0
    %2372 = vmatpush1.xpose.msra.mxu0 0.0
    %2373 = vmatprep.subr.mxu0 0.0
    %2374 = vmatpush1.xpose.msra.mxu0 0.0
    %2375 = vmatprep.subr.mxu0 0.0
    %2376 = vmatpush1.xpose.msra.mxu0 0.0
    %2377 = vmatprep.subr.mxu0 0.0
    %2378 = vmatpush1.xpose.msra.mxu0 0.0
    %2379 = vmatprep.subr.mxu0 0.0
    %2380 = vmatpush1.xpose.msra.mxu0 0.0
    %2381 = vmatprep.subr.mxu0 0.0
    %2382 = vmatpush1.xpose.msra.mxu0 0.0
    %2383 = vmatprep.mubr.f32.mxu0 0.0
    %2384 = vmatmul.mubr.f32.gmra.mrb[0].mxu0 %v2315
    %v2385 = vpop.f32.mrb[0].mxu0
    %v2386 = vadd.f32 0.0, %v2385
    %v2387 = vpop.f32.mrb[0].mxu0
    %2388 = vdwg.mxu0
    %2389 = vrot.lane.b32.xlu0 %v2296, 96
    %v2390 = vpop.permute.xlu0 %2389
    %v2391 = vsel %vm401, %v2296, 0
    %v2393 = vsel %vm401, %v2390, 0
    %2395 = vmatprep.subr.mxu0 0.0
    %2396 = vmatpush1.xpose.msra.mxu0 %v2393
    %2397 = vmatprep.subr.mxu0 0.0
    %2398 = vmatpush1.xpose.msra.mxu0 0.0
    %2399 = vmatprep.subr.mxu0 0.0
    %2400 = vmatpush1.xpose.msra.mxu0 0.0
    %2401 = vmatprep.subr.mxu0 0.0
    %2402 = vmatpush1.xpose.msra.mxu0 0.0
    %2403 = vmatprep.subr.mxu0 0.0
    %2404 = vmatpush1.xpose.msra.mxu0 0.0
    %2405 = vmatprep.subr.mxu0 0.0
    %2406 = vmatpush1.xpose.msra.mxu0 0.0
    %2407 = vmatprep.subr.mxu0 0.0
    %2408 = vmatpush1.xpose.msra.mxu0 0.0
    %2409 = vmatprep.subr.mxu0 0.0
    %2410 = vmatpush1.xpose.msra.mxu0 0.0
    %2411 = vmatprep.subr.mxu0 0.0
    %2412 = vmatpush1.xpose.msra.mxu0 0.0
    %2413 = vmatprep.subr.mxu0 0.0
    %2414 = vmatpush1.xpose.msra.mxu0 0.0
    %2415 = vmatprep.subr.mxu0 0.0
    %2416 = vmatpush1.xpose.msra.mxu0 0.0
    %2417 = vmatprep.subr.mxu0 0.0
    %2418 = vmatpush1.xpose.msra.mxu0 0.0
    %2419 = vmatprep.subr.mxu0 0.0
    %2420 = vmatpush1.xpose.msra.mxu0 0.0
    %2421 = vmatprep.subr.mxu0 0.0
    %2422 = vmatpush1.xpose.msra.mxu0 0.0
    %2423 = vmatprep.subr.mxu0 0.0
    %2424 = vmatpush1.xpose.msra.mxu0 0.0
    %2425 = vmatprep.subr.mxu0 0.0
    %2426 = vmatpush1.xpose.msra.mxu0 0.0
    %2427 = vmatprep.subr.mxu0 0.0
    %2428 = vmatpush1.xpose.msra.mxu0 0.0
    %2429 = vmatprep.subr.mxu0 0.0
    %2430 = vmatpush1.xpose.msra.mxu0 0.0
    %2431 = vmatprep.subr.mxu0 0.0
    %2432 = vmatpush1.xpose.msra.mxu0 0.0
    %2433 = vmatprep.subr.mxu0 0.0
    %2434 = vmatpush1.xpose.msra.mxu0 0.0
    %2435 = vmatprep.subr.mxu0 0.0
    %2436 = vmatpush1.xpose.msra.mxu0 0.0
    %2437 = vmatprep.subr.mxu0 0.0
    %2438 = vmatpush1.xpose.msra.mxu0 0.0
    %2439 = vmatprep.subr.mxu0 0.0
    %2440 = vmatpush1.xpose.msra.mxu0 0.0
    %2441 = vmatprep.subr.mxu0 0.0
    %2442 = vmatpush1.xpose.msra.mxu0 0.0
    %2443 = vmatprep.subr.mxu0 0.0
    %2444 = vmatpush1.xpose.msra.mxu0 0.0
    %2445 = vmatprep.subr.mxu0 0.0
    %2446 = vmatpush1.xpose.msra.mxu0 0.0
    %2447 = vmatprep.subr.mxu0 0.0
    %2448 = vmatpush1.xpose.msra.mxu0 0.0
    %2449 = vmatprep.subr.mxu0 0.0
    %2450 = vmatpush1.xpose.msra.mxu0 0.0
    %2451 = vmatprep.subr.mxu0 0.0
    %2452 = vmatpush1.xpose.msra.mxu0 0.0
    %2453 = vmatprep.subr.mxu0 0.0
    %2454 = vmatpush1.xpose.msra.mxu0 0.0
    %2455 = vmatprep.subr.mxu0 0.0
    %2456 = vmatpush1.xpose.msra.mxu0 0.0
    %2457 = vmatprep.subr.mxu0 0.0
    %2458 = vmatpush1.xpose.msra.mxu0 0.0
    %2459 = vmatprep.mubr.f32.mxu0 0.0
    %2460 = vmatmul.mubr.f32.gmra.mrb[0].mxu0 %v2391
    %v2461 = vpop.f32.mrb[0].mxu0
    %v2462 = vadd.f32 0.0, %v2461
    %v2463 = vpop.f32.mrb[0].mxu0
    %2464 = vdwg.mxu0
    %2465 = vrot.lane.b32.xlu0 %v2302, 96
    %v2466 = vpop.permute.xlu0 %2465
    %v2467 = vsel %vm401, %v2302, 0
    %v2469 = vsel %vm401, %v2466, 0
    %2471 = vmatprep.subr.mxu0 0.0
    %2472 = vmatpush1.xpose.msra.mxu0 %v2469
    %2473 = vmatprep.subr.mxu0 0.0
    %2474 = vmatpush1.xpose.msra.mxu0 0.0
    %2475 = vmatprep.subr.mxu0 0.0
    %2476 = vmatpush1.xpose.msra.mxu0 0.0
    %2477 = vmatprep.subr.mxu0 0.0
    %2478 = vmatpush1.xpose.msra.mxu0 0.0
    %2479 = vmatprep.subr.mxu0 0.0
    %2480 = vmatpush1.xpose.msra.mxu0 0.0
    %2481 = vmatprep.subr.mxu0 0.0
    %2482 = vmatpush1.xpose.msra.mxu0 0.0
    %2483 = vmatprep.subr.mxu0 0.0
    %2484 = vmatpush1.xpose.msra.mxu0 0.0
    %2485 = vmatprep.subr.mxu0 0.0
    %2486 = vmatpush1.xpose.msra.mxu0 0.0
    %2487 = vmatprep.subr.mxu0 0.0
    %2488 = vmatpush1.xpose.msra.mxu0 0.0
    %2489 = vmatprep.subr.mxu0 0.0
    %2490 = vmatpush1.xpose.msra.mxu0 0.0
    %2491 = vmatprep.subr.mxu0 0.0
    %2492 = vmatpush1.xpose.msra.mxu0 0.0
    %2493 = vmatprep.subr.mxu0 0.0
    %2494 = vmatpush1.xpose.msra.mxu0 0.0
    %2495 = vmatprep.subr.mxu0 0.0
    %2496 = vmatpush1.xpose.msra.mxu0 0.0
    %2497 = vmatprep.subr.mxu0 0.0
    %2498 = vmatpush1.xpose.msra.mxu0 0.0
    %2499 = vmatprep.subr.mxu0 0.0
    %2500 = vmatpush1.xpose.msra.mxu0 0.0
    %2501 = vmatprep.subr.mxu0 0.0
    %2502 = vmatpush1.xpose.msra.mxu0 0.0
    %2503 = vmatprep.subr.mxu0 0.0
    %2504 = vmatpush1.xpose.msra.mxu0 0.0
    %2505 = vmatprep.subr.mxu0 0.0
    %2506 = vmatpush1.xpose.msra.mxu0 0.0
    %2507 = vmatprep.subr.mxu0 0.0
    %2508 = vmatpush1.xpose.msra.mxu0 0.0
    %2509 = vmatprep.subr.mxu0 0.0
    %2510 = vmatpush1.xpose.msra.mxu0 0.0
    %2511 = vmatprep.subr.mxu0 0.0
    %2512 = vmatpush1.xpose.msra.mxu0 0.0
    %2513 = vmatprep.subr.mxu0 0.0
    %2514 = vmatpush1.xpose.msra.mxu0 0.0
    %2515 = vmatprep.subr.mxu0 0.0
    %2516 = vmatpush1.xpose.msra.mxu0 0.0
    %2517 = vmatprep.subr.mxu0 0.0
    %2518 = vmatpush1.xpose.msra.mxu0 0.0
    %2519 = vmatprep.subr.mxu0 0.0
    %2520 = vmatpush1.xpose.msra.mxu0 0.0
    %2521 = vmatprep.subr.mxu0 0.0
    %2522 = vmatpush1.xpose.msra.mxu0 0.0
    %2523 = vmatprep.subr.mxu0 0.0
    %2524 = vmatpush1.xpose.msra.mxu0 0.0
    %2525 = vmatprep.subr.mxu0 0.0
    %2526 = vmatpush1.xpose.msra.mxu0 0.0
    %2527 = vmatprep.subr.mxu0 0.0
    %2528 = vmatpush1.xpose.msra.mxu0 0.0
    %2529 = vmatprep.subr.mxu0 0.0
    %2530 = vmatpush1.xpose.msra.mxu0 0.0
    %2531 = vmatprep.subr.mxu0 0.0
    %2532 = vmatpush1.xpose.msra.mxu0 0.0
    %2533 = vmatprep.subr.mxu0 0.0
    %2534 = vmatpush1.xpose.msra.mxu0 0.0
    %2535 = vmatprep.mubr.f32.mxu0 0.0
    %2536 = vmatmul.mubr.f32.gmra.mrb[0].mxu0 %v2467
    %v2537 = vpop.f32.mrb[0].mxu0
    %v2538 = vadd.f32 0.0, %v2537
    %v2539 = vpop.f32.mrb[0].mxu0
    %2540 = vdwg.mxu0
    %2541 = vrot.lane.b32.xlu0 %v2304, 96
    %v2542 = vpop.permute.xlu0 %2541
    %v2543 = vsel %vm401, %v2304, 0
    %v2545 = vsel %vm401, %v2542, 0
    %2547 = vmatprep.subr.mxu0 0.0
    %2548 = vmatpush1.xpose.msra.mxu0 %v2545
    %2549 = vmatprep.subr.mxu0 0.0
    %2550 = vmatpush1.xpose.msra.mxu0 0.0
    %2551 = vmatprep.subr.mxu0 0.0
    %2552 = vmatpush1.xpose.msra.mxu0 0.0
    %2553 = vmatprep.subr.mxu0 0.0
    %2554 = vmatpush1.xpose.msra.mxu0 0.0
    %2555 = vmatprep.subr.mxu0 0.0
    %2556 = vmatpush1.xpose.msra.mxu0 0.0
    %2557 = vmatprep.subr.mxu0 0.0
    %2558 = vmatpush1.xpose.msra.mxu0 0.0
    %2559 = vmatprep.subr.mxu0 0.0
    %2560 = vmatpush1.xpose.msra.mxu0 0.0
    %2561 = vmatprep.subr.mxu0 0.0
    %2562 = vmatpush1.xpose.msra.mxu0 0.0
    %2563 = vmatprep.subr.mxu0 0.0
    %2564 = vmatpush1.xpose.msra.mxu0 0.0
    %2565 = vmatprep.subr.mxu0 0.0
    %2566 = vmatpush1.xpose.msra.mxu0 0.0
    %2567 = vmatprep.subr.mxu0 0.0
    %2568 = vmatpush1.xpose.msra.mxu0 0.0
    %2569 = vmatprep.subr.mxu0 0.0
    %2570 = vmatpush1.xpose.msra.mxu0 0.0
    %2571 = vmatprep.subr.mxu0 0.0
    %2572 = vmatpush1.xpose.msra.mxu0 0.0
    %2573 = vmatprep.subr.mxu0 0.0
    %2574 = vmatpush1.xpose.msra.mxu0 0.0
    %2575 = vmatprep.subr.mxu0 0.0
    %2576 = vmatpush1.xpose.msra.mxu0 0.0
    %2577 = vmatprep.subr.mxu0 0.0
    %2578 = vmatpush1.xpose.msra.mxu0 0.0
    %2579 = vmatprep.subr.mxu0 0.0
    %2580 = vmatpush1.xpose.msra.mxu0 0.0
    %2581 = vmatprep.subr.mxu0 0.0
    %2582 = vmatpush1.xpose.msra.mxu0 0.0
    %2583 = vmatprep.subr.mxu0 0.0
    %2584 = vmatpush1.xpose.msra.mxu0 0.0
    %2585 = vmatprep.subr.mxu0 0.0
    %2586 = vmatpush1.xpose.msra.mxu0 0.0
    %2587 = vmatprep.subr.mxu0 0.0
    %2588 = vmatpush1.xpose.msra.mxu0 0.0
    %2589 = vmatprep.subr.mxu0 0.0
    %2590 = vmatpush1.xpose.msra.mxu0 0.0
    %2591 = vmatprep.subr.mxu0 0.0
    %2592 = vmatpush1.xpose.msra.mxu0 0.0
    %2593 = vmatprep.subr.mxu0 0.0
    %2594 = vmatpush1.xpose.msra.mxu0 0.0
    %2595 = vmatprep.subr.mxu0 0.0
    %2596 = vmatpush1.xpose.msra.mxu0 0.0
    %2597 = vmatprep.subr.mxu0 0.0
    %2598 = vmatpush1.xpose.msra.mxu0 0.0
    %2599 = vmatprep.subr.mxu0 0.0
    %2600 = vmatpush1.xpose.msra.mxu0 0.0
    %2601 = vmatprep.subr.mxu0 0.0
    %2602 = vmatpush1.xpose.msra.mxu0 0.0
    %2603 = vmatprep.subr.mxu0 0.0
    %2604 = vmatpush1.xpose.msra.mxu0 0.0
    %2605 = vmatprep.subr.mxu0 0.0
    %2606 = vmatpush1.xpose.msra.mxu0 0.0
    %2607 = vmatprep.subr.mxu0 0.0
    %2608 = vmatpush1.xpose.msra.mxu0 0.0
    %2609 = vmatprep.subr.mxu0 0.0
    %2610 = vmatpush1.xpose.msra.mxu0 0.0
    %2611 = vmatprep.mubr.f32.mxu0 0.0
    %2612 = vmatmul.mubr.f32.gmra.mrb[0].mxu0 %v2543
    %v2613 = vpop.f32.mrb[0].mxu0
    %v2614 = vadd.f32 0.0, %v2613
    %v2615 = vpop.f32.mrb[0].mxu0
    %2616 = vdwg.mxu0
    %2617 = vrot.lane.b32.xlu0 %v2306, 96
    %v2618 = vpop.permute.xlu0 %2617
    %v2619 = vsel %vm401, %v2306, 0
    %v2621 = vsel %vm401, %v2618, 0
    %2623 = vmatprep.subr.mxu0 0.0
    %2624 = vmatpush1.xpose.msra.mxu0 %v2621
    %2625 = vmatprep.subr.mxu0 0.0
    %2626 = vmatpush1.xpose.msra.mxu0 0.0
    %2627 = vmatprep.subr.mxu0 0.0
    %2628 = vmatpush1.xpose.msra.mxu0 0.0
    %2629 = vmatprep.subr.mxu0 0.0
    %2630 = vmatpush1.xpose.msra.mxu0 0.0
    %2631 = vmatprep.subr.mxu0 0.0
    %2632 = vmatpush1.xpose.msra.mxu0 0.0
    %2633 = vmatprep.subr.mxu0 0.0
    %2634 = vmatpush1.xpose.msra.mxu0 0.0
    %2635 = vmatprep.subr.mxu0 0.0
    %2636 = vmatpush1.xpose.msra.mxu0 0.0
    %2637 = vmatprep.subr.mxu0 0.0
    %2638 = vmatpush1.xpose.msra.mxu0 0.0
    %2639 = vmatprep.subr.mxu0 0.0
    %2640 = vmatpush1.xpose.msra.mxu0 0.0
    %2641 = vmatprep.subr.mxu0 0.0
    %2642 = vmatpush1.xpose.msra.mxu0 0.0
    %2643 = vmatprep.subr.mxu0 0.0
    %2644 = vmatpush1.xpose.msra.mxu0 0.0
    %2645 = vmatprep.subr.mxu0 0.0
    %2646 = vmatpush1.xpose.msra.mxu0 0.0
    %2647 = vmatprep.subr.mxu0 0.0
    %2648 = vmatpush1.xpose.msra.mxu0 0.0
    %2649 = vmatprep.subr.mxu0 0.0
    %2650 = vmatpush1.xpose.msra.mxu0 0.0
    %2651 = vmatprep.subr.mxu0 0.0
    %2652 = vmatpush1.xpose.msra.mxu0 0.0
    %2653 = vmatprep.subr.mxu0 0.0
    %2654 = vmatpush1.xpose.msra.mxu0 0.0
    %2655 = vmatprep.subr.mxu0 0.0
    %2656 = vmatpush1.xpose.msra.mxu0 0.0
    %2657 = vmatprep.subr.mxu0 0.0
    %2658 = vmatpush1.xpose.msra.mxu0 0.0
    %2659 = vmatprep.subr.mxu0 0.0
    %2660 = vmatpush1.xpose.msra.mxu0 0.0
    %2661 = vmatprep.subr.mxu0 0.0
    %2662 = vmatpush1.xpose.msra.mxu0 0.0
    %2663 = vmatprep.subr.mxu0 0.0
    %2664 = vmatpush1.xpose.msra.mxu0 0.0
    %2665 = vmatprep.subr.mxu0 0.0
    %2666 = vmatpush1.xpose.msra.mxu0 0.0
    %2667 = vmatprep.subr.mxu0 0.0
    %2668 = vmatpush1.xpose.msra.mxu0 0.0
    %2669 = vmatprep.subr.mxu0 0.0
    %2670 = vmatpush1.xpose.msra.mxu0 0.0
    %2671 = vmatprep.subr.mxu0 0.0
    %2672 = vmatpush1.xpose.msra.mxu0 0.0
    %2673 = vmatprep.subr.mxu0 0.0
    %2674 = vmatpush1.xpose.msra.mxu0 0.0
    %2675 = vmatprep.subr.mxu0 0.0
    %2676 = vmatpush1.xpose.msra.mxu0 0.0
    %2677 = vmatprep.subr.mxu0 0.0
    %2678 = vmatpush1.xpose.msra.mxu0 0.0
    %2679 = vmatprep.subr.mxu0 0.0
    %2680 = vmatpush1.xpose.msra.mxu0 0.0
    %2681 = vmatprep.subr.mxu0 0.0
    %2682 = vmatpush1.xpose.msra.mxu0 0.0
    %2683 = vmatprep.subr.mxu0 0.0
    %2684 = vmatpush1.xpose.msra.mxu0 0.0
    %2685 = vmatprep.subr.mxu0 0.0
    %2686 = vmatpush1.xpose.msra.mxu0 0.0
    %2687 = vmatprep.mubr.f32.mxu0 0.0
    %2688 = vmatmul.mubr.f32.gmra.mrb[0].mxu0 %v2619
    %v2689 = vpop.f32.mrb[0].mxu0
    %v2690 = vadd.f32 0.0, %v2689
    %v2691 = vpop.f32.mrb[0].mxu0
    %2692 = vdwg.mxu0
    %2693 = vrot.lane.b32.xlu0 %v2308, 96
    %v2694 = vpop.permute.xlu0 %2693
    %v2695 = vsel %vm401, %v2308, 0
    %v2697 = vsel %vm401, %v2694, 0
    %2699 = vmatprep.subr.mxu0 0.0
    %2700 = vmatpush1.xpose.msra.mxu0 %v2697
    %2701 = vmatprep.subr.mxu0 0.0
    %2702 = vmatpush1.xpose.msra.mxu0 0.0
    %2703 = vmatprep.subr.mxu0 0.0
    %2704 = vmatpush1.xpose.msra.mxu0 0.0
    %2705 = vmatprep.subr.mxu0 0.0
    %2706 = vmatpush1.xpose.msra.mxu0 0.0
    %2707 = vmatprep.subr.mxu0 0.0
    %2708 = vmatpush1.xpose.msra.mxu0 0.0
    %2709 = vmatprep.subr.mxu0 0.0
    %2710 = vmatpush1.xpose.msra.mxu0 0.0
    %2711 = vmatprep.subr.mxu0 0.0
    %2712 = vmatpush1.xpose.msra.mxu0 0.0
    %2713 = vmatprep.subr.mxu0 0.0
    %2714 = vmatpush1.xpose.msra.mxu0 0.0
    %2715 = vmatprep.subr.mxu0 0.0
    %2716 = vmatpush1.xpose.msra.mxu0 0.0
    %2717 = vmatprep.subr.mxu0 0.0
    %2718 = vmatpush1.xpose.msra.mxu0 0.0
    %2719 = vmatprep.subr.mxu0 0.0
    %2720 = vmatpush1.xpose.msra.mxu0 0.0
    %2721 = vmatprep.subr.mxu0 0.0
    %2722 = vmatpush1.xpose.msra.mxu0 0.0
    %2723 = vmatprep.subr.mxu0 0.0
    %2724 = vmatpush1.xpose.msra.mxu0 0.0
    %2725 = vmatprep.subr.mxu0 0.0
    %2726 = vmatpush1.xpose.msra.mxu0 0.0
    %2727 = vmatprep.subr.mxu0 0.0
    %2728 = vmatpush1.xpose.msra.mxu0 0.0
    %2729 = vmatprep.subr.mxu0 0.0
    %2730 = vmatpush1.xpose.msra.mxu0 0.0
    %2731 = vmatprep.subr.mxu0 0.0
    %2732 = vmatpush1.xpose.msra.mxu0 0.0
    %2733 = vmatprep.subr.mxu0 0.0
    %2734 = vmatpush1.xpose.msra.mxu0 0.0
    %2735 = vmatprep.subr.mxu0 0.0
    %2736 = vmatpush1.xpose.msra.mxu0 0.0
    %2737 = vmatprep.subr.mxu0 0.0
    %2738 = vmatpush1.xpose.msra.mxu0 0.0
    %2739 = vmatprep.subr.mxu0 0.0
    %2740 = vmatpush1.xpose.msra.mxu0 0.0
    %2741 = vmatprep.subr.mxu0 0.0
    %2742 = vmatpush1.xpose.msra.mxu0 0.0
    %2743 = vmatprep.subr.mxu0 0.0
    %2744 = vmatpush1.xpose.msra.mxu0 0.0
    %2745 = vmatprep.subr.mxu0 0.0
    %2746 = vmatpush1.xpose.msra.mxu0 0.0
    %2747 = vmatprep.subr.mxu0 0.0
    %2748 = vmatpush1.xpose.msra.mxu0 0.0
    %2749 = vmatprep.subr.mxu0 0.0
    %2750 = vmatpush1.xpose.msra.mxu0 0.0
    %2751 = vmatprep.subr.mxu0 0.0
    %2752 = vmatpush1.xpose.msra.mxu0 0.0
    %2753 = vmatprep.subr.mxu0 0.0
    %2754 = vmatpush1.xpose.msra.mxu0 0.0
    %2755 = vmatprep.subr.mxu0 0.0
    %2756 = vmatpush1.xpose.msra.mxu0 0.0
    %2757 = vmatprep.subr.mxu0 0.0
    %2758 = vmatpush1.xpose.msra.mxu0 0.0
    %2759 = vmatprep.subr.mxu0 0.0
    %2760 = vmatpush1.xpose.msra.mxu0 0.0
    %2761 = vmatprep.subr.mxu0 0.0
    %2762 = vmatpush1.xpose.msra.mxu0 0.0
    %2763 = vmatprep.mubr.f32.mxu0 0.0
    %2764 = vmatmul.mubr.f32.gmra.mrb[0].mxu0 %v2695
    %v2765 = vpop.f32.mrb[0].mxu0
    %v2766 = vadd.f32 0.0, %v2765
    %v2767 = vpop.f32.mrb[0].mxu0
    %2768 = vdwg.mxu0
    %2769 = vrot.lane.b32.xlu0 %v2310, 96
    %v2770 = vpop.permute.xlu0 %2769
    %v2771 = vsel %vm401, %v2310, 0
    %v2773 = vsel %vm401, %v2770, 0
    %2775 = vmatprep.subr.mxu0 0.0
    %2776 = vmatpush1.xpose.msra.mxu0 %v2773
    %2777 = vmatprep.subr.mxu0 0.0
    %2778 = vmatpush1.xpose.msra.mxu0 0.0
    %2779 = vmatprep.subr.mxu0 0.0
    %2780 = vmatpush1.xpose.msra.mxu0 0.0
    %2781 = vmatprep.subr.mxu0 0.0
    %2782 = vmatpush1.xpose.msra.mxu0 0.0
    %2783 = vmatprep.subr.mxu0 0.0
    %2784 = vmatpush1.xpose.msra.mxu0 0.0
    %2785 = vmatprep.subr.mxu0 0.0
    %2786 = vmatpush1.xpose.msra.mxu0 0.0
    %2787 = vmatprep.subr.mxu0 0.0
    %2788 = vmatpush1.xpose.msra.mxu0 0.0
    %2789 = vmatprep.subr.mxu0 0.0
    %2790 = vmatpush1.xpose.msra.mxu0 0.0
    %2791 = vmatprep.subr.mxu0 0.0
    %2792 = vmatpush1.xpose.msra.mxu0 0.0
    %2793 = vmatprep.subr.mxu0 0.0
    %2794 = vmatpush1.xpose.msra.mxu0 0.0
    %2795 = vmatprep.subr.mxu0 0.0
    %2796 = vmatpush1.xpose.msra.mxu0 0.0
    %2797 = vmatprep.subr.mxu0 0.0
    %2798 = vmatpush1.xpose.msra.mxu0 0.0
    %2799 = vmatprep.subr.mxu0 0.0
    %2800 = vmatpush1.xpose.msra.mxu0 0.0
    %2801 = vmatprep.subr.mxu0 0.0
    %2802 = vmatpush1.xpose.msra.mxu0 0.0
    %2803 = vmatprep.subr.mxu0 0.0
    %2804 = vmatpush1.xpose.msra.mxu0 0.0
    %2805 = vmatprep.subr.mxu0 0.0
    %2806 = vmatpush1.xpose.msra.mxu0 0.0
    %2807 = vmatprep.subr.mxu0 0.0
    %2808 = vmatpush1.xpose.msra.mxu0 0.0
    %2809 = vmatprep.subr.mxu0 0.0
    %2810 = vmatpush1.xpose.msra.mxu0 0.0
    %2811 = vmatprep.subr.mxu0 0.0
    %2812 = vmatpush1.xpose.msra.mxu0 0.0
    %2813 = vmatprep.subr.mxu0 0.0
    %2814 = vmatpush1.xpose.msra.mxu0 0.0
    %2815 = vmatprep.subr.mxu0 0.0
    %2816 = vmatpush1.xpose.msra.mxu0 0.0
    %2817 = vmatprep.subr.mxu0 0.0
    %2818 = vmatpush1.xpose.msra.mxu0 0.0
    %2819 = vmatprep.subr.mxu0 0.0
    %2820 = vmatpush1.xpose.msra.mxu0 0.0
    %2821 = vmatprep.subr.mxu0 0.0
    %2822 = vmatpush1.xpose.msra.mxu0 0.0
    %2823 = vmatprep.subr.mxu0 0.0
    %2824 = vmatpush1.xpose.msra.mxu0 0.0
    %2825 = vmatprep.subr.mxu0 0.0
    %2826 = vmatpush1.xpose.msra.mxu0 0.0
    %2827 = vmatprep.subr.mxu0 0.0
    %2828 = vmatpush1.xpose.msra.mxu0 0.0
    %2829 = vmatprep.subr.mxu0 0.0
    %2830 = vmatpush1.xpose.msra.mxu0 0.0
    %2831 = vmatprep.subr.mxu0 0.0
    %2832 = vmatpush1.xpose.msra.mxu0 0.0
    %2833 = vmatprep.subr.mxu0 0.0
    %2834 = vmatpush1.xpose.msra.mxu0 0.0
    %2835 = vmatprep.subr.mxu0 0.0
    %2836 = vmatpush1.xpose.msra.mxu0 0.0
    %2837 = vmatprep.subr.mxu0 0.0
    %2838 = vmatpush1.xpose.msra.mxu0 0.0
    %2839 = vmatprep.mubr.f32.mxu0 0.0
    %2840 = vmatmul.mubr.f32.gmra.mrb[0].mxu0 %v2771
    %v2841 = vpop.f32.mrb[0].mxu0
    %v2842 = vadd.f32 0.0, %v2841
    %v2843 = vpop.f32.mrb[0].mxu0
    %2844 = vdwg.mxu0
    %2845 = vrot.lane.b32.xlu0 %v2312, 96
    %v2846 = vpop.permute.xlu0 %2845
    %v2847 = vsel %vm401, %v2312, 0
    %v2849 = vsel %vm401, %v2846, 0
    %2851 = vmatprep.subr.mxu0 0.0
    %2852 = vmatpush1.xpose.msra.mxu0 %v2849
    %2853 = vmatprep.subr.mxu0 0.0
    %2854 = vmatpush1.xpose.msra.mxu0 0.0
    %2855 = vmatprep.subr.mxu0 0.0
    %2856 = vmatpush1.xpose.msra.mxu0 0.0
    %2857 = vmatprep.subr.mxu0 0.0
    %2858 = vmatpush1.xpose.msra.mxu0 0.0
    %2859 = vmatprep.subr.mxu0 0.0
    %2860 = vmatpush1.xpose.msra.mxu0 0.0
    %2861 = vmatprep.subr.mxu0 0.0
    %2862 = vmatpush1.xpose.msra.mxu0 0.0
    %2863 = vmatprep.subr.mxu0 0.0
    %2864 = vmatpush1.xpose.msra.mxu0 0.0
    %2865 = vmatprep.subr.mxu0 0.0
    %2866 = vmatpush1.xpose.msra.mxu0 0.0
    %2867 = vmatprep.subr.mxu0 0.0
    %2868 = vmatpush1.xpose.msra.mxu0 0.0
    %2869 = vmatprep.subr.mxu0 0.0
    %2870 = vmatpush1.xpose.msra.mxu0 0.0
    %2871 = vmatprep.subr.mxu0 0.0
    %2872 = vmatpush1.xpose.msra.mxu0 0.0
    %2873 = vmatprep.subr.mxu0 0.0
    %2874 = vmatpush1.xpose.msra.mxu0 0.0
    %2875 = vmatprep.subr.mxu0 0.0
    %2876 = vmatpush1.xpose.msra.mxu0 0.0
    %2877 = vmatprep.subr.mxu0 0.0
    %2878 = vmatpush1.xpose.msra.mxu0 0.0
    %2879 = vmatprep.subr.mxu0 0.0
    %2880 = vmatpush1.xpose.msra.mxu0 0.0
    %2881 = vmatprep.subr.mxu0 0.0
    %2882 = vmatpush1.xpose.msra.mxu0 0.0
    %2883 = vmatprep.subr.mxu0 0.0
    %2884 = vmatpush1.xpose.msra.mxu0 0.0
    %2885 = vmatprep.subr.mxu0 0.0
    %2886 = vmatpush1.xpose.msra.mxu0 0.0
    %2887 = vmatprep.subr.mxu0 0.0
    %2888 = vmatpush1.xpose.msra.mxu0 0.0
    %2889 = vmatprep.subr.mxu0 0.0
    %2890 = vmatpush1.xpose.msra.mxu0 0.0
    %2891 = vmatprep.subr.mxu0 0.0
    %2892 = vmatpush1.xpose.msra.mxu0 0.0
    %2893 = vmatprep.subr.mxu0 0.0
    %2894 = vmatpush1.xpose.msra.mxu0 0.0
    %2895 = vmatprep.subr.mxu0 0.0
    %2896 = vmatpush1.xpose.msra.mxu0 0.0
    %2897 = vmatprep.subr.mxu0 0.0
    %2898 = vmatpush1.xpose.msra.mxu0 0.0
    %2899 = vmatprep.subr.mxu0 0.0
    %2900 = vmatpush1.xpose.msra.mxu0 0.0
    %2901 = vmatprep.subr.mxu0 0.0
    %2902 = vmatpush1.xpose.msra.mxu0 0.0
    %2903 = vmatprep.subr.mxu0 0.0
    %2904 = vmatpush1.xpose.msra.mxu0 0.0
    %2905 = vmatprep.subr.mxu0 0.0
    %2906 = vmatpush1.xpose.msra.mxu0 0.0
    %2907 = vmatprep.subr.mxu0 0.0
    %2908 = vmatpush1.xpose.msra.mxu0 0.0
    %2909 = vmatprep.subr.mxu0 0.0
    %2910 = vmatpush1.xpose.msra.mxu0 0.0
    %2911 = vmatprep.subr.mxu0 0.0
    %2912 = vmatpush1.xpose.msra.mxu0 0.0
    %2913 = vmatprep.subr.mxu0 0.0
    %2914 = vmatpush1.xpose.msra.mxu0 0.0
    %2915 = vmatprep.mubr.f32.mxu0 0.0
    %2916 = vmatmul.mubr.f32.gmra.mrb[0].mxu0 %v2847
    %v2917 = vpop.f32.mrb[0].mxu0
    %v2918 = vadd.f32 0.0, %v2917
    %v2919 = vpop.f32.mrb[0].mxu0
    %2920 = vdwg.mxu0
    %v2921 = vmul.f32 %v2386, 0.35355338
    %v2922 = vmul.f32 %v2462, 0.35355338
    %v2923 = vmul.f32 %v2538, 0.35355338
    %v2924 = vmul.f32 %v2614, 0.35355338
    %v2925 = vmul.f32 %v2690, 0.35355338
    %v2926 = vmul.f32 %v2766, 0.35355338
    %v2927 = vmul.f32 %v2842, 0.35355338
    %v2928 = vmul.f32 %v2918, 0.35355338
    %v2929 = vadd.f32 %v2921, %v54
    %v2930 = vadd.f32 %v2922, %v55
    %v2931 = vadd.f32 %v2923, %v54
    %v2932 = vadd.f32 %v2924, %v55
    %v2933 = vadd.f32 %v2925, %v54
    %v2934 = vadd.f32 %v2926, %v55
    %v2935 = vadd.f32 %v2927, %v54
    %v2936 = vadd.f32 %v2928, %v55
    %v2937 = vsel %vm401, %v2929, -inf
    %2938 = vmax.xlane.f32.xlu0 %v2937
    %v2939 = vpop.xlane.xlu0 %2938
    %v2940 = vsel %vm401, %v2930, -inf
    %2941 = vmax.xlane.f32.xlu0 %v2940
    %v2942 = vpop.xlane.xlu0 %2941
    %v2943 = vsel %vm401, %v2931, -inf
    %2944 = vmax.xlane.f32.xlu0 %v2943
    %v2945 = vpop.xlane.xlu0 %2944
    %v2946 = vsel %vm401, %v2932, -inf
    %2947 = vmax.xlane.f32.xlu0 %v2946
    %v2948 = vpop.xlane.xlu0 %2947
    %v2949 = vsel %vm401, %v2933, -inf
    %2950 = vmax.xlane.f32.xlu0 %v2949
    %v2951 = vpop.xlane.xlu0 %2950
    %v2952 = vsel %vm401, %v2934, -inf
    %2953 = vmax.xlane.f32.xlu0 %v2952
    %v2954 = vpop.xlane.xlu0 %2953
    %v2955 = vsel %vm401, %v2935, -inf
    %2956 = vmax.xlane.f32.xlu0 %v2955
    %v2957 = vpop.xlane.xlu0 %2956
    %v2958 = vsel %vm401, %v2936, -inf
    %2959 = vmax.xlane.f32.xlu0 %v2958
    %v2960 = vpop.xlane.xlu0 %2959
    %v2961 = vsub.f32 %v2929, %v2939
    %v2962 = vsub.f32 %v2930, %v2942
    %v2963 = vsub.f32 %v2931, %v2945
    %v2964 = vsub.f32 %v2932, %v2948
    %v2965 = vsub.f32 %v2933, %v2951
    %v2966 = vsub.f32 %v2934, %v2954
    %v2967 = vsub.f32 %v2935, %v2957
    %v2968 = vsub.f32 %v2936, %v2960
    %v2969 = vmul.f32 %v2961, 1.442695
    %v2970 = vpow.pop %v2969
    %v2971 = vmul.f32 %v2962, 1.442695
    %v2972 = vpow.pop %v2971
    %v2973 = vmul.f32 %v2963, 1.442695
    %v2974 = vpow.pop %v2973
    %v2975 = vmul.f32 %v2964, 1.442695
    %v2976 = vpow.pop %v2975
    %v2977 = vmul.f32 %v2965, 1.442695
    %v2978 = vpow.pop %v2977
    %v2979 = vmul.f32 %v2966, 1.442695
    %v2980 = vpow.pop %v2979
    %v2981 = vmul.f32 %v2967, 1.442695
    %v2982 = vpow.pop %v2981
    %v2983 = vmul.f32 %v2968, 1.442695
    %v2984 = vpow.pop %v2983
    %v2985 = vsel %vm401, %v2970, 0.0
    %2986 = vadd.xlane.f32.xlu0 %v2985
    %v2987 = vpop.xlane.xlu0 %2986
    %v2988 = vsel %vm401, %v2972, 0.0
    %2989 = vadd.xlane.f32.xlu0 %v2988
    %v2990 = vpop.xlane.xlu0 %2989
    %v2991 = vsel %vm401, %v2974, 0.0
    %2992 = vadd.xlane.f32.xlu0 %v2991
    %v2993 = vpop.xlane.xlu0 %2992
    %v2994 = vsel %vm401, %v2976, 0.0
    %2995 = vadd.xlane.f32.xlu0 %v2994
    %v2996 = vpop.xlane.xlu0 %2995
    %v2997 = vsel %vm401, %v2978, 0.0
    %2998 = vadd.xlane.f32.xlu0 %v2997
    %v2999 = vpop.xlane.xlu0 %2998
    %v3000 = vsel %vm401, %v2980, 0.0
    %3001 = vadd.xlane.f32.xlu0 %v3000
    %v3002 = vpop.xlane.xlu0 %3001
    %v3003 = vsel %vm401, %v2982, 0.0
    %3004 = vadd.xlane.f32.xlu0 %v3003
    %v3005 = vpop.xlane.xlu0 %3004
    %v3006 = vsel %vm401, %v2984, 0.0
    %3007 = vadd.xlane.f32.xlu0 %v3006
    %v3008 = vpop.xlane.xlu0 %3007
    %v3009 = vrcp.pop %v2987
    %v3010 = vmul.f32 %v2970, %v3009
    %v3011 = vrcp.pop %v2990
    %v3012 = vmul.f32 %v2972, %v3011
    %v3013 = vrcp.pop %v2993
    %v3014 = vmul.f32 %v2974, %v3013
    %v3015 = vrcp.pop %v2996
    %v3016 = vmul.f32 %v2976, %v3015
    %v3017 = vrcp.pop %v2999
    %v3018 = vmul.f32 %v2978, %v3017
    %v3019 = vrcp.pop %v3002
    %v3020 = vmul.f32 %v2980, %v3019
    %v3021 = vrcp.pop %v3005
    %v3022 = vmul.f32 %v2982, %v3021
    %v3023 = vrcp.pop %v3008
    %v3024 = vmul.f32 %v2984, %v3023
    %3025 = vrot.lane.b32.xlu0 %v2291, 64
    %v3026 = vpop.permute.xlu0 %3025
    %v3029 = vsel %vm401, %v3010, 0
    %3031 = vmatprep.subr.mxu0 0.0
    %3032 = vmatpush1.msra.mxu0 %v3026
    %3033 = vmatprep.subr.mxu0 0.0
    %3034 = vmatpush1.msra.mxu0 0.0
    %3035 = vmatprep.subr.mxu0 0.0
    %3036 = vmatpush1.msra.mxu0 0.0
    %3037 = vmatprep.subr.mxu0 0.0
    %3038 = vmatpush1.msra.mxu0 0.0
    %3039 = vmatprep.subr.mxu0 0.0
    %3040 = vmatpush1.msra.mxu0 0.0
    %3041 = vmatprep.subr.mxu0 0.0
    %3042 = vmatpush1.msra.mxu0 0.0
    %3043 = vmatprep.subr.mxu0 0.0
    %3044 = vmatpush1.msra.mxu0 0.0
    %3045 = vmatprep.subr.mxu0 0.0
    %3046 = vmatpush1.msra.mxu0 0.0
    %3047 = vmatprep.subr.mxu0 0.0
    %3048 = vmatpush1.msra.mxu0 0.0
    %3049 = vmatprep.subr.mxu0 0.0
    %3050 = vmatpush1.msra.mxu0 0.0
    %3051 = vmatprep.subr.mxu0 0.0
    %3052 = vmatpush1.msra.mxu0 0.0
    %3053 = vmatprep.subr.mxu0 0.0
    %3054 = vmatpush1.msra.mxu0 0.0
    %3055 = vmatprep.subr.mxu0 0.0
    %3056 = vmatpush1.msra.mxu0 0.0
    %3057 = vmatprep.subr.mxu0 0.0
    %3058 = vmatpush1.msra.mxu0 0.0
    %3059 = vmatprep.subr.mxu0 0.0
    %3060 = vmatpush1.msra.mxu0 0.0
    %3061 = vmatprep.subr.mxu0 0.0
    %3062 = vmatpush1.msra.mxu0 0.0
    %3063 = vmatprep.subr.mxu0 0.0
    %3064 = vmatpush1.msra.mxu0 0.0
    %3065 = vmatprep.subr.mxu0 0.0
    %3066 = vmatpush1.msra.mxu0 0.0
    %3067 = vmatprep.subr.mxu0 0.0
    %3068 = vmatpush1.msra.mxu0 0.0
    %3069 = vmatprep.subr.mxu0 0.0
    %3070 = vmatpush1.msra.mxu0 0.0
    %3071 = vmatprep.subr.mxu0 0.0
    %3072 = vmatpush1.msra.mxu0 0.0
    %3073 = vmatprep.subr.mxu0 0.0
    %3074 = vmatpush1.msra.mxu0 0.0
    %3075 = vmatprep.subr.mxu0 0.0
    %3076 = vmatpush1.msra.mxu0 0.0
    %3077 = vmatprep.subr.mxu0 0.0
    %3078 = vmatpush1.msra.mxu0 0.0
    %3079 = vmatprep.subr.mxu0 0.0
    %3080 = vmatpush1.msra.mxu0 0.0
    %3081 = vmatprep.subr.mxu0 0.0
    %3082 = vmatpush1.msra.mxu0 0.0
    %3083 = vmatprep.subr.mxu0 0.0
    %3084 = vmatpush1.msra.mxu0 0.0
    %3085 = vmatprep.subr.mxu0 0.0
    %3086 = vmatpush1.msra.mxu0 0.0
    %3087 = vmatprep.subr.mxu0 0.0
    %3088 = vmatpush1.msra.mxu0 0.0
    %3089 = vmatprep.subr.mxu0 0.0
    %3090 = vmatpush1.msra.mxu0 0.0
    %3091 = vmatprep.subr.mxu0 0.0
    %3092 = vmatpush1.msra.mxu0 0.0
    %3093 = vmatprep.subr.mxu0 0.0
    %3094 = vmatpush1.msra.mxu0 0.0
    %3095 = vmatprep.mubr.f32.mxu0 0.0
    %3096 = vmatmul.mubr.f32.gmra.mrb[0].mxu0 %v3029
    %v3097 = vpop.f32.mrb[0].mxu0
    %v3098 = vadd.f32 0.0, %v3097
    %v3099 = vpop.f32.mrb[0].mxu0
    %3100 = vdwg.mxu0
    %3101 = vrot.lane.b32.xlu0 %v2296, 64
    %v3102 = vpop.permute.xlu0 %3101
    %v3105 = vsel %vm401, %v3012, 0
    %3107 = vmatprep.subr.mxu0 0.0
    %3108 = vmatpush1.msra.mxu0 %v3102
    %3109 = vmatprep.subr.mxu0 0.0
    %3110 = vmatpush1.msra.mxu0 0.0
    %3111 = vmatprep.subr.mxu0 0.0
    %3112 = vmatpush1.msra.mxu0 0.0
    %3113 = vmatprep.subr.mxu0 0.0
    %3114 = vmatpush1.msra.mxu0 0.0
    %3115 = vmatprep.subr.mxu0 0.0
    %3116 = vmatpush1.msra.mxu0 0.0
    %3117 = vmatprep.subr.mxu0 0.0
    %3118 = vmatpush1.msra.mxu0 0.0
    %3119 = vmatprep.subr.mxu0 0.0
    %3120 = vmatpush1.msra.mxu0 0.0
    %3121 = vmatprep.subr.mxu0 0.0
    %3122 = vmatpush1.msra.mxu0 0.0
    %3123 = vmatprep.subr.mxu0 0.0
    %3124 = vmatpush1.msra.mxu0 0.0
    %3125 = vmatprep.subr.mxu0 0.0
    %3126 = vmatpush1.msra.mxu0 0.0
    %3127 = vmatprep.subr.mxu0 0.0
    %3128 = vmatpush1.msra.mxu0 0.0
    %3129 = vmatprep.subr.mxu0 0.0
    %3130 = vmatpush1.msra.mxu0 0.0
    %3131 = vmatprep.subr.mxu0 0.0
    %3132 = vmatpush1.msra.mxu0 0.0
    %3133 = vmatprep.subr.mxu0 0.0
    %3134 = vmatpush1.msra.mxu0 0.0
    %3135 = vmatprep.subr.mxu0 0.0
    %3136 = vmatpush1.msra.mxu0 0.0
    %3137 = vmatprep.subr.mxu0 0.0
    %3138 = vmatpush1.msra.mxu0 0.0
    %3139 = vmatprep.subr.mxu0 0.0
    %3140 = vmatpush1.msra.mxu0 0.0
    %3141 = vmatprep.subr.mxu0 0.0
    %3142 = vmatpush1.msra.mxu0 0.0
    %3143 = vmatprep.subr.mxu0 0.0
    %3144 = vmatpush1.msra.mxu0 0.0
    %3145 = vmatprep.subr.mxu0 0.0
    %3146 = vmatpush1.msra.mxu0 0.0
    %3147 = vmatprep.subr.mxu0 0.0
    %3148 = vmatpush1.msra.mxu0 0.0
    %3149 = vmatprep.subr.mxu0 0.0
    %3150 = vmatpush1.msra.mxu0 0.0
    %3151 = vmatprep.subr.mxu0 0.0
    %3152 = vmatpush1.msra.mxu0 0.0
    %3153 = vmatprep.subr.mxu0 0.0
    %3154 = vmatpush1.msra.mxu0 0.0
    %3155 = vmatprep.subr.mxu0 0.0
    %3156 = vmatpush1.msra.mxu0 0.0
    %3157 = vmatprep.subr.mxu0 0.0
    %3158 = vmatpush1.msra.mxu0 0.0
    %3159 = vmatprep.subr.mxu0 0.0
    %3160 = vmatpush1.msra.mxu0 0.0
    %3161 = vmatprep.subr.mxu0 0.0
    %3162 = vmatpush1.msra.mxu0 0.0
    %3163 = vmatprep.subr.mxu0 0.0
    %3164 = vmatpush1.msra.mxu0 0.0
    %3165 = vmatprep.subr.mxu0 0.0
    %3166 = vmatpush1.msra.mxu0 0.0
    %3167 = vmatprep.subr.mxu0 0.0
    %3168 = vmatpush1.msra.mxu0 0.0
    %3169 = vmatprep.subr.mxu0 0.0
    %3170 = vmatpush1.msra.mxu0 0.0
    %3171 = vmatprep.mubr.f32.mxu0 0.0
    %3172 = vmatmul.mubr.f32.gmra.mrb[0].mxu0 %v3105
    %v3173 = vpop.f32.mrb[0].mxu0
    %v3174 = vadd.f32 0.0, %v3173
    %v3175 = vpop.f32.mrb[0].mxu0
    %3176 = vdwg.mxu0
    %3177 = vrot.lane.b32.xlu0 %v2302, 64
    %v3178 = vpop.permute.xlu0 %3177
    %v3181 = vsel %vm401, %v3014, 0
    %3183 = vmatprep.subr.mxu0 0.0
    %3184 = vmatpush1.msra.mxu0 %v3178
    %3185 = vmatprep.subr.mxu0 0.0
    %3186 = vmatpush1.msra.mxu0 0.0
    %3187 = vmatprep.subr.mxu0 0.0
    %3188 = vmatpush1.msra.mxu0 0.0
    %3189 = vmatprep.subr.mxu0 0.0
    %3190 = vmatpush1.msra.mxu0 0.0
    %3191 = vmatprep.subr.mxu0 0.0
    %3192 = vmatpush1.msra.mxu0 0.0
    %3193 = vmatprep.subr.mxu0 0.0
    %3194 = vmatpush1.msra.mxu0 0.0
    %3195 = vmatprep.subr.mxu0 0.0
    %3196 = vmatpush1.msra.mxu0 0.0
    %3197 = vmatprep.subr.mxu0 0.0
    %3198 = vmatpush1.msra.mxu0 0.0
    %3199 = vmatprep.subr.mxu0 0.0
    %3200 = vmatpush1.msra.mxu0 0.0
    %3201 = vmatprep.subr.mxu0 0.0
    %3202 = vmatpush1.msra.mxu0 0.0
    %3203 = vmatprep.subr.mxu0 0.0
    %3204 = vmatpush1.msra.mxu0 0.0
    %3205 = vmatprep.subr.mxu0 0.0
    %3206 = vmatpush1.msra.mxu0 0.0
    %3207 = vmatprep.subr.mxu0 0.0
    %3208 = vmatpush1.msra.mxu0 0.0
    %3209 = vmatprep.subr.mxu0 0.0
    %3210 = vmatpush1.msra.mxu0 0.0
    %3211 = vmatprep.subr.mxu0 0.0
    %3212 = vmatpush1.msra.mxu0 0.0
    %3213 = vmatprep.subr.mxu0 0.0
    %3214 = vmatpush1.msra.mxu0 0.0
    %3215 = vmatprep.subr.mxu0 0.0
    %3216 = vmatpush1.msra.mxu0 0.0
    %3217 = vmatprep.subr.mxu0 0.0
    %3218 = vmatpush1.msra.mxu0 0.0
    %3219 = vmatprep.subr.mxu0 0.0
    %3220 = vmatpush1.msra.mxu0 0.0
    %3221 = vmatprep.subr.mxu0 0.0
    %3222 = vmatpush1.msra.mxu0 0.0
    %3223 = vmatprep.subr.mxu0 0.0
    %3224 = vmatpush1.msra.mxu0 0.0
    %3225 = vmatprep.subr.mxu0 0.0
    %3226 = vmatpush1.msra.mxu0 0.0
    %3227 = vmatprep.subr.mxu0 0.0
    %3228 = vmatpush1.msra.mxu0 0.0
    %3229 = vmatprep.subr.mxu0 0.0
    %3230 = vmatpush1.msra.mxu0 0.0
    %3231 = vmatprep.subr.mxu0 0.0
    %3232 = vmatpush1.msra.mxu0 0.0
    %3233 = vmatprep.subr.mxu0 0.0
    %3234 = vmatpush1.msra.mxu0 0.0
    %3235 = vmatprep.subr.mxu0 0.0
    %3236 = vmatpush1.msra.mxu0 0.0
    %3237 = vmatprep.subr.mxu0 0.0
    %3238 = vmatpush1.msra.mxu0 0.0
    %3239 = vmatprep.subr.mxu0 0.0
    %3240 = vmatpush1.msra.mxu0 0.0
    %3241 = vmatprep.subr.mxu0 0.0
    %3242 = vmatpush1.msra.mxu0 0.0
    %3243 = vmatprep.subr.mxu0 0.0
    %3244 = vmatpush1.msra.mxu0 0.0
    %3245 = vmatprep.subr.mxu0 0.0
    %3246 = vmatpush1.msra.mxu0 0.0
    %3247 = vmatprep.mubr.f32.mxu0 0.0
    %3248 = vmatmul.mubr.f32.gmra.mrb[0].mxu0 %v3181
    %v3249 = vpop.f32.mrb[0].mxu0
    %v3250 = vadd.f32 0.0, %v3249
    %v3251 = vpop.f32.mrb[0].mxu0
    %3252 = vdwg.mxu0
    %3253 = vrot.lane.b32.xlu0 %v2304, 64
    %v3254 = vpop.permute.xlu0 %3253
    %v3257 = vsel %vm401, %v3016, 0
    %3259 = vmatprep.subr.mxu0 0.0
    %3260 = vmatpush1.msra.mxu0 %v3254
    %3261 = vmatprep.subr.mxu0 0.0
    %3262 = vmatpush1.msra.mxu0 0.0
    %3263 = vmatprep.subr.mxu0 0.0
    %3264 = vmatpush1.msra.mxu0 0.0
    %3265 = vmatprep.subr.mxu0 0.0
    %3266 = vmatpush1.msra.mxu0 0.0
    %3267 = vmatprep.subr.mxu0 0.0
    %3268 = vmatpush1.msra.mxu0 0.0
    %3269 = vmatprep.subr.mxu0 0.0
    %3270 = vmatpush1.msra.mxu0 0.0
    %3271 = vmatprep.subr.mxu0 0.0
    %3272 = vmatpush1.msra.mxu0 0.0
    %3273 = vmatprep.subr.mxu0 0.0
    %3274 = vmatpush1.msra.mxu0 0.0
    %3275 = vmatprep.subr.mxu0 0.0
    %3276 = vmatpush1.msra.mxu0 0.0
    %3277 = vmatprep.subr.mxu0 0.0
    %3278 = vmatpush1.msra.mxu0 0.0
    %3279 = vmatprep.subr.mxu0 0.0
    %3280 = vmatpush1.msra.mxu0 0.0
    %3281 = vmatprep.subr.mxu0 0.0
    %3282 = vmatpush1.msra.mxu0 0.0
    %3283 = vmatprep.subr.mxu0 0.0
    %3284 = vmatpush1.msra.mxu0 0.0
    %3285 = vmatprep.subr.mxu0 0.0
    %3286 = vmatpush1.msra.mxu0 0.0
    %3287 = vmatprep.subr.mxu0 0.0
    %3288 = vmatpush1.msra.mxu0 0.0
    %3289 = vmatprep.subr.mxu0 0.0
    %3290 = vmatpush1.msra.mxu0 0.0
    %3291 = vmatprep.subr.mxu0 0.0
    %3292 = vmatpush1.msra.mxu0 0.0
    %3293 = vmatprep.subr.mxu0 0.0
    %3294 = vmatpush1.msra.mxu0 0.0
    %3295 = vmatprep.subr.mxu0 0.0
    %3296 = vmatpush1.msra.mxu0 0.0
    %3297 = vmatprep.subr.mxu0 0.0
    %3298 = vmatpush1.msra.mxu0 0.0
    %3299 = vmatprep.subr.mxu0 0.0
    %3300 = vmatpush1.msra.mxu0 0.0
    %3301 = vmatprep.subr.mxu0 0.0
    %3302 = vmatpush1.msra.mxu0 0.0
    %3303 = vmatprep.subr.mxu0 0.0
    %3304 = vmatpush1.msra.mxu0 0.0
    %3305 = vmatprep.subr.mxu0 0.0
    %3306 = vmatpush1.msra.mxu0 0.0
    %3307 = vmatprep.subr.mxu0 0.0
    %3308 = vmatpush1.msra.mxu0 0.0
    %3309 = vmatprep.subr.mxu0 0.0
    %3310 = vmatpush1.msra.mxu0 0.0
    %3311 = vmatprep.subr.mxu0 0.0
    %3312 = vmatpush1.msra.mxu0 0.0
    %3313 = vmatprep.subr.mxu0 0.0
    %3314 = vmatpush1.msra.mxu0 0.0
    %3315 = vmatprep.subr.mxu0 0.0
    %3316 = vmatpush1.msra.mxu0 0.0
    %3317 = vmatprep.subr.mxu0 0.0
    %3318 = vmatpush1.msra.mxu0 0.0
    %3319 = vmatprep.subr.mxu0 0.0
    %3320 = vmatpush1.msra.mxu0 0.0
    %3321 = vmatprep.subr.mxu0 0.0
    %3322 = vmatpush1.msra.mxu0 0.0
    %3323 = vmatprep.mubr.f32.mxu0 0.0
    %3324 = vmatmul.mubr.f32.gmra.mrb[0].mxu0 %v3257
    %v3325 = vpop.f32.mrb[0].mxu0
    %v3326 = vadd.f32 0.0, %v3325
    %v3327 = vpop.f32.mrb[0].mxu0
    %3328 = vdwg.mxu0
    %3329 = vrot.lane.b32.xlu0 %v2306, 64
    %v3330 = vpop.permute.xlu0 %3329
    %v3333 = vsel %vm401, %v3018, 0
    %3335 = vmatprep.subr.mxu0 0.0
    %3336 = vmatpush1.msra.mxu0 %v3330
    %3337 = vmatprep.subr.mxu0 0.0
    %3338 = vmatpush1.msra.mxu0 0.0
    %3339 = vmatprep.subr.mxu0 0.0
    %3340 = vmatpush1.msra.mxu0 0.0
    %3341 = vmatprep.subr.mxu0 0.0
    %3342 = vmatpush1.msra.mxu0 0.0
    %3343 = vmatprep.subr.mxu0 0.0
    %3344 = vmatpush1.msra.mxu0 0.0
    %3345 = vmatprep.subr.mxu0 0.0
    %3346 = vmatpush1.msra.mxu0 0.0
    %3347 = vmatprep.subr.mxu0 0.0
    %3348 = vmatpush1.msra.mxu0 0.0
    %3349 = vmatprep.subr.mxu0 0.0
    %3350 = vmatpush1.msra.mxu0 0.0
    %3351 = vmatprep.subr.mxu0 0.0
    %3352 = vmatpush1.msra.mxu0 0.0
    %3353 = vmatprep.subr.mxu0 0.0
    %3354 = vmatpush1.msra.mxu0 0.0
    %3355 = vmatprep.subr.mxu0 0.0
    %3356 = vmatpush1.msra.mxu0 0.0
    %3357 = vmatprep.subr.mxu0 0.0
    %3358 = vmatpush1.msra.mxu0 0.0
    %3359 = vmatprep.subr.mxu0 0.0
    %3360 = vmatpush1.msra.mxu0 0.0
    %3361 = vmatprep.subr.mxu0 0.0
    %3362 = vmatpush1.msra.mxu0 0.0
    %3363 = vmatprep.subr.mxu0 0.0
    %3364 = vmatpush1.msra.mxu0 0.0
    %3365 = vmatprep.subr.mxu0 0.0
    %3366 = vmatpush1.msra.mxu0 0.0
    %3367 = vmatprep.subr.mxu0 0.0
    %3368 = vmatpush1.msra.mxu0 0.0
    %3369 = vmatprep.subr.mxu0 0.0
    %3370 = vmatpush1.msra.mxu0 0.0
    %3371 = vmatprep.subr.mxu0 0.0
    %3372 = vmatpush1.msra.mxu0 0.0
    %3373 = vmatprep.subr.mxu0 0.0
    %3374 = vmatpush1.msra.mxu0 0.0
    %3375 = vmatprep.subr.mxu0 0.0
    %3376 = vmatpush1.msra.mxu0 0.0
    %3377 = vmatprep.subr.mxu0 0.0
    %3378 = vmatpush1.msra.mxu0 0.0
    %3379 = vmatprep.subr.mxu0 0.0
    %3380 = vmatpush1.msra.mxu0 0.0
    %3381 = vmatprep.subr.mxu0 0.0
    %3382 = vmatpush1.msra.mxu0 0.0
    %3383 = vmatprep.subr.mxu0 0.0
    %3384 = vmatpush1.msra.mxu0 0.0
    %3385 = vmatprep.subr.mxu0 0.0
    %3386 = vmatpush1.msra.mxu0 0.0
    %3387 = vmatprep.subr.mxu0 0.0
    %3388 = vmatpush1.msra.mxu0 0.0
    %3389 = vmatprep.subr.mxu0 0.0
    %3390 = vmatpush1.msra.mxu0 0.0
    %3391 = vmatprep.subr.mxu0 0.0
    %3392 = vmatpush1.msra.mxu0 0.0
    %3393 = vmatprep.subr.mxu0 0.0
    %3394 = vmatpush1.msra.mxu0 0.0
    %3395 = vmatprep.subr.mxu0 0.0
    %3396 = vmatpush1.msra.mxu0 0.0
    %3397 = vmatprep.subr.mxu0 0.0
    %3398 = vmatpush1.msra.mxu0 0.0
    %3399 = vmatprep.mubr.f32.mxu0 0.0
    %3400 = vmatmul.mubr.f32.gmra.mrb[0].mxu0 %v3333
    %v3401 = vpop.f32.mrb[0].mxu0
    %v3402 = vadd.f32 0.0, %v3401
    %v3403 = vpop.f32.mrb[0].mxu0
    %3404 = vdwg.mxu0
    %3405 = vrot.lane.b32.xlu0 %v2308, 64
    %v3406 = vpop.permute.xlu0 %3405
    %v3409 = vsel %vm401, %v3020, 0
    %3411 = vmatprep.subr.mxu0 0.0
    %3412 = vmatpush1.msra.mxu0 %v3406
    %3413 = vmatprep.subr.mxu0 0.0
    %3414 = vmatpush1.msra.mxu0 0.0
    %3415 = vmatprep.subr.mxu0 0.0
    %3416 = vmatpush1.msra.mxu0 0.0
    %3417 = vmatprep.subr.mxu0 0.0
    %3418 = vmatpush1.msra.mxu0 0.0
    %3419 = vmatprep.subr.mxu0 0.0
    %3420 = vmatpush1.msra.mxu0 0.0
    %3421 = vmatprep.subr.mxu0 0.0
    %3422 = vmatpush1.msra.mxu0 0.0
    %3423 = vmatprep.subr.mxu0 0.0
    %3424 = vmatpush1.msra.mxu0 0.0
    %3425 = vmatprep.subr.mxu0 0.0
    %3426 = vmatpush1.msra.mxu0 0.0
    %3427 = vmatprep.subr.mxu0 0.0
    %3428 = vmatpush1.msra.mxu0 0.0
    %3429 = vmatprep.subr.mxu0 0.0
    %3430 = vmatpush1.msra.mxu0 0.0
    %3431 = vmatprep.subr.mxu0 0.0
    %3432 = vmatpush1.msra.mxu0 0.0
    %3433 = vmatprep.subr.mxu0 0.0
    %3434 = vmatpush1.msra.mxu0 0.0
    %3435 = vmatprep.subr.mxu0 0.0
    %3436 = vmatpush1.msra.mxu0 0.0
    %3437 = vmatprep.subr.mxu0 0.0
    %3438 = vmatpush1.msra.mxu0 0.0
    %3439 = vmatprep.subr.mxu0 0.0
    %3440 = vmatpush1.msra.mxu0 0.0
    %3441 = vmatprep.subr.mxu0 0.0
    %3442 = vmatpush1.msra.mxu0 0.0
    %3443 = vmatprep.subr.mxu0 0.0
    %3444 = vmatpush1.msra.mxu0 0.0
    %3445 = vmatprep.subr.mxu0 0.0
    %3446 = vmatpush1.msra.mxu0 0.0
    %3447 = vmatprep.subr.mxu0 0.0
    %3448 = vmatpush1.msra.mxu0 0.0
    %3449 = vmatprep.subr.mxu0 0.0
    %3450 = vmatpush1.msra.mxu0 0.0
    %3451 = vmatprep.subr.mxu0 0.0
    %3452 = vmatpush1.msra.mxu0 0.0
    %3453 = vmatprep.subr.mxu0 0.0
    %3454 = vmatpush1.msra.mxu0 0.0
    %3455 = vmatprep.subr.mxu0 0.0
    %3456 = vmatpush1.msra.mxu0 0.0
    %3457 = vmatprep.subr.mxu0 0.0
    %3458 = vmatpush1.msra.mxu0 0.0
    %3459 = vmatprep.subr.mxu0 0.0
    %3460 = vmatpush1.msra.mxu0 0.0
    %3461 = vmatprep.subr.mxu0 0.0
    %3462 = vmatpush1.msra.mxu0 0.0
    %3463 = vmatprep.subr.mxu0 0.0
    %3464 = vmatpush1.msra.mxu0 0.0
    %3465 = vmatprep.subr.mxu0 0.0
    %3466 = vmatpush1.msra.mxu0 0.0
    %3467 = vmatprep.subr.mxu0 0.0
    %3468 = vmatpush1.msra.mxu0 0.0
    %3469 = vmatprep.subr.mxu0 0.0
    %3470 = vmatpush1.msra.mxu0 0.0
    %3471 = vmatprep.subr.mxu0 0.0
    %3472 = vmatpush1.msra.mxu0 0.0
    %3473 = vmatprep.subr.mxu0 0.0
    %3474 = vmatpush1.msra.mxu0 0.0
    %3475 = vmatprep.mubr.f32.mxu0 0.0
    %3476 = vmatmul.mubr.f32.gmra.mrb[0].mxu0 %v3409
    %v3477 = vpop.f32.mrb[0].mxu0
    %v3478 = vadd.f32 0.0, %v3477
    %v3479 = vpop.f32.mrb[0].mxu0
    %3480 = vdwg.mxu0
    %3481 = vrot.lane.b32.xlu0 %v2310, 64
    %v3482 = vpop.permute.xlu0 %3481
    %v3485 = vsel %vm401, %v3022, 0
    %3487 = vmatprep.subr.mxu0 0.0
    %3488 = vmatpush1.msra.mxu0 %v3482
    %3489 = vmatprep.subr.mxu0 0.0
    %3490 = vmatpush1.msra.mxu0 0.0
    %3491 = vmatprep.subr.mxu0 0.0
    %3492 = vmatpush1.msra.mxu0 0.0
    %3493 = vmatprep.subr.mxu0 0.0
    %3494 = vmatpush1.msra.mxu0 0.0
    %3495 = vmatprep.subr.mxu0 0.0
    %3496 = vmatpush1.msra.mxu0 0.0
    %3497 = vmatprep.subr.mxu0 0.0
    %3498 = vmatpush1.msra.mxu0 0.0
    %3499 = vmatprep.subr.mxu0 0.0
    %3500 = vmatpush1.msra.mxu0 0.0
    %3501 = vmatprep.subr.mxu0 0.0
    %3502 = vmatpush1.msra.mxu0 0.0
    %3503 = vmatprep.subr.mxu0 0.0
    %3504 = vmatpush1.msra.mxu0 0.0
    %3505 = vmatprep.subr.mxu0 0.0
    %3506 = vmatpush1.msra.mxu0 0.0
    %3507 = vmatprep.subr.mxu0 0.0
    %3508 = vmatpush1.msra.mxu0 0.0
    %3509 = vmatprep.subr.mxu0 0.0
    %3510 = vmatpush1.msra.mxu0 0.0
    %3511 = vmatprep.subr.mxu0 0.0
    %3512 = vmatpush1.msra.mxu0 0.0
    %3513 = vmatprep.subr.mxu0 0.0
    %3514 = vmatpush1.msra.mxu0 0.0
    %3515 = vmatprep.subr.mxu0 0.0
    %3516 = vmatpush1.msra.mxu0 0.0
    %3517 = vmatprep.subr.mxu0 0.0
    %3518 = vmatpush1.msra.mxu0 0.0
    %3519 = vmatprep.subr.mxu0 0.0
    %3520 = vmatpush1.msra.mxu0 0.0
    %3521 = vmatprep.subr.mxu0 0.0
    %3522 = vmatpush1.msra.mxu0 0.0
    %3523 = vmatprep.subr.mxu0 0.0
    %3524 = vmatpush1.msra.mxu0 0.0
    %3525 = vmatprep.subr.mxu0 0.0
    %3526 = vmatpush1.msra.mxu0 0.0
    %3527 = vmatprep.subr.mxu0 0.0
    %3528 = vmatpush1.msra.mxu0 0.0
    %3529 = vmatprep.subr.mxu0 0.0
    %3530 = vmatpush1.msra.mxu0 0.0
    %3531 = vmatprep.subr.mxu0 0.0
    %3532 = vmatpush1.msra.mxu0 0.0
    %3533 = vmatprep.subr.mxu0 0.0
    %3534 = vmatpush1.msra.mxu0 0.0
    %3535 = vmatprep.subr.mxu0 0.0
    %3536 = vmatpush1.msra.mxu0 0.0
    %3537 = vmatprep.subr.mxu0 0.0
    %3538 = vmatpush1.msra.mxu0 0.0
    %3539 = vmatprep.subr.mxu0 0.0
    %3540 = vmatpush1.msra.mxu0 0.0
    %3541 = vmatprep.subr.mxu0 0.0
    %3542 = vmatpush1.msra.mxu0 0.0
    %3543 = vmatprep.subr.mxu0 0.0
    %3544 = vmatpush1.msra.mxu0 0.0
    %3545 = vmatprep.subr.mxu0 0.0
    %3546 = vmatpush1.msra.mxu0 0.0
    %3547 = vmatprep.subr.mxu0 0.0
    %3548 = vmatpush1.msra.mxu0 0.0
    %3549 = vmatprep.subr.mxu0 0.0
    %3550 = vmatpush1.msra.mxu0 0.0
    %3551 = vmatprep.mubr.f32.mxu0 0.0
    %3552 = vmatmul.mubr.f32.gmra.mrb[0].mxu0 %v3485
    %v3553 = vpop.f32.mrb[0].mxu0
    %v3554 = vadd.f32 0.0, %v3553
    %v3555 = vpop.f32.mrb[0].mxu0
    %3556 = vdwg.mxu0
    %3557 = vrot.lane.b32.xlu0 %v2312, 64
    %v3558 = vpop.permute.xlu0 %3557
    %v3561 = vsel %vm401, %v3024, 0
    %3563 = vmatprep.subr.mxu0 0.0
    %3564 = vmatpush1.msra.mxu0 %v3558
    %3565 = vmatprep.subr.mxu0 0.0
    %3566 = vmatpush1.msra.mxu0 0.0
    %3567 = vmatprep.subr.mxu0 0.0
    %3568 = vmatpush1.msra.mxu0 0.0
    %3569 = vmatprep.subr.mxu0 0.0
    %3570 = vmatpush1.msra.mxu0 0.0
    %3571 = vmatprep.subr.mxu0 0.0
    %3572 = vmatpush1.msra.mxu0 0.0
    %3573 = vmatprep.subr.mxu0 0.0
    %3574 = vmatpush1.msra.mxu0 0.0
    %3575 = vmatprep.subr.mxu0 0.0
    %3576 = vmatpush1.msra.mxu0 0.0
    %3577 = vmatprep.subr.mxu0 0.0
    %3578 = vmatpush1.msra.mxu0 0.0
    %3579 = vmatprep.subr.mxu0 0.0
    %3580 = vmatpush1.msra.mxu0 0.0
    %3581 = vmatprep.subr.mxu0 0.0
    %3582 = vmatpush1.msra.mxu0 0.0
    %3583 = vmatprep.subr.mxu0 0.0
    %3584 = vmatpush1.msra.mxu0 0.0
    %3585 = vmatprep.subr.mxu0 0.0
    %3586 = vmatpush1.msra.mxu0 0.0
    %3587 = vmatprep.subr.mxu0 0.0
    %3588 = vmatpush1.msra.mxu0 0.0
    %3589 = vmatprep.subr.mxu0 0.0
    %3590 = vmatpush1.msra.mxu0 0.0
    %3591 = vmatprep.subr.mxu0 0.0
    %3592 = vmatpush1.msra.mxu0 0.0
    %3593 = vmatprep.subr.mxu0 0.0
    %3594 = vmatpush1.msra.mxu0 0.0
    %3595 = vmatprep.subr.mxu0 0.0
    %3596 = vmatpush1.msra.mxu0 0.0
    %3597 = vmatprep.subr.mxu0 0.0
    %3598 = vmatpush1.msra.mxu0 0.0
    %3599 = vmatprep.subr.mxu0 0.0
    %3600 = vmatpush1.msra.mxu0 0.0
    %3601 = vmatprep.subr.mxu0 0.0
    %3602 = vmatpush1.msra.mxu0 0.0
    %3603 = vmatprep.subr.mxu0 0.0
    %3604 = vmatpush1.msra.mxu0 0.0
    %3605 = vmatprep.subr.mxu0 0.0
    %3606 = vmatpush1.msra.mxu0 0.0
    %3607 = vmatprep.subr.mxu0 0.0
    %3608 = vmatpush1.msra.mxu0 0.0
    %3609 = vmatprep.subr.mxu0 0.0
    %3610 = vmatpush1.msra.mxu0 0.0
    %3611 = vmatprep.subr.mxu0 0.0
    %3612 = vmatpush1.msra.mxu0 0.0
    %3613 = vmatprep.subr.mxu0 0.0
    %3614 = vmatpush1.msra.mxu0 0.0
    %3615 = vmatprep.subr.mxu0 0.0
    %3616 = vmatpush1.msra.mxu0 0.0
    %3617 = vmatprep.subr.mxu0 0.0
    %3618 = vmatpush1.msra.mxu0 0.0
    %3619 = vmatprep.subr.mxu0 0.0
    %3620 = vmatpush1.msra.mxu0 0.0
    %3621 = vmatprep.subr.mxu0 0.0
    %3622 = vmatpush1.msra.mxu0 0.0
    %3623 = vmatprep.subr.mxu0 0.0
    %3624 = vmatpush1.msra.mxu0 0.0
    %3625 = vmatprep.subr.mxu0 0.0
    %3626 = vmatpush1.msra.mxu0 0.0
    %3627 = vmatprep.mubr.f32.mxu0 0.0
    %3628 = vmatmul.mubr.f32.gmra.mrb[0].mxu0 %v3561
    %v3629 = vpop.f32.mrb[0].mxu0
    %v3630 = vadd.f32 0.0, %v3629
    %v3631 = vpop.f32.mrb[0].mxu0
    %3632 = vdwg.mxu0
    %3635 = vrot.lane.b32.xlu0 %v3250, 8
    %v3636 = vpop.permute.xlu0 %3635
    %3637 = vrot.lane.b32.xlu0 %v3326, 8
    %v3638 = vpop.permute.xlu0 %3637
    %3643 = vrot.lane.b32.xlu0 %v3402, 16
    %v3644 = vpop.permute.xlu0 %3643
    %3645 = vrot.lane.b32.xlu0 %v3478, 16
    %v3646 = vpop.permute.xlu0 %3645
    %3651 = vrot.lane.b32.xlu0 %v3554, 24
    %v3652 = vpop.permute.xlu0 %3651
    %3653 = vrot.lane.b32.xlu0 %v3630, 24
    %v3654 = vpop.permute.xlu0 %3653
    %v3657 = vsel %vm401, %v3098, %v3636
    %v3658 = vsel %vm401, %v3174, %v3638
    %v3659 = vsel %vm1758, %v3657, %v3644
    %v3660 = vsel %vm1758, %v3658, %v3646
    %v3661 = vsel %vm1761, %v3659, %v3652
    %v3662 = vsel %vm1761, %v3660, %v3654
    %v3663 = vld [vmem:[#allocation2 + $0x178] sm:$0xff]
    %v3664 = vld [vmem:[#allocation2 + $0x180] sm:$0xff]
    %v3665 = vld [vmem:[#allocation2 + $0x188] sm:$0xff]
    %v3666 = vld [vmem:[#allocation2 + $0x190] sm:$0xff]
    %v3667 = vld [vmem:[#allocation2 + $0x198] sm:$0x1]
    %v3668 = vlaneseq
    %v3669 = vshrl.u32 %v3668, 7
    %v3670 = vsub.s32 0, %v3669
    %v3671 = vrot.slane %v3667, %v3670
    %v3673 = vsel %vm65, %v3661, 0
    %v3676 = vsel %vm65, %v3662, 0
    %3678 = vmatprep.subr.mxu0 0.0
    %3679 = vmatpush1.msra.mxu0 %v3663
    %3680 = vmatprep.subr.mxu0 0.0
    %3681 = vmatpush1.msra.mxu0 %v3664
    %3682 = vmatprep.subr.mxu0 0.0
    %3683 = vmatpush1.msra.mxu0 %v3665
    %3684 = vmatprep.subr.mxu0 0.0
    %3685 = vmatpush1.msra.mxu0 %v3666
    %3686 = vmatprep.subr.mxu0 0.0
    %3687 = vmatpush1.msra.mxu0 0.0
    %3688 = vmatprep.subr.mxu0 0.0
    %3689 = vmatpush1.msra.mxu0 0.0
    %3690 = vmatprep.subr.mxu0 0.0
    %3691 = vmatpush1.msra.mxu0 0.0
    %3692 = vmatprep.subr.mxu0 0.0
    %3693 = vmatpush1.msra.mxu0 0.0
    %3694 = vmatprep.subr.mxu0 0.0
    %3695 = vmatpush1.msra.mxu0 0.0
    %3696 = vmatprep.subr.mxu0 0.0
    %3697 = vmatpush1.msra.mxu0 0.0
    %3698 = vmatprep.subr.mxu0 0.0
    %3699 = vmatpush1.msra.mxu0 0.0
    %3700 = vmatprep.subr.mxu0 0.0
    %3701 = vmatpush1.msra.mxu0 0.0
    %3702 = vmatprep.subr.mxu0 0.0
    %3703 = vmatpush1.msra.mxu0 0.0
    %3704 = vmatprep.subr.mxu0 0.0
    %3705 = vmatpush1.msra.mxu0 0.0
    %3706 = vmatprep.subr.mxu0 0.0
    %3707 = vmatpush1.msra.mxu0 0.0
    %3708 = vmatprep.subr.mxu0 0.0
    %3709 = vmatpush1.msra.mxu0 0.0
    %3710 = vmatprep.subr.mxu0 0.0
    %3711 = vmatpush1.msra.mxu0 0.0
    %3712 = vmatprep.subr.mxu0 0.0
    %3713 = vmatpush1.msra.mxu0 0.0
    %3714 = vmatprep.subr.mxu0 0.0
    %3715 = vmatpush1.msra.mxu0 0.0
    %3716 = vmatprep.subr.mxu0 0.0
    %3717 = vmatpush1.msra.mxu0 0.0
    %3718 = vmatprep.subr.mxu0 0.0
    %3719 = vmatpush1.msra.mxu0 0.0
    %3720 = vmatprep.subr.mxu0 0.0
    %3721 = vmatpush1.msra.mxu0 0.0
    %3722 = vmatprep.subr.mxu0 0.0
    %3723 = vmatpush1.msra.mxu0 0.0
    %3724 = vmatprep.subr.mxu0 0.0
    %3725 = vmatpush1.msra.mxu0 0.0
    %3726 = vmatprep.subr.mxu0 0.0
    %3727 = vmatpush1.msra.mxu0 0.0
    %3728 = vmatprep.subr.mxu0 0.0
    %3729 = vmatpush1.msra.mxu0 0.0
    %3730 = vmatprep.subr.mxu0 0.0
    %3731 = vmatpush1.msra.mxu0 0.0
    %3732 = vmatprep.subr.mxu0 0.0
    %3733 = vmatpush1.msra.mxu0 0.0
    %3734 = vmatprep.subr.mxu0 0.0
    %3735 = vmatpush1.msra.mxu0 0.0
    %3736 = vmatprep.subr.mxu0 0.0
    %3737 = vmatpush1.msra.mxu0 0.0
    %3738 = vmatprep.subr.mxu0 0.0
    %3739 = vmatpush1.msra.mxu0 0.0
    %3740 = vmatprep.subr.mxu0 0.0
    %3741 = vmatpush1.msra.mxu0 0.0
    %3742 = vmatprep.mubr.f32.mxu0 0.0
    %3743 = vmatmul.mubr.f32.gmra.mrb[0].mxu0 %v3673
    %v3744 = vpop.f32.mrb[0].mxu0
    %v3745 = vadd.f32 %v3671, %v3744
    %v3746 = vpop.f32.mrb[0].mxu0
    %3747 = vmatprep.mubr.f32.mxu0 0.0
    %3748 = vmatmul.mubr.f32.gmra.mrb[0].mxu0 %v3676
    %v3749 = vpop.f32.mrb[0].mxu0
    %v3750 = vadd.f32 %v3671, %v3749
    %v3751 = vpop.f32.mrb[0].mxu0
    %3752 = vdwg.mxu0
    %v3753 = vadd.f32 %v40, %v3745
    %v3754 = vadd.f32 %v41, %v3750
    %v3755 = vld [vmem:[#allocation2 + $0x1a0] sm:$0x1]
    %v3756 = vld [vmem:[#allocation2 + $0x1a8] sm:$0x1]
    %v3757 = vsel %vm65, %v3753, 0.0
    %3758 = vadd.xlane.f32.xlu0 %v3757
    %v3759 = vpop.xlane.xlu0 %3758
    %v3760 = vsel %vm65, %v3754, 0.0
    %3761 = vadd.xlane.f32.xlu0 %v3760
    %v3762 = vpop.xlane.xlu0 %3761
    %v3763 = vmul.f32 %v3759, %v247
    %v3764 = vmul.f32 %v3762, %v247
    %v3765 = vsub.f32 %v3753, %v3763
    %v3766 = vsub.f32 %v3754, %v3764
    %v3767 = vmul.f32 %v3765, %v3765
    %v3768 = vmul.f32 %v3766, %v3766
    %v3769 = vsel %vm65, %v3767, 0.0
    %3770 = vadd.xlane.f32.xlu0 %v3769
    %v3771 = vpop.xlane.xlu0 %3770
    %v3772 = vsel %vm65, %v3768, 0.0
    %3773 = vadd.xlane.f32.xlu0 %v3772
    %v3774 = vpop.xlane.xlu0 %3773
    %v3775 = vmul.f32 %v3771, %v260
    %v3776 = vmul.f32 %v3774, %v260
    %v3777 = vlaneseq
    %v3778 = vshrl.u32 %v3777, 7
    %v3779 = vsub.s32 0, %v3778
    %v3780 = vrot.slane %v3755, %v3779
    %v3781 = vmul.f32 %v3780, %v3765
    %v3782 = vmul.f32 %v3780, %v3766
    %v3783 = vrsqrt.pop %v3775
    %v3784 = vmul.f32 %v3775, %v3783
    %vm3785 = vcmp.eq.f32.partialorder %v3775, inf
    %v3786 = vsel %vm3785, %v3775, %v3784
    %vm3787 = vcmp.eq.f32.partialorder %v3775, 0.0
    %v3788 = vand.u32 %v3775, 2147483648
    %v3789 = vsel %vm3787, %v3788, %v3786
    %v3790 = vrsqrt.pop %v3776
    %v3791 = vmul.f32 %v3776, %v3790
    %vm3792 = vcmp.eq.f32.partialorder %v3776, inf
    %v3793 = vsel %vm3792, %v3776, %v3791
    %vm3794 = vcmp.eq.f32.partialorder %v3776, 0.0
    %v3795 = vand.u32 %v3776, 2147483648
    %v3796 = vsel %vm3794, %v3795, %v3793
    %v3797 = vadd.f32 %v3789, 1e-06
    %v3798 = vadd.f32 %v3796, 1e-06
    %v3799 = vrcp.pop %v3797
    %v3800 = vmul.f32 %v3781, %v3799
    %v3801 = vrcp.pop %v3798
    %v3802 = vmul.f32 %v3782, %v3801
    %v3803 = vlaneseq
    %v3804 = vshrl.u32 %v3803, 7
    %v3805 = vsub.s32 0, %v3804
    %v3806 = vrot.slane %v3756, %v3805
    %v3807 = vadd.f32 %v3800, %v3806
    %v3808 = vadd.f32 %v3802, %v3806
    %v3809 = vld [vmem:[#allocation2 + $0x1b0] sm:$0xff]
    %v3810 = vld [vmem:[#allocation2 + $0x1b8] sm:$0xff]
    %v3811 = vld [vmem:[#allocation2 + $0x1c0] sm:$0xff]
    %v3812 = vld [vmem:[#allocation2 + $0x1c8] sm:$0xff]
    %v3813 = vld [vmem:[#allocation2 + $0x1d0] sm:$0x1]
    %v3814 = vlaneseq
    %v3815 = vshrl.u32 %v3814, 7
    %v3816 = vsub.s32 0, %v3815
    %v3817 = vrot.slane %v3813, %v3816
    %v3819 = vsel %vm65, %v3807, 0
    %v3822 = vsel %vm65, %v3808, 0
    %3824 = vmatprep.subr.mxu0 0.0
    %3825 = vmatpush1.msra.mxu0 %v3809
    %3826 = vmatprep.subr.mxu0 0.0
    %3827 = vmatpush1.msra.mxu0 %v3810
    %3828 = vmatprep.subr.mxu0 0.0
    %3829 = vmatpush1.msra.mxu0 %v3811
    %3830 = vmatprep.subr.mxu0 0.0
    %3831 = vmatpush1.msra.mxu0 %v3812
    %3832 = vmatprep.subr.mxu0 0.0
    %3833 = vmatpush1.msra.mxu0 0.0
    %3834 = vmatprep.subr.mxu0 0.0
    %3835 = vmatpush1.msra.mxu0 0.0
    %3836 = vmatprep.subr.mxu0 0.0
    %3837 = vmatpush1.msra.mxu0 0.0
    %3838 = vmatprep.subr.mxu0 0.0
    %3839 = vmatpush1.msra.mxu0 0.0
    %3840 = vmatprep.subr.mxu0 0.0
    %3841 = vmatpush1.msra.mxu0 0.0
    %3842 = vmatprep.subr.mxu0 0.0
    %3843 = vmatpush1.msra.mxu0 0.0
    %3844 = vmatprep.subr.mxu0 0.0
    %3845 = vmatpush1.msra.mxu0 0.0
    %3846 = vmatprep.subr.mxu0 0.0
    %3847 = vmatpush1.msra.mxu0 0.0
    %3848 = vmatprep.subr.mxu0 0.0
    %3849 = vmatpush1.msra.mxu0 0.0
    %3850 = vmatprep.subr.mxu0 0.0
    %3851 = vmatpush1.msra.mxu0 0.0
    %3852 = vmatprep.subr.mxu0 0.0
    %3853 = vmatpush1.msra.mxu0 0.0
    %3854 = vmatprep.subr.mxu0 0.0
    %3855 = vmatpush1.msra.mxu0 0.0
    %3856 = vmatprep.subr.mxu0 0.0
    %3857 = vmatpush1.msra.mxu0 0.0
    %3858 = vmatprep.subr.mxu0 0.0
    %3859 = vmatpush1.msra.mxu0 0.0
    %3860 = vmatprep.subr.mxu0 0.0
    %3861 = vmatpush1.msra.mxu0 0.0
    %3862 = vmatprep.subr.mxu0 0.0
    %3863 = vmatpush1.msra.mxu0 0.0
    %3864 = vmatprep.subr.mxu0 0.0
    %3865 = vmatpush1.msra.mxu0 0.0
    %3866 = vmatprep.subr.mxu0 0.0
    %3867 = vmatpush1.msra.mxu0 0.0
    %3868 = vmatprep.subr.mxu0 0.0
    %3869 = vmatpush1.msra.mxu0 0.0
    %3870 = vmatprep.subr.mxu0 0.0
    %3871 = vmatpush1.msra.mxu0 0.0
    %3872 = vmatprep.subr.mxu0 0.0
    %3873 = vmatpush1.msra.mxu0 0.0
    %3874 = vmatprep.subr.mxu0 0.0
    %3875 = vmatpush1.msra.mxu0 0.0
    %3876 = vmatprep.subr.mxu0 0.0
    %3877 = vmatpush1.msra.mxu0 0.0
    %3878 = vmatprep.subr.mxu0 0.0
    %3879 = vmatpush1.msra.mxu0 0.0
    %3880 = vmatprep.subr.mxu0 0.0
    %3881 = vmatpush1.msra.mxu0 0.0
    %3882 = vmatprep.subr.mxu0 0.0
    %3883 = vmatpush1.msra.mxu0 0.0
    %3884 = vmatprep.subr.mxu0 0.0
    %3885 = vmatpush1.msra.mxu0 0.0
    %3886 = vmatprep.subr.mxu0 0.0
    %3887 = vmatpush1.msra.mxu0 0.0
    %3888 = vmatprep.mubr.f32.mxu0 0.0
    %3889 = vmatmul.mubr.f32.gmra.mrb[0].mxu0 %v3819
    %v3890 = vpop.f32.mrb[0].mxu0
    %v3891 = vadd.f32 %v3817, %v3890
    %v3892 = vpop.f32.mrb[0].mxu0
    %3893 = vmatprep.mubr.f32.mxu0 0.0
    %3894 = vmatmul.mubr.f32.gmra.mrb[0].mxu0 %v3822
    %v3895 = vpop.f32.mrb[0].mxu0
    %v3896 = vadd.f32 %v3817, %v3895
    %v3897 = vpop.f32.mrb[0].mxu0
    %3898 = vdwg.mxu0
    %v3899 = vld [vmem:[#allocation2 + $0x1d8] sm:$0xff]
    %v3900 = vld [vmem:[#allocation2 + $0x1e0] sm:$0xff]
    %v3901 = vld [vmem:[#allocation2 + $0x1e8] sm:$0xff]
    %v3902 = vld [vmem:[#allocation2 + $0x1f0] sm:$0xff]
    %v3903 = vld [vmem:[#allocation2 + $0x1f8] sm:$0x1]
    %v3904 = vlaneseq
    %v3905 = vshrl.u32 %v3904, 7
    %v3906 = vsub.s32 0, %v3905
    %v3907 = vrot.slane %v3903, %v3906
    %v3909 = vsel %vm65, %v2153, 0
    %v3912 = vsel %vm65, %v2154, 0
    %3914 = vmatprep.subr.mxu0 0.0
    %3915 = vmatpush1.msra.mxu0 %v3899
    %3916 = vmatprep.subr.mxu0 0.0
    %3917 = vmatpush1.msra.mxu0 %v3900
    %3918 = vmatprep.subr.mxu0 0.0
    %3919 = vmatpush1.msra.mxu0 %v3901
    %3920 = vmatprep.subr.mxu0 0.0
    %3921 = vmatpush1.msra.mxu0 %v3902
    %3922 = vmatprep.subr.mxu0 0.0
    %3923 = vmatpush1.msra.mxu0 0.0
    %3924 = vmatprep.subr.mxu0 0.0
    %3925 = vmatpush1.msra.mxu0 0.0
    %3926 = vmatprep.subr.mxu0 0.0
    %3927 = vmatpush1.msra.mxu0 0.0
    %3928 = vmatprep.subr.mxu0 0.0
    %3929 = vmatpush1.msra.mxu0 0.0
    %3930 = vmatprep.subr.mxu0 0.0
    %3931 = vmatpush1.msra.mxu0 0.0
    %3932 = vmatprep.subr.mxu0 0.0
    %3933 = vmatpush1.msra.mxu0 0.0
    %3934 = vmatprep.subr.mxu0 0.0
    %3935 = vmatpush1.msra.mxu0 0.0
    %3936 = vmatprep.subr.mxu0 0.0
    %3937 = vmatpush1.msra.mxu0 0.0
    %3938 = vmatprep.subr.mxu0 0.0
    %3939 = vmatpush1.msra.mxu0 0.0
    %3940 = vmatprep.subr.mxu0 0.0
    %3941 = vmatpush1.msra.mxu0 0.0
    %3942 = vmatprep.subr.mxu0 0.0
    %3943 = vmatpush1.msra.mxu0 0.0
    %3944 = vmatprep.subr.mxu0 0.0
    %3945 = vmatpush1.msra.mxu0 0.0
    %3946 = vmatprep.subr.mxu0 0.0
    %3947 = vmatpush1.msra.mxu0 0.0
    %3948 = vmatprep.subr.mxu0 0.0
    %3949 = vmatpush1.msra.mxu0 0.0
    %3950 = vmatprep.subr.mxu0 0.0
    %3951 = vmatpush1.msra.mxu0 0.0
    %3952 = vmatprep.subr.mxu0 0.0
    %3953 = vmatpush1.msra.mxu0 0.0
    %3954 = vmatprep.subr.mxu0 0.0
    %3955 = vmatpush1.msra.mxu0 0.0
    %3956 = vmatprep.subr.mxu0 0.0
    %3957 = vmatpush1.msra.mxu0 0.0
    %3958 = vmatprep.subr.mxu0 0.0
    %3959 = vmatpush1.msra.mxu0 0.0
    %3960 = vmatprep.subr.mxu0 0.0
    %3961 = vmatpush1.msra.mxu0 0.0
    %3962 = vmatprep.subr.mxu0 0.0
    %3963 = vmatpush1.msra.mxu0 0.0
    %3964 = vmatprep.subr.mxu0 0.0
    %3965 = vmatpush1.msra.mxu0 0.0
    %3966 = vmatprep.subr.mxu0 0.0
    %3967 = vmatpush1.msra.mxu0 0.0
    %3968 = vmatprep.subr.mxu0 0.0
    %3969 = vmatpush1.msra.mxu0 0.0
    %3970 = vmatprep.subr.mxu0 0.0
    %3971 = vmatpush1.msra.mxu0 0.0
    %3972 = vmatprep.subr.mxu0 0.0
    %3973 = vmatpush1.msra.mxu0 0.0
    %3974 = vmatprep.subr.mxu0 0.0
    %3975 = vmatpush1.msra.mxu0 0.0
    %3976 = vmatprep.subr.mxu0 0.0
    %3977 = vmatpush1.msra.mxu0 0.0
    %3978 = vmatprep.mubr.f32.mxu0 0.0
    %3979 = vmatmul.mubr.f32.gmra.mrb[0].mxu0 %v3909
    %v3980 = vpop.f32.mrb[0].mxu0
    %v3981 = vadd.f32 %v3907, %v3980
    %v3982 = vpop.f32.mrb[0].mxu0
    %3983 = vmatprep.mubr.f32.mxu0 0.0
    %3984 = vmatmul.mubr.f32.gmra.mrb[0].mxu0 %v3912
    %v3985 = vpop.f32.mrb[0].mxu0
    %v3986 = vadd.f32 %v3907, %v3985
    %v3987 = vpop.f32.mrb[0].mxu0
    %3988 = vdwg.mxu0
    %3991 = vrot.lane.b32.xlu0 %v3891, 120
    %v3992 = vpop.permute.xlu0 %3991
    %3993 = vrot.lane.b32.xlu0 %v3896, 120
    %v3994 = vpop.permute.xlu0 %3993
    %3995 = vrot.lane.b32.xlu0 %v3891, 112
    %v3996 = vpop.permute.xlu0 %3995
    %3997 = vrot.lane.b32.xlu0 %v3896, 112
    %v3998 = vpop.permute.xlu0 %3997
    %3999 = vrot.lane.b32.xlu0 %v3891, 104
    %v4000 = vpop.permute.xlu0 %3999
    %4001 = vrot.lane.b32.xlu0 %v3896, 104
    %v4002 = vpop.permute.xlu0 %4001
    %4005 = vrot.lane.b32.xlu0 %v3981, 120
    %v4006 = vpop.permute.xlu0 %4005
    %4007 = vrot.lane.b32.xlu0 %v3986, 120
    %v4008 = vpop.permute.xlu0 %4007
    %4009 = vrot.lane.b32.xlu0 %v3981, 112
    %v4010 = vpop.permute.xlu0 %4009
    %4011 = vrot.lane.b32.xlu0 %v3986, 112
    %v4012 = vpop.permute.xlu0 %4011
    %4013 = vrot.lane.b32.xlu0 %v3981, 104
    %v4014 = vpop.permute.xlu0 %4013
    %4015 = vrot.lane.b32.xlu0 %v3986, 104
    %v4016 = vpop.permute.xlu0 %4015
    %v4017 = vsel %vm401, %v3891, 0
    %v4019 = vsel %vm401, %v3981, 0
    %4021 = vmatprep.subr.mxu0 0.0
    %4022 = vmatpush1.xpose.msra.mxu0 %v4019
    %4023 = vmatprep.subr.mxu0 0.0
    %4024 = vmatpush1.xpose.msra.mxu0 0.0
    %4025 = vmatprep.subr.mxu0 0.0
    %4026 = vmatpush1.xpose.msra.mxu0 0.0
    %4027 = vmatprep.subr.mxu0 0.0
    %4028 = vmatpush1.xpose.msra.mxu0 0.0
    %4029 = vmatprep.subr.mxu0 0.0
    %4030 = vmatpush1.xpose.msra.mxu0 0.0
    %4031 = vmatprep.subr.mxu0 0.0
    %4032 = vmatpush1.xpose.msra.mxu0 0.0
    %4033 = vmatprep.subr.mxu0 0.0
    %4034 = vmatpush1.xpose.msra.mxu0 0.0
    %4035 = vmatprep.subr.mxu0 0.0
    %4036 = vmatpush1.xpose.msra.mxu0 0.0
    %4037 = vmatprep.subr.mxu0 0.0
    %4038 = vmatpush1.xpose.msra.mxu0 0.0
    %4039 = vmatprep.subr.mxu0 0.0
    %4040 = vmatpush1.xpose.msra.mxu0 0.0
    %4041 = vmatprep.subr.mxu0 0.0
    %4042 = vmatpush1.xpose.msra.mxu0 0.0
    %4043 = vmatprep.subr.mxu0 0.0
    %4044 = vmatpush1.xpose.msra.mxu0 0.0
    %4045 = vmatprep.subr.mxu0 0.0
    %4046 = vmatpush1.xpose.msra.mxu0 0.0
    %4047 = vmatprep.subr.mxu0 0.0
    %4048 = vmatpush1.xpose.msra.mxu0 0.0
    %4049 = vmatprep.subr.mxu0 0.0
    %4050 = vmatpush1.xpose.msra.mxu0 0.0
    %4051 = vmatprep.subr.mxu0 0.0
    %4052 = vmatpush1.xpose.msra.mxu0 0.0
    %4053 = vmatprep.subr.mxu0 0.0
    %4054 = vmatpush1.xpose.msra.mxu0 0.0
    %4055 = vmatprep.subr.mxu0 0.0
    %4056 = vmatpush1.xpose.msra.mxu0 0.0
    %4057 = vmatprep.subr.mxu0 0.0
    %4058 = vmatpush1.xpose.msra.mxu0 0.0
    %4059 = vmatprep.subr.mxu0 0.0
    %4060 = vmatpush1.xpose.msra.mxu0 0.0
    %4061 = vmatprep.subr.mxu0 0.0
    %4062 = vmatpush1.xpose.msra.mxu0 0.0
    %4063 = vmatprep.subr.mxu0 0.0
    %4064 = vmatpush1.xpose.msra.mxu0 0.0
    %4065 = vmatprep.subr.mxu0 0.0
    %4066 = vmatpush1.xpose.msra.mxu0 0.0
    %4067 = vmatprep.subr.mxu0 0.0
    %4068 = vmatpush1.xpose.msra.mxu0 0.0
    %4069 = vmatprep.subr.mxu0 0.0
    %4070 = vmatpush1.xpose.msra.mxu0 0.0
    %4071 = vmatprep.subr.mxu0 0.0
    %4072 = vmatpush1.xpose.msra.mxu0 0.0
    %4073 = vmatprep.subr.mxu0 0.0
    %4074 = vmatpush1.xpose.msra.mxu0 0.0
    %4075 = vmatprep.subr.mxu0 0.0
    %4076 = vmatpush1.xpose.msra.mxu0 0.0
    %4077 = vmatprep.subr.mxu0 0.0
    %4078 = vmatpush1.xpose.msra.mxu0 0.0
    %4079 = vmatprep.subr.mxu0 0.0
    %4080 = vmatpush1.xpose.msra.mxu0 0.0
    %4081 = vmatprep.subr.mxu0 0.0
    %4082 = vmatpush1.xpose.msra.mxu0 0.0
    %4083 = vmatprep.subr.mxu0 0.0
    %4084 = vmatpush1.xpose.msra.mxu0 0.0
    %4085 = vmatprep.mubr.f32.mxu0 0.0
    %4086 = vmatmul.mubr.f32.gmra.mrb[0].mxu0 %v4017
    %v4087 = vpop.f32.mrb[0].mxu0
    %v4088 = vadd.f32 0.0, %v4087
    %v4089 = vpop.f32.mrb[0].mxu0
    %4090 = vdwg.mxu0
    %v4091 = vsel %vm401, %v3896, 0
    %v4093 = vsel %vm401, %v3986, 0
    %4095 = vmatprep.subr.mxu0 0.0
    %4096 = vmatpush1.xpose.msra.mxu0 %v4093
    %4097 = vmatprep.subr.mxu0 0.0
    %4098 = vmatpush1.xpose.msra.mxu0 0.0
    %4099 = vmatprep.subr.mxu0 0.0
    %4100 = vmatpush1.xpose.msra.mxu0 0.0
    %4101 = vmatprep.subr.mxu0 0.0
    %4102 = vmatpush1.xpose.msra.mxu0 0.0
    %4103 = vmatprep.subr.mxu0 0.0
    %4104 = vmatpush1.xpose.msra.mxu0 0.0
    %4105 = vmatprep.subr.mxu0 0.0
    %4106 = vmatpush1.xpose.msra.mxu0 0.0
    %4107 = vmatprep.subr.mxu0 0.0
    %4108 = vmatpush1.xpose.msra.mxu0 0.0
    %4109 = vmatprep.subr.mxu0 0.0
    %4110 = vmatpush1.xpose.msra.mxu0 0.0
    %4111 = vmatprep.subr.mxu0 0.0
    %4112 = vmatpush1.xpose.msra.mxu0 0.0
    %4113 = vmatprep.subr.mxu0 0.0
    %4114 = vmatpush1.xpose.msra.mxu0 0.0
    %4115 = vmatprep.subr.mxu0 0.0
    %4116 = vmatpush1.xpose.msra.mxu0 0.0
    %4117 = vmatprep.subr.mxu0 0.0
    %4118 = vmatpush1.xpose.msra.mxu0 0.0
    %4119 = vmatprep.subr.mxu0 0.0
    %4120 = vmatpush1.xpose.msra.mxu0 0.0
    %4121 = vmatprep.subr.mxu0 0.0
    %4122 = vmatpush1.xpose.msra.mxu0 0.0
    %4123 = vmatprep.subr.mxu0 0.0
    %4124 = vmatpush1.xpose.msra.mxu0 0.0
    %4125 = vmatprep.subr.mxu0 0.0
    %4126 = vmatpush1.xpose.msra.mxu0 0.0
    %4127 = vmatprep.subr.mxu0 0.0
    %4128 = vmatpush1.xpose.msra.mxu0 0.0
    %4129 = vmatprep.subr.mxu0 0.0
    %4130 = vmatpush1.xpose.msra.mxu0 0.0
    %4131 = vmatprep.subr.mxu0 0.0
    %4132 = vmatpush1.xpose.msra.mxu0 0.0
    %4133 = vmatprep.subr.mxu0 0.0
    %4134 = vmatpush1.xpose.msra.mxu0 0.0
    %4135 = vmatprep.subr.mxu0 0.0
    %4136 = vmatpush1.xpose.msra.mxu0 0.0
    %4137 = vmatprep.subr.mxu0 0.0
    %4138 = vmatpush1.xpose.msra.mxu0 0.0
    %4139 = vmatprep.subr.mxu0 0.0
    %4140 = vmatpush1.xpose.msra.mxu0 0.0
    %4141 = vmatprep.subr.mxu0 0.0
    %4142 = vmatpush1.xpose.msra.mxu0 0.0
    %4143 = vmatprep.subr.mxu0 0.0
    %4144 = vmatpush1.xpose.msra.mxu0 0.0
    %4145 = vmatprep.subr.mxu0 0.0
    %4146 = vmatpush1.xpose.msra.mxu0 0.0
    %4147 = vmatprep.subr.mxu0 0.0
    %4148 = vmatpush1.xpose.msra.mxu0 0.0
    %4149 = vmatprep.subr.mxu0 0.0
    %4150 = vmatpush1.xpose.msra.mxu0 0.0
    %4151 = vmatprep.subr.mxu0 0.0
    %4152 = vmatpush1.xpose.msra.mxu0 0.0
    %4153 = vmatprep.subr.mxu0 0.0
    %4154 = vmatpush1.xpose.msra.mxu0 0.0
    %4155 = vmatprep.subr.mxu0 0.0
    %4156 = vmatpush1.xpose.msra.mxu0 0.0
    %4157 = vmatprep.subr.mxu0 0.0
    %4158 = vmatpush1.xpose.msra.mxu0 0.0
    %4159 = vmatprep.mubr.f32.mxu0 0.0
    %4160 = vmatmul.mubr.f32.gmra.mrb[0].mxu0 %v4091
    %v4161 = vpop.f32.mrb[0].mxu0
    %v4162 = vadd.f32 0.0, %v4161
    %v4163 = vpop.f32.mrb[0].mxu0
    %4164 = vdwg.mxu0
    %v4165 = vsel %vm401, %v3992, 0
    %v4167 = vsel %vm401, %v4006, 0
    %4169 = vmatprep.subr.mxu0 0.0
    %4170 = vmatpush1.xpose.msra.mxu0 %v4167
    %4171 = vmatprep.subr.mxu0 0.0
    %4172 = vmatpush1.xpose.msra.mxu0 0.0
    %4173 = vmatprep.subr.mxu0 0.0
    %4174 = vmatpush1.xpose.msra.mxu0 0.0
    %4175 = vmatprep.subr.mxu0 0.0
    %4176 = vmatpush1.xpose.msra.mxu0 0.0
    %4177 = vmatprep.subr.mxu0 0.0
    %4178 = vmatpush1.xpose.msra.mxu0 0.0
    %4179 = vmatprep.subr.mxu0 0.0
    %4180 = vmatpush1.xpose.msra.mxu0 0.0
    %4181 = vmatprep.subr.mxu0 0.0
    %4182 = vmatpush1.xpose.msra.mxu0 0.0
    %4183 = vmatprep.subr.mxu0 0.0
    %4184 = vmatpush1.xpose.msra.mxu0 0.0
    %4185 = vmatprep.subr.mxu0 0.0
    %4186 = vmatpush1.xpose.msra.mxu0 0.0
    %4187 = vmatprep.subr.mxu0 0.0
    %4188 = vmatpush1.xpose.msra.mxu0 0.0
    %4189 = vmatprep.subr.mxu0 0.0
    %4190 = vmatpush1.xpose.msra.mxu0 0.0
    %4191 = vmatprep.subr.mxu0 0.0
    %4192 = vmatpush1.xpose.msra.mxu0 0.0
    %4193 = vmatprep.subr.mxu0 0.0
    %4194 = vmatpush1.xpose.msra.mxu0 0.0
    %4195 = vmatprep.subr.mxu0 0.0
    %4196 = vmatpush1.xpose.msra.mxu0 0.0
    %4197 = vmatprep.subr.mxu0 0.0
    %4198 = vmatpush1.xpose.msra.mxu0 0.0
    %4199 = vmatprep.subr.mxu0 0.0
    %4200 = vmatpush1.xpose.msra.mxu0 0.0
    %4201 = vmatprep.subr.mxu0 0.0
    %4202 = vmatpush1.xpose.msra.mxu0 0.0
    %4203 = vmatprep.subr.mxu0 0.0
    %4204 = vmatpush1.xpose.msra.mxu0 0.0
    %4205 = vmatprep.subr.mxu0 0.0
    %4206 = vmatpush1.xpose.msra.mxu0 0.0
    %4207 = vmatprep.subr.mxu0 0.0
    %4208 = vmatpush1.xpose.msra.mxu0 0.0
    %4209 = vmatprep.subr.mxu0 0.0
    %4210 = vmatpush1.xpose.msra.mxu0 0.0
    %4211 = vmatprep.subr.mxu0 0.0
    %4212 = vmatpush1.xpose.msra.mxu0 0.0
    %4213 = vmatprep.subr.mxu0 0.0
    %4214 = vmatpush1.xpose.msra.mxu0 0.0
    %4215 = vmatprep.subr.mxu0 0.0
    %4216 = vmatpush1.xpose.msra.mxu0 0.0
    %4217 = vmatprep.subr.mxu0 0.0
    %4218 = vmatpush1.xpose.msra.mxu0 0.0
    %4219 = vmatprep.subr.mxu0 0.0
    %4220 = vmatpush1.xpose.msra.mxu0 0.0
    %4221 = vmatprep.subr.mxu0 0.0
    %4222 = vmatpush1.xpose.msra.mxu0 0.0
    %4223 = vmatprep.subr.mxu0 0.0
    %4224 = vmatpush1.xpose.msra.mxu0 0.0
    %4225 = vmatprep.subr.mxu0 0.0
    %4226 = vmatpush1.xpose.msra.mxu0 0.0
    %4227 = vmatprep.subr.mxu0 0.0
    %4228 = vmatpush1.xpose.msra.mxu0 0.0
    %4229 = vmatprep.subr.mxu0 0.0
    %4230 = vmatpush1.xpose.msra.mxu0 0.0
    %4231 = vmatprep.subr.mxu0 0.0
    %4232 = vmatpush1.xpose.msra.mxu0 0.0
    %4233 = vmatprep.mubr.f32.mxu0 0.0
    %4234 = vmatmul.mubr.f32.gmra.mrb[0].mxu0 %v4165
    %v4235 = vpop.f32.mrb[0].mxu0
    %v4236 = vadd.f32 0.0, %v4235
    %v4237 = vpop.f32.mrb[0].mxu0
    %4238 = vdwg.mxu0
    %v4239 = vsel %vm401, %v3994, 0
    %v4241 = vsel %vm401, %v4008, 0
    %4243 = vmatprep.subr.mxu0 0.0
    %4244 = vmatpush1.xpose.msra.mxu0 %v4241
    %4245 = vmatprep.subr.mxu0 0.0
    %4246 = vmatpush1.xpose.msra.mxu0 0.0
    %4247 = vmatprep.subr.mxu0 0.0
    %4248 = vmatpush1.xpose.msra.mxu0 0.0
    %4249 = vmatprep.subr.mxu0 0.0
    %4250 = vmatpush1.xpose.msra.mxu0 0.0
    %4251 = vmatprep.subr.mxu0 0.0
    %4252 = vmatpush1.xpose.msra.mxu0 0.0
    %4253 = vmatprep.subr.mxu0 0.0
    %4254 = vmatpush1.xpose.msra.mxu0 0.0
    %4255 = vmatprep.subr.mxu0 0.0
    %4256 = vmatpush1.xpose.msra.mxu0 0.0
    %4257 = vmatprep.subr.mxu0 0.0
    %4258 = vmatpush1.xpose.msra.mxu0 0.0
    %4259 = vmatprep.subr.mxu0 0.0
    %4260 = vmatpush1.xpose.msra.mxu0 0.0
    %4261 = vmatprep.subr.mxu0 0.0
    %4262 = vmatpush1.xpose.msra.mxu0 0.0
    %4263 = vmatprep.subr.mxu0 0.0
    %4264 = vmatpush1.xpose.msra.mxu0 0.0
    %4265 = vmatprep.subr.mxu0 0.0
    %4266 = vmatpush1.xpose.msra.mxu0 0.0
    %4267 = vmatprep.subr.mxu0 0.0
    %4268 = vmatpush1.xpose.msra.mxu0 0.0
    %4269 = vmatprep.subr.mxu0 0.0
    %4270 = vmatpush1.xpose.msra.mxu0 0.0
    %4271 = vmatprep.subr.mxu0 0.0
    %4272 = vmatpush1.xpose.msra.mxu0 0.0
    %4273 = vmatprep.subr.mxu0 0.0
    %4274 = vmatpush1.xpose.msra.mxu0 0.0
    %4275 = vmatprep.subr.mxu0 0.0
    %4276 = vmatpush1.xpose.msra.mxu0 0.0
    %4277 = vmatprep.subr.mxu0 0.0
    %4278 = vmatpush1.xpose.msra.mxu0 0.0
    %4279 = vmatprep.subr.mxu0 0.0
    %4280 = vmatpush1.xpose.msra.mxu0 0.0
    %4281 = vmatprep.subr.mxu0 0.0
    %4282 = vmatpush1.xpose.msra.mxu0 0.0
    %4283 = vmatprep.subr.mxu0 0.0
    %4284 = vmatpush1.xpose.msra.mxu0 0.0
    %4285 = vmatprep.subr.mxu0 0.0
    %4286 = vmatpush1.xpose.msra.mxu0 0.0
    %4287 = vmatprep.subr.mxu0 0.0
    %4288 = vmatpush1.xpose.msra.mxu0 0.0
    %4289 = vmatprep.subr.mxu0 0.0
    %4290 = vmatpush1.xpose.msra.mxu0 0.0
    %4291 = vmatprep.subr.mxu0 0.0
    %4292 = vmatpush1.xpose.msra.mxu0 0.0
    %4293 = vmatprep.subr.mxu0 0.0
    %4294 = vmatpush1.xpose.msra.mxu0 0.0
    %4295 = vmatprep.subr.mxu0 0.0
    %4296 = vmatpush1.xpose.msra.mxu0 0.0
    %4297 = vmatprep.subr.mxu0 0.0
    %4298 = vmatpush1.xpose.msra.mxu0 0.0
    %4299 = vmatprep.subr.mxu0 0.0
    %4300 = vmatpush1.xpose.msra.mxu0 0.0
    %4301 = vmatprep.subr.mxu0 0.0
    %4302 = vmatpush1.xpose.msra.mxu0 0.0
    %4303 = vmatprep.subr.mxu0 0.0
    %4304 = vmatpush1.xpose.msra.mxu0 0.0
    %4305 = vmatprep.subr.mxu0 0.0
    %4306 = vmatpush1.xpose.msra.mxu0 0.0
    %4307 = vmatprep.mubr.f32.mxu0 0.0
    %4308 = vmatmul.mubr.f32.gmra.mrb[0].mxu0 %v4239
    %v4309 = vpop.f32.mrb[0].mxu0
    %v4310 = vadd.f32 0.0, %v4309
    %v4311 = vpop.f32.mrb[0].mxu0
    %4312 = vdwg.mxu0
    %v4313 = vsel %vm401, %v3996, 0
    %v4315 = vsel %vm401, %v4010, 0
    %4317 = vmatprep.subr.mxu0 0.0
    %4318 = vmatpush1.xpose.msra.mxu0 %v4315
    %4319 = vmatprep.subr.mxu0 0.0
    %4320 = vmatpush1.xpose.msra.mxu0 0.0
    %4321 = vmatprep.subr.mxu0 0.0
    %4322 = vmatpush1.xpose.msra.mxu0 0.0
    %4323 = vmatprep.subr.mxu0 0.0
    %4324 = vmatpush1.xpose.msra.mxu0 0.0
    %4325 = vmatprep.subr.mxu0 0.0
    %4326 = vmatpush1.xpose.msra.mxu0 0.0
    %4327 = vmatprep.subr.mxu0 0.0
    %4328 = vmatpush1.xpose.msra.mxu0 0.0
    %4329 = vmatprep.subr.mxu0 0.0
    %4330 = vmatpush1.xpose.msra.mxu0 0.0
    %4331 = vmatprep.subr.mxu0 0.0
    %4332 = vmatpush1.xpose.msra.mxu0 0.0
    %4333 = vmatprep.subr.mxu0 0.0
    %4334 = vmatpush1.xpose.msra.mxu0 0.0
    %4335 = vmatprep.subr.mxu0 0.0
    %4336 = vmatpush1.xpose.msra.mxu0 0.0
    %4337 = vmatprep.subr.mxu0 0.0
    %4338 = vmatpush1.xpose.msra.mxu0 0.0
    %4339 = vmatprep.subr.mxu0 0.0
    %4340 = vmatpush1.xpose.msra.mxu0 0.0
    %4341 = vmatprep.subr.mxu0 0.0
    %4342 = vmatpush1.xpose.msra.mxu0 0.0
    %4343 = vmatprep.subr.mxu0 0.0
    %4344 = vmatpush1.xpose.msra.mxu0 0.0
    %4345 = vmatprep.subr.mxu0 0.0
    %4346 = vmatpush1.xpose.msra.mxu0 0.0
    %4347 = vmatprep.subr.mxu0 0.0
    %4348 = vmatpush1.xpose.msra.mxu0 0.0
    %4349 = vmatprep.subr.mxu0 0.0
    %4350 = vmatpush1.xpose.msra.mxu0 0.0
    %4351 = vmatprep.subr.mxu0 0.0
    %4352 = vmatpush1.xpose.msra.mxu0 0.0
    %4353 = vmatprep.subr.mxu0 0.0
    %4354 = vmatpush1.xpose.msra.mxu0 0.0
    %4355 = vmatprep.subr.mxu0 0.0
    %4356 = vmatpush1.xpose.msra.mxu0 0.0
    %4357 = vmatprep.subr.mxu0 0.0
    %4358 = vmatpush1.xpose.msra.mxu0 0.0
    %4359 = vmatprep.subr.mxu0 0.0
    %4360 = vmatpush1.xpose.msra.mxu0 0.0
    %4361 = vmatprep.subr.mxu0 0.0
    %4362 = vmatpush1.xpose.msra.mxu0 0.0
    %4363 = vmatprep.subr.mxu0 0.0
    %4364 = vmatpush1.xpose.msra.mxu0 0.0
    %4365 = vmatprep.subr.mxu0 0.0
    %4366 = vmatpush1.xpose.msra.mxu0 0.0
    %4367 = vmatprep.subr.mxu0 0.0
    %4368 = vmatpush1.xpose.msra.mxu0 0.0
    %4369 = vmatprep.subr.mxu0 0.0
    %4370 = vmatpush1.xpose.msra.mxu0 0.0
    %4371 = vmatprep.subr.mxu0 0.0
    %4372 = vmatpush1.xpose.msra.mxu0 0.0
    %4373 = vmatprep.subr.mxu0 0.0
    %4374 = vmatpush1.xpose.msra.mxu0 0.0
    %4375 = vmatprep.subr.mxu0 0.0
    %4376 = vmatpush1.xpose.msra.mxu0 0.0
    %4377 = vmatprep.subr.mxu0 0.0
    %4378 = vmatpush1.xpose.msra.mxu0 0.0
    %4379 = vmatprep.subr.mxu0 0.0
    %4380 = vmatpush1.xpose.msra.mxu0 0.0
    %4381 = vmatprep.mubr.f32.mxu0 0.0
    %4382 = vmatmul.mubr.f32.gmra.mrb[0].mxu0 %v4313
    %v4383 = vpop.f32.mrb[0].mxu0
    %v4384 = vadd.f32 0.0, %v4383
    %v4385 = vpop.f32.mrb[0].mxu0
    %4386 = vdwg.mxu0
    %v4387 = vsel %vm401, %v3998, 0
    %v4389 = vsel %vm401, %v4012, 0
    %4391 = vmatprep.subr.mxu0 0.0
    %4392 = vmatpush1.xpose.msra.mxu0 %v4389
    %4393 = vmatprep.subr.mxu0 0.0
    %4394 = vmatpush1.xpose.msra.mxu0 0.0
    %4395 = vmatprep.subr.mxu0 0.0
    %4396 = vmatpush1.xpose.msra.mxu0 0.0
    %4397 = vmatprep.subr.mxu0 0.0
    %4398 = vmatpush1.xpose.msra.mxu0 0.0
    %4399 = vmatprep.subr.mxu0 0.0
    %4400 = vmatpush1.xpose.msra.mxu0 0.0
    %4401 = vmatprep.subr.mxu0 0.0
    %4402 = vmatpush1.xpose.msra.mxu0 0.0
    %4403 = vmatprep.subr.mxu0 0.0
    %4404 = vmatpush1.xpose.msra.mxu0 0.0
    %4405 = vmatprep.subr.mxu0 0.0
    %4406 = vmatpush1.xpose.msra.mxu0 0.0
    %4407 = vmatprep.subr.mxu0 0.0
    %4408 = vmatpush1.xpose.msra.mxu0 0.0
    %4409 = vmatprep.subr.mxu0 0.0
    %4410 = vmatpush1.xpose.msra.mxu0 0.0
    %4411 = vmatprep.subr.mxu0 0.0
    %4412 = vmatpush1.xpose.msra.mxu0 0.0
    %4413 = vmatprep.subr.mxu0 0.0
    %4414 = vmatpush1.xpose.msra.mxu0 0.0
    %4415 = vmatprep.subr.mxu0 0.0
    %4416 = vmatpush1.xpose.msra.mxu0 0.0
    %4417 = vmatprep.subr.mxu0 0.0
    %4418 = vmatpush1.xpose.msra.mxu0 0.0
    %4419 = vmatprep.subr.mxu0 0.0
    %4420 = vmatpush1.xpose.msra.mxu0 0.0
    %4421 = vmatprep.subr.mxu0 0.0
    %4422 = vmatpush1.xpose.msra.mxu0 0.0
    %4423 = vmatprep.subr.mxu0 0.0
    %4424 = vmatpush1.xpose.msra.mxu0 0.0
    %4425 = vmatprep.subr.mxu0 0.0
    %4426 = vmatpush1.xpose.msra.mxu0 0.0
    %4427 = vmatprep.subr.mxu0 0.0
    %4428 = vmatpush1.xpose.msra.mxu0 0.0
    %4429 = vmatprep.subr.mxu0 0.0
    %4430 = vmatpush1.xpose.msra.mxu0 0.0
    %4431 = vmatprep.subr.mxu0 0.0
    %4432 = vmatpush1.xpose.msra.mxu0 0.0
    %4433 = vmatprep.subr.mxu0 0.0
    %4434 = vmatpush1.xpose.msra.mxu0 0.0
    %4435 = vmatprep.subr.mxu0 0.0
    %4436 = vmatpush1.xpose.msra.mxu0 0.0
    %4437 = vmatprep.subr.mxu0 0.0
    %4438 = vmatpush1.xpose.msra.mxu0 0.0
    %4439 = vmatprep.subr.mxu0 0.0
    %4440 = vmatpush1.xpose.msra.mxu0 0.0
    %4441 = vmatprep.subr.mxu0 0.0
    %4442 = vmatpush1.xpose.msra.mxu0 0.0
    %4443 = vmatprep.subr.mxu0 0.0
    %4444 = vmatpush1.xpose.msra.mxu0 0.0
    %4445 = vmatprep.subr.mxu0 0.0
    %4446 = vmatpush1.xpose.msra.mxu0 0.0
    %4447 = vmatprep.subr.mxu0 0.0
    %4448 = vmatpush1.xpose.msra.mxu0 0.0
    %4449 = vmatprep.subr.mxu0 0.0
    %4450 = vmatpush1.xpose.msra.mxu0 0.0
    %4451 = vmatprep.subr.mxu0 0.0
    %4452 = vmatpush1.xpose.msra.mxu0 0.0
    %4453 = vmatprep.subr.mxu0 0.0
    %4454 = vmatpush1.xpose.msra.mxu0 0.0
    %4455 = vmatprep.mubr.f32.mxu0 0.0
    %4456 = vmatmul.mubr.f32.gmra.mrb[0].mxu0 %v4387
    %v4457 = vpop.f32.mrb[0].mxu0
    %v4458 = vadd.f32 0.0, %v4457
    %v4459 = vpop.f32.mrb[0].mxu0
    %4460 = vdwg.mxu0
    %v4461 = vsel %vm401, %v4000, 0
    %v4463 = vsel %vm401, %v4014, 0
    %4465 = vmatprep.subr.mxu0 0.0
    %4466 = vmatpush1.xpose.msra.mxu0 %v4463
    %4467 = vmatprep.subr.mxu0 0.0
    %4468 = vmatpush1.xpose.msra.mxu0 0.0
    %4469 = vmatprep.subr.mxu0 0.0
    %4470 = vmatpush1.xpose.msra.mxu0 0.0
    %4471 = vmatprep.subr.mxu0 0.0
    %4472 = vmatpush1.xpose.msra.mxu0 0.0
    %4473 = vmatprep.subr.mxu0 0.0
    %4474 = vmatpush1.xpose.msra.mxu0 0.0
    %4475 = vmatprep.subr.mxu0 0.0
    %4476 = vmatpush1.xpose.msra.mxu0 0.0
    %4477 = vmatprep.subr.mxu0 0.0
    %4478 = vmatpush1.xpose.msra.mxu0 0.0
    %4479 = vmatprep.subr.mxu0 0.0
    %4480 = vmatpush1.xpose.msra.mxu0 0.0
    %4481 = vmatprep.subr.mxu0 0.0
    %4482 = vmatpush1.xpose.msra.mxu0 0.0
    %4483 = vmatprep.subr.mxu0 0.0
    %4484 = vmatpush1.xpose.msra.mxu0 0.0
    %4485 = vmatprep.subr.mxu0 0.0
    %4486 = vmatpush1.xpose.msra.mxu0 0.0
    %4487 = vmatprep.subr.mxu0 0.0
    %4488 = vmatpush1.xpose.msra.mxu0 0.0
    %4489 = vmatprep.subr.mxu0 0.0
    %4490 = vmatpush1.xpose.msra.mxu0 0.0
    %4491 = vmatprep.subr.mxu0 0.0
    %4492 = vmatpush1.xpose.msra.mxu0 0.0
    %4493 = vmatprep.subr.mxu0 0.0
    %4494 = vmatpush1.xpose.msra.mxu0 0.0
    %4495 = vmatprep.subr.mxu0 0.0
    %4496 = vmatpush1.xpose.msra.mxu0 0.0
    %4497 = vmatprep.subr.mxu0 0.0
    %4498 = vmatpush1.xpose.msra.mxu0 0.0
    %4499 = vmatprep.subr.mxu0 0.0
    %4500 = vmatpush1.xpose.msra.mxu0 0.0
    %4501 = vmatprep.subr.mxu0 0.0
    %4502 = vmatpush1.xpose.msra.mxu0 0.0
    %4503 = vmatprep.subr.mxu0 0.0
    %4504 = vmatpush1.xpose.msra.mxu0 0.0
    %4505 = vmatprep.subr.mxu0 0.0
    %4506 = vmatpush1.xpose.msra.mxu0 0.0
    %4507 = vmatprep.subr.mxu0 0.0
    %4508 = vmatpush1.xpose.msra.mxu0 0.0
    %4509 = vmatprep.subr.mxu0 0.0
    %4510 = vmatpush1.xpose.msra.mxu0 0.0
    %4511 = vmatprep.subr.mxu0 0.0
    %4512 = vmatpush1.xpose.msra.mxu0 0.0
    %4513 = vmatprep.subr.mxu0 0.0
    %4514 = vmatpush1.xpose.msra.mxu0 0.0
    %4515 = vmatprep.subr.mxu0 0.0
    %4516 = vmatpush1.xpose.msra.mxu0 0.0
    %4517 = vmatprep.subr.mxu0 0.0
    %4518 = vmatpush1.xpose.msra.mxu0 0.0
    %4519 = vmatprep.subr.mxu0 0.0
    %4520 = vmatpush1.xpose.msra.mxu0 0.0
    %4521 = vmatprep.subr.mxu0 0.0
    %4522 = vmatpush1.xpose.msra.mxu0 0.0
    %4523 = vmatprep.subr.mxu0 0.0
    %4524 = vmatpush1.xpose.msra.mxu0 0.0
    %4525 = vmatprep.subr.mxu0 0.0
    %4526 = vmatpush1.xpose.msra.mxu0 0.0
    %4527 = vmatprep.subr.mxu0 0.0
    %4528 = vmatpush1.xpose.msra.mxu0 0.0
    %4529 = vmatprep.mubr.f32.mxu0 0.0
    %4530 = vmatmul.mubr.f32.gmra.mrb[0].mxu0 %v4461
    %v4531 = vpop.f32.mrb[0].mxu0
    %v4532 = vadd.f32 0.0, %v4531
    %v4533 = vpop.f32.mrb[0].mxu0
    %4534 = vdwg.mxu0
    %v4535 = vsel %vm401, %v4002, 0
    %v4537 = vsel %vm401, %v4016, 0
    %4539 = vmatprep.subr.mxu0 0.0
    %4540 = vmatpush1.xpose.msra.mxu0 %v4537
    %4541 = vmatprep.subr.mxu0 0.0
    %4542 = vmatpush1.xpose.msra.mxu0 0.0
    %4543 = vmatprep.subr.mxu0 0.0
    %4544 = vmatpush1.xpose.msra.mxu0 0.0
    %4545 = vmatprep.subr.mxu0 0.0
    %4546 = vmatpush1.xpose.msra.mxu0 0.0
    %4547 = vmatprep.subr.mxu0 0.0
    %4548 = vmatpush1.xpose.msra.mxu0 0.0
    %4549 = vmatprep.subr.mxu0 0.0
    %4550 = vmatpush1.xpose.msra.mxu0 0.0
    %4551 = vmatprep.subr.mxu0 0.0
    %4552 = vmatpush1.xpose.msra.mxu0 0.0
    %4553 = vmatprep.subr.mxu0 0.0
    %4554 = vmatpush1.xpose.msra.mxu0 0.0
    %4555 = vmatprep.subr.mxu0 0.0
    %4556 = vmatpush1.xpose.msra.mxu0 0.0
    %4557 = vmatprep.subr.mxu0 0.0
    %4558 = vmatpush1.xpose.msra.mxu0 0.0
    %4559 = vmatprep.subr.mxu0 0.0
    %4560 = vmatpush1.xpose.msra.mxu0 0.0
    %4561 = vmatprep.subr.mxu0 0.0
    %4562 = vmatpush1.xpose.msra.mxu0 0.0
    %4563 = vmatprep.subr.mxu0 0.0
    %4564 = vmatpush1.xpose.msra.mxu0 0.0
    %4565 = vmatprep.subr.mxu0 0.0
    %4566 = vmatpush1.xpose.msra.mxu0 0.0
    %4567 = vmatprep.subr.mxu0 0.0
    %4568 = vmatpush1.xpose.msra.mxu0 0.0
    %4569 = vmatprep.subr.mxu0 0.0
    %4570 = vmatpush1.xpose.msra.mxu0 0.0
    %4571 = vmatprep.subr.mxu0 0.0
    %4572 = vmatpush1.xpose.msra.mxu0 0.0
    %4573 = vmatprep.subr.mxu0 0.0
    %4574 = vmatpush1.xpose.msra.mxu0 0.0
    %4575 = vmatprep.subr.mxu0 0.0
    %4576 = vmatpush1.xpose.msra.mxu0 0.0
    %4577 = vmatprep.subr.mxu0 0.0
    %4578 = vmatpush1.xpose.msra.mxu0 0.0
    %4579 = vmatprep.subr.mxu0 0.0
    %4580 = vmatpush1.xpose.msra.mxu0 0.0
    %4581 = vmatprep.subr.mxu0 0.0
    %4582 = vmatpush1.xpose.msra.mxu0 0.0
    %4583 = vmatprep.subr.mxu0 0.0
    %4584 = vmatpush1.xpose.msra.mxu0 0.0
    %4585 = vmatprep.subr.mxu0 0.0
    %4586 = vmatpush1.xpose.msra.mxu0 0.0
    %4587 = vmatprep.subr.mxu0 0.0
    %4588 = vmatpush1.xpose.msra.mxu0 0.0
    %4589 = vmatprep.subr.mxu0 0.0
    %4590 = vmatpush1.xpose.msra.mxu0 0.0
    %4591 = vmatprep.subr.mxu0 0.0
    %4592 = vmatpush1.xpose.msra.mxu0 0.0
    %4593 = vmatprep.subr.mxu0 0.0
    %4594 = vmatpush1.xpose.msra.mxu0 0.0
    %4595 = vmatprep.subr.mxu0 0.0
    %4596 = vmatpush1.xpose.msra.mxu0 0.0
    %4597 = vmatprep.subr.mxu0 0.0
    %4598 = vmatpush1.xpose.msra.mxu0 0.0
    %4599 = vmatprep.subr.mxu0 0.0
    %4600 = vmatpush1.xpose.msra.mxu0 0.0
    %4601 = vmatprep.subr.mxu0 0.0
    %4602 = vmatpush1.xpose.msra.mxu0 0.0
    %4603 = vmatprep.mubr.f32.mxu0 0.0
    %4604 = vmatmul.mubr.f32.gmra.mrb[0].mxu0 %v4535
    %v4605 = vpop.f32.mrb[0].mxu0
    %v4606 = vadd.f32 0.0, %v4605
    %v4607 = vpop.f32.mrb[0].mxu0
    %4608 = vdwg.mxu0
    %v4609 = vmul.f32 %v4088, 0.35355338
    %v4610 = vmul.f32 %v4162, 0.35355338
    %v4611 = vmul.f32 %v4236, 0.35355338
    %v4612 = vmul.f32 %v4310, 0.35355338
    %v4613 = vmul.f32 %v4384, 0.35355338
    %v4614 = vmul.f32 %v4458, 0.35355338
    %v4615 = vmul.f32 %v4532, 0.35355338
    %v4616 = vmul.f32 %v4606, 0.35355338
    %v4617 = vadd.f32 %v4609, %v1021
    %v4618 = vadd.f32 %v4610, %v1025
    %v4619 = vadd.f32 %v4611, %v1021
    %v4620 = vadd.f32 %v4612, %v1025
    %v4621 = vadd.f32 %v4613, %v1021
    %v4622 = vadd.f32 %v4614, %v1025
    %v4623 = vadd.f32 %v4615, %v1021
    %v4624 = vadd.f32 %v4616, %v1025
    %v4625 = vsel %vm401, %v4617, -inf
    %4626 = vmax.xlane.f32.xlu0 %v4625
    %v4627 = vpop.xlane.xlu0 %4626
    %v4628 = vsel %vm401, %v4618, -inf
    %4629 = vmax.xlane.f32.xlu0 %v4628
    %v4630 = vpop.xlane.xlu0 %4629
    %v4631 = vsel %vm401, %v4619, -inf
    %4632 = vmax.xlane.f32.xlu0 %v4631
    %v4633 = vpop.xlane.xlu0 %4632
    %v4634 = vsel %vm401, %v4620, -inf
    %4635 = vmax.xlane.f32.xlu0 %v4634
    %v4636 = vpop.xlane.xlu0 %4635
    %v4637 = vsel %vm401, %v4621, -inf
    %4638 = vmax.xlane.f32.xlu0 %v4637
    %v4639 = vpop.xlane.xlu0 %4638
    %v4640 = vsel %vm401, %v4622, -inf
    %4641 = vmax.xlane.f32.xlu0 %v4640
    %v4642 = vpop.xlane.xlu0 %4641
    %v4643 = vsel %vm401, %v4623, -inf
    %4644 = vmax.xlane.f32.xlu0 %v4643
    %v4645 = vpop.xlane.xlu0 %4644
    %v4646 = vsel %vm401, %v4624, -inf
    %4647 = vmax.xlane.f32.xlu0 %v4646
    %v4648 = vpop.xlane.xlu0 %4647
    %v4649 = vsub.f32 %v4617, %v4627
    %v4650 = vsub.f32 %v4618, %v4630
    %v4651 = vsub.f32 %v4619, %v4633
    %v4652 = vsub.f32 %v4620, %v4636
    %v4653 = vsub.f32 %v4621, %v4639
    %v4654 = vsub.f32 %v4622, %v4642
    %v4655 = vsub.f32 %v4623, %v4645
    %v4656 = vsub.f32 %v4624, %v4648
    %v4657 = vmul.f32 %v4649, 1.442695
    %v4658 = vpow.pop %v4657
    %v4659 = vmul.f32 %v4650, 1.442695
    %v4660 = vpow.pop %v4659
    %v4661 = vmul.f32 %v4651, 1.442695
    %v4662 = vpow.pop %v4661
    %v4663 = vmul.f32 %v4652, 1.442695
    %v4664 = vpow.pop %v4663
    %v4665 = vmul.f32 %v4653, 1.442695
    %v4666 = vpow.pop %v4665
    %v4667 = vmul.f32 %v4654, 1.442695
    %v4668 = vpow.pop %v4667
    %v4669 = vmul.f32 %v4655, 1.442695
    %v4670 = vpow.pop %v4669
    %v4671 = vmul.f32 %v4656, 1.442695
    %v4672 = vpow.pop %v4671
    %v4673 = vsel %vm401, %v4658, 0.0
    %4674 = vadd.xlane.f32.xlu0 %v4673
    %v4675 = vpop.xlane.xlu0 %4674
    %v4676 = vsel %vm401, %v4660, 0.0
    %4677 = vadd.xlane.f32.xlu0 %v4676
    %v4678 = vpop.xlane.xlu0 %4677
    %v4679 = vsel %vm401, %v4662, 0.0
    %4680 = vadd.xlane.f32.xlu0 %v4679
    %v4681 = vpop.xlane.xlu0 %4680
    %v4682 = vsel %vm401, %v4664, 0.0
    %4683 = vadd.xlane.f32.xlu0 %v4682
    %v4684 = vpop.xlane.xlu0 %4683
    %v4685 = vsel %vm401, %v4666, 0.0
    %4686 = vadd.xlane.f32.xlu0 %v4685
    %v4687 = vpop.xlane.xlu0 %4686
    %v4688 = vsel %vm401, %v4668, 0.0
    %4689 = vadd.xlane.f32.xlu0 %v4688
    %v4690 = vpop.xlane.xlu0 %4689
    %v4691 = vsel %vm401, %v4670, 0.0
    %4692 = vadd.xlane.f32.xlu0 %v4691
    %v4693 = vpop.xlane.xlu0 %4692
    %v4694 = vsel %vm401, %v4672, 0.0
    %4695 = vadd.xlane.f32.xlu0 %v4694
    %v4696 = vpop.xlane.xlu0 %4695
    %v4697 = vrcp.pop %v4675
    %v4698 = vmul.f32 %v4658, %v4697
    %v4699 = vrcp.pop %v4678
    %v4700 = vmul.f32 %v4660, %v4699
    %v4701 = vrcp.pop %v4681
    %v4702 = vmul.f32 %v4662, %v4701
    %v4703 = vrcp.pop %v4684
    %v4704 = vmul.f32 %v4664, %v4703
    %v4705 = vrcp.pop %v4687
    %v4706 = vmul.f32 %v4666, %v4705
    %v4707 = vrcp.pop %v4690
    %v4708 = vmul.f32 %v4668, %v4707
    %v4709 = vrcp.pop %v4693
    %v4710 = vmul.f32 %v4670, %v4709
    %v4711 = vrcp.pop %v4696
    %v4712 = vmul.f32 %v4672, %v4711
    %4713 = vrot.lane.b32.xlu0 %v3981, 96
    %v4714 = vpop.permute.xlu0 %4713
    %v4717 = vsel %vm401, %v4698, 0
    %4719 = vmatprep.subr.mxu0 0.0
    %4720 = vmatpush1.msra.mxu0 %v4714
    %4721 = vmatprep.subr.mxu0 0.0
    %4722 = vmatpush1.msra.mxu0 0.0
    %4723 = vmatprep.subr.mxu0 0.0
    %4724 = vmatpush1.msra.mxu0 0.0
    %4725 = vmatprep.subr.mxu0 0.0
    %4726 = vmatpush1.msra.mxu0 0.0
    %4727 = vmatprep.subr.mxu0 0.0
    %4728 = vmatpush1.msra.mxu0 0.0
    %4729 = vmatprep.subr.mxu0 0.0
    %4730 = vmatpush1.msra.mxu0 0.0
    %4731 = vmatprep.subr.mxu0 0.0
    %4732 = vmatpush1.msra.mxu0 0.0
    %4733 = vmatprep.subr.mxu0 0.0
    %4734 = vmatpush1.msra.mxu0 0.0
    %4735 = vmatprep.subr.mxu0 0.0
    %4736 = vmatpush1.msra.mxu0 0.0
    %4737 = vmatprep.subr.mxu0 0.0
    %4738 = vmatpush1.msra.mxu0 0.0
    %4739 = vmatprep.subr.mxu0 0.0
    %4740 = vmatpush1.msra.mxu0 0.0
    %4741 = vmatprep.subr.mxu0 0.0
    %4742 = vmatpush1.msra.mxu0 0.0
    %4743 = vmatprep.subr.mxu0 0.0
    %4744 = vmatpush1.msra.mxu0 0.0
    %4745 = vmatprep.subr.mxu0 0.0
    %4746 = vmatpush1.msra.mxu0 0.0
    %4747 = vmatprep.subr.mxu0 0.0
    %4748 = vmatpush1.msra.mxu0 0.0
    %4749 = vmatprep.subr.mxu0 0.0
    %4750 = vmatpush1.msra.mxu0 0.0
    %4751 = vmatprep.subr.mxu0 0.0
    %4752 = vmatpush1.msra.mxu0 0.0
    %4753 = vmatprep.subr.mxu0 0.0
    %4754 = vmatpush1.msra.mxu0 0.0
    %4755 = vmatprep.subr.mxu0 0.0
    %4756 = vmatpush1.msra.mxu0 0.0
    %4757 = vmatprep.subr.mxu0 0.0
    %4758 = vmatpush1.msra.mxu0 0.0
    %4759 = vmatprep.subr.mxu0 0.0
    %4760 = vmatpush1.msra.mxu0 0.0
    %4761 = vmatprep.subr.mxu0 0.0
    %4762 = vmatpush1.msra.mxu0 0.0
    %4763 = vmatprep.subr.mxu0 0.0
    %4764 = vmatpush1.msra.mxu0 0.0
    %4765 = vmatprep.subr.mxu0 0.0
    %4766 = vmatpush1.msra.mxu0 0.0
    %4767 = vmatprep.subr.mxu0 0.0
    %4768 = vmatpush1.msra.mxu0 0.0
    %4769 = vmatprep.subr.mxu0 0.0
    %4770 = vmatpush1.msra.mxu0 0.0
    %4771 = vmatprep.subr.mxu0 0.0
    %4772 = vmatpush1.msra.mxu0 0.0
    %4773 = vmatprep.subr.mxu0 0.0
    %4774 = vmatpush1.msra.mxu0 0.0
    %4775 = vmatprep.subr.mxu0 0.0
    %4776 = vmatpush1.msra.mxu0 0.0
    %4777 = vmatprep.subr.mxu0 0.0
    %4778 = vmatpush1.msra.mxu0 0.0
    %4779 = vmatprep.subr.mxu0 0.0
    %4780 = vmatpush1.msra.mxu0 0.0
    %4781 = vmatprep.subr.mxu0 0.0
    %4782 = vmatpush1.msra.mxu0 0.0
    %4783 = vmatprep.mubr.f32.mxu0 0.0
    %4784 = vmatmul.mubr.f32.gmra.mrb[0].mxu0 %v4717
    %v4785 = vpop.f32.mrb[0].mxu0
    %v4786 = vadd.f32 0.0, %v4785
    %v4787 = vpop.f32.mrb[0].mxu0
    %4788 = vdwg.mxu0
    %4789 = vrot.lane.b32.xlu0 %v3986, 96
    %v4790 = vpop.permute.xlu0 %4789
    %v4793 = vsel %vm401, %v4700, 0
    %4795 = vmatprep.subr.mxu0 0.0
    %4796 = vmatpush1.msra.mxu0 %v4790
    %4797 = vmatprep.subr.mxu0 0.0
    %4798 = vmatpush1.msra.mxu0 0.0
    %4799 = vmatprep.subr.mxu0 0.0
    %4800 = vmatpush1.msra.mxu0 0.0
    %4801 = vmatprep.subr.mxu0 0.0
    %4802 = vmatpush1.msra.mxu0 0.0
    %4803 = vmatprep.subr.mxu0 0.0
    %4804 = vmatpush1.msra.mxu0 0.0
    %4805 = vmatprep.subr.mxu0 0.0
    %4806 = vmatpush1.msra.mxu0 0.0
    %4807 = vmatprep.subr.mxu0 0.0
    %4808 = vmatpush1.msra.mxu0 0.0
    %4809 = vmatprep.subr.mxu0 0.0
    %4810 = vmatpush1.msra.mxu0 0.0
    %4811 = vmatprep.subr.mxu0 0.0
    %4812 = vmatpush1.msra.mxu0 0.0
    %4813 = vmatprep.subr.mxu0 0.0
    %4814 = vmatpush1.msra.mxu0 0.0
    %4815 = vmatprep.subr.mxu0 0.0
    %4816 = vmatpush1.msra.mxu0 0.0
    %4817 = vmatprep.subr.mxu0 0.0
    %4818 = vmatpush1.msra.mxu0 0.0
    %4819 = vmatprep.subr.mxu0 0.0
    %4820 = vmatpush1.msra.mxu0 0.0
    %4821 = vmatprep.subr.mxu0 0.0
    %4822 = vmatpush1.msra.mxu0 0.0
    %4823 = vmatprep.subr.mxu0 0.0
    %4824 = vmatpush1.msra.mxu0 0.0
    %4825 = vmatprep.subr.mxu0 0.0
    %4826 = vmatpush1.msra.mxu0 0.0
    %4827 = vmatprep.subr.mxu0 0.0
    %4828 = vmatpush1.msra.mxu0 0.0
    %4829 = vmatprep.subr.mxu0 0.0
    %4830 = vmatpush1.msra.mxu0 0.0
    %4831 = vmatprep.subr.mxu0 0.0
    %4832 = vmatpush1.msra.mxu0 0.0
    %4833 = vmatprep.subr.mxu0 0.0
    %4834 = vmatpush1.msra.mxu0 0.0
    %4835 = vmatprep.subr.mxu0 0.0
    %4836 = vmatpush1.msra.mxu0 0.0
    %4837 = vmatprep.subr.mxu0 0.0
    %4838 = vmatpush1.msra.mxu0 0.0
    %4839 = vmatprep.subr.mxu0 0.0
    %4840 = vmatpush1.msra.mxu0 0.0
    %4841 = vmatprep.subr.mxu0 0.0
    %4842 = vmatpush1.msra.mxu0 0.0
    %4843 = vmatprep.subr.mxu0 0.0
    %4844 = vmatpush1.msra.mxu0 0.0
    %4845 = vmatprep.subr.mxu0 0.0
    %4846 = vmatpush1.msra.mxu0 0.0
    %4847 = vmatprep.subr.mxu0 0.0
    %4848 = vmatpush1.msra.mxu0 0.0
    %4849 = vmatprep.subr.mxu0 0.0
    %4850 = vmatpush1.msra.mxu0 0.0
    %4851 = vmatprep.subr.mxu0 0.0
    %4852 = vmatpush1.msra.mxu0 0.0
    %4853 = vmatprep.subr.mxu0 0.0
    %4854 = vmatpush1.msra.mxu0 0.0
    %4855 = vmatprep.subr.mxu0 0.0
    %4856 = vmatpush1.msra.mxu0 0.0
    %4857 = vmatprep.subr.mxu0 0.0
    %4858 = vmatpush1.msra.mxu0 0.0
    %4859 = vmatprep.mubr.f32.mxu0 0.0
    %4860 = vmatmul.mubr.f32.gmra.mrb[0].mxu0 %v4793
    %v4861 = vpop.f32.mrb[0].mxu0
    %v4862 = vadd.f32 0.0, %v4861
    %v4863 = vpop.f32.mrb[0].mxu0
    %4864 = vdwg.mxu0
    %4865 = vrot.lane.b32.xlu0 %v4006, 96
    %v4866 = vpop.permute.xlu0 %4865
    %v4869 = vsel %vm401, %v4702, 0
    %4871 = vmatprep.subr.mxu0 0.0
    %4872 = vmatpush1.msra.mxu0 %v4866
    %4873 = vmatprep.subr.mxu0 0.0
    %4874 = vmatpush1.msra.mxu0 0.0
    %4875 = vmatprep.subr.mxu0 0.0
    %4876 = vmatpush1.msra.mxu0 0.0
    %4877 = vmatprep.subr.mxu0 0.0
    %4878 = vmatpush1.msra.mxu0 0.0
    %4879 = vmatprep.subr.mxu0 0.0
    %4880 = vmatpush1.msra.mxu0 0.0
    %4881 = vmatprep.subr.mxu0 0.0
    %4882 = vmatpush1.msra.mxu0 0.0
    %4883 = vmatprep.subr.mxu0 0.0
    %4884 = vmatpush1.msra.mxu0 0.0
    %4885 = vmatprep.subr.mxu0 0.0
    %4886 = vmatpush1.msra.mxu0 0.0
    %4887 = vmatprep.subr.mxu0 0.0
    %4888 = vmatpush1.msra.mxu0 0.0
    %4889 = vmatprep.subr.mxu0 0.0
    %4890 = vmatpush1.msra.mxu0 0.0
    %4891 = vmatprep.subr.mxu0 0.0
    %4892 = vmatpush1.msra.mxu0 0.0
    %4893 = vmatprep.subr.mxu0 0.0
    %4894 = vmatpush1.msra.mxu0 0.0
    %4895 = vmatprep.subr.mxu0 0.0
    %4896 = vmatpush1.msra.mxu0 0.0
    %4897 = vmatprep.subr.mxu0 0.0
    %4898 = vmatpush1.msra.mxu0 0.0
    %4899 = vmatprep.subr.mxu0 0.0
    %4900 = vmatpush1.msra.mxu0 0.0
    %4901 = vmatprep.subr.mxu0 0.0
    %4902 = vmatpush1.msra.mxu0 0.0
    %4903 = vmatprep.subr.mxu0 0.0
    %4904 = vmatpush1.msra.mxu0 0.0
    %4905 = vmatprep.subr.mxu0 0.0
    %4906 = vmatpush1.msra.mxu0 0.0
    %4907 = vmatprep.subr.mxu0 0.0
    %4908 = vmatpush1.msra.mxu0 0.0
    %4909 = vmatprep.subr.mxu0 0.0
    %4910 = vmatpush1.msra.mxu0 0.0
    %4911 = vmatprep.subr.mxu0 0.0
    %4912 = vmatpush1.msra.mxu0 0.0
    %4913 = vmatprep.subr.mxu0 0.0
    %4914 = vmatpush1.msra.mxu0 0.0
    %4915 = vmatprep.subr.mxu0 0.0
    %4916 = vmatpush1.msra.mxu0 0.0
    %4917 = vmatprep.subr.mxu0 0.0
    %4918 = vmatpush1.msra.mxu0 0.0
    %4919 = vmatprep.subr.mxu0 0.0
    %4920 = vmatpush1.msra.mxu0 0.0
    %4921 = vmatprep.subr.mxu0 0.0
    %4922 = vmatpush1.msra.mxu0 0.0
    %4923 = vmatprep.subr.mxu0 0.0
    %4924 = vmatpush1.msra.mxu0 0.0
    %4925 = vmatprep.subr.mxu0 0.0
    %4926 = vmatpush1.msra.mxu0 0.0
    %4927 = vmatprep.subr.mxu0 0.0
    %4928 = vmatpush1.msra.mxu0 0.0
    %4929 = vmatprep.subr.mxu0 0.0
    %4930 = vmatpush1.msra.mxu0 0.0
    %4931 = vmatprep.subr.mxu0 0.0
    %4932 = vmatpush1.msra.mxu0 0.0
    %4933 = vmatprep.subr.mxu0 0.0
    %4934 = vmatpush1.msra.mxu0 0.0
    %4935 = vmatprep.mubr.f32.mxu0 0.0
    %4936 = vmatmul.mubr.f32.gmra.mrb[0].mxu0 %v4869
    %v4937 = vpop.f32.mrb[0].mxu0
    %v4938 = vadd.f32 0.0, %v4937
    %v4939 = vpop.f32.mrb[0].mxu0
    %4940 = vdwg.mxu0
    %4941 = vrot.lane.b32.xlu0 %v4008, 96
    %v4942 = vpop.permute.xlu0 %4941
    %v4945 = vsel %vm401, %v4704, 0
    %4947 = vmatprep.subr.mxu0 0.0
    %4948 = vmatpush1.msra.mxu0 %v4942
    %4949 = vmatprep.subr.mxu0 0.0
    %4950 = vmatpush1.msra.mxu0 0.0
    %4951 = vmatprep.subr.mxu0 0.0
    %4952 = vmatpush1.msra.mxu0 0.0
    %4953 = vmatprep.subr.mxu0 0.0
    %4954 = vmatpush1.msra.mxu0 0.0
    %4955 = vmatprep.subr.mxu0 0.0
    %4956 = vmatpush1.msra.mxu0 0.0
    %4957 = vmatprep.subr.mxu0 0.0
    %4958 = vmatpush1.msra.mxu0 0.0
    %4959 = vmatprep.subr.mxu0 0.0
    %4960 = vmatpush1.msra.mxu0 0.0
    %4961 = vmatprep.subr.mxu0 0.0
    %4962 = vmatpush1.msra.mxu0 0.0
    %4963 = vmatprep.subr.mxu0 0.0
    %4964 = vmatpush1.msra.mxu0 0.0
    %4965 = vmatprep.subr.mxu0 0.0
    %4966 = vmatpush1.msra.mxu0 0.0
    %4967 = vmatprep.subr.mxu0 0.0
    %4968 = vmatpush1.msra.mxu0 0.0
    %4969 = vmatprep.subr.mxu0 0.0
    %4970 = vmatpush1.msra.mxu0 0.0
    %4971 = vmatprep.subr.mxu0 0.0
    %4972 = vmatpush1.msra.mxu0 0.0
    %4973 = vmatprep.subr.mxu0 0.0
    %4974 = vmatpush1.msra.mxu0 0.0
    %4975 = vmatprep.subr.mxu0 0.0
    %4976 = vmatpush1.msra.mxu0 0.0
    %4977 = vmatprep.subr.mxu0 0.0
    %4978 = vmatpush1.msra.mxu0 0.0
    %4979 = vmatprep.subr.mxu0 0.0
    %4980 = vmatpush1.msra.mxu0 0.0
    %4981 = vmatprep.subr.mxu0 0.0
    %4982 = vmatpush1.msra.mxu0 0.0
    %4983 = vmatprep.subr.mxu0 0.0
    %4984 = vmatpush1.msra.mxu0 0.0
    %4985 = vmatprep.subr.mxu0 0.0
    %4986 = vmatpush1.msra.mxu0 0.0
    %4987 = vmatprep.subr.mxu0 0.0
    %4988 = vmatpush1.msra.mxu0 0.0
    %4989 = vmatprep.subr.mxu0 0.0
    %4990 = vmatpush1.msra.mxu0 0.0
    %4991 = vmatprep.subr.mxu0 0.0
    %4992 = vmatpush1.msra.mxu0 0.0
    %4993 = vmatprep.subr.mxu0 0.0
    %4994 = vmatpush1.msra.mxu0 0.0
    %4995 = vmatprep.subr.mxu0 0.0
    %4996 = vmatpush1.msra.mxu0 0.0
    %4997 = vmatprep.subr.mxu0 0.0
    %4998 = vmatpush1.msra.mxu0 0.0
    %4999 = vmatprep.subr.mxu0 0.0
    %5000 = vmatpush1.msra.mxu0 0.0
    %5001 = vmatprep.subr.mxu0 0.0
    %5002 = vmatpush1.msra.mxu0 0.0
    %5003 = vmatprep.subr.mxu0 0.0
    %5004 = vmatpush1.msra.mxu0 0.0
    %5005 = vmatprep.subr.mxu0 0.0
    %5006 = vmatpush1.msra.mxu0 0.0
    %5007 = vmatprep.subr.mxu0 0.0
    %5008 = vmatpush1.msra.mxu0 0.0
    %5009 = vmatprep.subr.mxu0 0.0
    %5010 = vmatpush1.msra.mxu0 0.0
    %5011 = vmatprep.mubr.f32.mxu0 0.0
    %5012 = vmatmul.mubr.f32.gmra.mrb[0].mxu0 %v4945
    %v5013 = vpop.f32.mrb[0].mxu0
    %v5014 = vadd.f32 0.0, %v5013
    %v5015 = vpop.f32.mrb[0].mxu0
    %5016 = vdwg.mxu0
    %5017 = vrot.lane.b32.xlu0 %v4010, 96
    %v5018 = vpop.permute.xlu0 %5017
    %v5021 = vsel %vm401, %v4706, 0
    %5023 = vmatprep.subr.mxu0 0.0
    %5024 = vmatpush1.msra.mxu0 %v5018
    %5025 = vmatprep.subr.mxu0 0.0
    %5026 = vmatpush1.msra.mxu0 0.0
    %5027 = vmatprep.subr.mxu0 0.0
    %5028 = vmatpush1.msra.mxu0 0.0
    %5029 = vmatprep.subr.mxu0 0.0
    %5030 = vmatpush1.msra.mxu0 0.0
    %5031 = vmatprep.subr.mxu0 0.0
    %5032 = vmatpush1.msra.mxu0 0.0
    %5033 = vmatprep.subr.mxu0 0.0
    %5034 = vmatpush1.msra.mxu0 0.0
    %5035 = vmatprep.subr.mxu0 0.0
    %5036 = vmatpush1.msra.mxu0 0.0
    %5037 = vmatprep.subr.mxu0 0.0
    %5038 = vmatpush1.msra.mxu0 0.0
    %5039 = vmatprep.subr.mxu0 0.0
    %5040 = vmatpush1.msra.mxu0 0.0
    %5041 = vmatprep.subr.mxu0 0.0
    %5042 = vmatpush1.msra.mxu0 0.0
    %5043 = vmatprep.subr.mxu0 0.0
    %5044 = vmatpush1.msra.mxu0 0.0
    %5045 = vmatprep.subr.mxu0 0.0
    %5046 = vmatpush1.msra.mxu0 0.0
    %5047 = vmatprep.subr.mxu0 0.0
    %5048 = vmatpush1.msra.mxu0 0.0
    %5049 = vmatprep.subr.mxu0 0.0
    %5050 = vmatpush1.msra.mxu0 0.0
    %5051 = vmatprep.subr.mxu0 0.0
    %5052 = vmatpush1.msra.mxu0 0.0
    %5053 = vmatprep.subr.mxu0 0.0
    %5054 = vmatpush1.msra.mxu0 0.0
    %5055 = vmatprep.subr.mxu0 0.0
    %5056 = vmatpush1.msra.mxu0 0.0
    %5057 = vmatprep.subr.mxu0 0.0
    %5058 = vmatpush1.msra.mxu0 0.0
    %5059 = vmatprep.subr.mxu0 0.0
    %5060 = vmatpush1.msra.mxu0 0.0
    %5061 = vmatprep.subr.mxu0 0.0
    %5062 = vmatpush1.msra.mxu0 0.0
    %5063 = vmatprep.subr.mxu0 0.0
    %5064 = vmatpush1.msra.mxu0 0.0
    %5065 = vmatprep.subr.mxu0 0.0
    %5066 = vmatpush1.msra.mxu0 0.0
    %5067 = vmatprep.subr.mxu0 0.0
    %5068 = vmatpush1.msra.mxu0 0.0
    %5069 = vmatprep.subr.mxu0 0.0
    %5070 = vmatpush1.msra.mxu0 0.0
    %5071 = vmatprep.subr.mxu0 0.0
    %5072 = vmatpush1.msra.mxu0 0.0
    %5073 = vmatprep.subr.mxu0 0.0
    %5074 = vmatpush1.msra.mxu0 0.0
    %5075 = vmatprep.subr.mxu0 0.0
    %5076 = vmatpush1.msra.mxu0 0.0
    %5077 = vmatprep.subr.mxu0 0.0
    %5078 = vmatpush1.msra.mxu0 0.0
    %5079 = vmatprep.subr.mxu0 0.0
    %5080 = vmatpush1.msra.mxu0 0.0
    %5081 = vmatprep.subr.mxu0 0.0
    %5082 = vmatpush1.msra.mxu0 0.0
    %5083 = vmatprep.subr.mxu0 0.0
    %5084 = vmatpush1.msra.mxu0 0.0
    %5085 = vmatprep.subr.mxu0 0.0
    %5086 = vmatpush1.msra.mxu0 0.0
    %5087 = vmatprep.mubr.f32.mxu0 0.0
    %5088 = vmatmul.mubr.f32.gmra.mrb[0].mxu0 %v5021
    %v5089 = vpop.f32.mrb[0].mxu0
    %v5090 = vadd.f32 0.0, %v5089
    %v5091 = vpop.f32.mrb[0].mxu0
    %5092 = vdwg.mxu0
    %5093 = vrot.lane.b32.xlu0 %v4012, 96
    %v5094 = vpop.permute.xlu0 %5093
    %v5097 = vsel %vm401, %v4708, 0
    %5099 = vmatprep.subr.mxu0 0.0
    %5100 = vmatpush1.msra.mxu0 %v5094
    %5101 = vmatprep.subr.mxu0 0.0
    %5102 = vmatpush1.msra.mxu0 0.0
    %5103 = vmatprep.subr.mxu0 0.0
    %5104 = vmatpush1.msra.mxu0 0.0
    %5105 = vmatprep.subr.mxu0 0.0
    %5106 = vmatpush1.msra.mxu0 0.0
    %5107 = vmatprep.subr.mxu0 0.0
    %5108 = vmatpush1.msra.mxu0 0.0
    %5109 = vmatprep.subr.mxu0 0.0
    %5110 = vmatpush1.msra.mxu0 0.0
    %5111 = vmatprep.subr.mxu0 0.0
    %5112 = vmatpush1.msra.mxu0 0.0
    %5113 = vmatprep.subr.mxu0 0.0
    %5114 = vmatpush1.msra.mxu0 0.0
    %5115 = vmatprep.subr.mxu0 0.0
    %5116 = vmatpush1.msra.mxu0 0.0
    %5117 = vmatprep.subr.mxu0 0.0
    %5118 = vmatpush1.msra.mxu0 0.0
    %5119 = vmatprep.subr.mxu0 0.0
    %5120 = vmatpush1.msra.mxu0 0.0
    %5121 = vmatprep.subr.mxu0 0.0
    %5122 = vmatpush1.msra.mxu0 0.0
    %5123 = vmatprep.subr.mxu0 0.0
    %5124 = vmatpush1.msra.mxu0 0.0
    %5125 = vmatprep.subr.mxu0 0.0
    %5126 = vmatpush1.msra.mxu0 0.0
    %5127 = vmatprep.subr.mxu0 0.0
    %5128 = vmatpush1.msra.mxu0 0.0
    %5129 = vmatprep.subr.mxu0 0.0
    %5130 = vmatpush1.msra.mxu0 0.0
    %5131 = vmatprep.subr.mxu0 0.0
    %5132 = vmatpush1.msra.mxu0 0.0
    %5133 = vmatprep.subr.mxu0 0.0
    %5134 = vmatpush1.msra.mxu0 0.0
    %5135 = vmatprep.subr.mxu0 0.0
    %5136 = vmatpush1.msra.mxu0 0.0
    %5137 = vmatprep.subr.mxu0 0.0
    %5138 = vmatpush1.msra.mxu0 0.0
    %5139 = vmatprep.subr.mxu0 0.0
    %5140 = vmatpush1.msra.mxu0 0.0
    %5141 = vmatprep.subr.mxu0 0.0
    %5142 = vmatpush1.msra.mxu0 0.0
    %5143 = vmatprep.subr.mxu0 0.0
    %5144 = vmatpush1.msra.mxu0 0.0
    %5145 = vmatprep.subr.mxu0 0.0
    %5146 = vmatpush1.msra.mxu0 0.0
    %5147 = vmatprep.subr.mxu0 0.0
    %5148 = vmatpush1.msra.mxu0 0.0
    %5149 = vmatprep.subr.mxu0 0.0
    %5150 = vmatpush1.msra.mxu0 0.0
    %5151 = vmatprep.subr.mxu0 0.0
    %5152 = vmatpush1.msra.mxu0 0.0
    %5153 = vmatprep.subr.mxu0 0.0
    %5154 = vmatpush1.msra.mxu0 0.0
    %5155 = vmatprep.subr.mxu0 0.0
    %5156 = vmatpush1.msra.mxu0 0.0
    %5157 = vmatprep.subr.mxu0 0.0
    %5158 = vmatpush1.msra.mxu0 0.0
    %5159 = vmatprep.subr.mxu0 0.0
    %5160 = vmatpush1.msra.mxu0 0.0
    %5161 = vmatprep.subr.mxu0 0.0
    %5162 = vmatpush1.msra.mxu0 0.0
    %5163 = vmatprep.mubr.f32.mxu0 0.0
    %5164 = vmatmul.mubr.f32.gmra.mrb[0].mxu0 %v5097
    %v5165 = vpop.f32.mrb[0].mxu0
    %v5166 = vadd.f32 0.0, %v5165
    %v5167 = vpop.f32.mrb[0].mxu0
    %5168 = vdwg.mxu0
    %5169 = vrot.lane.b32.xlu0 %v4014, 96
    %v5170 = vpop.permute.xlu0 %5169
    %v5173 = vsel %vm401, %v4710, 0
    %5175 = vmatprep.subr.mxu0 0.0
    %5176 = vmatpush1.msra.mxu0 %v5170
    %5177 = vmatprep.subr.mxu0 0.0
    %5178 = vmatpush1.msra.mxu0 0.0
    %5179 = vmatprep.subr.mxu0 0.0
    %5180 = vmatpush1.msra.mxu0 0.0
    %5181 = vmatprep.subr.mxu0 0.0
    %5182 = vmatpush1.msra.mxu0 0.0
    %5183 = vmatprep.subr.mxu0 0.0
    %5184 = vmatpush1.msra.mxu0 0.0
    %5185 = vmatprep.subr.mxu0 0.0
    %5186 = vmatpush1.msra.mxu0 0.0
    %5187 = vmatprep.subr.mxu0 0.0
    %5188 = vmatpush1.msra.mxu0 0.0
    %5189 = vmatprep.subr.mxu0 0.0
    %5190 = vmatpush1.msra.mxu0 0.0
    %5191 = vmatprep.subr.mxu0 0.0
    %5192 = vmatpush1.msra.mxu0 0.0
    %5193 = vmatprep.subr.mxu0 0.0
    %5194 = vmatpush1.msra.mxu0 0.0
    %5195 = vmatprep.subr.mxu0 0.0
    %5196 = vmatpush1.msra.mxu0 0.0
    %5197 = vmatprep.subr.mxu0 0.0
    %5198 = vmatpush1.msra.mxu0 0.0
    %5199 = vmatprep.subr.mxu0 0.0
    %5200 = vmatpush1.msra.mxu0 0.0
    %5201 = vmatprep.subr.mxu0 0.0
    %5202 = vmatpush1.msra.mxu0 0.0
    %5203 = vmatprep.subr.mxu0 0.0
    %5204 = vmatpush1.msra.mxu0 0.0
    %5205 = vmatprep.subr.mxu0 0.0
    %5206 = vmatpush1.msra.mxu0 0.0
    %5207 = vmatprep.subr.mxu0 0.0
    %5208 = vmatpush1.msra.mxu0 0.0
    %5209 = vmatprep.subr.mxu0 0.0
    %5210 = vmatpush1.msra.mxu0 0.0
    %5211 = vmatprep.subr.mxu0 0.0
    %5212 = vmatpush1.msra.mxu0 0.0
    %5213 = vmatprep.subr.mxu0 0.0
    %5214 = vmatpush1.msra.mxu0 0.0
    %5215 = vmatprep.subr.mxu0 0.0
    %5216 = vmatpush1.msra.mxu0 0.0
    %5217 = vmatprep.subr.mxu0 0.0
    %5218 = vmatpush1.msra.mxu0 0.0
    %5219 = vmatprep.subr.mxu0 0.0
    %5220 = vmatpush1.msra.mxu0 0.0
    %5221 = vmatprep.subr.mxu0 0.0
    %5222 = vmatpush1.msra.mxu0 0.0
    %5223 = vmatprep.subr.mxu0 0.0
    %5224 = vmatpush1.msra.mxu0 0.0
    %5225 = vmatprep.subr.mxu0 0.0
    %5226 = vmatpush1.msra.mxu0 0.0
    %5227 = vmatprep.subr.mxu0 0.0
    %5228 = vmatpush1.msra.mxu0 0.0
    %5229 = vmatprep.subr.mxu0 0.0
    %5230 = vmatpush1.msra.mxu0 0.0
    %5231 = vmatprep.subr.mxu0 0.0
    %5232 = vmatpush1.msra.mxu0 0.0
    %5233 = vmatprep.subr.mxu0 0.0
    %5234 = vmatpush1.msra.mxu0 0.0
    %5235 = vmatprep.subr.mxu0 0.0
    %5236 = vmatpush1.msra.mxu0 0.0
    %5237 = vmatprep.subr.mxu0 0.0
    %5238 = vmatpush1.msra.mxu0 0.0
    %5239 = vmatprep.mubr.f32.mxu0 0.0
    %5240 = vmatmul.mubr.f32.gmra.mrb[0].mxu0 %v5173
    %v5241 = vpop.f32.mrb[0].mxu0
    %v5242 = vadd.f32 0.0, %v5241
    %v5243 = vpop.f32.mrb[0].mxu0
    %5244 = vdwg.mxu0
    %5245 = vrot.lane.b32.xlu0 %v4016, 96
    %v5246 = vpop.permute.xlu0 %5245
    %v5249 = vsel %vm401, %v4712, 0
    %5251 = vmatprep.subr.mxu0 0.0
    %5252 = vmatpush1.msra.mxu0 %v5246
    %5253 = vmatprep.subr.mxu0 0.0
    %5254 = vmatpush1.msra.mxu0 0.0
    %5255 = vmatprep.subr.mxu0 0.0
    %5256 = vmatpush1.msra.mxu0 0.0
    %5257 = vmatprep.subr.mxu0 0.0
    %5258 = vmatpush1.msra.mxu0 0.0
    %5259 = vmatprep.subr.mxu0 0.0
    %5260 = vmatpush1.msra.mxu0 0.0
    %5261 = vmatprep.subr.mxu0 0.0
    %5262 = vmatpush1.msra.mxu0 0.0
    %5263 = vmatprep.subr.mxu0 0.0
    %5264 = vmatpush1.msra.mxu0 0.0
    %5265 = vmatprep.subr.mxu0 0.0
    %5266 = vmatpush1.msra.mxu0 0.0
    %5267 = vmatprep.subr.mxu0 0.0
    %5268 = vmatpush1.msra.mxu0 0.0
    %5269 = vmatprep.subr.mxu0 0.0
    %5270 = vmatpush1.msra.mxu0 0.0
    %5271 = vmatprep.subr.mxu0 0.0
    %5272 = vmatpush1.msra.mxu0 0.0
    %5273 = vmatprep.subr.mxu0 0.0
    %5274 = vmatpush1.msra.mxu0 0.0
    %5275 = vmatprep.subr.mxu0 0.0
    %5276 = vmatpush1.msra.mxu0 0.0
    %5277 = vmatprep.subr.mxu0 0.0
    %5278 = vmatpush1.msra.mxu0 0.0
    %5279 = vmatprep.subr.mxu0 0.0
    %5280 = vmatpush1.msra.mxu0 0.0
    %5281 = vmatprep.subr.mxu0 0.0
    %5282 = vmatpush1.msra.mxu0 0.0
    %5283 = vmatprep.subr.mxu0 0.0
    %5284 = vmatpush1.msra.mxu0 0.0
    %5285 = vmatprep.subr.mxu0 0.0
    %5286 = vmatpush1.msra.mxu0 0.0
    %5287 = vmatprep.subr.mxu0 0.0
    %5288 = vmatpush1.msra.mxu0 0.0
    %5289 = vmatprep.subr.mxu0 0.0
    %5290 = vmatpush1.msra.mxu0 0.0
    %5291 = vmatprep.subr.mxu0 0.0
    %5292 = vmatpush1.msra.mxu0 0.0
    %5293 = vmatprep.subr.mxu0 0.0
    %5294 = vmatpush1.msra.mxu0 0.0
    %5295 = vmatprep.subr.mxu0 0.0
    %5296 = vmatpush1.msra.mxu0 0.0
    %5297 = vmatprep.subr.mxu0 0.0
    %5298 = vmatpush1.msra.mxu0 0.0
    %5299 = vmatprep.subr.mxu0 0.0
    %5300 = vmatpush1.msra.mxu0 0.0
    %5301 = vmatprep.subr.mxu0 0.0
    %5302 = vmatpush1.msra.mxu0 0.0
    %5303 = vmatprep.subr.mxu0 0.0
    %5304 = vmatpush1.msra.mxu0 0.0
    %5305 = vmatprep.subr.mxu0 0.0
    %5306 = vmatpush1.msra.mxu0 0.0
    %5307 = vmatprep.subr.mxu0 0.0
    %5308 = vmatpush1.msra.mxu0 0.0
    %5309 = vmatprep.subr.mxu0 0.0
    %5310 = vmatpush1.msra.mxu0 0.0
    %5311 = vmatprep.subr.mxu0 0.0
    %5312 = vmatpush1.msra.mxu0 0.0
    %5313 = vmatprep.subr.mxu0 0.0
    %5314 = vmatpush1.msra.mxu0 0.0
    %5315 = vmatprep.mubr.f32.mxu0 0.0
    %5316 = vmatmul.mubr.f32.gmra.mrb[0].mxu0 %v5249
    %v5317 = vpop.f32.mrb[0].mxu0
    %v5318 = vadd.f32 0.0, %v5317
    %v5319 = vpop.f32.mrb[0].mxu0
    %5320 = vdwg.mxu0
    %5323 = vrot.lane.b32.xlu0 %v4938, 8
    %v5324 = vpop.permute.xlu0 %5323
    %5325 = vrot.lane.b32.xlu0 %v5014, 8
    %v5326 = vpop.permute.xlu0 %5325
    %5331 = vrot.lane.b32.xlu0 %v5090, 16
    %v5332 = vpop.permute.xlu0 %5331
    %5333 = vrot.lane.b32.xlu0 %v5166, 16
    %v5334 = vpop.permute.xlu0 %5333
    %5339 = vrot.lane.b32.xlu0 %v5242, 24
    %v5340 = vpop.permute.xlu0 %5339
    %5341 = vrot.lane.b32.xlu0 %v5318, 24
    %v5342 = vpop.permute.xlu0 %5341
    %v5345 = vsel %vm401, %v4786, %v5324
    %v5346 = vsel %vm401, %v4862, %v5326
    %v5347 = vsel %vm1758, %v5345, %v5332
    %v5348 = vsel %vm1758, %v5346, %v5334
    %v5349 = vsel %vm1761, %v5347, %v5340
    %v5350 = vsel %vm1761, %v5348, %v5342
    %v5351 = vld [vmem:[#allocation2 + $0x200] sm:$0xff]
    %v5352 = vld [vmem:[#allocation2 + $0x208] sm:$0xff]
    %v5353 = vld [vmem:[#allocation2 + $0x210] sm:$0xff]
    %v5354 = vld [vmem:[#allocation2 + $0x218] sm:$0xff]
    %v5355 = vld [vmem:[#allocation2 + $0x220] sm:$0x1]
    %v5356 = vlaneseq
    %v5357 = vshrl.u32 %v5356, 7
    %v5358 = vsub.s32 0, %v5357
    %v5359 = vrot.slane %v5355, %v5358
    %v5361 = vsel %vm65, %v5349, 0
    %v5364 = vsel %vm65, %v5350, 0
    %5366 = vmatprep.subr.mxu0 0.0
    %5367 = vmatpush1.msra.mxu0 %v5351
    %5368 = vmatprep.subr.mxu0 0.0
    %5369 = vmatpush1.msra.mxu0 %v5352
    %5370 = vmatprep.subr.mxu0 0.0
    %5371 = vmatpush1.msra.mxu0 %v5353
    %5372 = vmatprep.subr.mxu0 0.0
    %5373 = vmatpush1.msra.mxu0 %v5354
    %5374 = vmatprep.subr.mxu0 0.0
    %5375 = vmatpush1.msra.mxu0 0.0
    %5376 = vmatprep.subr.mxu0 0.0
    %5377 = vmatpush1.msra.mxu0 0.0
    %5378 = vmatprep.subr.mxu0 0.0
    %5379 = vmatpush1.msra.mxu0 0.0
    %5380 = vmatprep.subr.mxu0 0.0
    %5381 = vmatpush1.msra.mxu0 0.0
    %5382 = vmatprep.subr.mxu0 0.0
    %5383 = vmatpush1.msra.mxu0 0.0
    %5384 = vmatprep.subr.mxu0 0.0
    %5385 = vmatpush1.msra.mxu0 0.0
    %5386 = vmatprep.subr.mxu0 0.0
    %5387 = vmatpush1.msra.mxu0 0.0
    %5388 = vmatprep.subr.mxu0 0.0
    %5389 = vmatpush1.msra.mxu0 0.0
    %5390 = vmatprep.subr.mxu0 0.0
    %5391 = vmatpush1.msra.mxu0 0.0
    %5392 = vmatprep.subr.mxu0 0.0
    %5393 = vmatpush1.msra.mxu0 0.0
    %5394 = vmatprep.subr.mxu0 0.0
    %5395 = vmatpush1.msra.mxu0 0.0
    %5396 = vmatprep.subr.mxu0 0.0
    %5397 = vmatpush1.msra.mxu0 0.0
    %5398 = vmatprep.subr.mxu0 0.0
    %5399 = vmatpush1.msra.mxu0 0.0
    %5400 = vmatprep.subr.mxu0 0.0
    %5401 = vmatpush1.msra.mxu0 0.0
    %5402 = vmatprep.subr.mxu0 0.0
    %5403 = vmatpush1.msra.mxu0 0.0
    %5404 = vmatprep.subr.mxu0 0.0
    %5405 = vmatpush1.msra.mxu0 0.0
    %5406 = vmatprep.subr.mxu0 0.0
    %5407 = vmatpush1.msra.mxu0 0.0
    %5408 = vmatprep.subr.mxu0 0.0
    %5409 = vmatpush1.msra.mxu0 0.0
    %5410 = vmatprep.subr.mxu0 0.0
    %5411 = vmatpush1.msra.mxu0 0.0
    %5412 = vmatprep.subr.mxu0 0.0
    %5413 = vmatpush1.msra.mxu0 0.0
    %5414 = vmatprep.subr.mxu0 0.0
    %5415 = vmatpush1.msra.mxu0 0.0
    %5416 = vmatprep.subr.mxu0 0.0
    %5417 = vmatpush1.msra.mxu0 0.0
    %5418 = vmatprep.subr.mxu0 0.0
    %5419 = vmatpush1.msra.mxu0 0.0
    %5420 = vmatprep.subr.mxu0 0.0
    %5421 = vmatpush1.msra.mxu0 0.0
    %5422 = vmatprep.subr.mxu0 0.0
    %5423 = vmatpush1.msra.mxu0 0.0
    %5424 = vmatprep.subr.mxu0 0.0
    %5425 = vmatpush1.msra.mxu0 0.0
    %5426 = vmatprep.subr.mxu0 0.0
    %5427 = vmatpush1.msra.mxu0 0.0
    %5428 = vmatprep.subr.mxu0 0.0
    %5429 = vmatpush1.msra.mxu0 0.0
    %5430 = vmatprep.mubr.f32.mxu0 0.0
    %5431 = vmatmul.mubr.f32.gmra.mrb[0].mxu0 %v5361
    %v5432 = vpop.f32.mrb[0].mxu0
    %v5433 = vadd.f32 %v5359, %v5432
    %v5434 = vpop.f32.mrb[0].mxu0
    %5435 = vmatprep.mubr.f32.mxu0 0.0
    %5436 = vmatmul.mubr.f32.gmra.mrb[0].mxu0 %v5364
    %v5437 = vpop.f32.mrb[0].mxu0
    %v5438 = vadd.f32 %v5359, %v5437
    %v5439 = vpop.f32.mrb[0].mxu0
    %5440 = vdwg.mxu0
    %v5441 = vadd.f32 %v3753, %v5433
    %v5442 = vadd.f32 %v3754, %v5438
    %v5443 = vld [vmem:[#allocation2 + $0x228] sm:$0x1]
    %v5444 = vld [vmem:[#allocation2 + $0x230] sm:$0x1]
    %v5445 = vsel %vm65, %v5441, 0.0
    %5446 = vadd.xlane.f32.xlu0 %v5445
    %v5447 = vpop.xlane.xlu0 %5446
    %v5448 = vsel %vm65, %v5442, 0.0
    %5449 = vadd.xlane.f32.xlu0 %v5448
    %v5450 = vpop.xlane.xlu0 %5449
    %v5451 = vmul.f32 %v5447, %v247
    %v5452 = vmul.f32 %v5450, %v247
    %v5453 = vsub.f32 %v5441, %v5451
    %v5454 = vsub.f32 %v5442, %v5452
    %v5455 = vmul.f32 %v5453, %v5453
    %v5456 = vmul.f32 %v5454, %v5454
    %v5457 = vsel %vm65, %v5455, 0.0
    %5458 = vadd.xlane.f32.xlu0 %v5457
    %v5459 = vpop.xlane.xlu0 %5458
    %v5460 = vsel %vm65, %v5456, 0.0
    %5461 = vadd.xlane.f32.xlu0 %v5460
    %v5462 = vpop.xlane.xlu0 %5461
    %v5463 = vmul.f32 %v5459, %v260
    %v5464 = vmul.f32 %v5462, %v260
    %v5465 = vlaneseq
    %v5466 = vshrl.u32 %v5465, 7
    %v5467 = vsub.s32 0, %v5466
    %v5468 = vrot.slane %v5443, %v5467
    %v5469 = vmul.f32 %v5468, %v5453
    %v5470 = vmul.f32 %v5468, %v5454
    %v5471 = vrsqrt.pop %v5463
    %v5472 = vmul.f32 %v5463, %v5471
    %vm5473 = vcmp.eq.f32.partialorder %v5463, inf
    %v5474 = vsel %vm5473, %v5463, %v5472
    %vm5475 = vcmp.eq.f32.partialorder %v5463, 0.0
    %v5476 = vand.u32 %v5463, 2147483648
    %v5477 = vsel %vm5475, %v5476, %v5474
    %v5478 = vrsqrt.pop %v5464
    %v5479 = vmul.f32 %v5464, %v5478
    %vm5480 = vcmp.eq.f32.partialorder %v5464, inf
    %v5481 = vsel %vm5480, %v5464, %v5479
    %vm5482 = vcmp.eq.f32.partialorder %v5464, 0.0
    %v5483 = vand.u32 %v5464, 2147483648
    %v5484 = vsel %vm5482, %v5483, %v5481
    %v5485 = vadd.f32 %v5477, 1e-06
    %v5486 = vadd.f32 %v5484, 1e-06
    %v5487 = vrcp.pop %v5485
    %v5488 = vmul.f32 %v5469, %v5487
    %v5489 = vrcp.pop %v5486
    %v5490 = vmul.f32 %v5470, %v5489
    %v5491 = vlaneseq
    %v5492 = vshrl.u32 %v5491, 7
    %v5493 = vsub.s32 0, %v5492
    %v5494 = vrot.slane %v5444, %v5493
    %v5495 = vadd.f32 %v5488, %v5494
    %v5496 = vadd.f32 %v5490, %v5494
    %v5497 = vld [vmem:[#allocation2 + $0x238] sm:$0xff]
    %v5498 = vld [vmem:[#allocation2 + $0x240] sm:$0xff]
    %v5499 = vld [vmem:[#allocation2 + $0x248] sm:$0xff]
    %v5500 = vld [vmem:[#allocation2 + $0x250] sm:$0xff]
    %v5501 = vld [vmem:[#allocation2 + $0x258] sm:$0x1]
    %v5502 = vlaneseq
    %v5503 = vshrl.u32 %v5502, 7
    %v5504 = vsub.s32 0, %v5503
    %v5505 = vrot.slane %v5501, %v5504
    %v5507 = vsel %vm65, %v5495, 0
    %v5510 = vsel %vm65, %v5496, 0
    %5512 = vmatprep.subr.mxu0 0.0
    %5513 = vmatpush1.msra.mxu0 %v5497
    %5514 = vmatprep.subr.mxu0 0.0
    %5515 = vmatpush1.msra.mxu0 %v5498
    %5516 = vmatprep.subr.mxu0 0.0
    %5517 = vmatpush1.msra.mxu0 %v5499
    %5518 = vmatprep.subr.mxu0 0.0
    %5519 = vmatpush1.msra.mxu0 %v5500
    %5520 = vmatprep.subr.mxu0 0.0
    %5521 = vmatpush1.msra.mxu0 0.0
    %5522 = vmatprep.subr.mxu0 0.0
    %5523 = vmatpush1.msra.mxu0 0.0
    %5524 = vmatprep.subr.mxu0 0.0
    %5525 = vmatpush1.msra.mxu0 0.0
    %5526 = vmatprep.subr.mxu0 0.0
    %5527 = vmatpush1.msra.mxu0 0.0
    %5528 = vmatprep.subr.mxu0 0.0
    %5529 = vmatpush1.msra.mxu0 0.0
    %5530 = vmatprep.subr.mxu0 0.0
    %5531 = vmatpush1.msra.mxu0 0.0
    %5532 = vmatprep.subr.mxu0 0.0
    %5533 = vmatpush1.msra.mxu0 0.0
    %5534 = vmatprep.subr.mxu0 0.0
    %5535 = vmatpush1.msra.mxu0 0.0
    %5536 = vmatprep.subr.mxu0 0.0
    %5537 = vmatpush1.msra.mxu0 0.0
    %5538 = vmatprep.subr.mxu0 0.0
    %5539 = vmatpush1.msra.mxu0 0.0
    %5540 = vmatprep.subr.mxu0 0.0
    %5541 = vmatpush1.msra.mxu0 0.0
    %5542 = vmatprep.subr.mxu0 0.0
    %5543 = vmatpush1.msra.mxu0 0.0
    %5544 = vmatprep.subr.mxu0 0.0
    %5545 = vmatpush1.msra.mxu0 0.0
    %5546 = vmatprep.subr.mxu0 0.0
    %5547 = vmatpush1.msra.mxu0 0.0
    %5548 = vmatprep.subr.mxu0 0.0
    %5549 = vmatpush1.msra.mxu0 0.0
    %5550 = vmatprep.subr.mxu0 0.0
    %5551 = vmatpush1.msra.mxu0 0.0
    %5552 = vmatprep.subr.mxu0 0.0
    %5553 = vmatpush1.msra.mxu0 0.0
    %5554 = vmatprep.subr.mxu0 0.0
    %5555 = vmatpush1.msra.mxu0 0.0
    %5556 = vmatprep.subr.mxu0 0.0
    %5557 = vmatpush1.msra.mxu0 0.0
    %5558 = vmatprep.subr.mxu0 0.0
    %5559 = vmatpush1.msra.mxu0 0.0
    %5560 = vmatprep.subr.mxu0 0.0
    %5561 = vmatpush1.msra.mxu0 0.0
    %5562 = vmatprep.subr.mxu0 0.0
    %5563 = vmatpush1.msra.mxu0 0.0
    %5564 = vmatprep.subr.mxu0 0.0
    %5565 = vmatpush1.msra.mxu0 0.0
    %5566 = vmatprep.subr.mxu0 0.0
    %5567 = vmatpush1.msra.mxu0 0.0
    %5568 = vmatprep.subr.mxu0 0.0
    %5569 = vmatpush1.msra.mxu0 0.0
    %5570 = vmatprep.subr.mxu0 0.0
    %5571 = vmatpush1.msra.mxu0 0.0
    %5572 = vmatprep.subr.mxu0 0.0
    %5573 = vmatpush1.msra.mxu0 0.0
    %5574 = vmatprep.subr.mxu0 0.0
    %5575 = vmatpush1.msra.mxu0 0.0
    %5576 = vmatprep.mubr.f32.mxu0 0.0
    %5577 = vmatmul.mubr.f32.gmra.mrb[0].mxu0 %v5507
    %v5578 = vpop.f32.mrb[0].mxu0
    %v5579 = vadd.f32 %v5505, %v5578
    %v5580 = vpop.f32.mrb[0].mxu0
    %5581 = vmatprep.mubr.f32.mxu0 0.0
    %5582 = vmatmul.mubr.f32.gmra.mrb[0].mxu0 %v5510
    %v5583 = vpop.f32.mrb[0].mxu0
    %v5584 = vadd.f32 %v5505, %v5583
    %v5585 = vpop.f32.mrb[0].mxu0
    %5586 = vdwg.mxu0
    %v5587 = vmax.f32 %v5579, 0.0
    %v5588 = vmax.f32 %v5584, 0.0
    %v5589 = vld [vmem:[#allocation2 + $0x260] sm:$0xff]
    %v5590 = vld [vmem:[#allocation2 + $0x268] sm:$0xff]
    %v5591 = vld [vmem:[#allocation2 + $0x270] sm:$0xff]
    %v5592 = vld [vmem:[#allocation2 + $0x278] sm:$0xff]
    %v5593 = vld [vmem:[#allocation2 + $0x280] sm:$0xff]
    %v5594 = vld [vmem:[#allocation2 + $0x288] sm:$0xff]
    %v5595 = vld [vmem:[#allocation2 + $0x290] sm:$0xff]
    %v5596 = vld [vmem:[#allocation2 + $0x298] sm:$0xff]
    %v5597 = vld [vmem:[#allocation2 + $0x2a0] sm:$0x1]
    %v5598 = vlaneseq
    %v5599 = vshrl.u32 %v5598, 7
    %v5600 = vsub.s32 0, %v5599
    %v5601 = vrot.slane %v5597, %v5600
    %v5603 = vsel %vm2015, %v5587, 0
    %v5606 = vsel %vm2015, %v5588, 0
    %5608 = vmatprep.subr.mxu0 0.0
    %5609 = vmatpush1.msra.mxu0 %v5589
    %5610 = vmatprep.subr.mxu0 0.0
    %5611 = vmatpush1.msra.mxu0 %v5590
    %5612 = vmatprep.subr.mxu0 0.0
    %5613 = vmatpush1.msra.mxu0 %v5591
    %5614 = vmatprep.subr.mxu0 0.0
    %5615 = vmatpush1.msra.mxu0 %v5592
    %5616 = vmatprep.subr.mxu0 0.0
    %5617 = vmatpush1.msra.mxu0 %v5593
    %5618 = vmatprep.subr.mxu0 0.0
    %5619 = vmatpush1.msra.mxu0 %v5594
    %5620 = vmatprep.subr.mxu0 0.0
    %5621 = vmatpush1.msra.mxu0 %v5595
    %5622 = vmatprep.subr.mxu0 0.0
    %5623 = vmatpush1.msra.mxu0 %v5596
    %5624 = vmatprep.subr.mxu0 0.0
    %5625 = vmatpush1.msra.mxu0 0.0
    %5626 = vmatprep.subr.mxu0 0.0
    %5627 = vmatpush1.msra.mxu0 0.0
    %5628 = vmatprep.subr.mxu0 0.0
    %5629 = vmatpush1.msra.mxu0 0.0
    %5630 = vmatprep.subr.mxu0 0.0
    %5631 = vmatpush1.msra.mxu0 0.0
    %5632 = vmatprep.subr.mxu0 0.0
    %5633 = vmatpush1.msra.mxu0 0.0
    %5634 = vmatprep.subr.mxu0 0.0
    %5635 = vmatpush1.msra.mxu0 0.0
    %5636 = vmatprep.subr.mxu0 0.0
    %5637 = vmatpush1.msra.mxu0 0.0
    %5638 = vmatprep.subr.mxu0 0.0
    %5639 = vmatpush1.msra.mxu0 0.0
    %5640 = vmatprep.subr.mxu0 0.0
    %5641 = vmatpush1.msra.mxu0 0.0
    %5642 = vmatprep.subr.mxu0 0.0
    %5643 = vmatpush1.msra.mxu0 0.0
    %5644 = vmatprep.subr.mxu0 0.0
    %5645 = vmatpush1.msra.mxu0 0.0
    %5646 = vmatprep.subr.mxu0 0.0
    %5647 = vmatpush1.msra.mxu0 0.0
    %5648 = vmatprep.subr.mxu0 0.0
    %5649 = vmatpush1.msra.mxu0 0.0
    %5650 = vmatprep.subr.mxu0 0.0
    %5651 = vmatpush1.msra.mxu0 0.0
    %5652 = vmatprep.subr.mxu0 0.0
    %5653 = vmatpush1.msra.mxu0 0.0
    %5654 = vmatprep.subr.mxu0 0.0
    %5655 = vmatpush1.msra.mxu0 0.0
    %5656 = vmatprep.subr.mxu0 0.0
    %5657 = vmatpush1.msra.mxu0 0.0
    %5658 = vmatprep.subr.mxu0 0.0
    %5659 = vmatpush1.msra.mxu0 0.0
    %5660 = vmatprep.subr.mxu0 0.0
    %5661 = vmatpush1.msra.mxu0 0.0
    %5662 = vmatprep.subr.mxu0 0.0
    %5663 = vmatpush1.msra.mxu0 0.0
    %5664 = vmatprep.subr.mxu0 0.0
    %5665 = vmatpush1.msra.mxu0 0.0
    %5666 = vmatprep.subr.mxu0 0.0
    %5667 = vmatpush1.msra.mxu0 0.0
    %5668 = vmatprep.subr.mxu0 0.0
    %5669 = vmatpush1.msra.mxu0 0.0
    %5670 = vmatprep.subr.mxu0 0.0
    %5671 = vmatpush1.msra.mxu0 0.0
    %5672 = vmatprep.mubr.f32.mxu0 0.0
    %5673 = vmatmul.mubr.f32.gmra.mrb[0].mxu0 %v5603
    %v5674 = vpop.f32.mrb[0].mxu0
    %v5675 = vadd.f32 %v5601, %v5674
    %v5676 = vpop.f32.mrb[0].mxu0
    %5677 = vmatprep.mubr.f32.mxu0 0.0
    %5678 = vmatmul.mubr.f32.gmra.mrb[0].mxu0 %v5606
    %v5679 = vpop.f32.mrb[0].mxu0
    %v5680 = vadd.f32 %v5601, %v5679
    %v5681 = vpop.f32.mrb[0].mxu0
    %5682 = vdwg.mxu0
    %v5683 = vadd.f32 %v5441, %v5675
    %v5684 = vadd.f32 %v5442, %v5680
    %v5685 = vld [vmem:[#allocation2 + $0x2a8] sm:$0x1]
    %v5686 = vld [vmem:[#allocation2 + $0x2b0] sm:$0x1]
    %v5687 = vsel %vm65, %v5683, 0.0
    %5688 = vadd.xlane.f32.xlu0 %v5687
    %v5689 = vpop.xlane.xlu0 %5688
    %v5690 = vsel %vm65, %v5684, 0.0
    %5691 = vadd.xlane.f32.xlu0 %v5690
    %v5692 = vpop.xlane.xlu0 %5691
    %v5693 = vmul.f32 %v5689, %v247
    %v5694 = vmul.f32 %v5692, %v247
    %v5695 = vsub.f32 %v5683, %v5693
    %v5696 = vsub.f32 %v5684, %v5694
    %v5697 = vmul.f32 %v5695, %v5695
    %v5698 = vmul.f32 %v5696, %v5696
    %v5699 = vsel %vm65, %v5697, 0.0
    %5700 = vadd.xlane.f32.xlu0 %v5699
    %v5701 = vpop.xlane.xlu0 %5700
    %v5702 = vsel %vm65, %v5698, 0.0
    %5703 = vadd.xlane.f32.xlu0 %v5702
    %v5704 = vpop.xlane.xlu0 %5703
    %v5705 = vmul.f32 %v5701, %v260
    %v5706 = vmul.f32 %v5704, %v260
    %v5707 = vlaneseq
    %v5708 = vshrl.u32 %v5707, 7
    %v5709 = vsub.s32 0, %v5708
    %v5710 = vrot.slane %v5685, %v5709
    %v5711 = vmul.f32 %v5710, %v5695
    %v5712 = vmul.f32 %v5710, %v5696
    %v5713 = vrsqrt.pop %v5705
    %v5714 = vmul.f32 %v5705, %v5713
    %vm5715 = vcmp.eq.f32.partialorder %v5705, inf
    %v5716 = vsel %vm5715, %v5705, %v5714
    %vm5717 = vcmp.eq.f32.partialorder %v5705, 0.0
    %v5718 = vand.u32 %v5705, 2147483648
    %v5719 = vsel %vm5717, %v5718, %v5716
    %v5720 = vrsqrt.pop %v5706
    %v5721 = vmul.f32 %v5706, %v5720
    %vm5722 = vcmp.eq.f32.partialorder %v5706, inf
    %v5723 = vsel %vm5722, %v5706, %v5721
    %vm5724 = vcmp.eq.f32.partialorder %v5706, 0.0
    %v5725 = vand.u32 %v5706, 2147483648
    %v5726 = vsel %vm5724, %v5725, %v5723
    %v5727 = vadd.f32 %v5719, 1e-06
    %v5728 = vadd.f32 %v5726, 1e-06
    %v5729 = vrcp.pop %v5727
    %v5730 = vmul.f32 %v5711, %v5729
    %v5731 = vrcp.pop %v5728
    %v5732 = vmul.f32 %v5712, %v5731
    %v5733 = vlaneseq
    %v5734 = vshrl.u32 %v5733, 7
    %v5735 = vsub.s32 0, %v5734
    %v5736 = vrot.slane %v5686, %v5735
    %v5737 = vadd.f32 %v5730, %v5736
    %v5738 = vadd.f32 %v5732, %v5736
    %5739 = vst.msk [vmem:[#allocation5] sm:$0xff] %vm65, %v5737
    %5740 = vst.msk [vmem:[#allocation5 + $0x8] sm:$0xff] %vm65, %v5738
    // Predicated region
    $region30: #{encoder_decoder_forward.1} parent=1 // pred_check
      _
    $region31: #{encoder_decoder_forward.1} parent=1 // pred_check_branch
      %5742 = sbr.rel (0) target = $region33
    $region32: #{encoder_decoder_forward.1} parent=1 // pred_region
      %s5744 = ssub.s32 256, 256
      %5745 = vsyncadd [#allocation4], %s5744
      %s5746 = sshll.u32 [#allocation5], 4
      %s5747 = int_to_ptr.vmem [resolvable:$true] %s5746
      %5752 = dma.vmem_to_hbm [thread:$0]  %s5747, 256, %s6, [#allocation4], 128, 128, 8
    $region33: #{encoder_decoder_forward.1} parent=1 // pred_fallthru
      _
    // Predicated region
    $region34: #{encoder_decoder_forward.1} parent=1 // pred_check
      _
    $region35: #{encoder_decoder_forward.1} parent=1 // pred_check_branch
      %5754 = sbr.rel (0) target = $region37
    $region36: #{encoder_decoder_forward.1} parent=1 // pred_region
      %5755 = dma.done [#allocation4], 256
    $region37: #{encoder_decoder_forward.1} parent=1 // pred_fallthru
      _
    %5756 = vsyncpa [#allocation3], 1
    %5757 = vsyncpa [#allocation4], 1

</llo_original>
